<compile_context>
chip_gen: v5e
topology: v5e:2x2
jax: 0.10.0
libtpu: 0.0.40
codegen_flags: <defaults>
</compile_context>

<pallas_src>
import functools

import jax
import jax.numpy as jnp
import numpy as np
from jax.experimental import pallas as pl
from jax.experimental.pallas import tpu as pltpu

# Slab padding: must cover the max dilation (18); rounded up to a multiple of
# 8 sublanes so the center store into the padded VMEM slab is aligned.
PAD = 24
BN_EPS = 1e-5
LANE = 128


def _round_up(x, m):
    return (x + m - 1) // m * m


def _aspp_kernel(x_ref, w1_ref, w2_ref, w3_ref, w4_ref, w5_ref, wout_ref,
                 scale_ref, bias_ref, out_ref, xpad_ref, pool_ref,
                 *, H, W, Cin, Cp_in, Cp, tile_h):
    # x_ref:     (1, H, W, Cin)        f32   unpadded image (resident across tiles)
    # w1/w5:     (Cp_in, Cp)           bf16  1x1 conv weights
    # w2/3/4:    (9*Cp_in, Cp)         bf16  dilated 3x3 weights, taps folded into K
    # wout:      (5, Cp, Cp)           bf16  final 1x1 conv split per branch
    # scale/bias:(6, Cp)               f32   folded BatchNorm
    # out_ref:   (1, tile_h, W, Cp)    f32
    # xpad_ref:  (H+2*PAD, W+2*PAD, Cp_in) f32  zero-padded slab (scratch)
    # pool_ref:  (1, Cp)               f32   pooled-branch row (scratch)
    f32 = jnp.float32
    bf16 = jnp.bfloat16
    t = pl.program_id(1)
    M = tile_h * W

    def bn_relu(y, idx):
        s = scale_ref[idx, :][None, :]
        b = bias_ref[idx, :][None, :]
        return jnp.maximum(y * s + b, 0.0)

    # ---- once per image (first row tile): build padded slab + pooled row ----
    @pl.when(t == 0)
    def _init():
        xpad_ref[...] = jnp.zeros_like(xpad_ref)
        center = x_ref[0]                                # (H, W, Cin) f32
        if Cp_in > Cin:                                  # lane-pad on chip only
            center = jnp.concatenate(
                [center, jnp.zeros((H, W, Cp_in - Cin), center.dtype)],
                axis=-1)
        xpad_ref[pl.ds(PAD, H), pl.ds(PAD, W), :] = center

        # Global-average-pool branch -> 1x1 conv -> BN/ReLU -> its (constant
        # per pixel) contribution to the final 1x1 conv, reused by all tiles.
        pooled = jnp.mean(center.reshape(H * W, Cp_in), axis=0, keepdims=True)
        x5 = bn_relu(jnp.dot(pooled.astype(bf16), w5_ref[...],
                             preferred_element_type=f32), 4)
        pool_ref[...] = jnp.dot(x5.astype(bf16), wout_ref[4],
                                preferred_element_type=f32)

    # ---- per row tile ----
    row0 = PAD + t * tile_h

    def tap(dy, dx):
        sl = xpad_ref[pl.ds(row0 + dy, tile_h), pl.ds(PAD + dx, W), :]
        return sl.reshape(M, Cp_in).astype(bf16)

    # Branch 1: 1x1 conv + BN + ReLU, accumulated straight into the final conv.
    x1 = bn_relu(jnp.dot(tap(0, 0), w1_ref[...], preferred_element_type=f32), 0)
    acc = jnp.dot(x1.astype(bf16), wout_ref[0], preferred_element_type=f32)

    # Branches 2-4: dilated 3x3 convs, ONE matmul each (9 taps folded into K).
    for w_ref, d, idx in ((w2_ref, 6, 1), (w3_ref, 12, 2), (w4_ref, 18, 3)):
        cols = jnp.concatenate(
            [tap((ky - 1) * d, (kx - 1) * d)
             for ky in range(3) for kx in range(3)], axis=-1)    # (M, 9*Cp_in)
        xb = bn_relu(jnp.dot(cols, w_ref[...], preferred_element_type=f32), idx)
        acc = acc + jnp.dot(xb.astype(bf16), wout_ref[idx],
                            preferred_element_type=f32)

    # Pooled-branch row (broadcast add), final BN + ReLU, lane-dense store.
    out = bn_relu(acc + pool_ref[...], 5)
    out_ref[0] = out.reshape(tile_h, W, Cp).astype(out_ref.dtype)


def aspp_pallas(x_nhwc, params, tile_h=None):
    """ASPP forward. x_nhwc: (N, H, W, Cin) f32 -> (N, H, W, Cout) f32."""
    N, H, W, Cin = x_nhwc.shape
    Cout = params["w1"].shape[-1]
    Cp_in = _round_up(Cin, LANE)
    Cp = _round_up(Cout, LANE)
    if tile_h is None:
        tile_h = 8 if H % 8 == 0 else H   # TODO(synk): tune per chip/shape
    assert H % tile_h == 0
    n_tiles = H // tile_h
    Hp, Wp = H + 2 * PAD, W + 2 * PAD
    bf16, f32 = jnp.bfloat16, jnp.float32

    def pad_mat(w):                       # (Cin, Cout) -> (Cp_in, Cp) bf16
        return jnp.pad(w, ((0, Cp_in - Cin), (0, Cp - Cout))).astype(bf16)

    def pad_conv3(w):                     # (3,3,Cin,Cout) -> (9*Cp_in, Cp) bf16
        w = jnp.pad(w, ((0, 0), (0, 0), (0, Cp_in - Cin), (0, Cp - Cout)))
        return w.reshape(9 * Cp_in, Cp).astype(bf16)

    w1, w5 = pad_mat(params["w1"]), pad_mat(params["w5"])
    w2, w3, w4 = (pad_conv3(params[k]) for k in ("w2", "w3", "w4"))
    wout = params["w_out"].reshape(5, Cout, Cout)
    wout = jnp.pad(wout, ((0, 0), (0, Cp - Cout), (0, Cp - Cout))).astype(bf16)
    scale = jnp.pad(params["bn_scale"], ((0, 0), (0, Cp - Cout))).astype(f32)
    bias = jnp.pad(params["bn_bias"], ((0, 0), (0, Cp - Cout))).astype(f32)

    kernel = functools.partial(_aspp_kernel, H=H, W=W, Cin=Cin,
                               Cp_in=Cp_in, Cp=Cp, tile_h=tile_h)

    def const(shape):
        return pl.BlockSpec(shape, lambda n, t: (0,) * len(shape))

    out_p = pl.pallas_call(
        kernel,
        out_shape=jax.ShapeDtypeStruct((N, H, W, Cp), jnp.float32),
        grid=(N, n_tiles),
        in_specs=[
            # Unpadded image; block index depends only on n, so it is DMA'd
            # once per image and stays resident across its row tiles.
            pl.BlockSpec((1, H, W, Cin), lambda n, t: (n, 0, 0, 0)),
            const((Cp_in, Cp)),              # w1
            const((9 * Cp_in, Cp)),          # w2 (d=6)
            const((9 * Cp_in, Cp)),          # w3 (d=12)
            const((9 * Cp_in, Cp)),          # w4 (d=18)
            const((Cp_in, Cp)),              # w5 (pooled branch)
            const((5, Cp, Cp)),              # w_out split per branch
            const((6, Cp)),                  # folded BN scale
            const((6, Cp)),                  # folded BN bias
        ],
        out_specs=pl.BlockSpec((1, tile_h, W, Cp), lambda n, t: (n, t, 0, 0)),
        scratch_shapes=[
            pltpu.VMEM((Hp, Wp, Cp_in), jnp.float32),   # zero-padded slab
            pltpu.VMEM((1, Cp), jnp.float32),           # pooled-branch row
        ],
        compiler_params=pltpu.CompilerParams(
            dimension_semantics=("parallel", "arbitrary"),
            vmem_limit_bytes=64 * 1024 * 1024),
    )(x_nhwc, w1, w2, w3, w4, w5, wout, scale, bias)

    return out_p[..., :Cout]


def aspp_reference(x_nhwc, params):
    """Pure-JAX (lax) reference mirroring the PyTorch ASPP forward."""
    scale, bias = params["bn_scale"], params["bn_bias"]

    def bn_relu(y, idx):
        return jnp.maximum(y * scale[idx][None, None, None, :]
                           + bias[idx][None, None, None, :], 0.0)

    def conv1x1(x, w):
        return jnp.einsum("nhwc,cd->nhwd", x, w)

    def conv3x3(x, w, d):
        return jax.lax.conv_general_dilated(
            x, w, window_strides=(1, 1), padding=[(d, d), (d, d)],
            rhs_dilation=(d, d),
            dimension_numbers=("NHWC", "HWIO", "NHWC"))

    x1 = bn_relu(conv1x1(x_nhwc, params["w1"]), 0)
    x2 = bn_relu(conv3x3(x_nhwc, params["w2"], 6), 1)
    x3 = bn_relu(conv3x3(x_nhwc, params["w3"], 12), 2)
    x4 = bn_relu(conv3x3(x_nhwc, params["w4"], 18), 3)
    pooled = jnp.mean(x_nhwc, axis=(1, 2), keepdims=True)
    x5 = bn_relu(conv1x1(pooled, params["w5"]), 4)
    x5 = jnp.broadcast_to(x5, x1.shape)       # 1x1 bilinear upsample == broadcast
    xcat = jnp.concatenate([x1, x2, x3, x4, x5], axis=-1)
    return bn_relu(conv1x1(xcat, params["w_out"]), 5)


def make_params(key, cin, cout):
    ks = jax.random.split(key, 10)
    p = {
        "w1": jax.random.normal(ks[0], (cin, cout), jnp.float32) * 0.1,
        "w2": jax.random.normal(ks[1], (3, 3, cin, cout), jnp.float32) * 0.1,
        "w3": jax.random.normal(ks[2], (3, 3, cin, cout), jnp.float32) * 0.1,
        "w4": jax.random.normal(ks[3], (3, 3, cin, cout), jnp.float32) * 0.1,
        "w5": jax.random.normal(ks[4], (cin, cout), jnp.float32) * 0.1,
        "w_out": jax.random.normal(ks[5], (5 * cout, cout), jnp.float32) * 0.1,
    }
    # Deterministic BatchNorm params (inference mode), folded to scale/bias.
    gamma = 1.0 + 0.1 * jax.random.normal(ks[6], (6, cout), jnp.float32)
    beta = 0.1 * jax.random.normal(ks[7], (6, cout), jnp.float32)
    mean = 0.05 * jax.random.normal(ks[8], (6, cout), jnp.float32)
    var = 1.0 + 0.1 * jax.random.uniform(ks[9], (6, cout), jnp.float32)
    scale = gamma / jnp.sqrt(var + BN_EPS)
    p["bn_scale"] = scale
    p["bn_bias"] = beta - mean * scale
    return p


if __name__ == "__main__":
    key = jax.random.PRNGKey(0)
    N, Cin, Cout, H, W = 2, 4, 8, 16, 16

    kx, kp = jax.random.split(key)
    # PyTorch input would be NCHW (2, 4, 16, 16); we keep NHWC on-device.
    x_nchw = jax.random.normal(kx, (N, Cin, H, W), jnp.float32)
    x_nhwc = jnp.transpose(x_nchw, (0, 2, 3, 1))
    params = make_params(kp, Cin, Cout)

    out = jax.block_until_ready(aspp_pallas(x_nhwc, params))
    ref = jax.block_until_ready(aspp_reference(x_nhwc, params))

    assert out.shape == (N, H, W, Cout)
    # bf16 MXU operands -> compare against the f32 reference with a
    # bf16-appropriate tolerance.
    assert np.allclose(np.asarray(out), np.asarray(ref), atol=5e-2, rtol=5e-2), \
        "Pallas ASPP output mismatch vs JAX reference"
    print("KERNEL_OK")
</pallas_src>

<mosaic_0001>
module attributes {stable_mosaic.version = 11 : i64} {
  func.func @_aspp_kernel(%arg0: i32, %arg1: i32, %arg2: memref<1x16x16x4xf32, #tpu.memory_space<vmem>>, %arg3: memref<128x128xbf16, #tpu.memory_space<vmem>>, %arg4: memref<1152x128xbf16, #tpu.memory_space<vmem>>, %arg5: memref<1152x128xbf16, #tpu.memory_space<vmem>>, %arg6: memref<1152x128xbf16, #tpu.memory_space<vmem>>, %arg7: memref<128x128xbf16, #tpu.memory_space<vmem>>, %arg8: memref<5x128x128xbf16, #tpu.memory_space<vmem>>, %arg9: memref<6x128xf32, #tpu.memory_space<vmem>>, %arg10: memref<6x128xf32, #tpu.memory_space<vmem>>, %arg11: memref<1x8x16x128xf32, #tpu.memory_space<vmem>>, %arg12: memref<64x64x128xf32, #tpu.memory_space<vmem>>, %arg13: memref<1x128xf32, #tpu.memory_space<vmem>>) attributes {dimension_semantics = [#tpu.dimension_semantics<parallel>, #tpu.dimension_semantics<arbitrary>], iteration_bounds = array<i64: 2, 2>, scalar_prefetch = 0 : i64, scratch_operands = 2 : i64, tpu.core_type = #tpu.core_type<tc>, window_params = [{transform_indices = @transform_0, window_bounds = array<i64: 1, 16, 16, 4>}, {pipeline_mode = #tpu.pipeline_mode<synchronous>, transform_indices = @transform_1, window_bounds = array<i64: 128, 128>}, {pipeline_mode = #tpu.pipeline_mode<synchronous>, transform_indices = @transform_2, window_bounds = array<i64: 1152, 128>}, {pipeline_mode = #tpu.pipeline_mode<synchronous>, transform_indices = @transform_3, window_bounds = array<i64: 1152, 128>}, {pipeline_mode = #tpu.pipeline_mode<synchronous>, transform_indices = @transform_4, window_bounds = array<i64: 1152, 128>}, {pipeline_mode = #tpu.pipeline_mode<synchronous>, transform_indices = @transform_5, window_bounds = array<i64: 128, 128>}, {pipeline_mode = #tpu.pipeline_mode<synchronous>, transform_indices = @transform_6, window_bounds = array<i64: 5, 128, 128>}, {pipeline_mode = #tpu.pipeline_mode<synchronous>, transform_indices = @transform_7, window_bounds = array<i64: 6, 128>}, {pipeline_mode = #tpu.pipeline_mode<synchronous>, transform_indices = @transform_8, window_bounds = array<i64: 6, 128>}, {transform_indices = @transform_9, window_bounds = array<i64: 1, 8, 16, 128>}]} {
    %c0_i32 = arith.constant 0 : i32
    %0 = arith.cmpi eq, %arg1, %c0_i32 : i32
    %1 = arith.extui %0 : i1 to i32
    %c0_i32_0 = arith.constant 0 : i32
    %2 = arith.cmpi ne, %1, %c0_i32_0 : i32
    scf.if %2 {
      %cst_125 = arith.constant 0.000000e+00 : f32
      %242 = vector.broadcast %cst_125 : f32 to vector<64x64x128xf32>
      %c0_126 = arith.constant 0 : index
      %c0_127 = arith.constant 0 : index
      %c0_128 = arith.constant 0 : index
      %243 = vector.load %arg12[%c0_126, %c0_127, %c0_128] : memref<64x64x128xf32, #tpu.memory_space<vmem>>, vector<64x64x128xf32>
      tpu.vector_store %arg12[%c0_126, %c0_127, %c0_128], %242 {strides = array<i32>} : memref<64x64x128xf32, #tpu.memory_space<vmem>>, vector<64x64x128xf32>,
      %c0_129 = arith.constant 0 : index
      %c0_130 = arith.constant 0 : index
      %c0_131 = arith.constant 0 : index
      %c0_132 = arith.constant 0 : index
      %244 = vector.load %arg2[%c0_129, %c0_130, %c0_131, %c0_132] : memref<1x16x16x4xf32, #tpu.memory_space<vmem>>, vector<1x16x16x4xf32>
      %245 = vector.shape_cast %244 : vector<1x16x16x4xf32> to vector<16x16x4xf32>
      %cst_133 = arith.constant 0.000000e+00 : f32
      %246 = vector.broadcast %cst_133 : f32 to vector<16x16x124xf32>
      %247 = tpu.concatenate %245, %246 in 2 : vector<16x16x4xf32>, vector<16x16x124xf32> -> vector<16x16x128xf32>
      %c24_134 = arith.constant 24 : index
      %c24_135 = arith.constant 24 : index
      %c0_136 = arith.constant 0 : index
      %248 = vector.load %arg12[%c24_134, %c24_135, %c0_136] : memref<64x64x128xf32, #tpu.memory_space<vmem>>, vector<16x16x128xf32>
      tpu.vector_store %arg12[%c24_134, %c24_135, %c0_136], %247 {strides = array<i32>} : memref<64x64x128xf32, #tpu.memory_space<vmem>>, vector<16x16x128xf32>,
      %249 = vector.shape_cast %247 : vector<16x16x128xf32> to vector<256x128xf32>
      %cst_137 = arith.constant dense<0.000000e+00> : vector<128xf32>
      %250 = vector.multi_reduction <add>, %249, %cst_137 [0] : vector<256x128xf32> to vector<128xf32>
      %251 = vector.shape_cast %250 : vector<128xf32> to vector<1x128xf32>
      %cst_138 = arith.constant 2.560000e+02 : f32
      %252 = vector.broadcast %cst_138 : f32 to vector<1x128xf32>
      %253 = arith.divf %251, %252 : vector<1x128xf32>
      %254 = arith.truncf %253 : vector<1x128xf32> to vector<1x128xbf16>
      %c0_139 = arith.constant 0 : index
      %c0_140 = arith.constant 0 : index
      %255 = vector.load %arg7[%c0_139, %c0_140] : memref<128x128xbf16, #tpu.memory_space<vmem>>, vector<128x128xbf16>
      %cst_141 = arith.constant dense<0.000000e+00> : vector<1x128xf32>
      %256 = tpu.matmul %254, %255, %cst_141 {dimension_numbers = #tpu.dot_dimension_numbers<[1], [0], [0], [1], [0, 0, 1, 1], [], []>} : vector<1x128xbf16>, vector<128x128xbf16>, vector<1x128xf32> -> vector<1x128xf32>
      %c4 = arith.constant 4 : index
      %c0_142 = arith.constant 0 : index
      %257 = vector.load %arg9[%c4, %c0_142] : memref<6x128xf32, #tpu.memory_space<vmem>>, vector<1x128xf32>
      %258 = vector.shape_cast %257 : vector<1x128xf32> to vector<128xf32>
      %259 = vector.shape_cast %258 : vector<128xf32> to vector<1x128xf32>
      %c4_143 = arith.constant 4 : index
      %c0_144 = arith.constant 0 : index
      %260 = vector.load %arg10[%c4_143, %c0_144] : memref<6x128xf32, #tpu.memory_space<vmem>>, vector<1x128xf32>
      %261 = vector.shape_cast %260 : vector<1x128xf32> to vector<128xf32>
      %262 = vector.shape_cast %261 : vector<128xf32> to vector<1x128xf32>
      %263 = arith.mulf %256, %259 : vector<1x128xf32>
      %264 = arith.addf %263, %262 : vector<1x128xf32>
      %cst_145 = arith.constant 0.000000e+00 : f32
      %265 = vector.broadcast %cst_145 : f32 to vector<1x128xf32>
      %266 = arith.maximumf %264, %265 : vector<1x128xf32>
      %267 = arith.truncf %266 : vector<1x128xf32> to vector<1x128xbf16>
      %c4_146 = arith.constant 4 : index
      %c0_147 = arith.constant 0 : index
      %c0_148 = arith.constant 0 : index
      %268 = vector.load %arg8[%c4_146, %c0_147, %c0_148] : memref<5x128x128xbf16, #tpu.memory_space<vmem>>, vector<1x128x128xbf16>
      %269 = vector.shape_cast %268 : vector<1x128x128xbf16> to vector<128x128xbf16>
      %cst_149 = arith.constant dense<0.000000e+00> : vector<1x128xf32>
      %270 = tpu.matmul %267, %269, %cst_149 {dimension_numbers = #tpu.dot_dimension_numbers<[1], [0], [0], [1], [0, 0, 1, 1], [], []>} : vector<1x128xbf16>, vector<128x128xbf16>, vector<1x128xf32> -> vector<1x128xf32>
      %c0_150 = arith.constant 0 : index
      %c0_151 = arith.constant 0 : index
      %271 = vector.load %arg13[%c0_150, %c0_151] : memref<1x128xf32, #tpu.memory_space<vmem>>, vector<1x128xf32>
      tpu.vector_store %arg13[%c0_150, %c0_151], %270 {strides = array<i32>} : memref<1x128xf32, #tpu.memory_space<vmem>>, vector<1x128xf32>,
    } else {
    }
    %c8_i32 = arith.constant 8 : i32
    %3 = arith.muli %arg1, %c8_i32 : i32
    %c24_i32 = arith.constant 24 : i32
    %4 = arith.addi %c24_i32, %3 : i32
    %c0_i32_1 = arith.constant 0 : i32
    %5 = arith.addi %4, %c0_i32_1 : i32
    %6 = arith.index_cast %5 : i32 to index
    %c24 = arith.constant 24 : index
    %c0 = arith.constant 0 : index
    %7 = vector.load %arg12[%6, %c24, %c0] : memref<64x64x128xf32, #tpu.memory_space<vmem>>, vector<8x16x128xf32>
    %8 = vector.shape_cast %7 : vector<8x16x128xf32> to vector<128x128xf32>
    %9 = arith.truncf %8 : vector<128x128xf32> to vector<128x128xbf16>
    %c0_2 = arith.constant 0 : index
    %c0_3 = arith.constant 0 : index
    %10 = vector.load %arg3[%c0_2, %c0_3] : memref<128x128xbf16, #tpu.memory_space<vmem>>, vector<128x128xbf16>
    %cst = arith.constant dense<0.000000e+00> : vector<128x128xf32>
    %11 = tpu.matmul %9, %10, %cst {dimension_numbers = #tpu.dot_dimension_numbers<[1], [0], [0], [1], [0, 0, 1, 1], [], []>} : vector<128x128xbf16>, vector<128x128xbf16>, vector<128x128xf32> -> vector<128x128xf32>
    %c0_4 = arith.constant 0 : index
    %c0_5 = arith.constant 0 : index
    %12 = vector.load %arg9[%c0_4, %c0_5] : memref<6x128xf32, #tpu.memory_space<vmem>>, vector<1x128xf32>
    %13 = vector.shape_cast %12 : vector<1x128xf32> to vector<128xf32>
    %14 = vector.shape_cast %13 : vector<128xf32> to vector<1x128xf32>
    %c0_6 = arith.constant 0 : index
    %c0_7 = arith.constant 0 : index
    %15 = vector.load %arg10[%c0_6, %c0_7] : memref<6x128xf32, #tpu.memory_space<vmem>>, vector<1x128xf32>
    %16 = vector.shape_cast %15 : vector<1x128xf32> to vector<128xf32>
    %17 = vector.shape_cast %16 : vector<128xf32> to vector<1x128xf32>
    %18 = vector.broadcast %14 : vector<1x128xf32> to vector<128x128xf32>
    %19 = arith.mulf %11, %18 : vector<128x128xf32>
    %20 = vector.broadcast %17 : vector<1x128xf32> to vector<128x128xf32>
    %21 = arith.addf %19, %20 : vector<128x128xf32>
    %cst_8 = arith.constant 0.000000e+00 : f32
    %22 = vector.broadcast %cst_8 : f32 to vector<128x128xf32>
    %23 = arith.maximumf %21, %22 : vector<128x128xf32>
    %24 = arith.truncf %23 : vector<128x128xf32> to vector<128x128xbf16>
    %c0_9 = arith.constant 0 : index
    %c0_10 = arith.constant 0 : index
    %c0_11 = arith.constant 0 : index
    %25 = vector.load %arg8[%c0_9, %c0_10, %c0_11] : memref<5x128x128xbf16, #tpu.memory_space<vmem>>, vector<1x128x128xbf16>
    %26 = vector.shape_cast %25 : vector<1x128x128xbf16> to vector<128x128xbf16>
    %cst_12 = arith.constant dense<0.000000e+00> : vector<128x128xf32>
    %27 = tpu.matmul %24, %26, %cst_12 {dimension_numbers = #tpu.dot_dimension_numbers<[1], [0], [0], [1], [0, 0, 1, 1], [], []>} : vector<128x128xbf16>, vector<128x128xbf16>, vector<128x128xf32> -> vector<128x128xf32>
    %c-6_i32 = arith.constant -6 : i32
    %28 = arith.addi %4, %c-6_i32 : i32
    %29 = arith.index_cast %28 : i32 to index
    %c18 = arith.constant 18 : index
    %c0_13 = arith.constant 0 : index
    %30 = vector.load %arg12[%29, %c18, %c0_13] : memref<64x64x128xf32, #tpu.memory_space<vmem>>, vector<8x16x128xf32>
    %31 = vector.shape_cast %30 : vector<8x16x128xf32> to vector<128x128xf32>
    %32 = arith.truncf %31 : vector<128x128xf32> to vector<128x128xbf16>
    %c-6_i32_14 = arith.constant -6 : i32
    %33 = arith.addi %4, %c-6_i32_14 : i32
    %34 = arith.index_cast %33 : i32 to index
    %c24_15 = arith.constant 24 : index
    %c0_16 = arith.constant 0 : index
    %35 = vector.load %arg12[%34, %c24_15, %c0_16] : memref<64x64x128xf32, #tpu.memory_space<vmem>>, vector<8x16x128xf32>
    %36 = vector.shape_cast %35 : vector<8x16x128xf32> to vector<128x128xf32>
    %37 = arith.truncf %36 : vector<128x128xf32> to vector<128x128xbf16>
    %c-6_i32_17 = arith.constant -6 : i32
    %38 = arith.addi %4, %c-6_i32_17 : i32
    %39 = arith.index_cast %38 : i32 to index
    %c30 = arith.constant 30 : index
    %c0_18 = arith.constant 0 : index
    %40 = vector.load %arg12[%39, %c30, %c0_18] : memref<64x64x128xf32, #tpu.memory_space<vmem>>, vector<8x16x128xf32>
    %41 = vector.shape_cast %40 : vector<8x16x128xf32> to vector<128x128xf32>
    %42 = arith.truncf %41 : vector<128x128xf32> to vector<128x128xbf16>
    %c0_i32_19 = arith.constant 0 : i32
    %43 = arith.addi %4, %c0_i32_19 : i32
    %44 = arith.index_cast %43 : i32 to index
    %c18_20 = arith.constant 18 : index
    %c0_21 = arith.constant 0 : index
    %45 = vector.load %arg12[%44, %c18_20, %c0_21] : memref<64x64x128xf32, #tpu.memory_space<vmem>>, vector<8x16x128xf32>
    %46 = vector.shape_cast %45 : vector<8x16x128xf32> to vector<128x128xf32>
    %47 = arith.truncf %46 : vector<128x128xf32> to vector<128x128xbf16>
    %c0_i32_22 = arith.constant 0 : i32
    %48 = arith.addi %4, %c0_i32_22 : i32
    %49 = arith.index_cast %48 : i32 to index
    %c24_23 = arith.constant 24 : index
    %c0_24 = arith.constant 0 : index
    %50 = vector.load %arg12[%49, %c24_23, %c0_24] : memref<64x64x128xf32, #tpu.memory_space<vmem>>, vector<8x16x128xf32>
    %51 = vector.shape_cast %50 : vector<8x16x128xf32> to vector<128x128xf32>
    %52 = arith.truncf %51 : vector<128x128xf32> to vector<128x128xbf16>
    %c0_i32_25 = arith.constant 0 : i32
    %53 = arith.addi %4, %c0_i32_25 : i32
    %54 = arith.index_cast %53 : i32 to index
    %c30_26 = arith.constant 30 : index
    %c0_27 = arith.constant 0 : index
    %55 = vector.load %arg12[%54, %c30_26, %c0_27] : memref<64x64x128xf32, #tpu.memory_space<vmem>>, vector<8x16x128xf32>
    %56 = vector.shape_cast %55 : vector<8x16x128xf32> to vector<128x128xf32>
    %57 = arith.truncf %56 : vector<128x128xf32> to vector<128x128xbf16>
    %c6_i32 = arith.constant 6 : i32
    %58 = arith.addi %4, %c6_i32 : i32
    %59 = arith.index_cast %58 : i32 to index
    %c18_28 = arith.constant 18 : index
    %c0_29 = arith.constant 0 : index
    %60 = vector.load %arg12[%59, %c18_28, %c0_29] : memref<64x64x128xf32, #tpu.memory_space<vmem>>, vector<8x16x128xf32>
    %61 = vector.shape_cast %60 : vector<8x16x128xf32> to vector<128x128xf32>
    %62 = arith.truncf %61 : vector<128x128xf32> to vector<128x128xbf16>
    %c6_i32_30 = arith.constant 6 : i32
    %63 = arith.addi %4, %c6_i32_30 : i32
    %64 = arith.index_cast %63 : i32 to index
    %c24_31 = arith.constant 24 : index
    %c0_32 = arith.constant 0 : index
    %65 = vector.load %arg12[%64, %c24_31, %c0_32] : memref<64x64x128xf32, #tpu.memory_space<vmem>>, vector<8x16x128xf32>
    %66 = vector.shape_cast %65 : vector<8x16x128xf32> to vector<128x128xf32>
    %67 = arith.truncf %66 : vector<128x128xf32> to vector<128x128xbf16>
    %c6_i32_33 = arith.constant 6 : i32
    %68 = arith.addi %4, %c6_i32_33 : i32
    %69 = arith.index_cast %68 : i32 to index
    %c30_34 = arith.constant 30 : index
    %c0_35 = arith.constant 0 : index
    %70 = vector.load %arg12[%69, %c30_34, %c0_35] : memref<64x64x128xf32, #tpu.memory_space<vmem>>, vector<8x16x128xf32>
    %71 = vector.shape_cast %70 : vector<8x16x128xf32> to vector<128x128xf32>
    %72 = arith.truncf %71 : vector<128x128xf32> to vector<128x128xbf16>
    %73 = tpu.concatenate %32, %37, %42, %47, %52, %57, %62, %67, %72 in 1 : vector<128x128xbf16>, vector<128x128xbf16>, vector<128x128xbf16>, vector<128x128xbf16>, vector<128x128xbf16>, vector<128x128xbf16>, vector<128x128xbf16>, vector<128x128xbf16>, vector<128x128xbf16> -> vector<128x1152xbf16>
    %c0_36 = arith.constant 0 : index
    %c0_37 = arith.constant 0 : index
    %74 = vector.load %arg4[%c0_36, %c0_37] : memref<1152x128xbf16, #tpu.memory_space<vmem>>, vector<1152x128xbf16>
    %cst_38 = arith.constant dense<0.000000e+00> : vector<128x128xf32>
    %75 = tpu.matmul %73, %74, %cst_38 {dimension_numbers = #tpu.dot_dimension_numbers<[1], [0], [0], [1], [0, 0, 1, 1], [], []>} : vector<128x1152xbf16>, vector<1152x128xbf16>, vector<128x128xf32> -> vector<128x128xf32>
    %c1 = arith.constant 1 : index
    %c0_39 = arith.constant 0 : index
    %76 = vector.load %arg9[%c1, %c0_39] : memref<6x128xf32, #tpu.memory_space<vmem>>, vector<1x128xf32>
    %77 = vector.shape_cast %76 : vector<1x128xf32> to vector<128xf32>
    %78 = vector.shape_cast %77 : vector<128xf32> to vector<1x128xf32>
    %c1_40 = arith.constant 1 : index
    %c0_41 = arith.constant 0 : index
    %79 = vector.load %arg10[%c1_40, %c0_41] : memref<6x128xf32, #tpu.memory_space<vmem>>, vector<1x128xf32>
    %80 = vector.shape_cast %79 : vector<1x128xf32> to vector<128xf32>
    %81 = vector.shape_cast %80 : vector<128xf32> to vector<1x128xf32>
    %82 = vector.broadcast %78 : vector<1x128xf32> to vector<128x128xf32>
    %83 = arith.mulf %75, %82 : vector<128x128xf32>
    %84 = vector.broadcast %81 : vector<1x128xf32> to vector<128x128xf32>
    %85 = arith.addf %83, %84 : vector<128x128xf32>
    %cst_42 = arith.constant 0.000000e+00 : f32
    %86 = vector.broadcast %cst_42 : f32 to vector<128x128xf32>
    %87 = arith.maximumf %85, %86 : vector<128x128xf32>
    %88 = arith.truncf %87 : vector<128x128xf32> to vector<128x128xbf16>
    %c1_43 = arith.constant 1 : index
    %c0_44 = arith.constant 0 : index
    %c0_45 = arith.constant 0 : index
    %89 = vector.load %arg8[%c1_43, %c0_44, %c0_45] : memref<5x128x128xbf16, #tpu.memory_space<vmem>>, vector<1x128x128xbf16>
    %90 = vector.shape_cast %89 : vector<1x128x128xbf16> to vector<128x128xbf16>
    %cst_46 = arith.constant dense<0.000000e+00> : vector<128x128xf32>
    %91 = tpu.matmul %88, %90, %cst_46 {dimension_numbers = #tpu.dot_dimension_numbers<[1], [0], [0], [1], [0, 0, 1, 1], [], []>} : vector<128x128xbf16>, vector<128x128xbf16>, vector<128x128xf32> -> vector<128x128xf32>
    %92 = arith.addf %27, %91 : vector<128x128xf32>
    %c-12_i32 = arith.constant -12 : i32
    %93 = arith.addi %4, %c-12_i32 : i32
    %94 = arith.index_cast %93 : i32 to index
    %c12 = arith.constant 12 : index
    %c0_47 = arith.constant 0 : index
    %95 = vector.load %arg12[%94, %c12, %c0_47] : memref<64x64x128xf32, #tpu.memory_space<vmem>>, vector<8x16x128xf32>
    %96 = vector.shape_cast %95 : vector<8x16x128xf32> to vector<128x128xf32>
    %97 = arith.truncf %96 : vector<128x128xf32> to vector<128x128xbf16>
    %c-12_i32_48 = arith.constant -12 : i32
    %98 = arith.addi %4, %c-12_i32_48 : i32
    %99 = arith.index_cast %98 : i32 to index
    %c24_49 = arith.constant 24 : index
    %c0_50 = arith.constant 0 : index
    %100 = vector.load %arg12[%99, %c24_49, %c0_50] : memref<64x64x128xf32, #tpu.memory_space<vmem>>, vector<8x16x128xf32>
    %101 = vector.shape_cast %100 : vector<8x16x128xf32> to vector<128x128xf32>
    %102 = arith.truncf %101 : vector<128x128xf32> to vector<128x128xbf16>
    %c-12_i32_51 = arith.constant -12 : i32
    %103 = arith.addi %4, %c-12_i32_51 : i32
    %104 = arith.index_cast %103 : i32 to index
    %c36 = arith.constant 36 : index
    %c0_52 = arith.constant 0 : index
    %105 = vector.load %arg12[%104, %c36, %c0_52] : memref<64x64x128xf32, #tpu.memory_space<vmem>>, vector<8x16x128xf32>
    %106 = vector.shape_cast %105 : vector<8x16x128xf32> to vector<128x128xf32>
    %107 = arith.truncf %106 : vector<128x128xf32> to vector<128x128xbf16>
    %c0_i32_53 = arith.constant 0 : i32
    %108 = arith.addi %4, %c0_i32_53 : i32
    %109 = arith.index_cast %108 : i32 to index
    %c12_54 = arith.constant 12 : index
    %c0_55 = arith.constant 0 : index
    %110 = vector.load %arg12[%109, %c12_54, %c0_55] : memref<64x64x128xf32, #tpu.memory_space<vmem>>, vector<8x16x128xf32>
    %111 = vector.shape_cast %110 : vector<8x16x128xf32> to vector<128x128xf32>
    %112 = arith.truncf %111 : vector<128x128xf32> to vector<128x128xbf16>
    %c0_i32_56 = arith.constant 0 : i32
    %113 = arith.addi %4, %c0_i32_56 : i32
    %114 = arith.index_cast %113 : i32 to index
    %c24_57 = arith.constant 24 : index
    %c0_58 = arith.constant 0 : index
    %115 = vector.load %arg12[%114, %c24_57, %c0_58] : memref<64x64x128xf32, #tpu.memory_space<vmem>>, vector<8x16x128xf32>
    %116 = vector.shape_cast %115 : vector<8x16x128xf32> to vector<128x128xf32>
    %117 = arith.truncf %116 : vector<128x128xf32> to vector<128x128xbf16>
    %c0_i32_59 = arith.constant 0 : i32
    %118 = arith.addi %4, %c0_i32_59 : i32
    %119 = arith.index_cast %118 : i32 to index
    %c36_60 = arith.constant 36 : index
    %c0_61 = arith.constant 0 : index
    %120 = vector.load %arg12[%119, %c36_60, %c0_61] : memref<64x64x128xf32, #tpu.memory_space<vmem>>, vector<8x16x128xf32>
    %121 = vector.shape_cast %120 : vector<8x16x128xf32> to vector<128x128xf32>
    %122 = arith.truncf %121 : vector<128x128xf32> to vector<128x128xbf16>
    %c12_i32 = arith.constant 12 : i32
    %123 = arith.addi %4, %c12_i32 : i32
    %124 = arith.index_cast %123 : i32 to index
    %c12_62 = arith.constant 12 : index
    %c0_63 = arith.constant 0 : index
    %125 = vector.load %arg12[%124, %c12_62, %c0_63] : memref<64x64x128xf32, #tpu.memory_space<vmem>>, vector<8x16x128xf32>
    %126 = vector.shape_cast %125 : vector<8x16x128xf32> to vector<128x128xf32>
    %127 = arith.truncf %126 : vector<128x128xf32> to vector<128x128xbf16>
    %c12_i32_64 = arith.constant 12 : i32
    %128 = arith.addi %4, %c12_i32_64 : i32
    %129 = arith.index_cast %128 : i32 to index
    %c24_65 = arith.constant 24 : index
    %c0_66 = arith.constant 0 : index
    %130 = vector.load %arg12[%129, %c24_65, %c0_66] : memref<64x64x128xf32, #tpu.memory_space<vmem>>, vector<8x16x128xf32>
    %131 = vector.shape_cast %130 : vector<8x16x128xf32> to vector<128x128xf32>
    %132 = arith.truncf %131 : vector<128x128xf32> to vector<128x128xbf16>
    %c12_i32_67 = arith.constant 12 : i32
    %133 = arith.addi %4, %c12_i32_67 : i32
    %134 = arith.index_cast %133 : i32 to index
    %c36_68 = arith.constant 36 : index
    %c0_69 = arith.constant 0 : index
    %135 = vector.load %arg12[%134, %c36_68, %c0_69] : memref<64x64x128xf32, #tpu.memory_space<vmem>>, vector<8x16x128xf32>
    %136 = vector.shape_cast %135 : vector<8x16x128xf32> to vector<128x128xf32>
    %137 = arith.truncf %136 : vector<128x128xf32> to vector<128x128xbf16>
    %138 = tpu.concatenate %97, %102, %107, %112, %117, %122, %127, %132, %137 in 1 : vector<128x128xbf16>, vector<128x128xbf16>, vector<128x128xbf16>, vector<128x128xbf16>, vector<128x128xbf16>, vector<128x128xbf16>, vector<128x128xbf16>, vector<128x128xbf16>, vector<128x128xbf16> -> vector<128x1152xbf16>
    %c0_70 = arith.constant 0 : index
    %c0_71 = arith.constant 0 : index
    %139 = vector.load %arg5[%c0_70, %c0_71] : memref<1152x128xbf16, #tpu.memory_space<vmem>>, vector<1152x128xbf16>
    %cst_72 = arith.constant dense<0.000000e+00> : vector<128x128xf32>
    %140 = tpu.matmul %138, %139, %cst_72 {dimension_numbers = #tpu.dot_dimension_numbers<[1], [0], [0], [1], [0, 0, 1, 1], [], []>} : vector<128x1152xbf16>, vector<1152x128xbf16>, vector<128x128xf32> -> vector<128x128xf32>
    %c2 = arith.constant 2 : index
    %c0_73 = arith.constant 0 : index
    %141 = vector.load %arg9[%c2, %c0_73] : memref<6x128xf32, #tpu.memory_space<vmem>>, vector<1x128xf32>
    %142 = vector.shape_cast %141 : vector<1x128xf32> to vector<128xf32>
    %143 = vector.shape_cast %142 : vector<128xf32> to vector<1x128xf32>
    %c2_74 = arith.constant 2 : index
    %c0_75 = arith.constant 0 : index
    %144 = vector.load %arg10[%c2_74, %c0_75] : memref<6x128xf32, #tpu.memory_space<vmem>>, vector<1x128xf32>
    %145 = vector.shape_cast %144 : vector<1x128xf32> to vector<128xf32>
    %146 = vector.shape_cast %145 : vector<128xf32> to vector<1x128xf32>
    %147 = vector.broadcast %143 : vector<1x128xf32> to vector<128x128xf32>
    %148 = arith.mulf %140, %147 : vector<128x128xf32>
    %149 = vector.broadcast %146 : vector<1x128xf32> to vector<128x128xf32>
    %150 = arith.addf %148, %149 : vector<128x128xf32>
    %cst_76 = arith.constant 0.000000e+00 : f32
    %151 = vector.broadcast %cst_76 : f32 to vector<128x128xf32>
    %152 = arith.maximumf %150, %151 : vector<128x128xf32>
    %153 = arith.truncf %152 : vector<128x128xf32> to vector<128x128xbf16>
    %c2_77 = arith.constant 2 : index
    %c0_78 = arith.constant 0 : index
    %c0_79 = arith.constant 0 : index
    %154 = vector.load %arg8[%c2_77, %c0_78, %c0_79] : memref<5x128x128xbf16, #tpu.memory_space<vmem>>, vector<1x128x128xbf16>
    %155 = vector.shape_cast %154 : vector<1x128x128xbf16> to vector<128x128xbf16>
    %cst_80 = arith.constant dense<0.000000e+00> : vector<128x128xf32>
    %156 = tpu.matmul %153, %155, %cst_80 {dimension_numbers = #tpu.dot_dimension_numbers<[1], [0], [0], [1], [0, 0, 1, 1], [], []>} : vector<128x128xbf16>, vector<128x128xbf16>, vector<128x128xf32> -> vector<128x128xf32>
    %157 = arith.addf %92, %156 : vector<128x128xf32>
    %c-18_i32 = arith.constant -18 : i32
    %158 = arith.addi %4, %c-18_i32 : i32
    %159 = arith.index_cast %158 : i32 to index
    %c6 = arith.constant 6 : index
    %c0_81 = arith.constant 0 : index
    %160 = vector.load %arg12[%159, %c6, %c0_81] : memref<64x64x128xf32, #tpu.memory_space<vmem>>, vector<8x16x128xf32>
    %161 = vector.shape_cast %160 : vector<8x16x128xf32> to vector<128x128xf32>
    %162 = arith.truncf %161 : vector<128x128xf32> to vector<128x128xbf16>
    %c-18_i32_82 = arith.constant -18 : i32
    %163 = arith.addi %4, %c-18_i32_82 : i32
    %164 = arith.index_cast %163 : i32 to index
    %c24_83 = arith.constant 24 : index
    %c0_84 = arith.constant 0 : index
    %165 = vector.load %arg12[%164, %c24_83, %c0_84] : memref<64x64x128xf32, #tpu.memory_space<vmem>>, vector<8x16x128xf32>
    %166 = vector.shape_cast %165 : vector<8x16x128xf32> to vector<128x128xf32>
    %167 = arith.truncf %166 : vector<128x128xf32> to vector<128x128xbf16>
    %c-18_i32_85 = arith.constant -18 : i32
    %168 = arith.addi %4, %c-18_i32_85 : i32
    %169 = arith.index_cast %168 : i32 to index
    %c42 = arith.constant 42 : index
    %c0_86 = arith.constant 0 : index
    %170 = vector.load %arg12[%169, %c42, %c0_86] : memref<64x64x128xf32, #tpu.memory_space<vmem>>, vector<8x16x128xf32>
    %171 = vector.shape_cast %170 : vector<8x16x128xf32> to vector<128x128xf32>
    %172 = arith.truncf %171 : vector<128x128xf32> to vector<128x128xbf16>
    %c0_i32_87 = arith.constant 0 : i32
    %173 = arith.addi %4, %c0_i32_87 : i32
    %174 = arith.index_cast %173 : i32 to index
    %c6_88 = arith.constant 6 : index
    %c0_89 = arith.constant 0 : index
    %175 = vector.load %arg12[%174, %c6_88, %c0_89] : memref<64x64x128xf32, #tpu.memory_space<vmem>>, vector<8x16x128xf32>
    %176 = vector.shape_cast %175 : vector<8x16x128xf32> to vector<128x128xf32>
    %177 = arith.truncf %176 : vector<128x128xf32> to vector<128x128xbf16>
    %c0_i32_90 = arith.constant 0 : i32
    %178 = arith.addi %4, %c0_i32_90 : i32
    %179 = arith.index_cast %178 : i32 to index
    %c24_91 = arith.constant 24 : index
    %c0_92 = arith.constant 0 : index
    %180 = vector.load %arg12[%179, %c24_91, %c0_92] : memref<64x64x128xf32, #tpu.memory_space<vmem>>, vector<8x16x128xf32>
    %181 = vector.shape_cast %180 : vector<8x16x128xf32> to vector<128x128xf32>
    %182 = arith.truncf %181 : vector<128x128xf32> to vector<128x128xbf16>
    %c0_i32_93 = arith.constant 0 : i32
    %183 = arith.addi %4, %c0_i32_93 : i32
    %184 = arith.index_cast %183 : i32 to index
    %c42_94 = arith.constant 42 : index
    %c0_95 = arith.constant 0 : index
    %185 = vector.load %arg12[%184, %c42_94, %c0_95] : memref<64x64x128xf32, #tpu.memory_space<vmem>>, vector<8x16x128xf32>
    %186 = vector.shape_cast %185 : vector<8x16x128xf32> to vector<128x128xf32>
    %187 = arith.truncf %186 : vector<128x128xf32> to vector<128x128xbf16>
    %c18_i32 = arith.constant 18 : i32
    %188 = arith.addi %4, %c18_i32 : i32
    %189 = arith.index_cast %188 : i32 to index
    %c6_96 = arith.constant 6 : index
    %c0_97 = arith.constant 0 : index
    %190 = vector.load %arg12[%189, %c6_96, %c0_97] : memref<64x64x128xf32, #tpu.memory_space<vmem>>, vector<8x16x128xf32>
    %191 = vector.shape_cast %190 : vector<8x16x128xf32> to vector<128x128xf32>
    %192 = arith.truncf %191 : vector<128x128xf32> to vector<128x128xbf16>
    %c18_i32_98 = arith.constant 18 : i32
    %193 = arith.addi %4, %c18_i32_98 : i32
    %194 = arith.index_cast %193 : i32 to index
    %c24_99 = arith.constant 24 : index
    %c0_100 = arith.constant 0 : index
    %195 = vector.load %arg12[%194, %c24_99, %c0_100] : memref<64x64x128xf32, #tpu.memory_space<vmem>>, vector<8x16x128xf32>
    %196 = vector.shape_cast %195 : vector<8x16x128xf32> to vector<128x128xf32>
    %197 = arith.truncf %196 : vector<128x128xf32> to vector<128x128xbf16>
    %c18_i32_101 = arith.constant 18 : i32
    %198 = arith.addi %4, %c18_i32_101 : i32
    %199 = arith.index_cast %198 : i32 to index
    %c42_102 = arith.constant 42 : index
    %c0_103 = arith.constant 0 : index
    %200 = vector.load %arg12[%199, %c42_102, %c0_103] : memref<64x64x128xf32, #tpu.memory_space<vmem>>, vector<8x16x128xf32>
    %201 = vector.shape_cast %200 : vector<8x16x128xf32> to vector<128x128xf32>
    %202 = arith.truncf %201 : vector<128x128xf32> to vector<128x128xbf16>
    %203 = tpu.concatenate %162, %167, %172, %177, %182, %187, %192, %197, %202 in 1 : vector<128x128xbf16>, vector<128x128xbf16>, vector<128x128xbf16>, vector<128x128xbf16>, vector<128x128xbf16>, vector<128x128xbf16>, vector<128x128xbf16>, vector<128x128xbf16>, vector<128x128xbf16> -> vector<128x1152xbf16>
    %c0_104 = arith.constant 0 : index
    %c0_105 = arith.constant 0 : index
    %204 = vector.load %arg6[%c0_104, %c0_105] : memref<1152x128xbf16, #tpu.memory_space<vmem>>, vector<1152x128xbf16>
    %cst_106 = arith.constant dense<0.000000e+00> : vector<128x128xf32>
    %205 = tpu.matmul %203, %204, %cst_106 {dimension_numbers = #tpu.dot_dimension_numbers<[1], [0], [0], [1], [0, 0, 1, 1], [], []>} : vector<128x1152xbf16>, vector<1152x128xbf16>, vector<128x128xf32> -> vector<128x128xf32>
    %c3 = arith.constant 3 : index
    %c0_107 = arith.constant 0 : index
    %206 = vector.load %arg9[%c3, %c0_107] : memref<6x128xf32, #tpu.memory_space<vmem>>, vector<1x128xf32>
    %207 = vector.shape_cast %206 : vector<1x128xf32> to vector<128xf32>
    %208 = vector.shape_cast %207 : vector<128xf32> to vector<1x128xf32>
    %c3_108 = arith.constant 3 : index
    %c0_109 = arith.constant 0 : index
    %209 = vector.load %arg10[%c3_108, %c0_109] : memref<6x128xf32, #tpu.memory_space<vmem>>, vector<1x128xf32>
    %210 = vector.shape_cast %209 : vector<1x128xf32> to vector<128xf32>
    %211 = vector.shape_cast %210 : vector<128xf32> to vector<1x128xf32>
    %212 = vector.broadcast %208 : vector<1x128xf32> to vector<128x128xf32>
    %213 = arith.mulf %205, %212 : vector<128x128xf32>
    %214 = vector.broadcast %211 : vector<1x128xf32> to vector<128x128xf32>
    %215 = arith.addf %213, %214 : vector<128x128xf32>
    %cst_110 = arith.constant 0.000000e+00 : f32
    %216 = vector.broadcast %cst_110 : f32 to vector<128x128xf32>
    %217 = arith.maximumf %215, %216 : vector<128x128xf32>
    %218 = arith.truncf %217 : vector<128x128xf32> to vector<128x128xbf16>
    %c3_111 = arith.constant 3 : index
    %c0_112 = arith.constant 0 : index
    %c0_113 = arith.constant 0 : index
    %219 = vector.load %arg8[%c3_111, %c0_112, %c0_113] : memref<5x128x128xbf16, #tpu.memory_space<vmem>>, vector<1x128x128xbf16>
    %220 = vector.shape_cast %219 : vector<1x128x128xbf16> to vector<128x128xbf16>
    %cst_114 = arith.constant dense<0.000000e+00> : vector<128x128xf32>
    %221 = tpu.matmul %218, %220, %cst_114 {dimension_numbers = #tpu.dot_dimension_numbers<[1], [0], [0], [1], [0, 0, 1, 1], [], []>} : vector<128x128xbf16>, vector<128x128xbf16>, vector<128x128xf32> -> vector<128x128xf32>
    %222 = arith.addf %157, %221 : vector<128x128xf32>
    %c0_115 = arith.constant 0 : index
    %c0_116 = arith.constant 0 : index
    %223 = vector.load %arg13[%c0_115, %c0_116] : memref<1x128xf32, #tpu.memory_space<vmem>>, vector<1x128xf32>
    %224 = vector.broadcast %223 : vector<1x128xf32> to vector<128x128xf32>
    %225 = arith.addf %222, %224 : vector<128x128xf32>
    %c5 = arith.constant 5 : index
    %c0_117 = arith.constant 0 : index
    %226 = vector.load %arg9[%c5, %c0_117] : memref<6x128xf32, #tpu.memory_space<vmem>>, vector<1x128xf32>
    %227 = vector.shape_cast %226 : vector<1x128xf32> to vector<128xf32>
    %228 = vector.shape_cast %227 : vector<128xf32> to vector<1x128xf32>
    %c5_118 = arith.constant 5 : index
    %c0_119 = arith.constant 0 : index
    %229 = vector.load %arg10[%c5_118, %c0_119] : memref<6x128xf32, #tpu.memory_space<vmem>>, vector<1x128xf32>
    %230 = vector.shape_cast %229 : vector<1x128xf32> to vector<128xf32>
    %231 = vector.shape_cast %230 : vector<128xf32> to vector<1x128xf32>
    %232 = vector.broadcast %228 : vector<1x128xf32> to vector<128x128xf32>
    %233 = arith.mulf %225, %232 : vector<128x128xf32>
    %234 = vector.broadcast %231 : vector<1x128xf32> to vector<128x128xf32>
    %235 = arith.addf %233, %234 : vector<128x128xf32>
    %cst_120 = arith.constant 0.000000e+00 : f32
    %236 = vector.broadcast %cst_120 : f32 to vector<128x128xf32>
    %237 = arith.maximumf %235, %236 : vector<128x128xf32>
    %238 = vector.shape_cast %237 : vector<128x128xf32> to vector<8x16x128xf32>
    %c0_121 = arith.constant 0 : index
    %c0_122 = arith.constant 0 : index
    %c0_123 = arith.constant 0 : index
    %c0_124 = arith.constant 0 : index
    %239 = vector.load %arg11[%c0_121, %c0_122, %c0_123, %c0_124] : memref<1x8x16x128xf32, #tpu.memory_space<vmem>>, vector<1x8x16x128xf32>
    %240 = vector.shape_cast %239 : vector<1x8x16x128xf32> to vector<8x16x128xf32>
    %241 = vector.shape_cast %238 : vector<8x16x128xf32> to vector<1x8x16x128xf32>
    tpu.vector_store %arg11[%c0_121, %c0_122, %c0_123, %c0_124], %241 {strides = array<i32>} : memref<1x8x16x128xf32, #tpu.memory_space<vmem>>, vector<1x8x16x128xf32>,
    return
  }
  func.func @transform_0(%arg0: i32, %arg1: i32) -> (i32, i32, i32, i32) {
    %c0_i32 = arith.constant 0 : i32
    %c0_i32_0 = arith.constant 0 : i32
    %c0_i32_1 = arith.constant 0 : i32
    %c0_i32_2 = arith.constant 0 : i32
    return %arg0, %c0_i32, %c0_i32_0, %c0_i32_1 : i32, i32, i32, i32
  }
  func.func @transform_1(%arg0: i32, %arg1: i32) -> (i32, i32) {
    %c0_i32 = arith.constant 0 : i32
    %c0_i32_0 = arith.constant 0 : i32
    %c0_i32_1 = arith.constant 0 : i32
    return %c0_i32, %c0_i32_0 : i32, i32
  }
  func.func @transform_2(%arg0: i32, %arg1: i32) -> (i32, i32) {
    %c0_i32 = arith.constant 0 : i32
    %c0_i32_0 = arith.constant 0 : i32
    %c0_i32_1 = arith.constant 0 : i32
    return %c0_i32, %c0_i32_0 : i32, i32
  }
  func.func @transform_3(%arg0: i32, %arg1: i32) -> (i32, i32) {
    %c0_i32 = arith.constant 0 : i32
    %c0_i32_0 = arith.constant 0 : i32
    %c0_i32_1 = arith.constant 0 : i32
    return %c0_i32, %c0_i32_0 : i32, i32
  }
  func.func @transform_4(%arg0: i32, %arg1: i32) -> (i32, i32) {
    %c0_i32 = arith.constant 0 : i32
    %c0_i32_0 = arith.constant 0 : i32
    %c0_i32_1 = arith.constant 0 : i32
    return %c0_i32, %c0_i32_0 : i32, i32
  }
  func.func @transform_5(%arg0: i32, %arg1: i32) -> (i32, i32) {
    %c0_i32 = arith.constant 0 : i32
    %c0_i32_0 = arith.constant 0 : i32
    %c0_i32_1 = arith.constant 0 : i32
    return %c0_i32, %c0_i32_0 : i32, i32
  }
  func.func @transform_6(%arg0: i32, %arg1: i32) -> (i32, i32, i32) {
    %c0_i32 = arith.constant 0 : i32
    %c0_i32_0 = arith.constant 0 : i32
    %c0_i32_1 = arith.constant 0 : i32
    %c0_i32_2 = arith.constant 0 : i32
    return %c0_i32, %c0_i32_0, %c0_i32_1 : i32, i32, i32
  }
  func.func @transform_7(%arg0: i32, %arg1: i32) -> (i32, i32) {
    %c0_i32 = arith.constant 0 : i32
    %c0_i32_0 = arith.constant 0 : i32
    %c0_i32_1 = arith.constant 0 : i32
    return %c0_i32, %c0_i32_0 : i32, i32
  }
  func.func @transform_8(%arg0: i32, %arg1: i32) -> (i32, i32) {
    %c0_i32 = arith.constant 0 : i32
    %c0_i32_0 = arith.constant 0 : i32
    %c0_i32_1 = arith.constant 0 : i32
    return %c0_i32, %c0_i32_0 : i32, i32
  }
  func.func @transform_9(%arg0: i32, %arg1: i32) -> (i32, i32, i32, i32) {
    %c0_i32 = arith.constant 0 : i32
    %c0_i32_0 = arith.constant 0 : i32
    %c0_i32_1 = arith.constant 0 : i32
    return %arg0, %arg1, %c0_i32, %c0_i32_0 : i32, i32, i32, i32
  }
}

</mosaic_0001>

<llo_original>
// kernel: tpu_custom_call.1
$region0: #{tpu_custom_call.1}
  #allocation0 [shape = 'u32[]', space=smem, size = 0x4, offset = 0x4, fixed_abs, tag = 'smem constant byte address 0x4 - core index']
  #allocation1 [shape = 'u32[72,128]{1,0:T(1,128)}', space=vmem, size = 0x9000, scoped, tag = 'internal scratch']
  #allocation2 [shape = 'f32[64,64,128]{2,1,0:T(8,128)}', space=vmem, size = 0x200000, scoped, tag = 'scratch operand']
  #allocation3 [shape = 'f32[1,128]{1,0:T(1,128)}', space=vmem, size = 0x200, scoped, tag = 'scratch operand']
  %s0 = inlined_call_operand.vmem [shape: f32[2,16,16,4], index: 0, kind: input, shape index: {}]
  %s1 = inlined_call_operand.vmem [shape: bf16[128,128], index: 1, kind: input, shape index: {}]
  %s2 = inlined_call_operand.vmem [shape: bf16[1152,128], index: 2, kind: input, shape index: {}]
  %s3 = inlined_call_operand.hbm [shape: bf16[1152,128], index: 3, kind: input, shape index: {}]
  %s4 = inlined_call_operand.hbm [shape: bf16[1152,128], index: 4, kind: input, shape index: {}]
  %s5 = inlined_call_operand.hbm [shape: bf16[128,128], index: 5, kind: input, shape index: {}]
  %s6 = inlined_call_operand.hbm [shape: bf16[5,128,128], index: 6, kind: input, shape index: {}]
  %s7 = inlined_call_operand.hbm [shape: f32[6,128], index: 7, kind: input, shape index: {}]
  %s8 = inlined_call_operand.hbm [shape: f32[6,128], index: 8, kind: input, shape index: {}]
  %s9 = inlined_call_operand.hbm [shape: f32[2,16,16,128], index: 9, kind: output, shape index: {}]
  %s10 = sld [smem:[#allocation0]]
  $region97: #{tpu_custom_call.1} parent=0
    _
  %s12 = ssub.s32 1, %s10
  %s13 = scalar_select 0, %s12, %s10
  $region1: #{tpu_custom_call.1} parent=0
    #allocation4 [shape = 'u8[294912]{0}', space=vmem, size = 0x48000, scoped, tag = 'input window, operand 3, single buffered']
    #allocation5 [shape = 's32[2]{0}', space=sflag, size = 0x8, scoped, tag = 'scoped memory for tpu_custom_call.1']
    #allocation6 [shape = 's32[2]{0}', space=sflag, size = 0x8, scoped, tag = 'scoped memory for tpu_custom_call.1']
    #allocation7 [shape = 'u8[294912]{0}', space=vmem, size = 0x48000, scoped, tag = 'input window, operand 4, single buffered']
    #allocation8 [shape = 's32[1]{0}', space=sflag, size = 0x4, scoped, tag = 'scoped memory for tpu_custom_call.1']
    #allocation9 [shape = 'u8[32768]{0}', space=vmem, size = 0x8000, scoped, tag = 'input window, operand 5, single buffered']
    #allocation10 [shape = 'u8[163840]{0}', space=vmem, size = 0x28000, scoped, tag = 'input window, operand 6, single buffered']
    #allocation11 [shape = 's32[1]{0}', space=sflag, size = 0x4, scoped, tag = 'scoped memory for tpu_custom_call.1']
    #allocation12 [shape = 'u8[4096]{0}', space=vmem, size = 0x1000, scoped, tag = 'input window, operand 7, single buffered']
    #allocation13 [shape = 'u8[4096]{0}', space=vmem, size = 0x1000, scoped, tag = 'input window, operand 8, single buffered']
    #allocation14 [shape = 's32[1]{0}', space=sflag, size = 0x4, scoped, tag = 'scoped memory for tpu_custom_call.1']
    #allocation15 [shape = 'u8[131072]{0}', space=vmem, size = 0x20000, scoped, tag = 'output window, operand 0']
    %14 = vsyncpa [#allocation5], 0
    %15 = vsyncpa [#allocation8], 0
    %16 = vsyncpa [#allocation11], 0
    %17 = vsyncpa [#allocation14], 0
    %18 = vsyncpa [#allocation6], 0
    %s19 = scalar_lea.sflag [#allocation6], 1
    %20 = vsyncpa %s19, 0
    loop: start=0, step=1, limit=6
    $region2: #{tpu_custom_call.1} parent=1 // loop_pre_header
      _
    $region3: #{tpu_custom_call.1} parent=1 // loop_header
      %s22 = sphi 0, %s26
      %p23 = scmp.ge.s32.totalorder %s22, 6
      %s29 = sphi 0, %s41
      %s30 = sphi 0, %s37
      %s31 = sphi 0, %s29
      %s32 = sphi 0, %s30
      %s33 = sphi 0, %s31
      %s34 = sphi 0, %s32
      %s44 = sphi 0, %s46
      %s47 = sphi 0, %s44
      %s48 = sphi 0, %s47
      %s64 = sphi 0, %s48
      %s68 = sphi 0, %s68
      %s70 = sphi 0, %s68
      %s71 = sphi 0, %s70
      %s85 = sphi 0, %s71
      %s89 = sphi 0, %s89
      %s91 = sphi 0, %s89
      %s92 = sphi 0, %s91
      %s106 = sphi 0, %s92
      %s110 = sphi 0, %s110
      %s112 = sphi 0, %s110
      %s113 = sphi 0, %s112
      %s127 = sphi 0, %s113
      %s131 = sphi 0, %s131
      %s133 = sphi 0, %s131
      %s134 = sphi 0, %s133
      %s148 = sphi 0, %s134
      %s152 = sphi 0, %s152
      %s154 = sphi 0, %s152
      %s155 = sphi 0, %s154
      %s169 = sphi 0, %s155
      %s173 = sphi 0, %s173
      %s175 = sphi 0, %s173
      %s176 = sphi 0, %s175
      %s190 = sphi 0, %s176
      %s194 = sphi 0, %s194
      %s196 = sphi 0, %s194
      %s197 = sphi 0, %s196
      %s211 = sphi 0, %s197
      %s215 = sphi 0, %s215
      %s217 = sphi 0, %s215
      %s218 = sphi 0, %s217
      %s232 = sphi 0, %s218
      %s240 = sphi 0, %s242
      %s243 = sphi 0, %s240
      %s244 = sphi 0, %s243
      %s260 = sphi 0, %s244
    $region4: #{tpu_custom_call.1} parent=1 // loop_header_branch
      %25 = sbr.rel (%p23) target = $region8
    $region5: #{tpu_custom_call.1} parent=1 // loop_body
      %s27 = ssub.s32 %s22, 1
      %s28 = ssub.s32 %s22, 2
      %s35 = sadd.s32 1, %s30
      %p36 = scmp.ge.s32.totalorder %s35, 2
      %s37 = scalar_select %p36, 0, %s35
      %s38 = sadd.s32 1, %s29
      %s39 = scalar_select %p36, %s38, %s29
      %p40 = scmp.ge.s32.totalorder %s39, 2
      %s41 = scalar_select %p40, 0, %s39
      %s42 = ssub.s32 %s29, %s41
      %p43 = scmp.eq.s32.totalorder %s42, 0
      %s45 = sadd.s32 %s44, 1
      %s46 = scalar_select %p43, %s44, %s45
      %p49 = pneg %p43
      %p50 = scmp.eq.s32.totalorder %s22, 3
      %p51 = por %p49, %p50
      %p52 = scmp.ne.s32.totalorder %s44, %s47
      %p53 = scmp.eq.s32.totalorder %s22, 0
      %p54 = por %p52, %p53
      %p55 = scmp.ne.s32.totalorder %s44, %s47
      %p56 = scmp.eq.s32.totalorder %s27, 3
      %p57 = por %p55, %p56
      %p58 = scmp.ne.s32.totalorder %s47, %s48
      %p59 = scmp.eq.s32.totalorder %s27, 0
      %p60 = por %p58, %p59
      %p61 = scmp.ne.s32.totalorder %s47, %s48
      %p62 = scmp.eq.s32.totalorder %s28, 3
      %p63 = por %p61, %p62
      %p65 = scmp.ne.s32.totalorder %s48, %s64
      %p66 = scmp.eq.s32.totalorder %s28, 0
      %p67 = por %p65, %p66
      %s69 = sadd.s32 %s68, 1
      %p72 = scmp.eq.s32.totalorder %s22, 3
      %p73 = scmp.ne.s32.totalorder %s68, %s70
      %p74 = scmp.eq.s32.totalorder %s22, 0
      %p75 = por %p73, %p74
      %p76 = scmp.ne.s32.totalorder %s68, %s70
      %p77 = scmp.eq.s32.totalorder %s27, 3
      %p78 = por %p76, %p77
      %p79 = scmp.ne.s32.totalorder %s70, %s71
      %p80 = scmp.eq.s32.totalorder %s27, 0
      %p81 = por %p79, %p80
      %p82 = scmp.ne.s32.totalorder %s70, %s71
      %p83 = scmp.eq.s32.totalorder %s28, 3
      %p84 = por %p82, %p83
      %p86 = scmp.ne.s32.totalorder %s71, %s85
      %p87 = scmp.eq.s32.totalorder %s28, 0
      %p88 = por %p86, %p87
      %s90 = sadd.s32 %s89, 1
      %p93 = scmp.eq.s32.totalorder %s22, 3
      %p94 = scmp.ne.s32.totalorder %s89, %s91
      %p95 = scmp.eq.s32.totalorder %s22, 0
      %p96 = por %p94, %p95
      %p97 = scmp.ne.s32.totalorder %s89, %s91
      %p98 = scmp.eq.s32.totalorder %s27, 3
      %p99 = por %p97, %p98
      %p100 = scmp.ne.s32.totalorder %s91, %s92
      %p101 = scmp.eq.s32.totalorder %s27, 0
      %p102 = por %p100, %p101
      %p103 = scmp.ne.s32.totalorder %s91, %s92
      %p104 = scmp.eq.s32.totalorder %s28, 3
      %p105 = por %p103, %p104
      %p107 = scmp.ne.s32.totalorder %s92, %s106
      %p108 = scmp.eq.s32.totalorder %s28, 0
      %p109 = por %p107, %p108
      %s111 = sadd.s32 %s110, 1
      %p114 = scmp.eq.s32.totalorder %s22, 3
      %p115 = scmp.ne.s32.totalorder %s110, %s112
      %p116 = scmp.eq.s32.totalorder %s22, 0
      %p117 = por %p115, %p116
      %p118 = scmp.ne.s32.totalorder %s110, %s112
      %p119 = scmp.eq.s32.totalorder %s27, 3
      %p120 = por %p118, %p119
      %p121 = scmp.ne.s32.totalorder %s112, %s113
      %p122 = scmp.eq.s32.totalorder %s27, 0
      %p123 = por %p121, %p122
      %p124 = scmp.ne.s32.totalorder %s112, %s113
      %p125 = scmp.eq.s32.totalorder %s28, 3
      %p126 = por %p124, %p125
      %p128 = scmp.ne.s32.totalorder %s113, %s127
      %p129 = scmp.eq.s32.totalorder %s28, 0
      %p130 = por %p128, %p129
      %s132 = sadd.s32 %s131, 1
      %p135 = scmp.eq.s32.totalorder %s22, 3
      %p136 = scmp.ne.s32.totalorder %s131, %s133
      %p137 = scmp.eq.s32.totalorder %s22, 0
      %p138 = por %p136, %p137
      %p139 = scmp.ne.s32.totalorder %s131, %s133
      %p140 = scmp.eq.s32.totalorder %s27, 3
      %p141 = por %p139, %p140
      %p142 = scmp.ne.s32.totalorder %s133, %s134
      %p143 = scmp.eq.s32.totalorder %s27, 0
      %p144 = por %p142, %p143
      %p145 = scmp.ne.s32.totalorder %s133, %s134
      %p146 = scmp.eq.s32.totalorder %s28, 3
      %p147 = por %p145, %p146
      %p149 = scmp.ne.s32.totalorder %s134, %s148
      %p150 = scmp.eq.s32.totalorder %s28, 0
      %p151 = por %p149, %p150
      %s153 = sadd.s32 %s152, 1
      %p156 = scmp.eq.s32.totalorder %s22, 3
      %p157 = scmp.ne.s32.totalorder %s152, %s154
      %p158 = scmp.eq.s32.totalorder %s22, 0
      %p159 = por %p157, %p158
      %p160 = scmp.ne.s32.totalorder %s152, %s154
      %p161 = scmp.eq.s32.totalorder %s27, 3
      %p162 = por %p160, %p161
      %p163 = scmp.ne.s32.totalorder %s154, %s155
      %p164 = scmp.eq.s32.totalorder %s27, 0
      %p165 = por %p163, %p164
      %p166 = scmp.ne.s32.totalorder %s154, %s155
      %p167 = scmp.eq.s32.totalorder %s28, 3
      %p168 = por %p166, %p167
      %p170 = scmp.ne.s32.totalorder %s155, %s169
      %p171 = scmp.eq.s32.totalorder %s28, 0
      %p172 = por %p170, %p171
      %s174 = sadd.s32 %s173, 1
      %p177 = scmp.eq.s32.totalorder %s22, 3
      %p178 = scmp.ne.s32.totalorder %s173, %s175
      %p179 = scmp.eq.s32.totalorder %s22, 0
      %p180 = por %p178, %p179
      %p181 = scmp.ne.s32.totalorder %s173, %s175
      %p182 = scmp.eq.s32.totalorder %s27, 3
      %p183 = por %p181, %p182
      %p184 = scmp.ne.s32.totalorder %s175, %s176
      %p185 = scmp.eq.s32.totalorder %s27, 0
      %p186 = por %p184, %p185
      %p187 = scmp.ne.s32.totalorder %s175, %s176
      %p188 = scmp.eq.s32.totalorder %s28, 3
      %p189 = por %p187, %p188
      %p191 = scmp.ne.s32.totalorder %s176, %s190
      %p192 = scmp.eq.s32.totalorder %s28, 0
      %p193 = por %p191, %p192
      %s195 = sadd.s32 %s194, 1
      %p198 = scmp.eq.s32.totalorder %s22, 3
      %p199 = scmp.ne.s32.totalorder %s194, %s196
      %p200 = scmp.eq.s32.totalorder %s22, 0
      %p201 = por %p199, %p200
      %p202 = scmp.ne.s32.totalorder %s194, %s196
      %p203 = scmp.eq.s32.totalorder %s27, 3
      %p204 = por %p202, %p203
      %p205 = scmp.ne.s32.totalorder %s196, %s197
      %p206 = scmp.eq.s32.totalorder %s27, 0
      %p207 = por %p205, %p206
      %p208 = scmp.ne.s32.totalorder %s196, %s197
      %p209 = scmp.eq.s32.totalorder %s28, 3
      %p210 = por %p208, %p209
      %p212 = scmp.ne.s32.totalorder %s197, %s211
      %p213 = scmp.eq.s32.totalorder %s28, 0
      %p214 = por %p212, %p213
      %s216 = sadd.s32 %s215, 1
      %p219 = scmp.eq.s32.totalorder %s22, 3
      %p220 = scmp.ne.s32.totalorder %s215, %s217
      %p221 = scmp.eq.s32.totalorder %s22, 0
      %p222 = por %p220, %p221
      %p223 = scmp.ne.s32.totalorder %s215, %s217
      %p224 = scmp.eq.s32.totalorder %s27, 3
      %p225 = por %p223, %p224
      %p226 = scmp.ne.s32.totalorder %s217, %s218
      %p227 = scmp.eq.s32.totalorder %s27, 0
      %p228 = por %p226, %p227
      %p229 = scmp.ne.s32.totalorder %s217, %s218
      %p230 = scmp.eq.s32.totalorder %s28, 3
      %p231 = por %p229, %p230
      %p233 = scmp.ne.s32.totalorder %s218, %s232
      %p234 = scmp.eq.s32.totalorder %s28, 0
      %p235 = por %p233, %p234
      %s236 = ssub.s32 %s29, %s41
      %s237 = ssub.s32 %s30, %s37
      %s238 = sor.u32 %s236, %s237
      %p239 = scmp.eq.s32.totalorder %s238, 0
      %s241 = sadd.s32 %s240, 1
      %s242 = scalar_select %p239, %s240, %s241
      %p245 = pneg %p239
      %p246 = scmp.eq.s32.totalorder %s22, 3
      %p247 = por %p245, %p246
      %p248 = scmp.ne.s32.totalorder %s240, %s243
      %p249 = scmp.eq.s32.totalorder %s22, 0
      %p250 = por %p248, %p249
      %p251 = scmp.ne.s32.totalorder %s240, %s243
      %p252 = scmp.eq.s32.totalorder %s27, 3
      %p253 = por %p251, %p252
      %p254 = scmp.ne.s32.totalorder %s243, %s244
      %p255 = scmp.eq.s32.totalorder %s27, 0
      %p256 = por %p254, %p255
      %p257 = scmp.ne.s32.totalorder %s243, %s244
      %p258 = scmp.eq.s32.totalorder %s28, 3
      %p259 = por %p257, %p258
      %p261 = scmp.ne.s32.totalorder %s244, %s260
      %p262 = scmp.eq.s32.totalorder %s28, 0
      %p263 = por %p261, %p262
      %p264 = scmp.le.s32.totalorder 1, %s22
      %p265 = scmp.lt.s32.totalorder %s22, 5
      %p266 = pnand %p264, %p265
      %p267 = pneg %p266
      // Predicated region
      $region9: #{tpu_custom_call.1} parent=5 // pred_check
        _
      $region10: #{tpu_custom_call.1} parent=5 // pred_check_branch
        %269 = sbr.rel (%p266) target = $region12
      $region11: #{tpu_custom_call.1} parent=5 // pred_region
        %s270 = ssub.s32 %s22, 1
        // Predicated region
        $region13: #{tpu_custom_call.1} parent=11 // pred_check
          %p271 = pneg %p81
        $region14: #{tpu_custom_call.1} parent=11 // pred_check_branch
          %273 = sbr.rel (%p271) target = $region16
        $region15: #{tpu_custom_call.1} parent=11 // pred_region
          _
        $region16: #{tpu_custom_call.1} parent=11 // pred_fallthru
          _
        // Predicated region
        $region17: #{tpu_custom_call.1} parent=11 // pred_check
          %p274 = pneg %p102
        $region18: #{tpu_custom_call.1} parent=11 // pred_check_branch
          %276 = sbr.rel (%p274) target = $region20
        $region19: #{tpu_custom_call.1} parent=11 // pred_region
          _
        $region20: #{tpu_custom_call.1} parent=11 // pred_fallthru
          _
        // Predicated region
        $region21: #{tpu_custom_call.1} parent=11 // pred_check
          %p277 = pneg %p123
        $region22: #{tpu_custom_call.1} parent=11 // pred_check_branch
          %279 = sbr.rel (%p277) target = $region24
        $region23: #{tpu_custom_call.1} parent=11 // pred_region
          %281 = vsyncadd [#allocation5], 0
          %s282 = sshll.u32 %s3, 4
          %s283 = int_to_ptr.hbm [resolvable:$true] %s282
          %s284 = sshll.u32 [#allocation4], 4
          %s285 = int_to_ptr.vmem [resolvable:$true] %s284
          %290 = dma.hbm_to_vmem [thread:$0]  %s283, 9216, %s285, [#allocation5], 64, 64, 4
        $region24: #{tpu_custom_call.1} parent=11 // pred_fallthru
          _
        // Predicated region
        $region25: #{tpu_custom_call.1} parent=11 // pred_check
          %p291 = pneg %p144
        $region26: #{tpu_custom_call.1} parent=11 // pred_check_branch
          %293 = sbr.rel (%p291) target = $region28
        $region27: #{tpu_custom_call.1} parent=11 // pred_region
          %295 = vsyncadd [#allocation8], 0
          %s296 = sshll.u32 %s4, 4
          %s297 = int_to_ptr.hbm [resolvable:$true] %s296
          %s298 = sshll.u32 [#allocation7], 4
          %s299 = int_to_ptr.vmem [resolvable:$true] %s298
          %304 = dma.hbm_to_vmem [thread:$0]  %s297, 9216, %s299, [#allocation8], 64, 64, 4
        $region28: #{tpu_custom_call.1} parent=11 // pred_fallthru
          _
        // Predicated region
        $region29: #{tpu_custom_call.1} parent=11 // pred_check
          %p305 = pneg %p165
        $region30: #{tpu_custom_call.1} parent=11 // pred_check_branch
          %307 = sbr.rel (%p305) target = $region32
        $region31: #{tpu_custom_call.1} parent=11 // pred_region
          %309 = vsyncadd [#allocation8], 0
          %s310 = sshll.u32 %s5, 4
          %s311 = int_to_ptr.hbm [resolvable:$true] %s310
          %s312 = sshll.u32 [#allocation9], 4
          %s313 = int_to_ptr.vmem [resolvable:$true] %s312
          %318 = dma.hbm_to_vmem [thread:$0]  %s311, 1024, %s313, [#allocation8], 64, 64, 4
        $region32: #{tpu_custom_call.1} parent=11 // pred_fallthru
          _
        // Predicated region
        $region33: #{tpu_custom_call.1} parent=11 // pred_check
          %p319 = pneg %p186
        $region34: #{tpu_custom_call.1} parent=11 // pred_check_branch
          %321 = sbr.rel (%p319) target = $region36
        $region35: #{tpu_custom_call.1} parent=11 // pred_region
          %323 = vsyncadd [#allocation11], 0
          %s324 = sshll.u32 %s6, 4
          %s325 = int_to_ptr.hbm [resolvable:$true] %s324
          %s326 = sshll.u32 [#allocation10], 4
          %s327 = int_to_ptr.vmem [resolvable:$true] %s326
          %332 = dma.hbm_to_vmem [thread:$0]  %s325, 5120, %s327, [#allocation11], 64, 64, 4
        $region36: #{tpu_custom_call.1} parent=11 // pred_fallthru
          _
        // Predicated region
        $region37: #{tpu_custom_call.1} parent=11 // pred_check
          %p333 = pneg %p207
        $region38: #{tpu_custom_call.1} parent=11 // pred_check_branch
          %335 = sbr.rel (%p333) target = $region40
        $region39: #{tpu_custom_call.1} parent=11 // pred_region
          %337 = vsyncadd [#allocation11], 0
          %s339 = sshll.u32 %s7, 4
          %s340 = int_to_ptr.hbm [resolvable:$true] %s339
          %s341 = sshll.u32 [#allocation12], 4
          %s342 = int_to_ptr.vmem [resolvable:$true] %s341
          %344 = dma.hbm_to_vmem [thread:$0]  %s340, 128, %s342, [#allocation11]
        $region40: #{tpu_custom_call.1} parent=11 // pred_fallthru
          _
        // Predicated region
        $region41: #{tpu_custom_call.1} parent=11 // pred_check
          %p345 = pneg %p228
        $region42: #{tpu_custom_call.1} parent=11 // pred_check_branch
          %347 = sbr.rel (%p345) target = $region44
        $region43: #{tpu_custom_call.1} parent=11 // pred_region
          %349 = vsyncadd [#allocation14], 0
          %s351 = sshll.u32 %s8, 4
          %s352 = int_to_ptr.hbm [resolvable:$true] %s351
          %s353 = sshll.u32 [#allocation13], 4
          %s354 = int_to_ptr.vmem [resolvable:$true] %s353
          %356 = dma.hbm_to_vmem [thread:$0]  %s352, 128, %s354, [#allocation14]
        $region44: #{tpu_custom_call.1} parent=11 // pred_fallthru
          _
      $region12: #{tpu_custom_call.1} parent=5 // pred_fallthru
        _
      %p357 = scmp.lt.s32.totalorder %s22, 4
      // Predicated region
      $region45: #{tpu_custom_call.1} parent=5 // pred_check
        %p358 = pneg %p357
      $region46: #{tpu_custom_call.1} parent=5 // pred_check_branch
        %360 = sbr.rel (%p358) target = $region48
      $region47: #{tpu_custom_call.1} parent=5 // pred_region
        // Predicated region
        $region49: #{tpu_custom_call.1} parent=47 // pred_check
          %p361 = pneg %p54
        $region50: #{tpu_custom_call.1} parent=47 // pred_check_branch
          %363 = sbr.rel (%p361) target = $region52
        $region51: #{tpu_custom_call.1} parent=47 // pred_region
          %p364 = scmp.lt.s32.totalorder %s29, 1
          %s365 = scalar_select %p364, %s29, 1
          %s366 = smul.addr %s365, 32
          %s367 = smul.addr %s366, 8
          %s368 = scalar_lea.vmem %s0, %s367
        $region52: #{tpu_custom_call.1} parent=47 // pred_fallthru
          _
      $region48: #{tpu_custom_call.1} parent=5 // pred_fallthru
        _
      %p369 = scmp.le.s32.totalorder 1, %s22
      %p370 = scmp.lt.s32.totalorder %s22, 5
      %p371 = pnand %p369, %p370
      %p372 = pneg %p371
      // Predicated region
      $region53: #{tpu_custom_call.1} parent=5 // pred_check
        _
      $region54: #{tpu_custom_call.1} parent=5 // pred_check_branch
        %374 = sbr.rel (%p371) target = $region56
      $region55: #{tpu_custom_call.1} parent=5 // pred_region
        %s375 = ssub.s32 %s22, 1
        // Predicated region
        $region57: #{tpu_custom_call.1} parent=55 // pred_check
          %p376 = pneg %p123
        $region58: #{tpu_custom_call.1} parent=55 // pred_check_branch
          %378 = sbr.rel (%p376) target = $region60
        $region59: #{tpu_custom_call.1} parent=55 // pred_region
          %380 = dma.done [#allocation5], 9216
        $region60: #{tpu_custom_call.1} parent=55 // pred_fallthru
          _
        // Predicated region
        $region61: #{tpu_custom_call.1} parent=55 // pred_check
          %p381 = pneg %p144
        $region62: #{tpu_custom_call.1} parent=55 // pred_check_branch
          %383 = sbr.rel (%p381) target = $region64
        $region63: #{tpu_custom_call.1} parent=55 // pred_region
          %385 = dma.done [#allocation8], 9216
        $region64: #{tpu_custom_call.1} parent=55 // pred_fallthru
          _
        // Predicated region
        $region65: #{tpu_custom_call.1} parent=55 // pred_check
          %p386 = pneg %p165
        $region66: #{tpu_custom_call.1} parent=55 // pred_check_branch
          %388 = sbr.rel (%p386) target = $region68
        $region67: #{tpu_custom_call.1} parent=55 // pred_region
          %390 = dma.done [#allocation8], 1024
        $region68: #{tpu_custom_call.1} parent=55 // pred_fallthru
          _
        // Predicated region
        $region69: #{tpu_custom_call.1} parent=55 // pred_check
          %p391 = pneg %p186
        $region70: #{tpu_custom_call.1} parent=55 // pred_check_branch
          %393 = sbr.rel (%p391) target = $region72
        $region71: #{tpu_custom_call.1} parent=55 // pred_region
          %395 = dma.done [#allocation11], 5120
        $region72: #{tpu_custom_call.1} parent=55 // pred_fallthru
          _
        // Predicated region
        $region73: #{tpu_custom_call.1} parent=55 // pred_check
          %p396 = pneg %p207
        $region74: #{tpu_custom_call.1} parent=55 // pred_check_branch
          %398 = sbr.rel (%p396) target = $region76
        $region75: #{tpu_custom_call.1} parent=55 // pred_region
          %400 = dma.done [#allocation11], 128
        $region76: #{tpu_custom_call.1} parent=55 // pred_fallthru
          _
        // Predicated region
        $region77: #{tpu_custom_call.1} parent=55 // pred_check
          %p401 = pneg %p228
        $region78: #{tpu_custom_call.1} parent=55 // pred_check_branch
          %403 = sbr.rel (%p401) target = $region80
        $region79: #{tpu_custom_call.1} parent=55 // pred_region
          %405 = dma.done [#allocation14], 128
        $region80: #{tpu_custom_call.1} parent=55 // pred_fallthru
          _
        %p406 = scmp.lt.s32.totalorder %s31, 1
        %s407 = scalar_select %p406, %s31, 1
        %s408 = smul.addr %s407, 32
        %s409 = smul.addr %s408, 8
        %s410 = scalar_lea.vmem %s0, %s409
        %p411 = pneg %p60
        %p412 = pneg %p57
        %p413 = pneg %p81
        %p414 = pneg %p78
        %p415 = pneg %p102
        %p416 = pneg %p99
        %p417 = pneg %p123
        %p418 = pneg %p120
        %p419 = pneg %p144
        %p420 = pneg %p141
        %p421 = pneg %p165
        %p422 = pneg %p162
        %p423 = pneg %p186
        %p424 = pneg %p183
        %p425 = pneg %p207
        %p426 = pneg %p204
        %p427 = pneg %p228
        %p428 = pneg %p225
        %p429 = pneg %p256
        %p430 = pneg %p253
        %s431 = sand.u32 %s243, 1
        %s432 = scalar_lea.sflag [#allocation6], %s431
        %s433 = sand.u32 %s243, 1
        %s434 = smul.addr %s433, 128
        %s435 = scalar_lea.vmem [#allocation15], %s434
        %p436 = scmp.lt.s32.totalorder %s31, 1
        %s437 = scalar_select %p436, %s31, 1
        %s438 = smul.addr %s437, 32
        %s439 = smul.addr %s438, 8
        %s440 = scalar_lea.vmem %s0, %s439
        %s441 = smul.u32 8, %s32
        %p442 = scmp.eq.s32.totalorder %s32, 0
        // Predicated region
        $region81: #{tpu_custom_call.1} parent=55 // pred_check
          %p443 = pneg %p442
        $region82: #{tpu_custom_call.1} parent=55 // pred_check_branch
          %445 = sbr.rel (%p443) target = $region84
        $region83: #{tpu_custom_call.1} parent=55 // pred_region
          %446 = vst [vmem:[#allocation2] sm:$0xff] 0.0
          %447 = vst [vmem:[#allocation2 + $0x8] sm:$0xff] 0.0
          %448 = vst [vmem:[#allocation2 + $0x10] sm:$0xff] 0.0
          %449 = vst [vmem:[#allocation2 + $0x18] sm:$0xff] 0.0
          %450 = vst [vmem:[#allocation2 + $0x20] sm:$0xff] 0.0
          %451 = vst [vmem:[#allocation2 + $0x28] sm:$0xff] 0.0
          %452 = vst [vmem:[#allocation2 + $0x30] sm:$0xff] 0.0
          %453 = vst [vmem:[#allocation2 + $0x38] sm:$0xff] 0.0
          %454 = vst [vmem:[#allocation2 + $0x40] sm:$0xff] 0.0
          %455 = vst [vmem:[#allocation2 + $0x48] sm:$0xff] 0.0
          %456 = vst [vmem:[#allocation2 + $0x50] sm:$0xff] 0.0
          %457 = vst [vmem:[#allocation2 + $0x58] sm:$0xff] 0.0
          %458 = vst [vmem:[#allocation2 + $0x60] sm:$0xff] 0.0
          %459 = vst [vmem:[#allocation2 + $0x68] sm:$0xff] 0.0
          %460 = vst [vmem:[#allocation2 + $0x70] sm:$0xff] 0.0
          %461 = vst [vmem:[#allocation2 + $0x78] sm:$0xff] 0.0
          %462 = vst [vmem:[#allocation2 + $0x80] sm:$0xff] 0.0
          %463 = vst [vmem:[#allocation2 + $0x88] sm:$0xff] 0.0
          %464 = vst [vmem:[#allocation2 + $0x90] sm:$0xff] 0.0
          %465 = vst [vmem:[#allocation2 + $0x98] sm:$0xff] 0.0
          %466 = vst [vmem:[#allocation2 + $0xa0] sm:$0xff] 0.0
          %467 = vst [vmem:[#allocation2 + $0xa8] sm:$0xff] 0.0
          %468 = vst [vmem:[#allocation2 + $0xb0] sm:$0xff] 0.0
          %469 = vst [vmem:[#allocation2 + $0xb8] sm:$0xff] 0.0
          %470 = vst [vmem:[#allocation2 + $0xc0] sm:$0xff] 0.0
          %471 = vst [vmem:[#allocation2 + $0xc8] sm:$0xff] 0.0
          %472 = vst [vmem:[#allocation2 + $0xd0] sm:$0xff] 0.0
          %473 = vst [vmem:[#allocation2 + $0xd8] sm:$0xff] 0.0
          %474 = vst [vmem:[#allocation2 + $0xe0] sm:$0xff] 0.0
          %475 = vst [vmem:[#allocation2 + $0xe8] sm:$0xff] 0.0
          %476 = vst [vmem:[#allocation2 + $0xf0] sm:$0xff] 0.0
          %477 = vst [vmem:[#allocation2 + $0xf8] sm:$0xff] 0.0
          %478 = vst [vmem:[#allocation2 + $0x100] sm:$0xff] 0.0
          %479 = vst [vmem:[#allocation2 + $0x108] sm:$0xff] 0.0
          %480 = vst [vmem:[#allocation2 + $0x110] sm:$0xff] 0.0
          %481 = vst [vmem:[#allocation2 + $0x118] sm:$0xff] 0.0
          %482 = vst [vmem:[#allocation2 + $0x120] sm:$0xff] 0.0
          %483 = vst [vmem:[#allocation2 + $0x128] sm:$0xff] 0.0
          %484 = vst [vmem:[#allocation2 + $0x130] sm:$0xff] 0.0
          %485 = vst [vmem:[#allocation2 + $0x138] sm:$0xff] 0.0
          %486 = vst [vmem:[#allocation2 + $0x140] sm:$0xff] 0.0
          %487 = vst [vmem:[#allocation2 + $0x148] sm:$0xff] 0.0
          %488 = vst [vmem:[#allocation2 + $0x150] sm:$0xff] 0.0
          %489 = vst [vmem:[#allocation2 + $0x158] sm:$0xff] 0.0
          %490 = vst [vmem:[#allocation2 + $0x160] sm:$0xff] 0.0
          %491 = vst [vmem:[#allocation2 + $0x168] sm:$0xff] 0.0
          %492 = vst [vmem:[#allocation2 + $0x170] sm:$0xff] 0.0
          %493 = vst [vmem:[#allocation2 + $0x178] sm:$0xff] 0.0
          %494 = vst [vmem:[#allocation2 + $0x180] sm:$0xff] 0.0
          %495 = vst [vmem:[#allocation2 + $0x188] sm:$0xff] 0.0
          %496 = vst [vmem:[#allocation2 + $0x190] sm:$0xff] 0.0
          %497 = vst [vmem:[#allocation2 + $0x198] sm:$0xff] 0.0
          %498 = vst [vmem:[#allocation2 + $0x1a0] sm:$0xff] 0.0
          %499 = vst [vmem:[#allocation2 + $0x1a8] sm:$0xff] 0.0
          %500 = vst [vmem:[#allocation2 + $0x1b0] sm:$0xff] 0.0
          %501 = vst [vmem:[#allocation2 + $0x1b8] sm:$0xff] 0.0
          %502 = vst [vmem:[#allocation2 + $0x1c0] sm:$0xff] 0.0
          %503 = vst [vmem:[#allocation2 + $0x1c8] sm:$0xff] 0.0
          %504 = vst [vmem:[#allocation2 + $0x1d0] sm:$0xff] 0.0
          %505 = vst [vmem:[#allocation2 + $0x1d8] sm:$0xff] 0.0
          %506 = vst [vmem:[#allocation2 + $0x1e0] sm:$0xff] 0.0
          %507 = vst [vmem:[#allocation2 + $0x1e8] sm:$0xff] 0.0
          %508 = vst [vmem:[#allocation2 + $0x1f0] sm:$0xff] 0.0
          %509 = vst [vmem:[#allocation2 + $0x1f8] sm:$0xff] 0.0
          %510 = vst [vmem:[#allocation2 + $0x200] sm:$0xff] 0.0
          %511 = vst [vmem:[#allocation2 + $0x208] sm:$0xff] 0.0
          %512 = vst [vmem:[#allocation2 + $0x210] sm:$0xff] 0.0
          %513 = vst [vmem:[#allocation2 + $0x218] sm:$0xff] 0.0
          %514 = vst [vmem:[#allocation2 + $0x220] sm:$0xff] 0.0
          %515 = vst [vmem:[#allocation2 + $0x228] sm:$0xff] 0.0
          %516 = vst [vmem:[#allocation2 + $0x230] sm:$0xff] 0.0
          %517 = vst [vmem:[#allocation2 + $0x238] sm:$0xff] 0.0
          %518 = vst [vmem:[#allocation2 + $0x240] sm:$0xff] 0.0
          %519 = vst [vmem:[#allocation2 + $0x248] sm:$0xff] 0.0
          %520 = vst [vmem:[#allocation2 + $0x250] sm:$0xff] 0.0
          %521 = vst [vmem:[#allocation2 + $0x258] sm:$0xff] 0.0
          %522 = vst [vmem:[#allocation2 + $0x260] sm:$0xff] 0.0
          %523 = vst [vmem:[#allocation2 + $0x268] sm:$0xff] 0.0
          %524 = vst [vmem:[#allocation2 + $0x270] sm:$0xff] 0.0
          %525 = vst [vmem:[#allocation2 + $0x278] sm:$0xff] 0.0
          %526 = vst [vmem:[#allocation2 + $0x280] sm:$0xff] 0.0
          %527 = vst [vmem:[#allocation2 + $0x288] sm:$0xff] 0.0
          %528 = vst [vmem:[#allocation2 + $0x290] sm:$0xff] 0.0
          %529 = vst [vmem:[#allocation2 + $0x298] sm:$0xff] 0.0
          %530 = vst [vmem:[#allocation2 + $0x2a0] sm:$0xff] 0.0
          %531 = vst [vmem:[#allocation2 + $0x2a8] sm:$0xff] 0.0
          %532 = vst [vmem:[#allocation2 + $0x2b0] sm:$0xff] 0.0
          %533 = vst [vmem:[#allocation2 + $0x2b8] sm:$0xff] 0.0
          %534 = vst [vmem:[#allocation2 + $0x2c0] sm:$0xff] 0.0
          %535 = vst [vmem:[#allocation2 + $0x2c8] sm:$0xff] 0.0
          %536 = vst [vmem:[#allocation2 + $0x2d0] sm:$0xff] 0.0
          %537 = vst [vmem:[#allocation2 + $0x2d8] sm:$0xff] 0.0
          %538 = vst [vmem:[#allocation2 + $0x2e0] sm:$0xff] 0.0
          %539 = vst [vmem:[#allocation2 + $0x2e8] sm:$0xff] 0.0
          %540 = vst [vmem:[#allocation2 + $0x2f0] sm:$0xff] 0.0
          %541 = vst [vmem:[#allocation2 + $0x2f8] sm:$0xff] 0.0
          %542 = vst [vmem:[#allocation2 + $0x300] sm:$0xff] 0.0
          %543 = vst [vmem:[#allocation2 + $0x308] sm:$0xff] 0.0
          %544 = vst [vmem:[#allocation2 + $0x310] sm:$0xff] 0.0
          %545 = vst [vmem:[#allocation2 + $0x318] sm:$0xff] 0.0
          %546 = vst [vmem:[#allocation2 + $0x320] sm:$0xff] 0.0
          %547 = vst [vmem:[#allocation2 + $0x328] sm:$0xff] 0.0
          %548 = vst [vmem:[#allocation2 + $0x330] sm:$0xff] 0.0
          %549 = vst [vmem:[#allocation2 + $0x338] sm:$0xff] 0.0
          %550 = vst [vmem:[#allocation2 + $0x340] sm:$0xff] 0.0
          %551 = vst [vmem:[#allocation2 + $0x348] sm:$0xff] 0.0
          %552 = vst [vmem:[#allocation2 + $0x350] sm:$0xff] 0.0
          %553 = vst [vmem:[#allocation2 + $0x358] sm:$0xff] 0.0
          %554 = vst [vmem:[#allocation2 + $0x360] sm:$0xff] 0.0
          %555 = vst [vmem:[#allocation2 + $0x368] sm:$0xff] 0.0
          %556 = vst [vmem:[#allocation2 + $0x370] sm:$0xff] 0.0
          %557 = vst [vmem:[#allocation2 + $0x378] sm:$0xff] 0.0
          %558 = vst [vmem:[#allocation2 + $0x380] sm:$0xff] 0.0
          %559 = vst [vmem:[#allocation2 + $0x388] sm:$0xff] 0.0
          %560 = vst [vmem:[#allocation2 + $0x390] sm:$0xff] 0.0
          %561 = vst [vmem:[#allocation2 + $0x398] sm:$0xff] 0.0
          %562 = vst [vmem:[#allocation2 + $0x3a0] sm:$0xff] 0.0
          %563 = vst [vmem:[#allocation2 + $0x3a8] sm:$0xff] 0.0
          %564 = vst [vmem:[#allocation2 + $0x3b0] sm:$0xff] 0.0
          %565 = vst [vmem:[#allocation2 + $0x3b8] sm:$0xff] 0.0
          %566 = vst [vmem:[#allocation2 + $0x3c0] sm:$0xff] 0.0
          %567 = vst [vmem:[#allocation2 + $0x3c8] sm:$0xff] 0.0
          %568 = vst [vmem:[#allocation2 + $0x3d0] sm:$0xff] 0.0
          %569 = vst [vmem:[#allocation2 + $0x3d8] sm:$0xff] 0.0
          %570 = vst [vmem:[#allocation2 + $0x3e0] sm:$0xff] 0.0
          %571 = vst [vmem:[#allocation2 + $0x3e8] sm:$0xff] 0.0
          %572 = vst [vmem:[#allocation2 + $0x3f0] sm:$0xff] 0.0
          %573 = vst [vmem:[#allocation2 + $0x3f8] sm:$0xff] 0.0
          %574 = vst [vmem:[#allocation2 + $0x400] sm:$0xff] 0.0
          %575 = vst [vmem:[#allocation2 + $0x408] sm:$0xff] 0.0
          %576 = vst [vmem:[#allocation2 + $0x410] sm:$0xff] 0.0
          %577 = vst [vmem:[#allocation2 + $0x418] sm:$0xff] 0.0
          %578 = vst [vmem:[#allocation2 + $0x420] sm:$0xff] 0.0
          %579 = vst [vmem:[#allocation2 + $0x428] sm:$0xff] 0.0
          %580 = vst [vmem:[#allocation2 + $0x430] sm:$0xff] 0.0
          %581 = vst [vmem:[#allocation2 + $0x438] sm:$0xff] 0.0
          %582 = vst [vmem:[#allocation2 + $0x440] sm:$0xff] 0.0
          %583 = vst [vmem:[#allocation2 + $0x448] sm:$0xff] 0.0
          %584 = vst [vmem:[#allocation2 + $0x450] sm:$0xff] 0.0
          %585 = vst [vmem:[#allocation2 + $0x458] sm:$0xff] 0.0
          %586 = vst [vmem:[#allocation2 + $0x460] sm:$0xff] 0.0
          %587 = vst [vmem:[#allocation2 + $0x468] sm:$0xff] 0.0
          %588 = vst [vmem:[#allocation2 + $0x470] sm:$0xff] 0.0
          %589 = vst [vmem:[#allocation2 + $0x478] sm:$0xff] 0.0
          %590 = vst [vmem:[#allocation2 + $0x480] sm:$0xff] 0.0
          %591 = vst [vmem:[#allocation2 + $0x488] sm:$0xff] 0.0
          %592 = vst [vmem:[#allocation2 + $0x490] sm:$0xff] 0.0
          %593 = vst [vmem:[#allocation2 + $0x498] sm:$0xff] 0.0
          %594 = vst [vmem:[#allocation2 + $0x4a0] sm:$0xff] 0.0
          %595 = vst [vmem:[#allocation2 + $0x4a8] sm:$0xff] 0.0
          %596 = vst [vmem:[#allocation2 + $0x4b0] sm:$0xff] 0.0
          %597 = vst [vmem:[#allocation2 + $0x4b8] sm:$0xff] 0.0
          %598 = vst [vmem:[#allocation2 + $0x4c0] sm:$0xff] 0.0
          %599 = vst [vmem:[#allocation2 + $0x4c8] sm:$0xff] 0.0
          %600 = vst [vmem:[#allocation2 + $0x4d0] sm:$0xff] 0.0
          %601 = vst [vmem:[#allocation2 + $0x4d8] sm:$0xff] 0.0
          %602 = vst [vmem:[#allocation2 + $0x4e0] sm:$0xff] 0.0
          %603 = vst [vmem:[#allocation2 + $0x4e8] sm:$0xff] 0.0
          %604 = vst [vmem:[#allocation2 + $0x4f0] sm:$0xff] 0.0
          %605 = vst [vmem:[#allocation2 + $0x4f8] sm:$0xff] 0.0
          %606 = vst [vmem:[#allocation2 + $0x500] sm:$0xff] 0.0
          %607 = vst [vmem:[#allocation2 + $0x508] sm:$0xff] 0.0
          %608 = vst [vmem:[#allocation2 + $0x510] sm:$0xff] 0.0
          %609 = vst [vmem:[#allocation2 + $0x518] sm:$0xff] 0.0
          %610 = vst [vmem:[#allocation2 + $0x520] sm:$0xff] 0.0
          %611 = vst [vmem:[#allocation2 + $0x528] sm:$0xff] 0.0
          %612 = vst [vmem:[#allocation2 + $0x530] sm:$0xff] 0.0
          %613 = vst [vmem:[#allocation2 + $0x538] sm:$0xff] 0.0
          %614 = vst [vmem:[#allocation2 + $0x540] sm:$0xff] 0.0
          %615 = vst [vmem:[#allocation2 + $0x548] sm:$0xff] 0.0
          %616 = vst [vmem:[#allocation2 + $0x550] sm:$0xff] 0.0
          %617 = vst [vmem:[#allocation2 + $0x558] sm:$0xff] 0.0
          %618 = vst [vmem:[#allocation2 + $0x560] sm:$0xff] 0.0
          %619 = vst [vmem:[#allocation2 + $0x568] sm:$0xff] 0.0
          %620 = vst [vmem:[#allocation2 + $0x570] sm:$0xff] 0.0
          %621 = vst [vmem:[#allocation2 + $0x578] sm:$0xff] 0.0
          %622 = vst [vmem:[#allocation2 + $0x580] sm:$0xff] 0.0
          %623 = vst [vmem:[#allocation2 + $0x588] sm:$0xff] 0.0
          %624 = vst [vmem:[#allocation2 + $0x590] sm:$0xff] 0.0
          %625 = vst [vmem:[#allocation2 + $0x598] sm:$0xff] 0.0
          %626 = vst [vmem:[#allocation2 + $0x5a0] sm:$0xff] 0.0
          %627 = vst [vmem:[#allocation2 + $0x5a8] sm:$0xff] 0.0
          %628 = vst [vmem:[#allocation2 + $0x5b0] sm:$0xff] 0.0
          %629 = vst [vmem:[#allocation2 + $0x5b8] sm:$0xff] 0.0
          %630 = vst [vmem:[#allocation2 + $0x5c0] sm:$0xff] 0.0
          %631 = vst [vmem:[#allocation2 + $0x5c8] sm:$0xff] 0.0
          %632 = vst [vmem:[#allocation2 + $0x5d0] sm:$0xff] 0.0
          %633 = vst [vmem:[#allocation2 + $0x5d8] sm:$0xff] 0.0
          %634 = vst [vmem:[#allocation2 + $0x5e0] sm:$0xff] 0.0
          %635 = vst [vmem:[#allocation2 + $0x5e8] sm:$0xff] 0.0
          %636 = vst [vmem:[#allocation2 + $0x5f0] sm:$0xff] 0.0
          %637 = vst [vmem:[#allocation2 + $0x5f8] sm:$0xff] 0.0
          %638 = vst [vmem:[#allocation2 + $0x600] sm:$0xff] 0.0
          %639 = vst [vmem:[#allocation2 + $0x608] sm:$0xff] 0.0
          %640 = vst [vmem:[#allocation2 + $0x610] sm:$0xff] 0.0
          %641 = vst [vmem:[#allocation2 + $0x618] sm:$0xff] 0.0
          %642 = vst [vmem:[#allocation2 + $0x620] sm:$0xff] 0.0
          %643 = vst [vmem:[#allocation2 + $0x628] sm:$0xff] 0.0
          %644 = vst [vmem:[#allocation2 + $0x630] sm:$0xff] 0.0
          %645 = vst [vmem:[#allocation2 + $0x638] sm:$0xff] 0.0
          %646 = vst [vmem:[#allocation2 + $0x640] sm:$0xff] 0.0
          %647 = vst [vmem:[#allocation2 + $0x648] sm:$0xff] 0.0
          %648 = vst [vmem:[#allocation2 + $0x650] sm:$0xff] 0.0
          %649 = vst [vmem:[#allocation2 + $0x658] sm:$0xff] 0.0
          %650 = vst [vmem:[#allocation2 + $0x660] sm:$0xff] 0.0
          %651 = vst [vmem:[#allocation2 + $0x668] sm:$0xff] 0.0
          %652 = vst [vmem:[#allocation2 + $0x670] sm:$0xff] 0.0
          %653 = vst [vmem:[#allocation2 + $0x678] sm:$0xff] 0.0
          %654 = vst [vmem:[#allocation2 + $0x680] sm:$0xff] 0.0
          %655 = vst [vmem:[#allocation2 + $0x688] sm:$0xff] 0.0
          %656 = vst [vmem:[#allocation2 + $0x690] sm:$0xff] 0.0
          %657 = vst [vmem:[#allocation2 + $0x698] sm:$0xff] 0.0
          %658 = vst [vmem:[#allocation2 + $0x6a0] sm:$0xff] 0.0
          %659 = vst [vmem:[#allocation2 + $0x6a8] sm:$0xff] 0.0
          %660 = vst [vmem:[#allocation2 + $0x6b0] sm:$0xff] 0.0
          %661 = vst [vmem:[#allocation2 + $0x6b8] sm:$0xff] 0.0
          %662 = vst [vmem:[#allocation2 + $0x6c0] sm:$0xff] 0.0
          %663 = vst [vmem:[#allocation2 + $0x6c8] sm:$0xff] 0.0
          %664 = vst [vmem:[#allocation2 + $0x6d0] sm:$0xff] 0.0
          %665 = vst [vmem:[#allocation2 + $0x6d8] sm:$0xff] 0.0
          %666 = vst [vmem:[#allocation2 + $0x6e0] sm:$0xff] 0.0
          %667 = vst [vmem:[#allocation2 + $0x6e8] sm:$0xff] 0.0
          %668 = vst [vmem:[#allocation2 + $0x6f0] sm:$0xff] 0.0
          %669 = vst [vmem:[#allocation2 + $0x6f8] sm:$0xff] 0.0
          %670 = vst [vmem:[#allocation2 + $0x700] sm:$0xff] 0.0
          %671 = vst [vmem:[#allocation2 + $0x708] sm:$0xff] 0.0
          %672 = vst [vmem:[#allocation2 + $0x710] sm:$0xff] 0.0
          %673 = vst [vmem:[#allocation2 + $0x718] sm:$0xff] 0.0
          %674 = vst [vmem:[#allocation2 + $0x720] sm:$0xff] 0.0
          %675 = vst [vmem:[#allocation2 + $0x728] sm:$0xff] 0.0
          %676 = vst [vmem:[#allocation2 + $0x730] sm:$0xff] 0.0
          %677 = vst [vmem:[#allocation2 + $0x738] sm:$0xff] 0.0
          %678 = vst [vmem:[#allocation2 + $0x740] sm:$0xff] 0.0
          %679 = vst [vmem:[#allocation2 + $0x748] sm:$0xff] 0.0
          %680 = vst [vmem:[#allocation2 + $0x750] sm:$0xff] 0.0
          %681 = vst [vmem:[#allocation2 + $0x758] sm:$0xff] 0.0
          %682 = vst [vmem:[#allocation2 + $0x760] sm:$0xff] 0.0
          %683 = vst [vmem:[#allocation2 + $0x768] sm:$0xff] 0.0
          %684 = vst [vmem:[#allocation2 + $0x770] sm:$0xff] 0.0
          %685 = vst [vmem:[#allocation2 + $0x778] sm:$0xff] 0.0
          %686 = vst [vmem:[#allocation2 + $0x780] sm:$0xff] 0.0
          %687 = vst [vmem:[#allocation2 + $0x788] sm:$0xff] 0.0
          %688 = vst [vmem:[#allocation2 + $0x790] sm:$0xff] 0.0
          %689 = vst [vmem:[#allocation2 + $0x798] sm:$0xff] 0.0
          %690 = vst [vmem:[#allocation2 + $0x7a0] sm:$0xff] 0.0
          %691 = vst [vmem:[#allocation2 + $0x7a8] sm:$0xff] 0.0
          %692 = vst [vmem:[#allocation2 + $0x7b0] sm:$0xff] 0.0
          %693 = vst [vmem:[#allocation2 + $0x7b8] sm:$0xff] 0.0
          %694 = vst [vmem:[#allocation2 + $0x7c0] sm:$0xff] 0.0
          %695 = vst [vmem:[#allocation2 + $0x7c8] sm:$0xff] 0.0
          %696 = vst [vmem:[#allocation2 + $0x7d0] sm:$0xff] 0.0
          %697 = vst [vmem:[#allocation2 + $0x7d8] sm:$0xff] 0.0
          %698 = vst [vmem:[#allocation2 + $0x7e0] sm:$0xff] 0.0
          %699 = vst [vmem:[#allocation2 + $0x7e8] sm:$0xff] 0.0
          %700 = vst [vmem:[#allocation2 + $0x7f0] sm:$0xff] 0.0
          %701 = vst [vmem:[#allocation2 + $0x7f8] sm:$0xff] 0.0
          %702 = vst [vmem:[#allocation2 + $0x800] sm:$0xff] 0.0
          %703 = vst [vmem:[#allocation2 + $0x808] sm:$0xff] 0.0
          %704 = vst [vmem:[#allocation2 + $0x810] sm:$0xff] 0.0
          %705 = vst [vmem:[#allocation2 + $0x818] sm:$0xff] 0.0
          %706 = vst [vmem:[#allocation2 + $0x820] sm:$0xff] 0.0
          %707 = vst [vmem:[#allocation2 + $0x828] sm:$0xff] 0.0
          %708 = vst [vmem:[#allocation2 + $0x830] sm:$0xff] 0.0
          %709 = vst [vmem:[#allocation2 + $0x838] sm:$0xff] 0.0
          %710 = vst [vmem:[#allocation2 + $0x840] sm:$0xff] 0.0
          %711 = vst [vmem:[#allocation2 + $0x848] sm:$0xff] 0.0
          %712 = vst [vmem:[#allocation2 + $0x850] sm:$0xff] 0.0
          %713 = vst [vmem:[#allocation2 + $0x858] sm:$0xff] 0.0
          %714 = vst [vmem:[#allocation2 + $0x860] sm:$0xff] 0.0
          %715 = vst [vmem:[#allocation2 + $0x868] sm:$0xff] 0.0
          %716 = vst [vmem:[#allocation2 + $0x870] sm:$0xff] 0.0
          %717 = vst [vmem:[#allocation2 + $0x878] sm:$0xff] 0.0
          %718 = vst [vmem:[#allocation2 + $0x880] sm:$0xff] 0.0
          %719 = vst [vmem:[#allocation2 + $0x888] sm:$0xff] 0.0
          %720 = vst [vmem:[#allocation2 + $0x890] sm:$0xff] 0.0
          %721 = vst [vmem:[#allocation2 + $0x898] sm:$0xff] 0.0
          %722 = vst [vmem:[#allocation2 + $0x8a0] sm:$0xff] 0.0
          %723 = vst [vmem:[#allocation2 + $0x8a8] sm:$0xff] 0.0
          %724 = vst [vmem:[#allocation2 + $0x8b0] sm:$0xff] 0.0
          %725 = vst [vmem:[#allocation2 + $0x8b8] sm:$0xff] 0.0
          %726 = vst [vmem:[#allocation2 + $0x8c0] sm:$0xff] 0.0
          %727 = vst [vmem:[#allocation2 + $0x8c8] sm:$0xff] 0.0
          %728 = vst [vmem:[#allocation2 + $0x8d0] sm:$0xff] 0.0
          %729 = vst [vmem:[#allocation2 + $0x8d8] sm:$0xff] 0.0
          %730 = vst [vmem:[#allocation2 + $0x8e0] sm:$0xff] 0.0
          %731 = vst [vmem:[#allocation2 + $0x8e8] sm:$0xff] 0.0
          %732 = vst [vmem:[#allocation2 + $0x8f0] sm:$0xff] 0.0
          %733 = vst [vmem:[#allocation2 + $0x8f8] sm:$0xff] 0.0
          %734 = vst [vmem:[#allocation2 + $0x900] sm:$0xff] 0.0
          %735 = vst [vmem:[#allocation2 + $0x908] sm:$0xff] 0.0
          %736 = vst [vmem:[#allocation2 + $0x910] sm:$0xff] 0.0
          %737 = vst [vmem:[#allocation2 + $0x918] sm:$0xff] 0.0
          %738 = vst [vmem:[#allocation2 + $0x920] sm:$0xff] 0.0
          %739 = vst [vmem:[#allocation2 + $0x928] sm:$0xff] 0.0
          %740 = vst [vmem:[#allocation2 + $0x930] sm:$0xff] 0.0
          %741 = vst [vmem:[#allocation2 + $0x938] sm:$0xff] 0.0
          %742 = vst [vmem:[#allocation2 + $0x940] sm:$0xff] 0.0
          %743 = vst [vmem:[#allocation2 + $0x948] sm:$0xff] 0.0
          %744 = vst [vmem:[#allocation2 + $0x950] sm:$0xff] 0.0
          %745 = vst [vmem:[#allocation2 + $0x958] sm:$0xff] 0.0
          %746 = vst [vmem:[#allocation2 + $0x960] sm:$0xff] 0.0
          %747 = vst [vmem:[#allocation2 + $0x968] sm:$0xff] 0.0
          %748 = vst [vmem:[#allocation2 + $0x970] sm:$0xff] 0.0
          %749 = vst [vmem:[#allocation2 + $0x978] sm:$0xff] 0.0
          %750 = vst [vmem:[#allocation2 + $0x980] sm:$0xff] 0.0
          %751 = vst [vmem:[#allocation2 + $0x988] sm:$0xff] 0.0
          %752 = vst [vmem:[#allocation2 + $0x990] sm:$0xff] 0.0
          %753 = vst [vmem:[#allocation2 + $0x998] sm:$0xff] 0.0
          %754 = vst [vmem:[#allocation2 + $0x9a0] sm:$0xff] 0.0
          %755 = vst [vmem:[#allocation2 + $0x9a8] sm:$0xff] 0.0
          %756 = vst [vmem:[#allocation2 + $0x9b0] sm:$0xff] 0.0
          %757 = vst [vmem:[#allocation2 + $0x9b8] sm:$0xff] 0.0
          %758 = vst [vmem:[#allocation2 + $0x9c0] sm:$0xff] 0.0
          %759 = vst [vmem:[#allocation2 + $0x9c8] sm:$0xff] 0.0
          %760 = vst [vmem:[#allocation2 + $0x9d0] sm:$0xff] 0.0
          %761 = vst [vmem:[#allocation2 + $0x9d8] sm:$0xff] 0.0
          %762 = vst [vmem:[#allocation2 + $0x9e0] sm:$0xff] 0.0
          %763 = vst [vmem:[#allocation2 + $0x9e8] sm:$0xff] 0.0
          %764 = vst [vmem:[#allocation2 + $0x9f0] sm:$0xff] 0.0
          %765 = vst [vmem:[#allocation2 + $0x9f8] sm:$0xff] 0.0
          %766 = vst [vmem:[#allocation2 + $0xa00] sm:$0xff] 0.0
          %767 = vst [vmem:[#allocation2 + $0xa08] sm:$0xff] 0.0
          %768 = vst [vmem:[#allocation2 + $0xa10] sm:$0xff] 0.0
          %769 = vst [vmem:[#allocation2 + $0xa18] sm:$0xff] 0.0
          %770 = vst [vmem:[#allocation2 + $0xa20] sm:$0xff] 0.0
          %771 = vst [vmem:[#allocation2 + $0xa28] sm:$0xff] 0.0
          %772 = vst [vmem:[#allocation2 + $0xa30] sm:$0xff] 0.0
          %773 = vst [vmem:[#allocation2 + $0xa38] sm:$0xff] 0.0
          %774 = vst [vmem:[#allocation2 + $0xa40] sm:$0xff] 0.0
          %775 = vst [vmem:[#allocation2 + $0xa48] sm:$0xff] 0.0
          %776 = vst [vmem:[#allocation2 + $0xa50] sm:$0xff] 0.0
          %777 = vst [vmem:[#allocation2 + $0xa58] sm:$0xff] 0.0
          %778 = vst [vmem:[#allocation2 + $0xa60] sm:$0xff] 0.0
          %779 = vst [vmem:[#allocation2 + $0xa68] sm:$0xff] 0.0
          %780 = vst [vmem:[#allocation2 + $0xa70] sm:$0xff] 0.0
          %781 = vst [vmem:[#allocation2 + $0xa78] sm:$0xff] 0.0
          %782 = vst [vmem:[#allocation2 + $0xa80] sm:$0xff] 0.0
          %783 = vst [vmem:[#allocation2 + $0xa88] sm:$0xff] 0.0
          %784 = vst [vmem:[#allocation2 + $0xa90] sm:$0xff] 0.0
          %785 = vst [vmem:[#allocation2 + $0xa98] sm:$0xff] 0.0
          %786 = vst [vmem:[#allocation2 + $0xaa0] sm:$0xff] 0.0
          %787 = vst [vmem:[#allocation2 + $0xaa8] sm:$0xff] 0.0
          %788 = vst [vmem:[#allocation2 + $0xab0] sm:$0xff] 0.0
          %789 = vst [vmem:[#allocation2 + $0xab8] sm:$0xff] 0.0
          %790 = vst [vmem:[#allocation2 + $0xac0] sm:$0xff] 0.0
          %791 = vst [vmem:[#allocation2 + $0xac8] sm:$0xff] 0.0
          %792 = vst [vmem:[#allocation2 + $0xad0] sm:$0xff] 0.0
          %793 = vst [vmem:[#allocation2 + $0xad8] sm:$0xff] 0.0
          %794 = vst [vmem:[#allocation2 + $0xae0] sm:$0xff] 0.0
          %795 = vst [vmem:[#allocation2 + $0xae8] sm:$0xff] 0.0
          %796 = vst [vmem:[#allocation2 + $0xaf0] sm:$0xff] 0.0
          %797 = vst [vmem:[#allocation2 + $0xaf8] sm:$0xff] 0.0
          %798 = vst [vmem:[#allocation2 + $0xb00] sm:$0xff] 0.0
          %799 = vst [vmem:[#allocation2 + $0xb08] sm:$0xff] 0.0
          %800 = vst [vmem:[#allocation2 + $0xb10] sm:$0xff] 0.0
          %801 = vst [vmem:[#allocation2 + $0xb18] sm:$0xff] 0.0
          %802 = vst [vmem:[#allocation2 + $0xb20] sm:$0xff] 0.0
          %803 = vst [vmem:[#allocation2 + $0xb28] sm:$0xff] 0.0
          %804 = vst [vmem:[#allocation2 + $0xb30] sm:$0xff] 0.0
          %805 = vst [vmem:[#allocation2 + $0xb38] sm:$0xff] 0.0
          %806 = vst [vmem:[#allocation2 + $0xb40] sm:$0xff] 0.0
          %807 = vst [vmem:[#allocation2 + $0xb48] sm:$0xff] 0.0
          %808 = vst [vmem:[#allocation2 + $0xb50] sm:$0xff] 0.0
          %809 = vst [vmem:[#allocation2 + $0xb58] sm:$0xff] 0.0
          %810 = vst [vmem:[#allocation2 + $0xb60] sm:$0xff] 0.0
          %811 = vst [vmem:[#allocation2 + $0xb68] sm:$0xff] 0.0
          %812 = vst [vmem:[#allocation2 + $0xb70] sm:$0xff] 0.0
          %813 = vst [vmem:[#allocation2 + $0xb78] sm:$0xff] 0.0
          %814 = vst [vmem:[#allocation2 + $0xb80] sm:$0xff] 0.0
          %815 = vst [vmem:[#allocation2 + $0xb88] sm:$0xff] 0.0
          %816 = vst [vmem:[#allocation2 + $0xb90] sm:$0xff] 0.0
          %817 = vst [vmem:[#allocation2 + $0xb98] sm:$0xff] 0.0
          %818 = vst [vmem:[#allocation2 + $0xba0] sm:$0xff] 0.0
          %819 = vst [vmem:[#allocation2 + $0xba8] sm:$0xff] 0.0
          %820 = vst [vmem:[#allocation2 + $0xbb0] sm:$0xff] 0.0
          %821 = vst [vmem:[#allocation2 + $0xbb8] sm:$0xff] 0.0
          %822 = vst [vmem:[#allocation2 + $0xbc0] sm:$0xff] 0.0
          %823 = vst [vmem:[#allocation2 + $0xbc8] sm:$0xff] 0.0
          %824 = vst [vmem:[#allocation2 + $0xbd0] sm:$0xff] 0.0
          %825 = vst [vmem:[#allocation2 + $0xbd8] sm:$0xff] 0.0
          %826 = vst [vmem:[#allocation2 + $0xbe0] sm:$0xff] 0.0
          %827 = vst [vmem:[#allocation2 + $0xbe8] sm:$0xff] 0.0
          %828 = vst [vmem:[#allocation2 + $0xbf0] sm:$0xff] 0.0
          %829 = vst [vmem:[#allocation2 + $0xbf8] sm:$0xff] 0.0
          %830 = vst [vmem:[#allocation2 + $0xc00] sm:$0xff] 0.0
          %831 = vst [vmem:[#allocation2 + $0xc08] sm:$0xff] 0.0
          %832 = vst [vmem:[#allocation2 + $0xc10] sm:$0xff] 0.0
          %833 = vst [vmem:[#allocation2 + $0xc18] sm:$0xff] 0.0
          %834 = vst [vmem:[#allocation2 + $0xc20] sm:$0xff] 0.0
          %835 = vst [vmem:[#allocation2 + $0xc28] sm:$0xff] 0.0
          %836 = vst [vmem:[#allocation2 + $0xc30] sm:$0xff] 0.0
          %837 = vst [vmem:[#allocation2 + $0xc38] sm:$0xff] 0.0
          %838 = vst [vmem:[#allocation2 + $0xc40] sm:$0xff] 0.0
          %839 = vst [vmem:[#allocation2 + $0xc48] sm:$0xff] 0.0
          %840 = vst [vmem:[#allocation2 + $0xc50] sm:$0xff] 0.0
          %841 = vst [vmem:[#allocation2 + $0xc58] sm:$0xff] 0.0
          %842 = vst [vmem:[#allocation2 + $0xc60] sm:$0xff] 0.0
          %843 = vst [vmem:[#allocation2 + $0xc68] sm:$0xff] 0.0
          %844 = vst [vmem:[#allocation2 + $0xc70] sm:$0xff] 0.0
          %845 = vst [vmem:[#allocation2 + $0xc78] sm:$0xff] 0.0
          %846 = vst [vmem:[#allocation2 + $0xc80] sm:$0xff] 0.0
          %847 = vst [vmem:[#allocation2 + $0xc88] sm:$0xff] 0.0
          %848 = vst [vmem:[#allocation2 + $0xc90] sm:$0xff] 0.0
          %849 = vst [vmem:[#allocation2 + $0xc98] sm:$0xff] 0.0
          %850 = vst [vmem:[#allocation2 + $0xca0] sm:$0xff] 0.0
          %851 = vst [vmem:[#allocation2 + $0xca8] sm:$0xff] 0.0
          %852 = vst [vmem:[#allocation2 + $0xcb0] sm:$0xff] 0.0
          %853 = vst [vmem:[#allocation2 + $0xcb8] sm:$0xff] 0.0
          %854 = vst [vmem:[#allocation2 + $0xcc0] sm:$0xff] 0.0
          %855 = vst [vmem:[#allocation2 + $0xcc8] sm:$0xff] 0.0
          %856 = vst [vmem:[#allocation2 + $0xcd0] sm:$0xff] 0.0
          %857 = vst [vmem:[#allocation2 + $0xcd8] sm:$0xff] 0.0
          %858 = vst [vmem:[#allocation2 + $0xce0] sm:$0xff] 0.0
          %859 = vst [vmem:[#allocation2 + $0xce8] sm:$0xff] 0.0
          %860 = vst [vmem:[#allocation2 + $0xcf0] sm:$0xff] 0.0
          %861 = vst [vmem:[#allocation2 + $0xcf8] sm:$0xff] 0.0
          %862 = vst [vmem:[#allocation2 + $0xd00] sm:$0xff] 0.0
          %863 = vst [vmem:[#allocation2 + $0xd08] sm:$0xff] 0.0
          %864 = vst [vmem:[#allocation2 + $0xd10] sm:$0xff] 0.0
          %865 = vst [vmem:[#allocation2 + $0xd18] sm:$0xff] 0.0
          %866 = vst [vmem:[#allocation2 + $0xd20] sm:$0xff] 0.0
          %867 = vst [vmem:[#allocation2 + $0xd28] sm:$0xff] 0.0
          %868 = vst [vmem:[#allocation2 + $0xd30] sm:$0xff] 0.0
          %869 = vst [vmem:[#allocation2 + $0xd38] sm:$0xff] 0.0
          %870 = vst [vmem:[#allocation2 + $0xd40] sm:$0xff] 0.0
          %871 = vst [vmem:[#allocation2 + $0xd48] sm:$0xff] 0.0
          %872 = vst [vmem:[#allocation2 + $0xd50] sm:$0xff] 0.0
          %873 = vst [vmem:[#allocation2 + $0xd58] sm:$0xff] 0.0
          %874 = vst [vmem:[#allocation2 + $0xd60] sm:$0xff] 0.0
          %875 = vst [vmem:[#allocation2 + $0xd68] sm:$0xff] 0.0
          %876 = vst [vmem:[#allocation2 + $0xd70] sm:$0xff] 0.0
          %877 = vst [vmem:[#allocation2 + $0xd78] sm:$0xff] 0.0
          %878 = vst [vmem:[#allocation2 + $0xd80] sm:$0xff] 0.0
          %879 = vst [vmem:[#allocation2 + $0xd88] sm:$0xff] 0.0
          %880 = vst [vmem:[#allocation2 + $0xd90] sm:$0xff] 0.0
          %881 = vst [vmem:[#allocation2 + $0xd98] sm:$0xff] 0.0
          %882 = vst [vmem:[#allocation2 + $0xda0] sm:$0xff] 0.0
          %883 = vst [vmem:[#allocation2 + $0xda8] sm:$0xff] 0.0
          %884 = vst [vmem:[#allocation2 + $0xdb0] sm:$0xff] 0.0
          %885 = vst [vmem:[#allocation2 + $0xdb8] sm:$0xff] 0.0
          %886 = vst [vmem:[#allocation2 + $0xdc0] sm:$0xff] 0.0
          %887 = vst [vmem:[#allocation2 + $0xdc8] sm:$0xff] 0.0
          %888 = vst [vmem:[#allocation2 + $0xdd0] sm:$0xff] 0.0
          %889 = vst [vmem:[#allocation2 + $0xdd8] sm:$0xff] 0.0
          %890 = vst [vmem:[#allocation2 + $0xde0] sm:$0xff] 0.0
          %891 = vst [vmem:[#allocation2 + $0xde8] sm:$0xff] 0.0
          %892 = vst [vmem:[#allocation2 + $0xdf0] sm:$0xff] 0.0
          %893 = vst [vmem:[#allocation2 + $0xdf8] sm:$0xff] 0.0
          %894 = vst [vmem:[#allocation2 + $0xe00] sm:$0xff] 0.0
          %895 = vst [vmem:[#allocation2 + $0xe08] sm:$0xff] 0.0
          %896 = vst [vmem:[#allocation2 + $0xe10] sm:$0xff] 0.0
          %897 = vst [vmem:[#allocation2 + $0xe18] sm:$0xff] 0.0
          %898 = vst [vmem:[#allocation2 + $0xe20] sm:$0xff] 0.0
          %899 = vst [vmem:[#allocation2 + $0xe28] sm:$0xff] 0.0
          %900 = vst [vmem:[#allocation2 + $0xe30] sm:$0xff] 0.0
          %901 = vst [vmem:[#allocation2 + $0xe38] sm:$0xff] 0.0
          %902 = vst [vmem:[#allocation2 + $0xe40] sm:$0xff] 0.0
          %903 = vst [vmem:[#allocation2 + $0xe48] sm:$0xff] 0.0
          %904 = vst [vmem:[#allocation2 + $0xe50] sm:$0xff] 0.0
          %905 = vst [vmem:[#allocation2 + $0xe58] sm:$0xff] 0.0
          %906 = vst [vmem:[#allocation2 + $0xe60] sm:$0xff] 0.0
          %907 = vst [vmem:[#allocation2 + $0xe68] sm:$0xff] 0.0
          %908 = vst [vmem:[#allocation2 + $0xe70] sm:$0xff] 0.0
          %909 = vst [vmem:[#allocation2 + $0xe78] sm:$0xff] 0.0
          %910 = vst [vmem:[#allocation2 + $0xe80] sm:$0xff] 0.0
          %911 = vst [vmem:[#allocation2 + $0xe88] sm:$0xff] 0.0
          %912 = vst [vmem:[#allocation2 + $0xe90] sm:$0xff] 0.0
          %913 = vst [vmem:[#allocation2 + $0xe98] sm:$0xff] 0.0
          %914 = vst [vmem:[#allocation2 + $0xea0] sm:$0xff] 0.0
          %915 = vst [vmem:[#allocation2 + $0xea8] sm:$0xff] 0.0
          %916 = vst [vmem:[#allocation2 + $0xeb0] sm:$0xff] 0.0
          %917 = vst [vmem:[#allocation2 + $0xeb8] sm:$0xff] 0.0
          %918 = vst [vmem:[#allocation2 + $0xec0] sm:$0xff] 0.0
          %919 = vst [vmem:[#allocation2 + $0xec8] sm:$0xff] 0.0
          %920 = vst [vmem:[#allocation2 + $0xed0] sm:$0xff] 0.0
          %921 = vst [vmem:[#allocation2 + $0xed8] sm:$0xff] 0.0
          %922 = vst [vmem:[#allocation2 + $0xee0] sm:$0xff] 0.0
          %923 = vst [vmem:[#allocation2 + $0xee8] sm:$0xff] 0.0
          %924 = vst [vmem:[#allocation2 + $0xef0] sm:$0xff] 0.0
          %925 = vst [vmem:[#allocation2 + $0xef8] sm:$0xff] 0.0
          %926 = vst [vmem:[#allocation2 + $0xf00] sm:$0xff] 0.0
          %927 = vst [vmem:[#allocation2 + $0xf08] sm:$0xff] 0.0
          %928 = vst [vmem:[#allocation2 + $0xf10] sm:$0xff] 0.0
          %929 = vst [vmem:[#allocation2 + $0xf18] sm:$0xff] 0.0
          %930 = vst [vmem:[#allocation2 + $0xf20] sm:$0xff] 0.0
          %931 = vst [vmem:[#allocation2 + $0xf28] sm:$0xff] 0.0
          %932 = vst [vmem:[#allocation2 + $0xf30] sm:$0xff] 0.0
          %933 = vst [vmem:[#allocation2 + $0xf38] sm:$0xff] 0.0
          %934 = vst [vmem:[#allocation2 + $0xf40] sm:$0xff] 0.0
          %935 = vst [vmem:[#allocation2 + $0xf48] sm:$0xff] 0.0
          %936 = vst [vmem:[#allocation2 + $0xf50] sm:$0xff] 0.0
          %937 = vst [vmem:[#allocation2 + $0xf58] sm:$0xff] 0.0
          %938 = vst [vmem:[#allocation2 + $0xf60] sm:$0xff] 0.0
          %939 = vst [vmem:[#allocation2 + $0xf68] sm:$0xff] 0.0
          %940 = vst [vmem:[#allocation2 + $0xf70] sm:$0xff] 0.0
          %941 = vst [vmem:[#allocation2 + $0xf78] sm:$0xff] 0.0
          %942 = vst [vmem:[#allocation2 + $0xf80] sm:$0xff] 0.0
          %943 = vst [vmem:[#allocation2 + $0xf88] sm:$0xff] 0.0
          %944 = vst [vmem:[#allocation2 + $0xf90] sm:$0xff] 0.0
          %945 = vst [vmem:[#allocation2 + $0xf98] sm:$0xff] 0.0
          %946 = vst [vmem:[#allocation2 + $0xfa0] sm:$0xff] 0.0
          %947 = vst [vmem:[#allocation2 + $0xfa8] sm:$0xff] 0.0
          %948 = vst [vmem:[#allocation2 + $0xfb0] sm:$0xff] 0.0
          %949 = vst [vmem:[#allocation2 + $0xfb8] sm:$0xff] 0.0
          %950 = vst [vmem:[#allocation2 + $0xfc0] sm:$0xff] 0.0
          %951 = vst [vmem:[#allocation2 + $0xfc8] sm:$0xff] 0.0
          %952 = vst [vmem:[#allocation2 + $0xfd0] sm:$0xff] 0.0
          %953 = vst [vmem:[#allocation2 + $0xfd8] sm:$0xff] 0.0
          %954 = vst [vmem:[#allocation2 + $0xfe0] sm:$0xff] 0.0
          %955 = vst [vmem:[#allocation2 + $0xfe8] sm:$0xff] 0.0
          %956 = vst [vmem:[#allocation2 + $0xff0] sm:$0xff] 0.0
          %957 = vst [vmem:[#allocation2 + $0xff8] sm:$0xff] 0.0
          %v958 = vld [vmem:[%s440] sm:$0xff]
          %v959 = vld [vmem:[%s440 + $0x8] sm:$0xff]
          %v960 = vld [vmem:[%s440 + $0x10] sm:$0xff]
          %v961 = vld [vmem:[%s440 + $0x18] sm:$0xff]
          %v962 = vld [vmem:[%s440 + $0x20] sm:$0xff]
          %v963 = vld [vmem:[%s440 + $0x28] sm:$0xff]
          %v964 = vld [vmem:[%s440 + $0x30] sm:$0xff]
          %v965 = vld [vmem:[%s440 + $0x38] sm:$0xff]
          %v966 = vld [vmem:[%s440 + $0x40] sm:$0xff]
          %v967 = vld [vmem:[%s440 + $0x48] sm:$0xff]
          %v968 = vld [vmem:[%s440 + $0x50] sm:$0xff]
          %v969 = vld [vmem:[%s440 + $0x58] sm:$0xff]
          %v970 = vld [vmem:[%s440 + $0x60] sm:$0xff]
          %v971 = vld [vmem:[%s440 + $0x68] sm:$0xff]
          %v972 = vld [vmem:[%s440 + $0x70] sm:$0xff]
          %v973 = vld [vmem:[%s440 + $0x78] sm:$0xff]
          %v974 = vld [vmem:[%s440 + $0x80] sm:$0xff]
          %v975 = vld [vmem:[%s440 + $0x88] sm:$0xff]
          %v976 = vld [vmem:[%s440 + $0x90] sm:$0xff]
          %v977 = vld [vmem:[%s440 + $0x98] sm:$0xff]
          %v978 = vld [vmem:[%s440 + $0xa0] sm:$0xff]
          %v979 = vld [vmem:[%s440 + $0xa8] sm:$0xff]
          %v980 = vld [vmem:[%s440 + $0xb0] sm:$0xff]
          %v981 = vld [vmem:[%s440 + $0xb8] sm:$0xff]
          %v982 = vld [vmem:[%s440 + $0xc0] sm:$0xff]
          %v983 = vld [vmem:[%s440 + $0xc8] sm:$0xff]
          %v984 = vld [vmem:[%s440 + $0xd0] sm:$0xff]
          %v985 = vld [vmem:[%s440 + $0xd8] sm:$0xff]
          %v986 = vld [vmem:[%s440 + $0xe0] sm:$0xff]
          %v987 = vld [vmem:[%s440 + $0xe8] sm:$0xff]
          %v988 = vld [vmem:[%s440 + $0xf0] sm:$0xff]
          %v989 = vld [vmem:[%s440 + $0xf8] sm:$0xff]
          %vm990 = vcmask 31744
          %v991 = vsel %vm990, %v958, 0.0
          %v992 = vsel %vm990, %v959, 0.0
          %v993 = vsel %vm990, %v960, 0.0
          %v994 = vsel %vm990, %v961, 0.0
          %v995 = vsel %vm990, %v962, 0.0
          %v996 = vsel %vm990, %v963, 0.0
          %v997 = vsel %vm990, %v964, 0.0
          %v998 = vsel %vm990, %v965, 0.0
          %v999 = vsel %vm990, %v966, 0.0
          %v1000 = vsel %vm990, %v967, 0.0
          %v1001 = vsel %vm990, %v968, 0.0
          %v1002 = vsel %vm990, %v969, 0.0
          %v1003 = vsel %vm990, %v970, 0.0
          %v1004 = vsel %vm990, %v971, 0.0
          %v1005 = vsel %vm990, %v972, 0.0
          %v1006 = vsel %vm990, %v973, 0.0
          %v1007 = vsel %vm990, %v974, 0.0
          %v1008 = vsel %vm990, %v975, 0.0
          %v1009 = vsel %vm990, %v976, 0.0
          %v1010 = vsel %vm990, %v977, 0.0
          %v1011 = vsel %vm990, %v978, 0.0
          %v1012 = vsel %vm990, %v979, 0.0
          %v1013 = vsel %vm990, %v980, 0.0
          %v1014 = vsel %vm990, %v981, 0.0
          %v1015 = vsel %vm990, %v982, 0.0
          %v1016 = vsel %vm990, %v983, 0.0
          %v1017 = vsel %vm990, %v984, 0.0
          %v1018 = vsel %vm990, %v985, 0.0
          %v1019 = vsel %vm990, %v986, 0.0
          %v1020 = vsel %vm990, %v987, 0.0
          %v1021 = vsel %vm990, %v988, 0.0
          %v1022 = vsel %vm990, %v989, 0.0
          %s1023 = scalar_lea.vmem [#allocation2], 1536
          %1024 = vst [vmem:[%s1023 + $0x18] sm:$0xff] %v991
          %1025 = vst [vmem:[%s1023 + $0x20] sm:$0xff] %v992
          %1026 = vst [vmem:[%s1023 + $0x58] sm:$0xff] %v993
          %1027 = vst [vmem:[%s1023 + $0x60] sm:$0xff] %v994
          %1028 = vst [vmem:[%s1023 + $0x98] sm:$0xff] %v995
          %1029 = vst [vmem:[%s1023 + $0xa0] sm:$0xff] %v996
          %1030 = vst [vmem:[%s1023 + $0xd8] sm:$0xff] %v997
          %1031 = vst [vmem:[%s1023 + $0xe0] sm:$0xff] %v998
          %1032 = vst [vmem:[%s1023 + $0x118] sm:$0xff] %v999
          %1033 = vst [vmem:[%s1023 + $0x120] sm:$0xff] %v1000
          %1034 = vst [vmem:[%s1023 + $0x158] sm:$0xff] %v1001
          %1035 = vst [vmem:[%s1023 + $0x160] sm:$0xff] %v1002
          %1036 = vst [vmem:[%s1023 + $0x198] sm:$0xff] %v1003
          %1037 = vst [vmem:[%s1023 + $0x1a0] sm:$0xff] %v1004
          %1038 = vst [vmem:[%s1023 + $0x1d8] sm:$0xff] %v1005
          %1039 = vst [vmem:[%s1023 + $0x1e0] sm:$0xff] %v1006
          %1040 = vst [vmem:[%s1023 + $0x218] sm:$0xff] %v1007
          %1041 = vst [vmem:[%s1023 + $0x220] sm:$0xff] %v1008
          %1042 = vst [vmem:[%s1023 + $0x258] sm:$0xff] %v1009
          %1043 = vst [vmem:[%s1023 + $0x260] sm:$0xff] %v1010
          %1044 = vst [vmem:[%s1023 + $0x298] sm:$0xff] %v1011
          %1045 = vst [vmem:[%s1023 + $0x2a0] sm:$0xff] %v1012
          %1046 = vst [vmem:[%s1023 + $0x2d8] sm:$0xff] %v1013
          %1047 = vst [vmem:[%s1023 + $0x2e0] sm:$0xff] %v1014
          %1048 = vst [vmem:[%s1023 + $0x318] sm:$0xff] %v1015
          %1049 = vst [vmem:[%s1023 + $0x320] sm:$0xff] %v1016
          %1050 = vst [vmem:[%s1023 + $0x358] sm:$0xff] %v1017
          %1051 = vst [vmem:[%s1023 + $0x360] sm:$0xff] %v1018
          %1052 = vst [vmem:[%s1023 + $0x398] sm:$0xff] %v1019
          %1053 = vst [vmem:[%s1023 + $0x3a0] sm:$0xff] %v1020
          %1054 = vst [vmem:[%s1023 + $0x3d8] sm:$0xff] %v1021
          %1055 = vst [vmem:[%s1023 + $0x3e0] sm:$0xff] %v1022
          %v1056 = vadd.f32 %v991, %v992
          %v1057 = vadd.f32 %v1056, %v993
          %v1058 = vadd.f32 %v1057, %v994
          %v1059 = vadd.f32 %v1058, %v995
          %v1060 = vadd.f32 %v1059, %v996
          %v1061 = vadd.f32 %v1060, %v997
          %v1062 = vadd.f32 %v1061, %v998
          %v1063 = vadd.f32 %v1062, %v999
          %v1064 = vadd.f32 %v1063, %v1000
          %v1065 = vadd.f32 %v1064, %v1001
          %v1066 = vadd.f32 %v1065, %v1002
          %v1067 = vadd.f32 %v1066, %v1003
          %v1068 = vadd.f32 %v1067, %v1004
          %v1069 = vadd.f32 %v1068, %v1005
          %v1070 = vadd.f32 %v1069, %v1006
          %v1071 = vadd.f32 %v1070, %v1007
          %v1072 = vadd.f32 %v1071, %v1008
          %v1073 = vadd.f32 %v1072, %v1009
          %v1074 = vadd.f32 %v1073, %v1010
          %v1075 = vadd.f32 %v1074, %v1011
          %v1076 = vadd.f32 %v1075, %v1012
          %v1077 = vadd.f32 %v1076, %v1013
          %v1078 = vadd.f32 %v1077, %v1014
          %v1079 = vadd.f32 %v1078, %v1015
          %v1080 = vadd.f32 %v1079, %v1016
          %v1081 = vadd.f32 %v1080, %v1017
          %v1082 = vadd.f32 %v1081, %v1018
          %v1083 = vadd.f32 %v1082, %v1019
          %v1084 = vadd.f32 %v1083, %v1020
          %v1085 = vadd.f32 %v1084, %v1021
          %v1086 = vadd.f32 %v1085, %v1022
          %v1087 = vrot.slane %v1086, 4
          %v1088 = vadd.f32 %v1086, %v1087
          %v1089 = vrot.slane %v1088, 2
          %v1090 = vadd.f32 %v1088, %v1089
          %v1091 = vrot.slane %v1090, 1
          %v1092 = vadd.f32 %v1090, %v1091
          %v1093 = vrcp.pop 256.0
          %v1094 = vmul.f32 256.0, %v1093
          %v1095 = vsub.f32 1.0, %v1094
          %v1096 = vmul.f32 %v1093, %v1095
          %v1097 = vadd.f32 %v1093, %v1096
          %vm1098 = vweird.f32 %v1093
          %v1099 = vsel %vm1098, %v1093, %v1097
          %v1100 = vmul.f32 %v1092, %v1099
          %v1101 = vpack.c.bf16 %v1100, %v1100
          %v1102 = vld [vmem:[#allocation9] sm:$0xf]
          %v1103 = vld [vmem:[#allocation9 + $0x4] sm:$0xf]
          %v1104 = vld [vmem:[#allocation9 + $0x8] sm:$0xf]
          %v1105 = vld [vmem:[#allocation9 + $0xc] sm:$0xf]
          %v1106 = vld [vmem:[#allocation9 + $0x10] sm:$0xf]
          %v1107 = vld [vmem:[#allocation9 + $0x14] sm:$0xf]
          %v1108 = vld [vmem:[#allocation9 + $0x18] sm:$0xf]
          %v1109 = vld [vmem:[#allocation9 + $0x1c] sm:$0xf]
          %v1110 = vld [vmem:[#allocation9 + $0x20] sm:$0xf]
          %v1111 = vld [vmem:[#allocation9 + $0x24] sm:$0xf]
          %v1112 = vld [vmem:[#allocation9 + $0x28] sm:$0xf]
          %v1113 = vld [vmem:[#allocation9 + $0x2c] sm:$0xf]
          %v1114 = vld [vmem:[#allocation9 + $0x30] sm:$0xf]
          %v1115 = vld [vmem:[#allocation9 + $0x34] sm:$0xf]
          %v1116 = vld [vmem:[#allocation9 + $0x38] sm:$0xf]
          %v1117 = vld [vmem:[#allocation9 + $0x3c] sm:$0xf]
          %v1134 = vunpack.c.l.b16 %v1102
          %v1135 = vunpack.c.l.b16 %v1103
          %v1136 = vunpack.c.l.b16 %v1104
          %v1137 = vunpack.c.l.b16 %v1105
          %v1138 = vunpack.c.l.b16 %v1106
          %v1139 = vunpack.c.l.b16 %v1107
          %v1140 = vunpack.c.l.b16 %v1108
          %v1141 = vunpack.c.l.b16 %v1109
          %v1142 = vunpack.c.l.b16 %v1110
          %v1143 = vunpack.c.l.b16 %v1111
          %v1144 = vunpack.c.l.b16 %v1112
          %v1145 = vunpack.c.l.b16 %v1113
          %v1146 = vunpack.c.l.b16 %v1114
          %v1147 = vunpack.c.l.b16 %v1115
          %v1148 = vunpack.c.l.b16 %v1116
          %v1149 = vunpack.c.l.b16 %v1117
          %v1150 = vpack.c.b16 %v1135, %v1134
          %v1151 = vpack.c.b16 %v1137, %v1136
          %v1152 = vpack.c.b16 %v1139, %v1138
          %v1153 = vpack.c.b16 %v1141, %v1140
          %v1154 = vpack.c.b16 %v1143, %v1142
          %v1155 = vpack.c.b16 %v1145, %v1144
          %v1156 = vpack.c.b16 %v1147, %v1146
          %v1157 = vpack.c.b16 %v1149, %v1148
          %1166 = vmatpush.bf16.msra.mxu0 %v1157
          %1167 = vmatpush.bf16.msra.mxu0 %v1156
          %1168 = vmatpush.bf16.msra.mxu0 %v1155
          %1169 = vmatpush.bf16.msra.mxu0 %v1154
          %1170 = vmatpush.bf16.msra.mxu0 %v1153
          %1171 = vmatpush.bf16.msra.mxu0 %v1152
          %1172 = vmatpush.bf16.msra.mxu0 %v1151
          %1173 = vmatpush.bf16.msra.mxu0 %v1150
          %1174 = vmatmul.bf16.gmra.mxu0 %v1101
          %v1175 = vpop.f32.mrf.mxu0
          %v1176 = vadd.f32 0.0, %v1175
          %v1177 = vpop.f32.mrf.mxu0
          %1178 = vdwg.mxu0
          %v1179 = vld [vmem:[#allocation12 + $0x4] sm:$0x1]
          %v1180 = vld [vmem:[#allocation13 + $0x4] sm:$0x1]
          %v1181 = vmul.f32 %v1176, %v1179
          %v1182 = vadd.f32 %v1181, %v1180
          %v1183 = vmax.f32 %v1182, 0.0
          %v1184 = vpack.c.bf16 %v1183, %v1183
          %s1185 = scalar_lea.vmem [#allocation10], 256
          %v1186 = vld [vmem:[%s1185] sm:$0xf]
          %v1187 = vld [vmem:[%s1185 + $0x4] sm:$0xf]
          %v1188 = vld [vmem:[%s1185 + $0x8] sm:$0xf]
          %v1189 = vld [vmem:[%s1185 + $0xc] sm:$0xf]
          %v1190 = vld [vmem:[%s1185 + $0x10] sm:$0xf]
          %v1191 = vld [vmem:[%s1185 + $0x14] sm:$0xf]
          %v1192 = vld [vmem:[%s1185 + $0x18] sm:$0xf]
          %v1193 = vld [vmem:[%s1185 + $0x1c] sm:$0xf]
          %v1194 = vld [vmem:[%s1185 + $0x20] sm:$0xf]
          %v1195 = vld [vmem:[%s1185 + $0x24] sm:$0xf]
          %v1196 = vld [vmem:[%s1185 + $0x28] sm:$0xf]
          %v1197 = vld [vmem:[%s1185 + $0x2c] sm:$0xf]
          %v1198 = vld [vmem:[%s1185 + $0x30] sm:$0xf]
          %v1199 = vld [vmem:[%s1185 + $0x34] sm:$0xf]
          %v1200 = vld [vmem:[%s1185 + $0x38] sm:$0xf]
          %v1201 = vld [vmem:[%s1185 + $0x3c] sm:$0xf]
          %v1218 = vunpack.c.l.b16 %v1186
          %v1219 = vunpack.c.l.b16 %v1187
          %v1220 = vunpack.c.l.b16 %v1188
          %v1221 = vunpack.c.l.b16 %v1189
          %v1222 = vunpack.c.l.b16 %v1190
          %v1223 = vunpack.c.l.b16 %v1191
          %v1224 = vunpack.c.l.b16 %v1192
          %v1225 = vunpack.c.l.b16 %v1193
          %v1226 = vunpack.c.l.b16 %v1194
          %v1227 = vunpack.c.l.b16 %v1195
          %v1228 = vunpack.c.l.b16 %v1196
          %v1229 = vunpack.c.l.b16 %v1197
          %v1230 = vunpack.c.l.b16 %v1198
          %v1231 = vunpack.c.l.b16 %v1199
          %v1232 = vunpack.c.l.b16 %v1200
          %v1233 = vunpack.c.l.b16 %v1201
          %v1234 = vpack.c.b16 %v1219, %v1218
          %v1235 = vpack.c.b16 %v1221, %v1220
          %v1236 = vpack.c.b16 %v1223, %v1222
          %v1237 = vpack.c.b16 %v1225, %v1224
          %v1238 = vpack.c.b16 %v1227, %v1226
          %v1239 = vpack.c.b16 %v1229, %v1228
          %v1240 = vpack.c.b16 %v1231, %v1230
          %v1241 = vpack.c.b16 %v1233, %v1232
          %1250 = vmatpush.bf16.msra.mxu0 %v1241
          %1251 = vmatpush.bf16.msra.mxu0 %v1240
          %1252 = vmatpush.bf16.msra.mxu0 %v1239
          %1253 = vmatpush.bf16.msra.mxu0 %v1238
          %1254 = vmatpush.bf16.msra.mxu0 %v1237
          %1255 = vmatpush.bf16.msra.mxu0 %v1236
          %1256 = vmatpush.bf16.msra.mxu0 %v1235
          %1257 = vmatpush.bf16.msra.mxu0 %v1234
          %1258 = vmatmul.bf16.gmra.mxu0 %v1184
          %v1259 = vpop.f32.mrf.mxu0
          %v1260 = vadd.f32 0.0, %v1259
          %v1261 = vpop.f32.mrf.mxu0
          %1262 = vdwg.mxu0
          %1263 = vst [vmem:[#allocation3] sm:$0x1] %v1260
        $region84: #{tpu_custom_call.1} parent=55 // pred_fallthru
          _
        %s1264 = smul.u32 %s32, 8
        %s1265 = sadd.s32 %s1264, 24
        %s1266 = smul.u32 %s1265, 64
        %s1267 = scalar_lea.vmem [#allocation2], %s1266
        %v1268 = vld [vmem:[%s1267 + $0x18] sm:$0xff]
        %v1269 = vld [vmem:[%s1267 + $0x20] sm:$0xff]
        %v1270 = vld [vmem:[%s1267 + $0x58] sm:$0xff]
        %v1271 = vld [vmem:[%s1267 + $0x60] sm:$0xff]
        %v1272 = vld [vmem:[%s1267 + $0x98] sm:$0xff]
        %v1273 = vld [vmem:[%s1267 + $0xa0] sm:$0xff]
        %v1274 = vld [vmem:[%s1267 + $0xd8] sm:$0xff]
        %v1275 = vld [vmem:[%s1267 + $0xe0] sm:$0xff]
        %v1276 = vld [vmem:[%s1267 + $0x118] sm:$0xff]
        %v1277 = vld [vmem:[%s1267 + $0x120] sm:$0xff]
        %v1278 = vld [vmem:[%s1267 + $0x158] sm:$0xff]
        %v1279 = vld [vmem:[%s1267 + $0x160] sm:$0xff]
        %v1280 = vld [vmem:[%s1267 + $0x198] sm:$0xff]
        %v1281 = vld [vmem:[%s1267 + $0x1a0] sm:$0xff]
        %v1282 = vld [vmem:[%s1267 + $0x1d8] sm:$0xff]
        %v1283 = vld [vmem:[%s1267 + $0x1e0] sm:$0xff]
        %v1284 = vpack.c.bf16 %v1268, %v1268
        %v1285 = vpack.c.bf16 %v1269, %v1269
        %v1286 = vpack.c.bf16 %v1270, %v1270
        %v1287 = vpack.c.bf16 %v1271, %v1271
        %v1288 = vpack.c.bf16 %v1272, %v1272
        %v1289 = vpack.c.bf16 %v1273, %v1273
        %v1290 = vpack.c.bf16 %v1274, %v1274
        %v1291 = vpack.c.bf16 %v1275, %v1275
        %v1292 = vpack.c.bf16 %v1276, %v1276
        %v1293 = vpack.c.bf16 %v1277, %v1277
        %v1294 = vpack.c.bf16 %v1278, %v1278
        %v1295 = vpack.c.bf16 %v1279, %v1279
        %v1296 = vpack.c.bf16 %v1280, %v1280
        %v1297 = vpack.c.bf16 %v1281, %v1281
        %v1298 = vpack.c.bf16 %v1282, %v1282
        %v1299 = vpack.c.bf16 %v1283, %v1283
        %v1300 = vld [vmem:[%s1] sm:$0xf]
        %v1301 = vld [vmem:[%s1 + $0x4] sm:$0xf]
        %v1302 = vld [vmem:[%s1 + $0x8] sm:$0xf]
        %v1303 = vld [vmem:[%s1 + $0xc] sm:$0xf]
        %v1304 = vld [vmem:[%s1 + $0x10] sm:$0xf]
        %v1305 = vld [vmem:[%s1 + $0x14] sm:$0xf]
        %v1306 = vld [vmem:[%s1 + $0x18] sm:$0xf]
        %v1307 = vld [vmem:[%s1 + $0x1c] sm:$0xf]
        %v1308 = vld [vmem:[%s1 + $0x20] sm:$0xf]
        %v1309 = vld [vmem:[%s1 + $0x24] sm:$0xf]
        %v1310 = vld [vmem:[%s1 + $0x28] sm:$0xf]
        %v1311 = vld [vmem:[%s1 + $0x2c] sm:$0xf]
        %v1312 = vld [vmem:[%s1 + $0x30] sm:$0xf]
        %v1313 = vld [vmem:[%s1 + $0x34] sm:$0xf]
        %v1314 = vld [vmem:[%s1 + $0x38] sm:$0xf]
        %v1315 = vld [vmem:[%s1 + $0x3c] sm:$0xf]
        %v1332 = vunpack.c.l.b16 %v1284
        %v1333 = vunpack.c.l.b16 %v1285
        %v1334 = vunpack.c.l.b16 %v1286
        %v1335 = vunpack.c.l.b16 %v1287
        %v1336 = vunpack.c.l.b16 %v1288
        %v1337 = vunpack.c.l.b16 %v1289
        %v1338 = vunpack.c.l.b16 %v1290
        %v1339 = vunpack.c.l.b16 %v1291
        %v1340 = vunpack.c.l.b16 %v1292
        %v1341 = vunpack.c.l.b16 %v1293
        %v1342 = vunpack.c.l.b16 %v1294
        %v1343 = vunpack.c.l.b16 %v1295
        %v1344 = vunpack.c.l.b16 %v1296
        %v1345 = vunpack.c.l.b16 %v1297
        %v1346 = vunpack.c.l.b16 %v1298
        %v1347 = vunpack.c.l.b16 %v1299
        %v1348 = vpack.c.b16 %v1333, %v1332
        %v1349 = vpack.c.b16 %v1335, %v1334
        %v1350 = vpack.c.b16 %v1337, %v1336
        %v1351 = vpack.c.b16 %v1339, %v1338
        %v1352 = vpack.c.b16 %v1341, %v1340
        %v1353 = vpack.c.b16 %v1343, %v1342
        %v1354 = vpack.c.b16 %v1345, %v1344
        %v1355 = vpack.c.b16 %v1347, %v1346
        %v1380 = vunpack.c.l.b16 %v1300
        %v1381 = vunpack.c.l.b16 %v1301
        %v1382 = vunpack.c.l.b16 %v1302
        %v1383 = vunpack.c.l.b16 %v1303
        %v1384 = vunpack.c.l.b16 %v1304
        %v1385 = vunpack.c.l.b16 %v1305
        %v1386 = vunpack.c.l.b16 %v1306
        %v1387 = vunpack.c.l.b16 %v1307
        %v1388 = vunpack.c.l.b16 %v1308
        %v1389 = vunpack.c.l.b16 %v1309
        %v1390 = vunpack.c.l.b16 %v1310
        %v1391 = vunpack.c.l.b16 %v1311
        %v1392 = vunpack.c.l.b16 %v1312
        %v1393 = vunpack.c.l.b16 %v1313
        %v1394 = vunpack.c.l.b16 %v1314
        %v1395 = vunpack.c.l.b16 %v1315
        %v1396 = vpack.c.b16 %v1381, %v1380
        %v1397 = vpack.c.b16 %v1383, %v1382
        %v1398 = vpack.c.b16 %v1385, %v1384
        %v1399 = vpack.c.b16 %v1387, %v1386
        %v1400 = vpack.c.b16 %v1389, %v1388
        %v1401 = vpack.c.b16 %v1391, %v1390
        %v1402 = vpack.c.b16 %v1393, %v1392
        %v1403 = vpack.c.b16 %v1395, %v1394
        %1412 = vmatpush.bf16.msra.mxu0 %v1403
        %1413 = vmatpush.bf16.msra.mxu0 %v1402
        %1414 = vmatpush.bf16.msra.mxu0 %v1401
        %1415 = vmatpush.bf16.msra.mxu0 %v1400
        %1416 = vmatpush.bf16.msra.mxu0 %v1399
        %1417 = vmatpush.bf16.msra.mxu0 %v1398
        %1418 = vmatpush.bf16.msra.mxu0 %v1397
        %1419 = vmatpush.bf16.msra.mxu0 %v1396
        %1420 = vmatmul.bf16.gmra.mxu0 %v1348
        %v1421 = vpop.f32.mrf.mxu0
        %v1422 = vadd.f32 0.0, %v1421
        %v1423 = vpop.f32.mrf.mxu0
        %v1424 = vadd.f32 0.0, %v1423
        %1425 = vmatmul.bf16.gmra.mxu0 %v1349
        %v1426 = vpop.f32.mrf.mxu0
        %v1427 = vadd.f32 0.0, %v1426
        %v1428 = vpop.f32.mrf.mxu0
        %v1429 = vadd.f32 0.0, %v1428
        %1430 = vmatmul.bf16.gmra.mxu0 %v1350
        %v1431 = vpop.f32.mrf.mxu0
        %v1432 = vadd.f32 0.0, %v1431
        %v1433 = vpop.f32.mrf.mxu0
        %v1434 = vadd.f32 0.0, %v1433
        %1435 = vmatmul.bf16.gmra.mxu0 %v1351
        %v1436 = vpop.f32.mrf.mxu0
        %v1437 = vadd.f32 0.0, %v1436
        %v1438 = vpop.f32.mrf.mxu0
        %v1439 = vadd.f32 0.0, %v1438
        %1440 = vmatmul.bf16.gmra.mxu0 %v1352
        %v1441 = vpop.f32.mrf.mxu0
        %v1442 = vadd.f32 0.0, %v1441
        %v1443 = vpop.f32.mrf.mxu0
        %v1444 = vadd.f32 0.0, %v1443
        %1445 = vmatmul.bf16.gmra.mxu0 %v1353
        %v1446 = vpop.f32.mrf.mxu0
        %v1447 = vadd.f32 0.0, %v1446
        %v1448 = vpop.f32.mrf.mxu0
        %v1449 = vadd.f32 0.0, %v1448
        %1450 = vmatmul.bf16.gmra.mxu0 %v1354
        %v1451 = vpop.f32.mrf.mxu0
        %v1452 = vadd.f32 0.0, %v1451
        %v1453 = vpop.f32.mrf.mxu0
        %v1454 = vadd.f32 0.0, %v1453
        %1455 = vmatmul.bf16.gmra.mxu0 %v1355
        %v1456 = vpop.f32.mrf.mxu0
        %v1457 = vadd.f32 0.0, %v1456
        %v1458 = vpop.f32.mrf.mxu0
        %v1459 = vadd.f32 0.0, %v1458
        %1460 = vdwg.mxu0
        %v1461 = vld [vmem:[#allocation12] sm:$0x1]
        %v1462 = vld [vmem:[#allocation13] sm:$0x1]
        %v1463 = vperm.slane %v1461, 0
        %v1464 = vmul.f32 %v1422, %v1463
        %v1465 = vmul.f32 %v1424, %v1463
        %v1466 = vmul.f32 %v1427, %v1463
        %v1467 = vmul.f32 %v1429, %v1463
        %v1468 = vmul.f32 %v1432, %v1463
        %v1469 = vmul.f32 %v1434, %v1463
        %v1470 = vmul.f32 %v1437, %v1463
        %v1471 = vmul.f32 %v1439, %v1463
        %v1472 = vmul.f32 %v1442, %v1463
        %v1473 = vmul.f32 %v1444, %v1463
        %v1474 = vmul.f32 %v1447, %v1463
        %v1475 = vmul.f32 %v1449, %v1463
        %v1476 = vmul.f32 %v1452, %v1463
        %v1477 = vmul.f32 %v1454, %v1463
        %v1478 = vmul.f32 %v1457, %v1463
        %v1479 = vmul.f32 %v1459, %v1463
        %v1480 = vperm.slane %v1462, 0
        %v1481 = vadd.f32 %v1464, %v1480
        %v1482 = vadd.f32 %v1465, %v1480
        %v1483 = vadd.f32 %v1466, %v1480
        %v1484 = vadd.f32 %v1467, %v1480
        %v1485 = vadd.f32 %v1468, %v1480
        %v1486 = vadd.f32 %v1469, %v1480
        %v1487 = vadd.f32 %v1470, %v1480
        %v1488 = vadd.f32 %v1471, %v1480
        %v1489 = vadd.f32 %v1472, %v1480
        %v1490 = vadd.f32 %v1473, %v1480
        %v1491 = vadd.f32 %v1474, %v1480
        %v1492 = vadd.f32 %v1475, %v1480
        %v1493 = vadd.f32 %v1476, %v1480
        %v1494 = vadd.f32 %v1477, %v1480
        %v1495 = vadd.f32 %v1478, %v1480
        %v1496 = vadd.f32 %v1479, %v1480
        %v1497 = vmax.f32 %v1481, 0.0
        %v1498 = vmax.f32 %v1482, 0.0
        %v1499 = vmax.f32 %v1483, 0.0
        %v1500 = vmax.f32 %v1484, 0.0
        %v1501 = vmax.f32 %v1485, 0.0
        %v1502 = vmax.f32 %v1486, 0.0
        %v1503 = vmax.f32 %v1487, 0.0
        %v1504 = vmax.f32 %v1488, 0.0
        %v1505 = vmax.f32 %v1489, 0.0
        %v1506 = vmax.f32 %v1490, 0.0
        %v1507 = vmax.f32 %v1491, 0.0
        %v1508 = vmax.f32 %v1492, 0.0
        %v1509 = vmax.f32 %v1493, 0.0
        %v1510 = vmax.f32 %v1494, 0.0
        %v1511 = vmax.f32 %v1495, 0.0
        %v1512 = vmax.f32 %v1496, 0.0
        %v1513 = vpack.c.bf16 %v1498, %v1497
        %v1514 = vpack.c.bf16 %v1500, %v1499
        %v1515 = vpack.c.bf16 %v1502, %v1501
        %v1516 = vpack.c.bf16 %v1504, %v1503
        %v1517 = vpack.c.bf16 %v1506, %v1505
        %v1518 = vpack.c.bf16 %v1508, %v1507
        %v1519 = vpack.c.bf16 %v1510, %v1509
        %v1520 = vpack.c.bf16 %v1512, %v1511
        %v1521 = vld [vmem:[#allocation10] sm:$0xf]
        %v1522 = vld [vmem:[#allocation10 + $0x4] sm:$0xf]
        %v1523 = vld [vmem:[#allocation10 + $0x8] sm:$0xf]
        %v1524 = vld [vmem:[#allocation10 + $0xc] sm:$0xf]
        %v1525 = vld [vmem:[#allocation10 + $0x10] sm:$0xf]
        %v1526 = vld [vmem:[#allocation10 + $0x14] sm:$0xf]
        %v1527 = vld [vmem:[#allocation10 + $0x18] sm:$0xf]
        %v1528 = vld [vmem:[#allocation10 + $0x1c] sm:$0xf]
        %v1529 = vld [vmem:[#allocation10 + $0x20] sm:$0xf]
        %v1530 = vld [vmem:[#allocation10 + $0x24] sm:$0xf]
        %v1531 = vld [vmem:[#allocation10 + $0x28] sm:$0xf]
        %v1532 = vld [vmem:[#allocation10 + $0x2c] sm:$0xf]
        %v1533 = vld [vmem:[#allocation10 + $0x30] sm:$0xf]
        %v1534 = vld [vmem:[#allocation10 + $0x34] sm:$0xf]
        %v1535 = vld [vmem:[#allocation10 + $0x38] sm:$0xf]
        %v1536 = vld [vmem:[#allocation10 + $0x3c] sm:$0xf]
        %s1537 = sadd.s32 %s1264, 18
        %s1538 = smul.u32 %s1537, 64
        %s1539 = scalar_lea.vmem [#allocation2], %s1538
        %v1540 = vld [vmem:[%s1539 + $0x12] sm:$0xff]
        %v1541 = vld [vmem:[%s1539 + $0x1a] sm:$0xff]
        %v1542 = vld [vmem:[%s1539 + $0x52] sm:$0xff]
        %v1543 = vld [vmem:[%s1539 + $0x5a] sm:$0xff]
        %v1544 = vld [vmem:[%s1539 + $0x92] sm:$0xff]
        %v1545 = vld [vmem:[%s1539 + $0x9a] sm:$0xff]
        %v1546 = vld [vmem:[%s1539 + $0xd2] sm:$0xff]
        %v1547 = vld [vmem:[%s1539 + $0xda] sm:$0xff]
        %v1548 = vld [vmem:[%s1539 + $0x112] sm:$0xff]
        %v1549 = vld [vmem:[%s1539 + $0x11a] sm:$0xff]
        %v1550 = vld [vmem:[%s1539 + $0x152] sm:$0xff]
        %v1551 = vld [vmem:[%s1539 + $0x15a] sm:$0xff]
        %v1552 = vld [vmem:[%s1539 + $0x192] sm:$0xff]
        %v1553 = vld [vmem:[%s1539 + $0x19a] sm:$0xff]
        %v1554 = vld [vmem:[%s1539 + $0x1d2] sm:$0xff]
        %v1555 = vld [vmem:[%s1539 + $0x1da] sm:$0xff]
        %v1556 = vpack.c.bf16 %v1540, %v1540
        %v1557 = vpack.c.bf16 %v1541, %v1541
        %v1558 = vpack.c.bf16 %v1542, %v1542
        %v1559 = vpack.c.bf16 %v1543, %v1543
        %v1560 = vpack.c.bf16 %v1544, %v1544
        %v1561 = vpack.c.bf16 %v1545, %v1545
        %v1562 = vpack.c.bf16 %v1546, %v1546
        %v1563 = vpack.c.bf16 %v1547, %v1547
        %v1564 = vpack.c.bf16 %v1548, %v1548
        %v1565 = vpack.c.bf16 %v1549, %v1549
        %v1566 = vpack.c.bf16 %v1550, %v1550
        %v1567 = vpack.c.bf16 %v1551, %v1551
        %v1568 = vpack.c.bf16 %v1552, %v1552
        %v1569 = vpack.c.bf16 %v1553, %v1553
        %v1570 = vpack.c.bf16 %v1554, %v1554
        %v1571 = vpack.c.bf16 %v1555, %v1555
        %v1572 = vld [vmem:[%s1539 + $0x18] sm:$0xff]
        %v1573 = vld [vmem:[%s1539 + $0x20] sm:$0xff]
        %v1574 = vld [vmem:[%s1539 + $0x58] sm:$0xff]
        %v1575 = vld [vmem:[%s1539 + $0x60] sm:$0xff]
        %v1576 = vld [vmem:[%s1539 + $0x98] sm:$0xff]
        %v1577 = vld [vmem:[%s1539 + $0xa0] sm:$0xff]
        %v1578 = vld [vmem:[%s1539 + $0xd8] sm:$0xff]
        %v1579 = vld [vmem:[%s1539 + $0xe0] sm:$0xff]
        %v1580 = vld [vmem:[%s1539 + $0x118] sm:$0xff]
        %v1581 = vld [vmem:[%s1539 + $0x120] sm:$0xff]
        %v1582 = vld [vmem:[%s1539 + $0x158] sm:$0xff]
        %v1583 = vld [vmem:[%s1539 + $0x160] sm:$0xff]
        %v1584 = vld [vmem:[%s1539 + $0x198] sm:$0xff]
        %v1585 = vld [vmem:[%s1539 + $0x1a0] sm:$0xff]
        %v1586 = vld [vmem:[%s1539 + $0x1d8] sm:$0xff]
        %v1587 = vld [vmem:[%s1539 + $0x1e0] sm:$0xff]
        %v1588 = vpack.c.bf16 %v1572, %v1572
        %v1589 = vpack.c.bf16 %v1573, %v1573
        %v1590 = vpack.c.bf16 %v1574, %v1574
        %v1591 = vpack.c.bf16 %v1575, %v1575
        %v1592 = vpack.c.bf16 %v1576, %v1576
        %v1593 = vpack.c.bf16 %v1577, %v1577
        %v1594 = vpack.c.bf16 %v1578, %v1578
        %v1595 = vpack.c.bf16 %v1579, %v1579
        %v1596 = vpack.c.bf16 %v1580, %v1580
        %v1597 = vpack.c.bf16 %v1581, %v1581
        %v1598 = vpack.c.bf16 %v1582, %v1582
        %v1599 = vpack.c.bf16 %v1583, %v1583
        %v1600 = vpack.c.bf16 %v1584, %v1584
        %v1601 = vpack.c.bf16 %v1585, %v1585
        %v1602 = vpack.c.bf16 %v1586, %v1586
        %v1603 = vpack.c.bf16 %v1587, %v1587
        %v1604 = vld [vmem:[%s1539 + $0x1e] sm:$0xff]
        %v1605 = vld [vmem:[%s1539 + $0x26] sm:$0xff]
        %v1606 = vld [vmem:[%s1539 + $0x5e] sm:$0xff]
        %v1607 = vld [vmem:[%s1539 + $0x66] sm:$0xff]
        %v1608 = vld [vmem:[%s1539 + $0x9e] sm:$0xff]
        %v1609 = vld [vmem:[%s1539 + $0xa6] sm:$0xff]
        %v1610 = vld [vmem:[%s1539 + $0xde] sm:$0xff]
        %v1611 = vld [vmem:[%s1539 + $0xe6] sm:$0xff]
        %v1612 = vld [vmem:[%s1539 + $0x11e] sm:$0xff]
        %v1613 = vld [vmem:[%s1539 + $0x126] sm:$0xff]
        %v1614 = vld [vmem:[%s1539 + $0x15e] sm:$0xff]
        %v1615 = vld [vmem:[%s1539 + $0x166] sm:$0xff]
        %v1616 = vld [vmem:[%s1539 + $0x19e] sm:$0xff]
        %v1617 = vld [vmem:[%s1539 + $0x1a6] sm:$0xff]
        %v1618 = vld [vmem:[%s1539 + $0x1de] sm:$0xff]
        %v1619 = vld [vmem:[%s1539 + $0x1e6] sm:$0xff]
        %v1620 = vpack.c.bf16 %v1604, %v1604
        %v1621 = vpack.c.bf16 %v1605, %v1605
        %v1622 = vpack.c.bf16 %v1606, %v1606
        %v1623 = vpack.c.bf16 %v1607, %v1607
        %v1624 = vpack.c.bf16 %v1608, %v1608
        %v1625 = vpack.c.bf16 %v1609, %v1609
        %v1626 = vpack.c.bf16 %v1610, %v1610
        %v1627 = vpack.c.bf16 %v1611, %v1611
        %v1628 = vpack.c.bf16 %v1612, %v1612
        %v1629 = vpack.c.bf16 %v1613, %v1613
        %v1630 = vpack.c.bf16 %v1614, %v1614
        %v1631 = vpack.c.bf16 %v1615, %v1615
        %v1632 = vpack.c.bf16 %v1616, %v1616
        %v1633 = vpack.c.bf16 %v1617, %v1617
        %v1634 = vpack.c.bf16 %v1618, %v1618
        %v1635 = vpack.c.bf16 %v1619, %v1619
        %v1636 = vld [vmem:[%s1267 + $0x12] sm:$0xff]
        %v1637 = vld [vmem:[%s1267 + $0x1a] sm:$0xff]
        %v1638 = vld [vmem:[%s1267 + $0x52] sm:$0xff]
        %v1639 = vld [vmem:[%s1267 + $0x5a] sm:$0xff]
        %v1640 = vld [vmem:[%s1267 + $0x92] sm:$0xff]
        %v1641 = vld [vmem:[%s1267 + $0x9a] sm:$0xff]
        %v1642 = vld [vmem:[%s1267 + $0xd2] sm:$0xff]
        %v1643 = vld [vmem:[%s1267 + $0xda] sm:$0xff]
        %v1644 = vld [vmem:[%s1267 + $0x112] sm:$0xff]
        %v1645 = vld [vmem:[%s1267 + $0x11a] sm:$0xff]
        %v1646 = vld [vmem:[%s1267 + $0x152] sm:$0xff]
        %v1647 = vld [vmem:[%s1267 + $0x15a] sm:$0xff]
        %v1648 = vld [vmem:[%s1267 + $0x192] sm:$0xff]
        %v1649 = vld [vmem:[%s1267 + $0x19a] sm:$0xff]
        %v1650 = vld [vmem:[%s1267 + $0x1d2] sm:$0xff]
        %v1651 = vld [vmem:[%s1267 + $0x1da] sm:$0xff]
        %v1652 = vpack.c.bf16 %v1636, %v1636
        %v1653 = vpack.c.bf16 %v1637, %v1637
        %v1654 = vpack.c.bf16 %v1638, %v1638
        %v1655 = vpack.c.bf16 %v1639, %v1639
        %v1656 = vpack.c.bf16 %v1640, %v1640
        %v1657 = vpack.c.bf16 %v1641, %v1641
        %v1658 = vpack.c.bf16 %v1642, %v1642
        %v1659 = vpack.c.bf16 %v1643, %v1643
        %v1660 = vpack.c.bf16 %v1644, %v1644
        %v1661 = vpack.c.bf16 %v1645, %v1645
        %v1662 = vpack.c.bf16 %v1646, %v1646
        %v1663 = vpack.c.bf16 %v1647, %v1647
        %v1664 = vpack.c.bf16 %v1648, %v1648
        %v1665 = vpack.c.bf16 %v1649, %v1649
        %v1666 = vpack.c.bf16 %v1650, %v1650
        %v1667 = vpack.c.bf16 %v1651, %v1651
        %v1668 = vld [vmem:[%s1267 + $0x1e] sm:$0xff]
        %v1669 = vld [vmem:[%s1267 + $0x26] sm:$0xff]
        %v1670 = vld [vmem:[%s1267 + $0x5e] sm:$0xff]
        %v1671 = vld [vmem:[%s1267 + $0x66] sm:$0xff]
        %v1672 = vld [vmem:[%s1267 + $0x9e] sm:$0xff]
        %v1673 = vld [vmem:[%s1267 + $0xa6] sm:$0xff]
        %v1674 = vld [vmem:[%s1267 + $0xde] sm:$0xff]
        %v1675 = vld [vmem:[%s1267 + $0xe6] sm:$0xff]
        %v1676 = vld [vmem:[%s1267 + $0x11e] sm:$0xff]
        %v1677 = vld [vmem:[%s1267 + $0x126] sm:$0xff]
        %v1678 = vld [vmem:[%s1267 + $0x15e] sm:$0xff]
        %v1679 = vld [vmem:[%s1267 + $0x166] sm:$0xff]
        %v1680 = vld [vmem:[%s1267 + $0x19e] sm:$0xff]
        %v1681 = vld [vmem:[%s1267 + $0x1a6] sm:$0xff]
        %v1682 = vld [vmem:[%s1267 + $0x1de] sm:$0xff]
        %v1683 = vld [vmem:[%s1267 + $0x1e6] sm:$0xff]
        %v1684 = vpack.c.bf16 %v1668, %v1668
        %v1685 = vpack.c.bf16 %v1669, %v1669
        %v1686 = vpack.c.bf16 %v1670, %v1670
        %v1687 = vpack.c.bf16 %v1671, %v1671
        %v1688 = vpack.c.bf16 %v1672, %v1672
        %v1689 = vpack.c.bf16 %v1673, %v1673
        %v1690 = vpack.c.bf16 %v1674, %v1674
        %v1691 = vpack.c.bf16 %v1675, %v1675
        %v1692 = vpack.c.bf16 %v1676, %v1676
        %v1693 = vpack.c.bf16 %v1677, %v1677
        %v1694 = vpack.c.bf16 %v1678, %v1678
        %v1695 = vpack.c.bf16 %v1679, %v1679
        %v1696 = vpack.c.bf16 %v1680, %v1680
        %v1697 = vpack.c.bf16 %v1681, %v1681
        %v1698 = vpack.c.bf16 %v1682, %v1682
        %v1699 = vpack.c.bf16 %v1683, %v1683
        %s1700 = sadd.s32 %s1264, 30
        %s1701 = smul.u32 %s1700, 64
        %s1702 = scalar_lea.vmem [#allocation2], %s1701
        %v1703 = vld [vmem:[%s1702 + $0x12] sm:$0xff]
        %v1704 = vld [vmem:[%s1702 + $0x1a] sm:$0xff]
        %v1705 = vld [vmem:[%s1702 + $0x52] sm:$0xff]
        %v1706 = vld [vmem:[%s1702 + $0x5a] sm:$0xff]
        %v1707 = vld [vmem:[%s1702 + $0x92] sm:$0xff]
        %v1708 = vld [vmem:[%s1702 + $0x9a] sm:$0xff]
        %v1709 = vld [vmem:[%s1702 + $0xd2] sm:$0xff]
        %v1710 = vld [vmem:[%s1702 + $0xda] sm:$0xff]
        %v1711 = vld [vmem:[%s1702 + $0x112] sm:$0xff]
        %v1712 = vld [vmem:[%s1702 + $0x11a] sm:$0xff]
        %v1713 = vld [vmem:[%s1702 + $0x152] sm:$0xff]
        %v1714 = vld [vmem:[%s1702 + $0x15a] sm:$0xff]
        %v1715 = vld [vmem:[%s1702 + $0x192] sm:$0xff]
        %v1716 = vld [vmem:[%s1702 + $0x19a] sm:$0xff]
        %v1717 = vld [vmem:[%s1702 + $0x1d2] sm:$0xff]
        %v1718 = vld [vmem:[%s1702 + $0x1da] sm:$0xff]
        %v1719 = vpack.c.bf16 %v1703, %v1703
        %v1720 = vpack.c.bf16 %v1704, %v1704
        %v1721 = vpack.c.bf16 %v1705, %v1705
        %v1722 = vpack.c.bf16 %v1706, %v1706
        %v1723 = vpack.c.bf16 %v1707, %v1707
        %v1724 = vpack.c.bf16 %v1708, %v1708
        %v1725 = vpack.c.bf16 %v1709, %v1709
        %v1726 = vpack.c.bf16 %v1710, %v1710
        %v1727 = vpack.c.bf16 %v1711, %v1711
        %v1728 = vpack.c.bf16 %v1712, %v1712
        %v1729 = vpack.c.bf16 %v1713, %v1713
        %v1730 = vpack.c.bf16 %v1714, %v1714
        %v1731 = vpack.c.bf16 %v1715, %v1715
        %v1732 = vpack.c.bf16 %v1716, %v1716
        %v1733 = vpack.c.bf16 %v1717, %v1717
        %v1734 = vpack.c.bf16 %v1718, %v1718
        %v1735 = vld [vmem:[%s1702 + $0x18] sm:$0xff]
        %v1736 = vld [vmem:[%s1702 + $0x20] sm:$0xff]
        %v1737 = vld [vmem:[%s1702 + $0x58] sm:$0xff]
        %v1738 = vld [vmem:[%s1702 + $0x60] sm:$0xff]
        %v1739 = vld [vmem:[%s1702 + $0x98] sm:$0xff]
        %v1740 = vld [vmem:[%s1702 + $0xa0] sm:$0xff]
        %v1741 = vld [vmem:[%s1702 + $0xd8] sm:$0xff]
        %v1742 = vld [vmem:[%s1702 + $0xe0] sm:$0xff]
        %v1743 = vld [vmem:[%s1702 + $0x118] sm:$0xff]
        %v1744 = vld [vmem:[%s1702 + $0x120] sm:$0xff]
        %v1745 = vld [vmem:[%s1702 + $0x158] sm:$0xff]
        %v1746 = vld [vmem:[%s1702 + $0x160] sm:$0xff]
        %v1747 = vld [vmem:[%s1702 + $0x198] sm:$0xff]
        %v1748 = vld [vmem:[%s1702 + $0x1a0] sm:$0xff]
        %v1749 = vld [vmem:[%s1702 + $0x1d8] sm:$0xff]
        %v1750 = vld [vmem:[%s1702 + $0x1e0] sm:$0xff]
        %v1751 = vpack.c.bf16 %v1735, %v1735
        %v1752 = vpack.c.bf16 %v1736, %v1736
        %v1753 = vpack.c.bf16 %v1737, %v1737
        %v1754 = vpack.c.bf16 %v1738, %v1738
        %v1755 = vpack.c.bf16 %v1739, %v1739
        %v1756 = vpack.c.bf16 %v1740, %v1740
        %v1757 = vpack.c.bf16 %v1741, %v1741
        %v1758 = vpack.c.bf16 %v1742, %v1742
        %v1759 = vpack.c.bf16 %v1743, %v1743
        %v1760 = vpack.c.bf16 %v1744, %v1744
        %v1761 = vpack.c.bf16 %v1745, %v1745
        %v1762 = vpack.c.bf16 %v1746, %v1746
        %v1763 = vpack.c.bf16 %v1747, %v1747
        %v1764 = vpack.c.bf16 %v1748, %v1748
        %v1765 = vpack.c.bf16 %v1749, %v1749
        %v1766 = vpack.c.bf16 %v1750, %v1750
        %v1767 = vld [vmem:[%s1702 + $0x1e] sm:$0xff]
        %v1768 = vld [vmem:[%s1702 + $0x26] sm:$0xff]
        %v1769 = vld [vmem:[%s1702 + $0x5e] sm:$0xff]
        %v1770 = vld [vmem:[%s1702 + $0x66] sm:$0xff]
        %v1771 = vld [vmem:[%s1702 + $0x9e] sm:$0xff]
        %v1772 = vld [vmem:[%s1702 + $0xa6] sm:$0xff]
        %v1773 = vld [vmem:[%s1702 + $0xde] sm:$0xff]
        %v1774 = vld [vmem:[%s1702 + $0xe6] sm:$0xff]
        %v1775 = vld [vmem:[%s1702 + $0x11e] sm:$0xff]
        %v1776 = vld [vmem:[%s1702 + $0x126] sm:$0xff]
        %v1777 = vld [vmem:[%s1702 + $0x15e] sm:$0xff]
        %v1778 = vld [vmem:[%s1702 + $0x166] sm:$0xff]
        %v1779 = vld [vmem:[%s1702 + $0x19e] sm:$0xff]
        %v1780 = vld [vmem:[%s1702 + $0x1a6] sm:$0xff]
        %v1781 = vld [vmem:[%s1702 + $0x1de] sm:$0xff]
        %v1782 = vld [vmem:[%s1702 + $0x1e6] sm:$0xff]
        %v1783 = vpack.c.bf16 %v1767, %v1767
        %v1784 = vpack.c.bf16 %v1768, %v1768
        %v1785 = vpack.c.bf16 %v1769, %v1769
        %v1786 = vpack.c.bf16 %v1770, %v1770
        %v1787 = vpack.c.bf16 %v1771, %v1771
        %v1788 = vpack.c.bf16 %v1772, %v1772
        %v1789 = vpack.c.bf16 %v1773, %v1773
        %v1790 = vpack.c.bf16 %v1774, %v1774
        %v1791 = vpack.c.bf16 %v1775, %v1775
        %v1792 = vpack.c.bf16 %v1776, %v1776
        %v1793 = vpack.c.bf16 %v1777, %v1777
        %v1794 = vpack.c.bf16 %v1778, %v1778
        %v1795 = vpack.c.bf16 %v1779, %v1779
        %v1796 = vpack.c.bf16 %v1780, %v1780
        %v1797 = vpack.c.bf16 %v1781, %v1781
        %v1798 = vpack.c.bf16 %v1782, %v1782
        %v1815 = vunpack.c.l.b16 %v1556
        %v1816 = vunpack.c.l.b16 %v1557
        %v1817 = vunpack.c.l.b16 %v1558
        %v1818 = vunpack.c.l.b16 %v1559
        %v1819 = vunpack.c.l.b16 %v1560
        %v1820 = vunpack.c.l.b16 %v1561
        %v1821 = vunpack.c.l.b16 %v1562
        %v1822 = vunpack.c.l.b16 %v1563
        %v1823 = vunpack.c.l.b16 %v1564
        %v1824 = vunpack.c.l.b16 %v1565
        %v1825 = vunpack.c.l.b16 %v1566
        %v1826 = vunpack.c.l.b16 %v1567
        %v1827 = vunpack.c.l.b16 %v1568
        %v1828 = vunpack.c.l.b16 %v1569
        %v1829 = vunpack.c.l.b16 %v1570
        %v1830 = vunpack.c.l.b16 %v1571
        %v1831 = vpack.c.b16 %v1816, %v1815
        %v1832 = vpack.c.b16 %v1818, %v1817
        %v1833 = vpack.c.b16 %v1820, %v1819
        %v1834 = vpack.c.b16 %v1822, %v1821
        %v1835 = vpack.c.b16 %v1824, %v1823
        %v1836 = vpack.c.b16 %v1826, %v1825
        %v1837 = vpack.c.b16 %v1828, %v1827
        %v1838 = vpack.c.b16 %v1830, %v1829
        %v1863 = vunpack.c.l.b16 %v1588
        %v1864 = vunpack.c.l.b16 %v1589
        %v1865 = vunpack.c.l.b16 %v1590
        %v1866 = vunpack.c.l.b16 %v1591
        %v1867 = vunpack.c.l.b16 %v1592
        %v1868 = vunpack.c.l.b16 %v1593
        %v1869 = vunpack.c.l.b16 %v1594
        %v1870 = vunpack.c.l.b16 %v1595
        %v1871 = vunpack.c.l.b16 %v1596
        %v1872 = vunpack.c.l.b16 %v1597
        %v1873 = vunpack.c.l.b16 %v1598
        %v1874 = vunpack.c.l.b16 %v1599
        %v1875 = vunpack.c.l.b16 %v1600
        %v1876 = vunpack.c.l.b16 %v1601
        %v1877 = vunpack.c.l.b16 %v1602
        %v1878 = vunpack.c.l.b16 %v1603
        %v1879 = vpack.c.b16 %v1864, %v1863
        %v1880 = vpack.c.b16 %v1866, %v1865
        %v1881 = vpack.c.b16 %v1868, %v1867
        %v1882 = vpack.c.b16 %v1870, %v1869
        %v1883 = vpack.c.b16 %v1872, %v1871
        %v1884 = vpack.c.b16 %v1874, %v1873
        %v1885 = vpack.c.b16 %v1876, %v1875
        %v1886 = vpack.c.b16 %v1878, %v1877
        %v1911 = vunpack.c.l.b16 %v1620
        %v1912 = vunpack.c.l.b16 %v1621
        %v1913 = vunpack.c.l.b16 %v1622
        %v1914 = vunpack.c.l.b16 %v1623
        %v1915 = vunpack.c.l.b16 %v1624
        %v1916 = vunpack.c.l.b16 %v1625
        %v1917 = vunpack.c.l.b16 %v1626
        %v1918 = vunpack.c.l.b16 %v1627
        %v1919 = vunpack.c.l.b16 %v1628
        %v1920 = vunpack.c.l.b16 %v1629
        %v1921 = vunpack.c.l.b16 %v1630
        %v1922 = vunpack.c.l.b16 %v1631
        %v1923 = vunpack.c.l.b16 %v1632
        %v1924 = vunpack.c.l.b16 %v1633
        %v1925 = vunpack.c.l.b16 %v1634
        %v1926 = vunpack.c.l.b16 %v1635
        %v1927 = vpack.c.b16 %v1912, %v1911
        %v1928 = vpack.c.b16 %v1914, %v1913
        %v1929 = vpack.c.b16 %v1916, %v1915
        %v1930 = vpack.c.b16 %v1918, %v1917
        %v1931 = vpack.c.b16 %v1920, %v1919
        %v1932 = vpack.c.b16 %v1922, %v1921
        %v1933 = vpack.c.b16 %v1924, %v1923
        %v1934 = vpack.c.b16 %v1926, %v1925
        %v1959 = vunpack.c.l.b16 %v1652
        %v1960 = vunpack.c.l.b16 %v1653
        %v1961 = vunpack.c.l.b16 %v1654
        %v1962 = vunpack.c.l.b16 %v1655
        %v1963 = vunpack.c.l.b16 %v1656
        %v1964 = vunpack.c.l.b16 %v1657
        %v1965 = vunpack.c.l.b16 %v1658
        %v1966 = vunpack.c.l.b16 %v1659
        %v1967 = vunpack.c.l.b16 %v1660
        %v1968 = vunpack.c.l.b16 %v1661
        %v1969 = vunpack.c.l.b16 %v1662
        %v1970 = vunpack.c.l.b16 %v1663
        %v1971 = vunpack.c.l.b16 %v1664
        %v1972 = vunpack.c.l.b16 %v1665
        %v1973 = vunpack.c.l.b16 %v1666
        %v1974 = vunpack.c.l.b16 %v1667
        %v1975 = vpack.c.b16 %v1960, %v1959
        %v1976 = vpack.c.b16 %v1962, %v1961
        %v1977 = vpack.c.b16 %v1964, %v1963
        %v1978 = vpack.c.b16 %v1966, %v1965
        %v1979 = vpack.c.b16 %v1968, %v1967
        %v1980 = vpack.c.b16 %v1970, %v1969
        %v1981 = vpack.c.b16 %v1972, %v1971
        %v1982 = vpack.c.b16 %v1974, %v1973
        %v2007 = vunpack.c.l.b16 %v1684
        %v2008 = vunpack.c.l.b16 %v1685
        %v2009 = vunpack.c.l.b16 %v1686
        %v2010 = vunpack.c.l.b16 %v1687
        %v2011 = vunpack.c.l.b16 %v1688
        %v2012 = vunpack.c.l.b16 %v1689
        %v2013 = vunpack.c.l.b16 %v1690
        %v2014 = vunpack.c.l.b16 %v1691
        %v2015 = vunpack.c.l.b16 %v1692
        %v2016 = vunpack.c.l.b16 %v1693
        %v2017 = vunpack.c.l.b16 %v1694
        %v2018 = vunpack.c.l.b16 %v1695
        %v2019 = vunpack.c.l.b16 %v1696
        %v2020 = vunpack.c.l.b16 %v1697
        %v2021 = vunpack.c.l.b16 %v1698
        %v2022 = vunpack.c.l.b16 %v1699
        %v2023 = vpack.c.b16 %v2008, %v2007
        %v2024 = vpack.c.b16 %v2010, %v2009
        %v2025 = vpack.c.b16 %v2012, %v2011
        %v2026 = vpack.c.b16 %v2014, %v2013
        %v2027 = vpack.c.b16 %v2016, %v2015
        %v2028 = vpack.c.b16 %v2018, %v2017
        %v2029 = vpack.c.b16 %v2020, %v2019
        %v2030 = vpack.c.b16 %v2022, %v2021
        %v2055 = vunpack.c.l.b16 %v1719
        %v2056 = vunpack.c.l.b16 %v1720
        %v2057 = vunpack.c.l.b16 %v1721
        %v2058 = vunpack.c.l.b16 %v1722
        %v2059 = vunpack.c.l.b16 %v1723
        %v2060 = vunpack.c.l.b16 %v1724
        %v2061 = vunpack.c.l.b16 %v1725
        %v2062 = vunpack.c.l.b16 %v1726
        %v2063 = vunpack.c.l.b16 %v1727
        %v2064 = vunpack.c.l.b16 %v1728
        %v2065 = vunpack.c.l.b16 %v1729
        %v2066 = vunpack.c.l.b16 %v1730
        %v2067 = vunpack.c.l.b16 %v1731
        %v2068 = vunpack.c.l.b16 %v1732
        %v2069 = vunpack.c.l.b16 %v1733
        %v2070 = vunpack.c.l.b16 %v1734
        %v2071 = vpack.c.b16 %v2056, %v2055
        %v2072 = vpack.c.b16 %v2058, %v2057
        %v2073 = vpack.c.b16 %v2060, %v2059
        %v2074 = vpack.c.b16 %v2062, %v2061
        %v2075 = vpack.c.b16 %v2064, %v2063
        %v2076 = vpack.c.b16 %v2066, %v2065
        %v2077 = vpack.c.b16 %v2068, %v2067
        %v2078 = vpack.c.b16 %v2070, %v2069
        %v2103 = vunpack.c.l.b16 %v1751
        %v2104 = vunpack.c.l.b16 %v1752
        %v2105 = vunpack.c.l.b16 %v1753
        %v2106 = vunpack.c.l.b16 %v1754
        %v2107 = vunpack.c.l.b16 %v1755
        %v2108 = vunpack.c.l.b16 %v1756
        %v2109 = vunpack.c.l.b16 %v1757
        %v2110 = vunpack.c.l.b16 %v1758
        %v2111 = vunpack.c.l.b16 %v1759
        %v2112 = vunpack.c.l.b16 %v1760
        %v2113 = vunpack.c.l.b16 %v1761
        %v2114 = vunpack.c.l.b16 %v1762
        %v2115 = vunpack.c.l.b16 %v1763
        %v2116 = vunpack.c.l.b16 %v1764
        %v2117 = vunpack.c.l.b16 %v1765
        %v2118 = vunpack.c.l.b16 %v1766
        %v2119 = vpack.c.b16 %v2104, %v2103
        %v2120 = vpack.c.b16 %v2106, %v2105
        %v2121 = vpack.c.b16 %v2108, %v2107
        %v2122 = vpack.c.b16 %v2110, %v2109
        %v2123 = vpack.c.b16 %v2112, %v2111
        %v2124 = vpack.c.b16 %v2114, %v2113
        %v2125 = vpack.c.b16 %v2116, %v2115
        %v2126 = vpack.c.b16 %v2118, %v2117
        %v2151 = vunpack.c.l.b16 %v1783
        %v2152 = vunpack.c.l.b16 %v1784
        %v2153 = vunpack.c.l.b16 %v1785
        %v2154 = vunpack.c.l.b16 %v1786
        %v2155 = vunpack.c.l.b16 %v1787
        %v2156 = vunpack.c.l.b16 %v1788
        %v2157 = vunpack.c.l.b16 %v1789
        %v2158 = vunpack.c.l.b16 %v1790
        %v2159 = vunpack.c.l.b16 %v1791
        %v2160 = vunpack.c.l.b16 %v1792
        %v2161 = vunpack.c.l.b16 %v1793
        %v2162 = vunpack.c.l.b16 %v1794
        %v2163 = vunpack.c.l.b16 %v1795
        %v2164 = vunpack.c.l.b16 %v1796
        %v2165 = vunpack.c.l.b16 %v1797
        %v2166 = vunpack.c.l.b16 %v1798
        %v2167 = vpack.c.b16 %v2152, %v2151
        %v2168 = vpack.c.b16 %v2154, %v2153
        %v2169 = vpack.c.b16 %v2156, %v2155
        %v2170 = vpack.c.b16 %v2158, %v2157
        %v2171 = vpack.c.b16 %v2160, %v2159
        %v2172 = vpack.c.b16 %v2162, %v2161
        %v2173 = vpack.c.b16 %v2164, %v2163
        %v2174 = vpack.c.b16 %v2166, %v2165
        %v2183 = vld [vmem:[%s2] sm:$0xf]
        %v2184 = vld [vmem:[%s2 + $0x4] sm:$0xf]
        %v2185 = vld [vmem:[%s2 + $0x8] sm:$0xf]
        %v2186 = vld [vmem:[%s2 + $0xc] sm:$0xf]
        %v2187 = vld [vmem:[%s2 + $0x10] sm:$0xf]
        %v2188 = vld [vmem:[%s2 + $0x14] sm:$0xf]
        %v2189 = vld [vmem:[%s2 + $0x18] sm:$0xf]
        %v2190 = vld [vmem:[%s2 + $0x1c] sm:$0xf]
        %v2191 = vld [vmem:[%s2 + $0x20] sm:$0xf]
        %v2192 = vld [vmem:[%s2 + $0x24] sm:$0xf]
        %v2193 = vld [vmem:[%s2 + $0x28] sm:$0xf]
        %v2194 = vld [vmem:[%s2 + $0x2c] sm:$0xf]
        %v2195 = vld [vmem:[%s2 + $0x30] sm:$0xf]
        %v2196 = vld [vmem:[%s2 + $0x34] sm:$0xf]
        %v2197 = vld [vmem:[%s2 + $0x38] sm:$0xf]
        %v2198 = vld [vmem:[%s2 + $0x3c] sm:$0xf]
        %v2199 = vld [vmem:[%s2 + $0x40] sm:$0xf]
        %v2200 = vld [vmem:[%s2 + $0x44] sm:$0xf]
        %v2201 = vld [vmem:[%s2 + $0x48] sm:$0xf]
        %v2202 = vld [vmem:[%s2 + $0x4c] sm:$0xf]
        %v2203 = vld [vmem:[%s2 + $0x50] sm:$0xf]
        %v2204 = vld [vmem:[%s2 + $0x54] sm:$0xf]
        %v2205 = vld [vmem:[%s2 + $0x58] sm:$0xf]
        %v2206 = vld [vmem:[%s2 + $0x5c] sm:$0xf]
        %v2207 = vld [vmem:[%s2 + $0x60] sm:$0xf]
        %v2208 = vld [vmem:[%s2 + $0x64] sm:$0xf]
        %v2209 = vld [vmem:[%s2 + $0x68] sm:$0xf]
        %v2210 = vld [vmem:[%s2 + $0x6c] sm:$0xf]
        %v2211 = vld [vmem:[%s2 + $0x70] sm:$0xf]
        %v2212 = vld [vmem:[%s2 + $0x74] sm:$0xf]
        %v2213 = vld [vmem:[%s2 + $0x78] sm:$0xf]
        %v2214 = vld [vmem:[%s2 + $0x7c] sm:$0xf]
        %v2215 = vld [vmem:[%s2 + $0x80] sm:$0xf]
        %v2216 = vld [vmem:[%s2 + $0x84] sm:$0xf]
        %v2217 = vld [vmem:[%s2 + $0x88] sm:$0xf]
        %v2218 = vld [vmem:[%s2 + $0x8c] sm:$0xf]
        %v2219 = vld [vmem:[%s2 + $0x90] sm:$0xf]
        %v2220 = vld [vmem:[%s2 + $0x94] sm:$0xf]
        %v2221 = vld [vmem:[%s2 + $0x98] sm:$0xf]
        %v2222 = vld [vmem:[%s2 + $0x9c] sm:$0xf]
        %v2223 = vld [vmem:[%s2 + $0xa0] sm:$0xf]
        %v2224 = vld [vmem:[%s2 + $0xa4] sm:$0xf]
        %v2225 = vld [vmem:[%s2 + $0xa8] sm:$0xf]
        %v2226 = vld [vmem:[%s2 + $0xac] sm:$0xf]
        %v2227 = vld [vmem:[%s2 + $0xb0] sm:$0xf]
        %v2228 = vld [vmem:[%s2 + $0xb4] sm:$0xf]
        %v2229 = vld [vmem:[%s2 + $0xb8] sm:$0xf]
        %v2230 = vld [vmem:[%s2 + $0xbc] sm:$0xf]
        %v2231 = vld [vmem:[%s2 + $0xc0] sm:$0xf]
        %v2232 = vld [vmem:[%s2 + $0xc4] sm:$0xf]
        %v2233 = vld [vmem:[%s2 + $0xc8] sm:$0xf]
        %v2234 = vld [vmem:[%s2 + $0xcc] sm:$0xf]
        %v2235 = vld [vmem:[%s2 + $0xd0] sm:$0xf]
        %v2236 = vld [vmem:[%s2 + $0xd4] sm:$0xf]
        %v2237 = vld [vmem:[%s2 + $0xd8] sm:$0xf]
        %v2238 = vld [vmem:[%s2 + $0xdc] sm:$0xf]
        %v2239 = vld [vmem:[%s2 + $0xe0] sm:$0xf]
        %v2240 = vld [vmem:[%s2 + $0xe4] sm:$0xf]
        %v2241 = vld [vmem:[%s2 + $0xe8] sm:$0xf]
        %v2242 = vld [vmem:[%s2 + $0xec] sm:$0xf]
        %v2243 = vld [vmem:[%s2 + $0xf0] sm:$0xf]
        %v2244 = vld [vmem:[%s2 + $0xf4] sm:$0xf]
        %v2245 = vld [vmem:[%s2 + $0xf8] sm:$0xf]
        %v2246 = vld [vmem:[%s2 + $0xfc] sm:$0xf]
        %v2247 = vld [vmem:[%s2 + $0x100] sm:$0xf]
        %v2248 = vld [vmem:[%s2 + $0x104] sm:$0xf]
        %v2249 = vld [vmem:[%s2 + $0x108] sm:$0xf]
        %v2250 = vld [vmem:[%s2 + $0x10c] sm:$0xf]
        %v2251 = vld [vmem:[%s2 + $0x110] sm:$0xf]
        %v2252 = vld [vmem:[%s2 + $0x114] sm:$0xf]
        %v2253 = vld [vmem:[%s2 + $0x118] sm:$0xf]
        %v2254 = vld [vmem:[%s2 + $0x11c] sm:$0xf]
        %v2255 = vld [vmem:[%s2 + $0x120] sm:$0xf]
        %v2256 = vld [vmem:[%s2 + $0x124] sm:$0xf]
        %v2257 = vld [vmem:[%s2 + $0x128] sm:$0xf]
        %v2258 = vld [vmem:[%s2 + $0x12c] sm:$0xf]
        %v2259 = vld [vmem:[%s2 + $0x130] sm:$0xf]
        %v2260 = vld [vmem:[%s2 + $0x134] sm:$0xf]
        %v2261 = vld [vmem:[%s2 + $0x138] sm:$0xf]
        %v2262 = vld [vmem:[%s2 + $0x13c] sm:$0xf]
        %v2263 = vld [vmem:[%s2 + $0x140] sm:$0xf]
        %v2264 = vld [vmem:[%s2 + $0x144] sm:$0xf]
        %v2265 = vld [vmem:[%s2 + $0x148] sm:$0xf]
        %v2266 = vld [vmem:[%s2 + $0x14c] sm:$0xf]
        %v2267 = vld [vmem:[%s2 + $0x150] sm:$0xf]
        %v2268 = vld [vmem:[%s2 + $0x154] sm:$0xf]
        %v2269 = vld [vmem:[%s2 + $0x158] sm:$0xf]
        %v2270 = vld [vmem:[%s2 + $0x15c] sm:$0xf]
        %v2271 = vld [vmem:[%s2 + $0x160] sm:$0xf]
        %v2272 = vld [vmem:[%s2 + $0x164] sm:$0xf]
        %v2273 = vld [vmem:[%s2 + $0x168] sm:$0xf]
        %v2274 = vld [vmem:[%s2 + $0x16c] sm:$0xf]
        %v2275 = vld [vmem:[%s2 + $0x170] sm:$0xf]
        %v2276 = vld [vmem:[%s2 + $0x174] sm:$0xf]
        %v2277 = vld [vmem:[%s2 + $0x178] sm:$0xf]
        %v2278 = vld [vmem:[%s2 + $0x17c] sm:$0xf]
        %v2279 = vld [vmem:[%s2 + $0x180] sm:$0xf]
        %v2280 = vld [vmem:[%s2 + $0x184] sm:$0xf]
        %v2281 = vld [vmem:[%s2 + $0x188] sm:$0xf]
        %v2282 = vld [vmem:[%s2 + $0x18c] sm:$0xf]
        %v2283 = vld [vmem:[%s2 + $0x190] sm:$0xf]
        %v2284 = vld [vmem:[%s2 + $0x194] sm:$0xf]
        %v2285 = vld [vmem:[%s2 + $0x198] sm:$0xf]
        %v2286 = vld [vmem:[%s2 + $0x19c] sm:$0xf]
        %v2287 = vld [vmem:[%s2 + $0x1a0] sm:$0xf]
        %v2288 = vld [vmem:[%s2 + $0x1a4] sm:$0xf]
        %v2289 = vld [vmem:[%s2 + $0x1a8] sm:$0xf]
        %v2290 = vld [vmem:[%s2 + $0x1ac] sm:$0xf]
        %v2291 = vld [vmem:[%s2 + $0x1b0] sm:$0xf]
        %v2292 = vld [vmem:[%s2 + $0x1b4] sm:$0xf]
        %v2293 = vld [vmem:[%s2 + $0x1b8] sm:$0xf]
        %v2294 = vld [vmem:[%s2 + $0x1bc] sm:$0xf]
        %v2295 = vld [vmem:[%s2 + $0x1c0] sm:$0xf]
        %v2296 = vld [vmem:[%s2 + $0x1c4] sm:$0xf]
        %v2297 = vld [vmem:[%s2 + $0x1c8] sm:$0xf]
        %v2298 = vld [vmem:[%s2 + $0x1cc] sm:$0xf]
        %v2299 = vld [vmem:[%s2 + $0x1d0] sm:$0xf]
        %v2300 = vld [vmem:[%s2 + $0x1d4] sm:$0xf]
        %v2301 = vld [vmem:[%s2 + $0x1d8] sm:$0xf]
        %v2302 = vld [vmem:[%s2 + $0x1dc] sm:$0xf]
        %v2303 = vld [vmem:[%s2 + $0x1e0] sm:$0xf]
        %v2304 = vld [vmem:[%s2 + $0x1e4] sm:$0xf]
        %v2305 = vld [vmem:[%s2 + $0x1e8] sm:$0xf]
        %v2306 = vld [vmem:[%s2 + $0x1ec] sm:$0xf]
        %v2307 = vld [vmem:[%s2 + $0x1f0] sm:$0xf]
        %v2308 = vld [vmem:[%s2 + $0x1f4] sm:$0xf]
        %v2309 = vld [vmem:[%s2 + $0x1f8] sm:$0xf]
        %v2310 = vld [vmem:[%s2 + $0x1fc] sm:$0xf]
        %v2311 = vld [vmem:[%s2 + $0x200] sm:$0xf]
        %v2312 = vld [vmem:[%s2 + $0x204] sm:$0xf]
        %v2313 = vld [vmem:[%s2 + $0x208] sm:$0xf]
        %v2314 = vld [vmem:[%s2 + $0x20c] sm:$0xf]
        %v2315 = vld [vmem:[%s2 + $0x210] sm:$0xf]
        %v2316 = vld [vmem:[%s2 + $0x214] sm:$0xf]
        %v2317 = vld [vmem:[%s2 + $0x218] sm:$0xf]
        %v2318 = vld [vmem:[%s2 + $0x21c] sm:$0xf]
        %v2319 = vld [vmem:[%s2 + $0x220] sm:$0xf]
        %v2320 = vld [vmem:[%s2 + $0x224] sm:$0xf]
        %v2321 = vld [vmem:[%s2 + $0x228] sm:$0xf]
        %v2322 = vld [vmem:[%s2 + $0x22c] sm:$0xf]
        %v2323 = vld [vmem:[%s2 + $0x230] sm:$0xf]
        %v2324 = vld [vmem:[%s2 + $0x234] sm:$0xf]
        %v2325 = vld [vmem:[%s2 + $0x238] sm:$0xf]
        %v2326 = vld [vmem:[%s2 + $0x23c] sm:$0xf]
        %v2471 = vunpack.c.l.b16 %v2183
        %v2472 = vunpack.c.l.b16 %v2184
        %v2473 = vunpack.c.l.b16 %v2185
        %v2474 = vunpack.c.l.b16 %v2186
        %v2475 = vunpack.c.l.b16 %v2187
        %v2476 = vunpack.c.l.b16 %v2188
        %v2477 = vunpack.c.l.b16 %v2189
        %v2478 = vunpack.c.l.b16 %v2190
        %v2479 = vunpack.c.l.b16 %v2191
        %v2480 = vunpack.c.l.b16 %v2192
        %v2481 = vunpack.c.l.b16 %v2193
        %v2482 = vunpack.c.l.b16 %v2194
        %v2483 = vunpack.c.l.b16 %v2195
        %v2484 = vunpack.c.l.b16 %v2196
        %v2485 = vunpack.c.l.b16 %v2197
        %v2486 = vunpack.c.l.b16 %v2198
        %v2487 = vunpack.c.l.b16 %v2199
        %v2488 = vunpack.c.l.b16 %v2200
        %v2489 = vunpack.c.l.b16 %v2201
        %v2490 = vunpack.c.l.b16 %v2202
        %v2491 = vunpack.c.l.b16 %v2203
        %v2492 = vunpack.c.l.b16 %v2204
        %v2493 = vunpack.c.l.b16 %v2205
        %v2494 = vunpack.c.l.b16 %v2206
        %v2495 = vunpack.c.l.b16 %v2207
        %v2496 = vunpack.c.l.b16 %v2208
        %v2497 = vunpack.c.l.b16 %v2209
        %v2498 = vunpack.c.l.b16 %v2210
        %v2499 = vunpack.c.l.b16 %v2211
        %v2500 = vunpack.c.l.b16 %v2212
        %v2501 = vunpack.c.l.b16 %v2213
        %v2502 = vunpack.c.l.b16 %v2214
        %v2503 = vunpack.c.l.b16 %v2215
        %v2504 = vunpack.c.l.b16 %v2216
        %v2505 = vunpack.c.l.b16 %v2217
        %v2506 = vunpack.c.l.b16 %v2218
        %v2507 = vunpack.c.l.b16 %v2219
        %v2508 = vunpack.c.l.b16 %v2220
        %v2509 = vunpack.c.l.b16 %v2221
        %v2510 = vunpack.c.l.b16 %v2222
        %v2511 = vunpack.c.l.b16 %v2223
        %v2512 = vunpack.c.l.b16 %v2224
        %v2513 = vunpack.c.l.b16 %v2225
        %v2514 = vunpack.c.l.b16 %v2226
        %v2515 = vunpack.c.l.b16 %v2227
        %v2516 = vunpack.c.l.b16 %v2228
        %v2517 = vunpack.c.l.b16 %v2229
        %v2518 = vunpack.c.l.b16 %v2230
        %v2519 = vunpack.c.l.b16 %v2231
        %v2520 = vunpack.c.l.b16 %v2232
        %v2521 = vunpack.c.l.b16 %v2233
        %v2522 = vunpack.c.l.b16 %v2234
        %v2523 = vunpack.c.l.b16 %v2235
        %v2524 = vunpack.c.l.b16 %v2236
        %v2525 = vunpack.c.l.b16 %v2237
        %v2526 = vunpack.c.l.b16 %v2238
        %v2527 = vunpack.c.l.b16 %v2239
        %v2528 = vunpack.c.l.b16 %v2240
        %v2529 = vunpack.c.l.b16 %v2241
        %v2530 = vunpack.c.l.b16 %v2242
        %v2531 = vunpack.c.l.b16 %v2243
        %v2532 = vunpack.c.l.b16 %v2244
        %v2533 = vunpack.c.l.b16 %v2245
        %v2534 = vunpack.c.l.b16 %v2246
        %v2535 = vunpack.c.l.b16 %v2247
        %v2536 = vunpack.c.l.b16 %v2248
        %v2537 = vunpack.c.l.b16 %v2249
        %v2538 = vunpack.c.l.b16 %v2250
        %v2539 = vunpack.c.l.b16 %v2251
        %v2540 = vunpack.c.l.b16 %v2252
        %v2541 = vunpack.c.l.b16 %v2253
        %v2542 = vunpack.c.l.b16 %v2254
        %v2543 = vunpack.c.l.b16 %v2255
        %v2544 = vunpack.c.l.b16 %v2256
        %v2545 = vunpack.c.l.b16 %v2257
        %v2546 = vunpack.c.l.b16 %v2258
        %v2547 = vunpack.c.l.b16 %v2259
        %v2548 = vunpack.c.l.b16 %v2260
        %v2549 = vunpack.c.l.b16 %v2261
        %v2550 = vunpack.c.l.b16 %v2262
        %v2551 = vunpack.c.l.b16 %v2263
        %v2552 = vunpack.c.l.b16 %v2264
        %v2553 = vunpack.c.l.b16 %v2265
        %v2554 = vunpack.c.l.b16 %v2266
        %v2555 = vunpack.c.l.b16 %v2267
        %v2556 = vunpack.c.l.b16 %v2268
        %v2557 = vunpack.c.l.b16 %v2269
        %v2558 = vunpack.c.l.b16 %v2270
        %v2559 = vunpack.c.l.b16 %v2271
        %v2560 = vunpack.c.l.b16 %v2272
        %v2561 = vunpack.c.l.b16 %v2273
        %v2562 = vunpack.c.l.b16 %v2274
        %v2563 = vunpack.c.l.b16 %v2275
        %v2564 = vunpack.c.l.b16 %v2276
        %v2565 = vunpack.c.l.b16 %v2277
        %v2566 = vunpack.c.l.b16 %v2278
        %v2567 = vunpack.c.l.b16 %v2279
        %v2568 = vunpack.c.l.b16 %v2280
        %v2569 = vunpack.c.l.b16 %v2281
        %v2570 = vunpack.c.l.b16 %v2282
        %v2571 = vunpack.c.l.b16 %v2283
        %v2572 = vunpack.c.l.b16 %v2284
        %v2573 = vunpack.c.l.b16 %v2285
        %v2574 = vunpack.c.l.b16 %v2286
        %v2575 = vunpack.c.l.b16 %v2287
        %v2576 = vunpack.c.l.b16 %v2288
        %v2577 = vunpack.c.l.b16 %v2289
        %v2578 = vunpack.c.l.b16 %v2290
        %v2579 = vunpack.c.l.b16 %v2291
        %v2580 = vunpack.c.l.b16 %v2292
        %v2581 = vunpack.c.l.b16 %v2293
        %v2582 = vunpack.c.l.b16 %v2294
        %v2583 = vunpack.c.l.b16 %v2295
        %v2584 = vunpack.c.l.b16 %v2296
        %v2585 = vunpack.c.l.b16 %v2297
        %v2586 = vunpack.c.l.b16 %v2298
        %v2587 = vunpack.c.l.b16 %v2299
        %v2588 = vunpack.c.l.b16 %v2300
        %v2589 = vunpack.c.l.b16 %v2301
        %v2590 = vunpack.c.l.b16 %v2302
        %v2591 = vunpack.c.l.b16 %v2303
        %v2592 = vunpack.c.l.b16 %v2304
        %v2593 = vunpack.c.l.b16 %v2305
        %v2594 = vunpack.c.l.b16 %v2306
        %v2595 = vunpack.c.l.b16 %v2307
        %v2596 = vunpack.c.l.b16 %v2308
        %v2597 = vunpack.c.l.b16 %v2309
        %v2598 = vunpack.c.l.b16 %v2310
        %v2599 = vunpack.c.l.b16 %v2311
        %v2600 = vunpack.c.l.b16 %v2312
        %v2601 = vunpack.c.l.b16 %v2313
        %v2602 = vunpack.c.l.b16 %v2314
        %v2603 = vunpack.c.l.b16 %v2315
        %v2604 = vunpack.c.l.b16 %v2316
        %v2605 = vunpack.c.l.b16 %v2317
        %v2606 = vunpack.c.l.b16 %v2318
        %v2607 = vunpack.c.l.b16 %v2319
        %v2608 = vunpack.c.l.b16 %v2320
        %v2609 = vunpack.c.l.b16 %v2321
        %v2610 = vunpack.c.l.b16 %v2322
        %v2611 = vunpack.c.l.b16 %v2323
        %v2612 = vunpack.c.l.b16 %v2324
        %v2613 = vunpack.c.l.b16 %v2325
        %v2614 = vunpack.c.l.b16 %v2326
        %v2615 = vpack.c.b16 %v2472, %v2471
        %v2616 = vpack.c.b16 %v2474, %v2473
        %v2617 = vpack.c.b16 %v2476, %v2475
        %v2618 = vpack.c.b16 %v2478, %v2477
        %v2619 = vpack.c.b16 %v2480, %v2479
        %v2620 = vpack.c.b16 %v2482, %v2481
        %v2621 = vpack.c.b16 %v2484, %v2483
        %v2622 = vpack.c.b16 %v2486, %v2485
        %v2623 = vpack.c.b16 %v2488, %v2487
        %v2624 = vpack.c.b16 %v2490, %v2489
        %v2625 = vpack.c.b16 %v2492, %v2491
        %v2626 = vpack.c.b16 %v2494, %v2493
        %v2627 = vpack.c.b16 %v2496, %v2495
        %v2628 = vpack.c.b16 %v2498, %v2497
        %v2629 = vpack.c.b16 %v2500, %v2499
        %v2630 = vpack.c.b16 %v2502, %v2501
        %v2631 = vpack.c.b16 %v2504, %v2503
        %v2632 = vpack.c.b16 %v2506, %v2505
        %v2633 = vpack.c.b16 %v2508, %v2507
        %v2634 = vpack.c.b16 %v2510, %v2509
        %v2635 = vpack.c.b16 %v2512, %v2511
        %v2636 = vpack.c.b16 %v2514, %v2513
        %v2637 = vpack.c.b16 %v2516, %v2515
        %v2638 = vpack.c.b16 %v2518, %v2517
        %v2639 = vpack.c.b16 %v2520, %v2519
        %v2640 = vpack.c.b16 %v2522, %v2521
        %v2641 = vpack.c.b16 %v2524, %v2523
        %v2642 = vpack.c.b16 %v2526, %v2525
        %v2643 = vpack.c.b16 %v2528, %v2527
        %v2644 = vpack.c.b16 %v2530, %v2529
        %v2645 = vpack.c.b16 %v2532, %v2531
        %v2646 = vpack.c.b16 %v2534, %v2533
        %v2647 = vpack.c.b16 %v2536, %v2535
        %v2648 = vpack.c.b16 %v2538, %v2537
        %v2649 = vpack.c.b16 %v2540, %v2539
        %v2650 = vpack.c.b16 %v2542, %v2541
        %v2651 = vpack.c.b16 %v2544, %v2543
        %v2652 = vpack.c.b16 %v2546, %v2545
        %v2653 = vpack.c.b16 %v2548, %v2547
        %v2654 = vpack.c.b16 %v2550, %v2549
        %v2655 = vpack.c.b16 %v2552, %v2551
        %v2656 = vpack.c.b16 %v2554, %v2553
        %v2657 = vpack.c.b16 %v2556, %v2555
        %v2658 = vpack.c.b16 %v2558, %v2557
        %v2659 = vpack.c.b16 %v2560, %v2559
        %v2660 = vpack.c.b16 %v2562, %v2561
        %v2661 = vpack.c.b16 %v2564, %v2563
        %v2662 = vpack.c.b16 %v2566, %v2565
        %v2663 = vpack.c.b16 %v2568, %v2567
        %v2664 = vpack.c.b16 %v2570, %v2569
        %v2665 = vpack.c.b16 %v2572, %v2571
        %v2666 = vpack.c.b16 %v2574, %v2573
        %v2667 = vpack.c.b16 %v2576, %v2575
        %v2668 = vpack.c.b16 %v2578, %v2577
        %v2669 = vpack.c.b16 %v2580, %v2579
        %v2670 = vpack.c.b16 %v2582, %v2581
        %v2671 = vpack.c.b16 %v2584, %v2583
        %v2672 = vpack.c.b16 %v2586, %v2585
        %v2673 = vpack.c.b16 %v2588, %v2587
        %v2674 = vpack.c.b16 %v2590, %v2589
        %v2675 = vpack.c.b16 %v2592, %v2591
        %v2676 = vpack.c.b16 %v2594, %v2593
        %v2677 = vpack.c.b16 %v2596, %v2595
        %v2678 = vpack.c.b16 %v2598, %v2597
        %v2679 = vpack.c.b16 %v2600, %v2599
        %v2680 = vpack.c.b16 %v2602, %v2601
        %v2681 = vpack.c.b16 %v2604, %v2603
        %v2682 = vpack.c.b16 %v2606, %v2605
        %v2683 = vpack.c.b16 %v2608, %v2607
        %v2684 = vpack.c.b16 %v2610, %v2609
        %v2685 = vpack.c.b16 %v2612, %v2611
        %v2686 = vpack.c.b16 %v2614, %v2613
        %2759 = vmatpush.bf16.msra.mxu0 %v2622
        %2760 = vmatpush.bf16.msra.mxu0 %v2621
        %2761 = vmatpush.bf16.msra.mxu0 %v2620
        %2762 = vmatpush.bf16.msra.mxu0 %v2619
        %2763 = vmatpush.bf16.msra.mxu0 %v2618
        %2764 = vmatpush.bf16.msra.mxu0 %v2617
        %2765 = vmatpush.bf16.msra.mxu0 %v2616
        %2766 = vmatpush.bf16.msra.mxu0 %v2615
        %2767 = vmatmul.bf16.gmra.mxu0 %v1831
        %v2768 = vpop.f32.mrf.mxu0
        %v2769 = vadd.f32 0.0, %v2768
        %v2770 = vpop.f32.mrf.mxu0
        %v2771 = vadd.f32 0.0, %v2770
        %2772 = vmatmul.bf16.gmra.mxu0 %v1832
        %v2773 = vpop.f32.mrf.mxu0
        %v2774 = vadd.f32 0.0, %v2773
        %v2775 = vpop.f32.mrf.mxu0
        %v2776 = vadd.f32 0.0, %v2775
        %2777 = vmatmul.bf16.gmra.mxu0 %v1833
        %v2778 = vpop.f32.mrf.mxu0
        %v2779 = vadd.f32 0.0, %v2778
        %v2780 = vpop.f32.mrf.mxu0
        %v2781 = vadd.f32 0.0, %v2780
        %2782 = vmatmul.bf16.gmra.mxu0 %v1834
        %v2783 = vpop.f32.mrf.mxu0
        %v2784 = vadd.f32 0.0, %v2783
        %v2785 = vpop.f32.mrf.mxu0
        %v2786 = vadd.f32 0.0, %v2785
        %2787 = vmatmul.bf16.gmra.mxu0 %v1835
        %v2788 = vpop.f32.mrf.mxu0
        %v2789 = vadd.f32 0.0, %v2788
        %v2790 = vpop.f32.mrf.mxu0
        %v2791 = vadd.f32 0.0, %v2790
        %2792 = vmatmul.bf16.gmra.mxu0 %v1836
        %v2793 = vpop.f32.mrf.mxu0
        %v2794 = vadd.f32 0.0, %v2793
        %v2795 = vpop.f32.mrf.mxu0
        %v2796 = vadd.f32 0.0, %v2795
        %2797 = vmatmul.bf16.gmra.mxu0 %v1837
        %v2798 = vpop.f32.mrf.mxu0
        %v2799 = vadd.f32 0.0, %v2798
        %v2800 = vpop.f32.mrf.mxu0
        %v2801 = vadd.f32 0.0, %v2800
        %2802 = vmatmul.bf16.gmra.mxu0 %v1838
        %v2803 = vpop.f32.mrf.mxu0
        %v2804 = vadd.f32 0.0, %v2803
        %v2805 = vpop.f32.mrf.mxu0
        %v2806 = vadd.f32 0.0, %v2805
        %2807 = vdwg.mxu0
        %2808 = vmatpush.bf16.msra.mxu0 %v2630
        %2809 = vmatpush.bf16.msra.mxu0 %v2629
        %2810 = vmatpush.bf16.msra.mxu0 %v2628
        %2811 = vmatpush.bf16.msra.mxu0 %v2627
        %2812 = vmatpush.bf16.msra.mxu0 %v2626
        %2813 = vmatpush.bf16.msra.mxu0 %v2625
        %2814 = vmatpush.bf16.msra.mxu0 %v2624
        %2815 = vmatpush.bf16.msra.mxu0 %v2623
        %2816 = vmatmul.bf16.gmra.mxu0 %v1879
        %v2817 = vpop.f32.mrf.mxu0
        %v2818 = vadd.f32 %v2769, %v2817
        %v2819 = vpop.f32.mrf.mxu0
        %v2820 = vadd.f32 %v2771, %v2819
        %2821 = vmatmul.bf16.gmra.mxu0 %v1880
        %v2822 = vpop.f32.mrf.mxu0
        %v2823 = vadd.f32 %v2774, %v2822
        %v2824 = vpop.f32.mrf.mxu0
        %v2825 = vadd.f32 %v2776, %v2824
        %2826 = vmatmul.bf16.gmra.mxu0 %v1881
        %v2827 = vpop.f32.mrf.mxu0
        %v2828 = vadd.f32 %v2779, %v2827
        %v2829 = vpop.f32.mrf.mxu0
        %v2830 = vadd.f32 %v2781, %v2829
        %2831 = vmatmul.bf16.gmra.mxu0 %v1882
        %v2832 = vpop.f32.mrf.mxu0
        %v2833 = vadd.f32 %v2784, %v2832
        %v2834 = vpop.f32.mrf.mxu0
        %v2835 = vadd.f32 %v2786, %v2834
        %2836 = vmatmul.bf16.gmra.mxu0 %v1883
        %v2837 = vpop.f32.mrf.mxu0
        %v2838 = vadd.f32 %v2789, %v2837
        %v2839 = vpop.f32.mrf.mxu0
        %v2840 = vadd.f32 %v2791, %v2839
        %2841 = vmatmul.bf16.gmra.mxu0 %v1884
        %v2842 = vpop.f32.mrf.mxu0
        %v2843 = vadd.f32 %v2794, %v2842
        %v2844 = vpop.f32.mrf.mxu0
        %v2845 = vadd.f32 %v2796, %v2844
        %2846 = vmatmul.bf16.gmra.mxu0 %v1885
        %v2847 = vpop.f32.mrf.mxu0
        %v2848 = vadd.f32 %v2799, %v2847
        %v2849 = vpop.f32.mrf.mxu0
        %v2850 = vadd.f32 %v2801, %v2849
        %2851 = vmatmul.bf16.gmra.mxu0 %v1886
        %v2852 = vpop.f32.mrf.mxu0
        %v2853 = vadd.f32 %v2804, %v2852
        %v2854 = vpop.f32.mrf.mxu0
        %v2855 = vadd.f32 %v2806, %v2854
        %2856 = vdwg.mxu0
        %2857 = vmatpush.bf16.msra.mxu0 %v2638
        %2858 = vmatpush.bf16.msra.mxu0 %v2637
        %2859 = vmatpush.bf16.msra.mxu0 %v2636
        %2860 = vmatpush.bf16.msra.mxu0 %v2635
        %2861 = vmatpush.bf16.msra.mxu0 %v2634
        %2862 = vmatpush.bf16.msra.mxu0 %v2633
        %2863 = vmatpush.bf16.msra.mxu0 %v2632
        %2864 = vmatpush.bf16.msra.mxu0 %v2631
        %2865 = vmatmul.bf16.gmra.mxu0 %v1927
        %v2866 = vpop.f32.mrf.mxu0
        %v2867 = vadd.f32 %v2818, %v2866
        %v2868 = vpop.f32.mrf.mxu0
        %v2869 = vadd.f32 %v2820, %v2868
        %2870 = vmatmul.bf16.gmra.mxu0 %v1928
        %v2871 = vpop.f32.mrf.mxu0
        %v2872 = vadd.f32 %v2823, %v2871
        %v2873 = vpop.f32.mrf.mxu0
        %v2874 = vadd.f32 %v2825, %v2873
        %2875 = vmatmul.bf16.gmra.mxu0 %v1929
        %v2876 = vpop.f32.mrf.mxu0
        %v2877 = vadd.f32 %v2828, %v2876
        %v2878 = vpop.f32.mrf.mxu0
        %v2879 = vadd.f32 %v2830, %v2878
        %2880 = vmatmul.bf16.gmra.mxu0 %v1930
        %v2881 = vpop.f32.mrf.mxu0
        %v2882 = vadd.f32 %v2833, %v2881
        %v2883 = vpop.f32.mrf.mxu0
        %v2884 = vadd.f32 %v2835, %v2883
        %2885 = vmatmul.bf16.gmra.mxu0 %v1931
        %v2886 = vpop.f32.mrf.mxu0
        %v2887 = vadd.f32 %v2838, %v2886
        %v2888 = vpop.f32.mrf.mxu0
        %v2889 = vadd.f32 %v2840, %v2888
        %2890 = vmatmul.bf16.gmra.mxu0 %v1932
        %v2891 = vpop.f32.mrf.mxu0
        %v2892 = vadd.f32 %v2843, %v2891
        %v2893 = vpop.f32.mrf.mxu0
        %v2894 = vadd.f32 %v2845, %v2893
        %2895 = vmatmul.bf16.gmra.mxu0 %v1933
        %v2896 = vpop.f32.mrf.mxu0
        %v2897 = vadd.f32 %v2848, %v2896
        %v2898 = vpop.f32.mrf.mxu0
        %v2899 = vadd.f32 %v2850, %v2898
        %2900 = vmatmul.bf16.gmra.mxu0 %v1934
        %v2901 = vpop.f32.mrf.mxu0
        %v2902 = vadd.f32 %v2853, %v2901
        %v2903 = vpop.f32.mrf.mxu0
        %v2904 = vadd.f32 %v2855, %v2903
        %2905 = vdwg.mxu0
        %2906 = vmatpush.bf16.msra.mxu0 %v2646
        %2907 = vmatpush.bf16.msra.mxu0 %v2645
        %2908 = vmatpush.bf16.msra.mxu0 %v2644
        %2909 = vmatpush.bf16.msra.mxu0 %v2643
        %2910 = vmatpush.bf16.msra.mxu0 %v2642
        %2911 = vmatpush.bf16.msra.mxu0 %v2641
        %2912 = vmatpush.bf16.msra.mxu0 %v2640
        %2913 = vmatpush.bf16.msra.mxu0 %v2639
        %2914 = vmatmul.bf16.gmra.mxu0 %v1975
        %v2915 = vpop.f32.mrf.mxu0
        %v2916 = vadd.f32 %v2867, %v2915
        %v2917 = vpop.f32.mrf.mxu0
        %v2918 = vadd.f32 %v2869, %v2917
        %2919 = vmatmul.bf16.gmra.mxu0 %v1976
        %v2920 = vpop.f32.mrf.mxu0
        %v2921 = vadd.f32 %v2872, %v2920
        %v2922 = vpop.f32.mrf.mxu0
        %v2923 = vadd.f32 %v2874, %v2922
        %2924 = vmatmul.bf16.gmra.mxu0 %v1977
        %v2925 = vpop.f32.mrf.mxu0
        %v2926 = vadd.f32 %v2877, %v2925
        %v2927 = vpop.f32.mrf.mxu0
        %v2928 = vadd.f32 %v2879, %v2927
        %2929 = vmatmul.bf16.gmra.mxu0 %v1978
        %v2930 = vpop.f32.mrf.mxu0
        %v2931 = vadd.f32 %v2882, %v2930
        %v2932 = vpop.f32.mrf.mxu0
        %v2933 = vadd.f32 %v2884, %v2932
        %2934 = vmatmul.bf16.gmra.mxu0 %v1979
        %v2935 = vpop.f32.mrf.mxu0
        %v2936 = vadd.f32 %v2887, %v2935
        %v2937 = vpop.f32.mrf.mxu0
        %v2938 = vadd.f32 %v2889, %v2937
        %2939 = vmatmul.bf16.gmra.mxu0 %v1980
        %v2940 = vpop.f32.mrf.mxu0
        %v2941 = vadd.f32 %v2892, %v2940
        %v2942 = vpop.f32.mrf.mxu0
        %v2943 = vadd.f32 %v2894, %v2942
        %2944 = vmatmul.bf16.gmra.mxu0 %v1981
        %v2945 = vpop.f32.mrf.mxu0
        %v2946 = vadd.f32 %v2897, %v2945
        %v2947 = vpop.f32.mrf.mxu0
        %v2948 = vadd.f32 %v2899, %v2947
        %2949 = vmatmul.bf16.gmra.mxu0 %v1982
        %v2950 = vpop.f32.mrf.mxu0
        %v2951 = vadd.f32 %v2902, %v2950
        %v2952 = vpop.f32.mrf.mxu0
        %v2953 = vadd.f32 %v2904, %v2952
        %2954 = vdwg.mxu0
        %2955 = vmatpush.bf16.msra.mxu0 %v2654
        %2956 = vmatpush.bf16.msra.mxu0 %v2653
        %2957 = vmatpush.bf16.msra.mxu0 %v2652
        %2958 = vmatpush.bf16.msra.mxu0 %v2651
        %2959 = vmatpush.bf16.msra.mxu0 %v2650
        %2960 = vmatpush.bf16.msra.mxu0 %v2649
        %2961 = vmatpush.bf16.msra.mxu0 %v2648
        %2962 = vmatpush.bf16.msra.mxu0 %v2647
        %2963 = vmatmul.bf16.gmra.mxu0 %v1348
        %v2964 = vpop.f32.mrf.mxu0
        %v2965 = vadd.f32 %v2916, %v2964
        %v2966 = vpop.f32.mrf.mxu0
        %v2967 = vadd.f32 %v2918, %v2966
        %2968 = vmatmul.bf16.gmra.mxu0 %v1349
        %v2969 = vpop.f32.mrf.mxu0
        %v2970 = vadd.f32 %v2921, %v2969
        %v2971 = vpop.f32.mrf.mxu0
        %v2972 = vadd.f32 %v2923, %v2971
        %2973 = vmatmul.bf16.gmra.mxu0 %v1350
        %v2974 = vpop.f32.mrf.mxu0
        %v2975 = vadd.f32 %v2926, %v2974
        %v2976 = vpop.f32.mrf.mxu0
        %v2977 = vadd.f32 %v2928, %v2976
        %2978 = vmatmul.bf16.gmra.mxu0 %v1351
        %v2979 = vpop.f32.mrf.mxu0
        %v2980 = vadd.f32 %v2931, %v2979
        %v2981 = vpop.f32.mrf.mxu0
        %v2982 = vadd.f32 %v2933, %v2981
        %2983 = vmatmul.bf16.gmra.mxu0 %v1352
        %v2984 = vpop.f32.mrf.mxu0
        %v2985 = vadd.f32 %v2936, %v2984
        %v2986 = vpop.f32.mrf.mxu0
        %v2987 = vadd.f32 %v2938, %v2986
        %2988 = vmatmul.bf16.gmra.mxu0 %v1353
        %v2989 = vpop.f32.mrf.mxu0
        %v2990 = vadd.f32 %v2941, %v2989
        %v2991 = vpop.f32.mrf.mxu0
        %v2992 = vadd.f32 %v2943, %v2991
        %2993 = vmatmul.bf16.gmra.mxu0 %v1354
        %v2994 = vpop.f32.mrf.mxu0
        %v2995 = vadd.f32 %v2946, %v2994
        %v2996 = vpop.f32.mrf.mxu0
        %v2997 = vadd.f32 %v2948, %v2996
        %2998 = vmatmul.bf16.gmra.mxu0 %v1355
        %v2999 = vpop.f32.mrf.mxu0
        %v3000 = vadd.f32 %v2951, %v2999
        %v3001 = vpop.f32.mrf.mxu0
        %v3002 = vadd.f32 %v2953, %v3001
        %3003 = vdwg.mxu0
        %3004 = vmatpush.bf16.msra.mxu0 %v2662
        %3005 = vmatpush.bf16.msra.mxu0 %v2661
        %3006 = vmatpush.bf16.msra.mxu0 %v2660
        %3007 = vmatpush.bf16.msra.mxu0 %v2659
        %3008 = vmatpush.bf16.msra.mxu0 %v2658
        %3009 = vmatpush.bf16.msra.mxu0 %v2657
        %3010 = vmatpush.bf16.msra.mxu0 %v2656
        %3011 = vmatpush.bf16.msra.mxu0 %v2655
        %3012 = vmatmul.bf16.gmra.mxu0 %v2023
        %v3013 = vpop.f32.mrf.mxu0
        %v3014 = vadd.f32 %v2965, %v3013
        %v3015 = vpop.f32.mrf.mxu0
        %v3016 = vadd.f32 %v2967, %v3015
        %3017 = vmatmul.bf16.gmra.mxu0 %v2024
        %v3018 = vpop.f32.mrf.mxu0
        %v3019 = vadd.f32 %v2970, %v3018
        %v3020 = vpop.f32.mrf.mxu0
        %v3021 = vadd.f32 %v2972, %v3020
        %3022 = vmatmul.bf16.gmra.mxu0 %v2025
        %v3023 = vpop.f32.mrf.mxu0
        %v3024 = vadd.f32 %v2975, %v3023
        %v3025 = vpop.f32.mrf.mxu0
        %v3026 = vadd.f32 %v2977, %v3025
        %3027 = vmatmul.bf16.gmra.mxu0 %v2026
        %v3028 = vpop.f32.mrf.mxu0
        %v3029 = vadd.f32 %v2980, %v3028
        %v3030 = vpop.f32.mrf.mxu0
        %v3031 = vadd.f32 %v2982, %v3030
        %3032 = vmatmul.bf16.gmra.mxu0 %v2027
        %v3033 = vpop.f32.mrf.mxu0
        %v3034 = vadd.f32 %v2985, %v3033
        %v3035 = vpop.f32.mrf.mxu0
        %v3036 = vadd.f32 %v2987, %v3035
        %3037 = vmatmul.bf16.gmra.mxu0 %v2028
        %v3038 = vpop.f32.mrf.mxu0
        %v3039 = vadd.f32 %v2990, %v3038
        %v3040 = vpop.f32.mrf.mxu0
        %v3041 = vadd.f32 %v2992, %v3040
        %3042 = vmatmul.bf16.gmra.mxu0 %v2029
        %v3043 = vpop.f32.mrf.mxu0
        %v3044 = vadd.f32 %v2995, %v3043
        %v3045 = vpop.f32.mrf.mxu0
        %v3046 = vadd.f32 %v2997, %v3045
        %3047 = vmatmul.bf16.gmra.mxu0 %v2030
        %v3048 = vpop.f32.mrf.mxu0
        %v3049 = vadd.f32 %v3000, %v3048
        %v3050 = vpop.f32.mrf.mxu0
        %v3051 = vadd.f32 %v3002, %v3050
        %3052 = vdwg.mxu0
        %3053 = vmatpush.bf16.msra.mxu0 %v2670
        %3054 = vmatpush.bf16.msra.mxu0 %v2669
        %3055 = vmatpush.bf16.msra.mxu0 %v2668
        %3056 = vmatpush.bf16.msra.mxu0 %v2667
        %3057 = vmatpush.bf16.msra.mxu0 %v2666
        %3058 = vmatpush.bf16.msra.mxu0 %v2665
        %3059 = vmatpush.bf16.msra.mxu0 %v2664
        %3060 = vmatpush.bf16.msra.mxu0 %v2663
        %3061 = vmatmul.bf16.gmra.mxu0 %v2071
        %v3062 = vpop.f32.mrf.mxu0
        %v3063 = vadd.f32 %v3014, %v3062
        %v3064 = vpop.f32.mrf.mxu0
        %v3065 = vadd.f32 %v3016, %v3064
        %3066 = vmatmul.bf16.gmra.mxu0 %v2072
        %v3067 = vpop.f32.mrf.mxu0
        %v3068 = vadd.f32 %v3019, %v3067
        %v3069 = vpop.f32.mrf.mxu0
        %v3070 = vadd.f32 %v3021, %v3069
        %3071 = vmatmul.bf16.gmra.mxu0 %v2073
        %v3072 = vpop.f32.mrf.mxu0
        %v3073 = vadd.f32 %v3024, %v3072
        %v3074 = vpop.f32.mrf.mxu0
        %v3075 = vadd.f32 %v3026, %v3074
        %3076 = vmatmul.bf16.gmra.mxu0 %v2074
        %v3077 = vpop.f32.mrf.mxu0
        %v3078 = vadd.f32 %v3029, %v3077
        %v3079 = vpop.f32.mrf.mxu0
        %v3080 = vadd.f32 %v3031, %v3079
        %3081 = vmatmul.bf16.gmra.mxu0 %v2075
        %v3082 = vpop.f32.mrf.mxu0
        %v3083 = vadd.f32 %v3034, %v3082
        %v3084 = vpop.f32.mrf.mxu0
        %v3085 = vadd.f32 %v3036, %v3084
        %3086 = vmatmul.bf16.gmra.mxu0 %v2076
        %v3087 = vpop.f32.mrf.mxu0
        %v3088 = vadd.f32 %v3039, %v3087
        %v3089 = vpop.f32.mrf.mxu0
        %v3090 = vadd.f32 %v3041, %v3089
        %3091 = vmatmul.bf16.gmra.mxu0 %v2077
        %v3092 = vpop.f32.mrf.mxu0
        %v3093 = vadd.f32 %v3044, %v3092
        %v3094 = vpop.f32.mrf.mxu0
        %v3095 = vadd.f32 %v3046, %v3094
        %3096 = vmatmul.bf16.gmra.mxu0 %v2078
        %v3097 = vpop.f32.mrf.mxu0
        %v3098 = vadd.f32 %v3049, %v3097
        %v3099 = vpop.f32.mrf.mxu0
        %v3100 = vadd.f32 %v3051, %v3099
        %3101 = vdwg.mxu0
        %3102 = vmatpush.bf16.msra.mxu0 %v2678
        %3103 = vmatpush.bf16.msra.mxu0 %v2677
        %3104 = vmatpush.bf16.msra.mxu0 %v2676
        %3105 = vmatpush.bf16.msra.mxu0 %v2675
        %3106 = vmatpush.bf16.msra.mxu0 %v2674
        %3107 = vmatpush.bf16.msra.mxu0 %v2673
        %3108 = vmatpush.bf16.msra.mxu0 %v2672
        %3109 = vmatpush.bf16.msra.mxu0 %v2671
        %3110 = vmatmul.bf16.gmra.mxu0 %v2119
        %v3111 = vpop.f32.mrf.mxu0
        %v3112 = vadd.f32 %v3063, %v3111
        %v3113 = vpop.f32.mrf.mxu0
        %v3114 = vadd.f32 %v3065, %v3113
        %3115 = vmatmul.bf16.gmra.mxu0 %v2120
        %v3116 = vpop.f32.mrf.mxu0
        %v3117 = vadd.f32 %v3068, %v3116
        %v3118 = vpop.f32.mrf.mxu0
        %v3119 = vadd.f32 %v3070, %v3118
        %3120 = vmatmul.bf16.gmra.mxu0 %v2121
        %v3121 = vpop.f32.mrf.mxu0
        %v3122 = vadd.f32 %v3073, %v3121
        %v3123 = vpop.f32.mrf.mxu0
        %v3124 = vadd.f32 %v3075, %v3123
        %3125 = vmatmul.bf16.gmra.mxu0 %v2122
        %v3126 = vpop.f32.mrf.mxu0
        %v3127 = vadd.f32 %v3078, %v3126
        %v3128 = vpop.f32.mrf.mxu0
        %v3129 = vadd.f32 %v3080, %v3128
        %3130 = vmatmul.bf16.gmra.mxu0 %v2123
        %v3131 = vpop.f32.mrf.mxu0
        %v3132 = vadd.f32 %v3083, %v3131
        %v3133 = vpop.f32.mrf.mxu0
        %v3134 = vadd.f32 %v3085, %v3133
        %3135 = vmatmul.bf16.gmra.mxu0 %v2124
        %v3136 = vpop.f32.mrf.mxu0
        %v3137 = vadd.f32 %v3088, %v3136
        %v3138 = vpop.f32.mrf.mxu0
        %v3139 = vadd.f32 %v3090, %v3138
        %3140 = vmatmul.bf16.gmra.mxu0 %v2125
        %v3141 = vpop.f32.mrf.mxu0
        %v3142 = vadd.f32 %v3093, %v3141
        %v3143 = vpop.f32.mrf.mxu0
        %v3144 = vadd.f32 %v3095, %v3143
        %3145 = vmatmul.bf16.gmra.mxu0 %v2126
        %v3146 = vpop.f32.mrf.mxu0
        %v3147 = vadd.f32 %v3098, %v3146
        %v3148 = vpop.f32.mrf.mxu0
        %v3149 = vadd.f32 %v3100, %v3148
        %3150 = vdwg.mxu0
        %3151 = vmatpush.bf16.msra.mxu0 %v2686
        %3152 = vmatpush.bf16.msra.mxu0 %v2685
        %3153 = vmatpush.bf16.msra.mxu0 %v2684
        %3154 = vmatpush.bf16.msra.mxu0 %v2683
        %3155 = vmatpush.bf16.msra.mxu0 %v2682
        %3156 = vmatpush.bf16.msra.mxu0 %v2681
        %3157 = vmatpush.bf16.msra.mxu0 %v2680
        %3158 = vmatpush.bf16.msra.mxu0 %v2679
        %3159 = vmatmul.bf16.gmra.mxu0 %v2167
        %v3160 = vpop.f32.mrf.mxu0
        %v3161 = vadd.f32 %v3112, %v3160
        %v3162 = vpop.f32.mrf.mxu0
        %v3163 = vadd.f32 %v3114, %v3162
        %3164 = vmatmul.bf16.gmra.mxu0 %v2168
        %v3165 = vpop.f32.mrf.mxu0
        %v3166 = vadd.f32 %v3117, %v3165
        %v3167 = vpop.f32.mrf.mxu0
        %v3168 = vadd.f32 %v3119, %v3167
        %3169 = vmatmul.bf16.gmra.mxu0 %v2169
        %v3170 = vpop.f32.mrf.mxu0
        %v3171 = vadd.f32 %v3122, %v3170
        %v3172 = vpop.f32.mrf.mxu0
        %v3173 = vadd.f32 %v3124, %v3172
        %3174 = vmatmul.bf16.gmra.mxu0 %v2170
        %v3175 = vpop.f32.mrf.mxu0
        %v3176 = vadd.f32 %v3127, %v3175
        %v3177 = vpop.f32.mrf.mxu0
        %v3178 = vadd.f32 %v3129, %v3177
        %3179 = vmatmul.bf16.gmra.mxu0 %v2171
        %v3180 = vpop.f32.mrf.mxu0
        %v3181 = vadd.f32 %v3132, %v3180
        %v3182 = vpop.f32.mrf.mxu0
        %v3183 = vadd.f32 %v3134, %v3182
        %3184 = vmatmul.bf16.gmra.mxu0 %v2172
        %v3185 = vpop.f32.mrf.mxu0
        %v3186 = vadd.f32 %v3137, %v3185
        %v3187 = vpop.f32.mrf.mxu0
        %v3188 = vadd.f32 %v3139, %v3187
        %3189 = vmatmul.bf16.gmra.mxu0 %v2173
        %v3190 = vpop.f32.mrf.mxu0
        %v3191 = vadd.f32 %v3142, %v3190
        %v3192 = vpop.f32.mrf.mxu0
        %v3193 = vadd.f32 %v3144, %v3192
        %3194 = vmatmul.bf16.gmra.mxu0 %v2174
        %v3195 = vpop.f32.mrf.mxu0
        %v3196 = vadd.f32 %v3147, %v3195
        %v3197 = vpop.f32.mrf.mxu0
        %v3198 = vadd.f32 %v3149, %v3197
        %3199 = vdwg.mxu0
        %v3200 = vld [vmem:[#allocation12 + $0x1] sm:$0x1]
        %v3201 = vld [vmem:[#allocation13 + $0x1] sm:$0x1]
        %v3202 = vperm.slane %v3200, 0
        %v3203 = vmul.f32 %v3161, %v3202
        %v3204 = vmul.f32 %v3163, %v3202
        %v3205 = vmul.f32 %v3166, %v3202
        %v3206 = vmul.f32 %v3168, %v3202
        %v3207 = vmul.f32 %v3171, %v3202
        %v3208 = vmul.f32 %v3173, %v3202
        %v3209 = vmul.f32 %v3176, %v3202
        %v3210 = vmul.f32 %v3178, %v3202
        %v3211 = vmul.f32 %v3181, %v3202
        %v3212 = vmul.f32 %v3183, %v3202
        %v3213 = vmul.f32 %v3186, %v3202
        %v3214 = vmul.f32 %v3188, %v3202
        %v3215 = vmul.f32 %v3191, %v3202
        %v3216 = vmul.f32 %v3193, %v3202
        %v3217 = vmul.f32 %v3196, %v3202
        %v3218 = vmul.f32 %v3198, %v3202
        %v3219 = vperm.slane %v3201, 0
        %v3220 = vadd.f32 %v3203, %v3219
        %v3221 = vadd.f32 %v3204, %v3219
        %v3222 = vadd.f32 %v3205, %v3219
        %v3223 = vadd.f32 %v3206, %v3219
        %v3224 = vadd.f32 %v3207, %v3219
        %v3225 = vadd.f32 %v3208, %v3219
        %v3226 = vadd.f32 %v3209, %v3219
        %v3227 = vadd.f32 %v3210, %v3219
        %v3228 = vadd.f32 %v3211, %v3219
        %v3229 = vadd.f32 %v3212, %v3219
        %v3230 = vadd.f32 %v3213, %v3219
        %v3231 = vadd.f32 %v3214, %v3219
        %v3232 = vadd.f32 %v3215, %v3219
        %v3233 = vadd.f32 %v3216, %v3219
        %v3234 = vadd.f32 %v3217, %v3219
        %v3235 = vadd.f32 %v3218, %v3219
        %v3236 = vmax.f32 %v3220, 0.0
        %v3237 = vmax.f32 %v3221, 0.0
        %v3238 = vmax.f32 %v3222, 0.0
        %v3239 = vmax.f32 %v3223, 0.0
        %v3240 = vmax.f32 %v3224, 0.0
        %v3241 = vmax.f32 %v3225, 0.0
        %v3242 = vmax.f32 %v3226, 0.0
        %v3243 = vmax.f32 %v3227, 0.0
        %v3244 = vmax.f32 %v3228, 0.0
        %v3245 = vmax.f32 %v3229, 0.0
        %v3246 = vmax.f32 %v3230, 0.0
        %v3247 = vmax.f32 %v3231, 0.0
        %v3248 = vmax.f32 %v3232, 0.0
        %v3249 = vmax.f32 %v3233, 0.0
        %v3250 = vmax.f32 %v3234, 0.0
        %v3251 = vmax.f32 %v3235, 0.0
        %v3252 = vpack.c.bf16 %v3237, %v3236
        %v3253 = vpack.c.bf16 %v3239, %v3238
        %v3254 = vpack.c.bf16 %v3241, %v3240
        %v3255 = vpack.c.bf16 %v3243, %v3242
        %v3256 = vpack.c.bf16 %v3245, %v3244
        %v3257 = vpack.c.bf16 %v3247, %v3246
        %v3258 = vpack.c.bf16 %v3249, %v3248
        %v3259 = vpack.c.bf16 %v3251, %v3250
        %s3260 = scalar_lea.vmem [#allocation10], 64
        %v3261 = vld [vmem:[%s3260] sm:$0xf]
        %v3262 = vld [vmem:[%s3260 + $0x4] sm:$0xf]
        %v3263 = vld [vmem:[%s3260 + $0x8] sm:$0xf]
        %v3264 = vld [vmem:[%s3260 + $0xc] sm:$0xf]
        %v3265 = vld [vmem:[%s3260 + $0x10] sm:$0xf]
        %v3266 = vld [vmem:[%s3260 + $0x14] sm:$0xf]
        %v3267 = vld [vmem:[%s3260 + $0x18] sm:$0xf]
        %v3268 = vld [vmem:[%s3260 + $0x1c] sm:$0xf]
        %v3269 = vld [vmem:[%s3260 + $0x20] sm:$0xf]
        %v3270 = vld [vmem:[%s3260 + $0x24] sm:$0xf]
        %v3271 = vld [vmem:[%s3260 + $0x28] sm:$0xf]
        %v3272 = vld [vmem:[%s3260 + $0x2c] sm:$0xf]
        %v3273 = vld [vmem:[%s3260 + $0x30] sm:$0xf]
        %v3274 = vld [vmem:[%s3260 + $0x34] sm:$0xf]
        %v3275 = vld [vmem:[%s3260 + $0x38] sm:$0xf]
        %v3276 = vld [vmem:[%s3260 + $0x3c] sm:$0xf]
        %v3293 = vunpack.c.l.b16 %v3261
        %v3294 = vunpack.c.l.b16 %v3262
        %v3295 = vunpack.c.l.b16 %v3263
        %v3296 = vunpack.c.l.b16 %v3264
        %v3297 = vunpack.c.l.b16 %v3265
        %v3298 = vunpack.c.l.b16 %v3266
        %v3299 = vunpack.c.l.b16 %v3267
        %v3300 = vunpack.c.l.b16 %v3268
        %v3301 = vunpack.c.l.b16 %v3269
        %v3302 = vunpack.c.l.b16 %v3270
        %v3303 = vunpack.c.l.b16 %v3271
        %v3304 = vunpack.c.l.b16 %v3272
        %v3305 = vunpack.c.l.b16 %v3273
        %v3306 = vunpack.c.l.b16 %v3274
        %v3307 = vunpack.c.l.b16 %v3275
        %v3308 = vunpack.c.l.b16 %v3276
        %v3309 = vpack.c.b16 %v3294, %v3293
        %v3310 = vpack.c.b16 %v3296, %v3295
        %v3311 = vpack.c.b16 %v3298, %v3297
        %v3312 = vpack.c.b16 %v3300, %v3299
        %v3313 = vpack.c.b16 %v3302, %v3301
        %v3314 = vpack.c.b16 %v3304, %v3303
        %v3315 = vpack.c.b16 %v3306, %v3305
        %v3316 = vpack.c.b16 %v3308, %v3307
        %3325 = vmatpush.bf16.msra.mxu0 %v3316
        %3326 = vmatpush.bf16.msra.mxu0 %v3315
        %3327 = vmatpush.bf16.msra.mxu0 %v3314
        %3328 = vmatpush.bf16.msra.mxu0 %v3313
        %3329 = vmatpush.bf16.msra.mxu0 %v3312
        %3330 = vmatpush.bf16.msra.mxu0 %v3311
        %3331 = vmatpush.bf16.msra.mxu0 %v3310
        %3332 = vmatpush.bf16.msra.mxu0 %v3309
        %3333 = vmatmul.bf16.gmra.mxu0 %v3252
        %v3334 = vpop.f32.mrf.mxu0
        %v3335 = vadd.f32 0.0, %v3334
        %v3336 = vpop.f32.mrf.mxu0
        %v3337 = vadd.f32 0.0, %v3336
        %3338 = vmatmul.bf16.gmra.mxu0 %v3253
        %v3339 = vpop.f32.mrf.mxu0
        %v3340 = vadd.f32 0.0, %v3339
        %v3341 = vpop.f32.mrf.mxu0
        %v3342 = vadd.f32 0.0, %v3341
        %3343 = vmatmul.bf16.gmra.mxu0 %v3254
        %v3344 = vpop.f32.mrf.mxu0
        %v3345 = vadd.f32 0.0, %v3344
        %v3346 = vpop.f32.mrf.mxu0
        %v3347 = vadd.f32 0.0, %v3346
        %3348 = vmatmul.bf16.gmra.mxu0 %v3255
        %v3349 = vpop.f32.mrf.mxu0
        %v3350 = vadd.f32 0.0, %v3349
        %v3351 = vpop.f32.mrf.mxu0
        %v3352 = vadd.f32 0.0, %v3351
        %3353 = vmatmul.bf16.gmra.mxu0 %v3256
        %v3354 = vpop.f32.mrf.mxu0
        %v3355 = vadd.f32 0.0, %v3354
        %v3356 = vpop.f32.mrf.mxu0
        %v3357 = vadd.f32 0.0, %v3356
        %3358 = vmatmul.bf16.gmra.mxu0 %v3257
        %v3359 = vpop.f32.mrf.mxu0
        %v3360 = vadd.f32 0.0, %v3359
        %v3361 = vpop.f32.mrf.mxu0
        %v3362 = vadd.f32 0.0, %v3361
        %3363 = vmatmul.bf16.gmra.mxu0 %v3258
        %v3364 = vpop.f32.mrf.mxu0
        %v3365 = vadd.f32 0.0, %v3364
        %v3366 = vpop.f32.mrf.mxu0
        %v3367 = vadd.f32 0.0, %v3366
        %3368 = vmatmul.bf16.gmra.mxu0 %v3259
        %v3369 = vpop.f32.mrf.mxu0
        %v3370 = vadd.f32 0.0, %v3369
        %v3371 = vpop.f32.mrf.mxu0
        %v3372 = vadd.f32 0.0, %v3371
        %3373 = vdwg.mxu0
        %v3390 = vunpack.c.l.b16 %v1521
        %v3391 = vunpack.c.l.b16 %v1522
        %v3392 = vunpack.c.l.b16 %v1523
        %v3393 = vunpack.c.l.b16 %v1524
        %v3394 = vunpack.c.l.b16 %v1525
        %v3395 = vunpack.c.l.b16 %v1526
        %v3396 = vunpack.c.l.b16 %v1527
        %v3397 = vunpack.c.l.b16 %v1528
        %v3398 = vunpack.c.l.b16 %v1529
        %v3399 = vunpack.c.l.b16 %v1530
        %v3400 = vunpack.c.l.b16 %v1531
        %v3401 = vunpack.c.l.b16 %v1532
        %v3402 = vunpack.c.l.b16 %v1533
        %v3403 = vunpack.c.l.b16 %v1534
        %v3404 = vunpack.c.l.b16 %v1535
        %v3405 = vunpack.c.l.b16 %v1536
        %v3406 = vpack.c.b16 %v3391, %v3390
        %v3407 = vpack.c.b16 %v3393, %v3392
        %v3408 = vpack.c.b16 %v3395, %v3394
        %v3409 = vpack.c.b16 %v3397, %v3396
        %v3410 = vpack.c.b16 %v3399, %v3398
        %v3411 = vpack.c.b16 %v3401, %v3400
        %v3412 = vpack.c.b16 %v3403, %v3402
        %v3413 = vpack.c.b16 %v3405, %v3404
        %3422 = vmatpush.bf16.msra.mxu0 %v3413
        %3423 = vmatpush.bf16.msra.mxu0 %v3412
        %3424 = vmatpush.bf16.msra.mxu0 %v3411
        %3425 = vmatpush.bf16.msra.mxu0 %v3410
        %3426 = vmatpush.bf16.msra.mxu0 %v3409
        %3427 = vmatpush.bf16.msra.mxu0 %v3408
        %3428 = vmatpush.bf16.msra.mxu0 %v3407
        %3429 = vmatpush.bf16.msra.mxu0 %v3406
        %3430 = vmatmul.bf16.gmra.mxu0 %v1513
        %v3431 = vpop.f32.mrf.mxu0
        %v3432 = vadd.f32 %v3335, %v3431
        %v3433 = vpop.f32.mrf.mxu0
        %v3434 = vadd.f32 %v3337, %v3433
        %3435 = vmatmul.bf16.gmra.mxu0 %v1514
        %v3436 = vpop.f32.mrf.mxu0
        %v3437 = vadd.f32 %v3340, %v3436
        %v3438 = vpop.f32.mrf.mxu0
        %v3439 = vadd.f32 %v3342, %v3438
        %3440 = vmatmul.bf16.gmra.mxu0 %v1515
        %v3441 = vpop.f32.mrf.mxu0
        %v3442 = vadd.f32 %v3345, %v3441
        %v3443 = vpop.f32.mrf.mxu0
        %v3444 = vadd.f32 %v3347, %v3443
        %3445 = vmatmul.bf16.gmra.mxu0 %v1516
        %v3446 = vpop.f32.mrf.mxu0
        %v3447 = vadd.f32 %v3350, %v3446
        %v3448 = vpop.f32.mrf.mxu0
        %v3449 = vadd.f32 %v3352, %v3448
        %3450 = vmatmul.bf16.gmra.mxu0 %v1517
        %v3451 = vpop.f32.mrf.mxu0
        %v3452 = vadd.f32 %v3355, %v3451
        %v3453 = vpop.f32.mrf.mxu0
        %v3454 = vadd.f32 %v3357, %v3453
        %3455 = vmatmul.bf16.gmra.mxu0 %v1518
        %v3456 = vpop.f32.mrf.mxu0
        %v3457 = vadd.f32 %v3360, %v3456
        %v3458 = vpop.f32.mrf.mxu0
        %v3459 = vadd.f32 %v3362, %v3458
        %3460 = vmatmul.bf16.gmra.mxu0 %v1519
        %v3461 = vpop.f32.mrf.mxu0
        %v3462 = vadd.f32 %v3365, %v3461
        %v3463 = vpop.f32.mrf.mxu0
        %v3464 = vadd.f32 %v3367, %v3463
        %3465 = vmatmul.bf16.gmra.mxu0 %v1520
        %v3466 = vpop.f32.mrf.mxu0
        %v3467 = vadd.f32 %v3370, %v3466
        %v3468 = vpop.f32.mrf.mxu0
        %v3469 = vadd.f32 %v3372, %v3468
        %3470 = vdwg.mxu0
        %s3471 = sadd.s32 %s1264, 12
        %s3472 = smul.u32 %s3471, 64
        %s3473 = scalar_lea.vmem [#allocation2], %s3472
        %v3474 = vld [vmem:[%s3473 + $0xc] sm:$0xff]
        %v3475 = vld [vmem:[%s3473 + $0x14] sm:$0xff]
        %v3476 = vld [vmem:[%s3473 + $0x4c] sm:$0xff]
        %v3477 = vld [vmem:[%s3473 + $0x54] sm:$0xff]
        %v3478 = vld [vmem:[%s3473 + $0x8c] sm:$0xff]
        %v3479 = vld [vmem:[%s3473 + $0x94] sm:$0xff]
        %v3480 = vld [vmem:[%s3473 + $0xcc] sm:$0xff]
        %v3481 = vld [vmem:[%s3473 + $0xd4] sm:$0xff]
        %v3482 = vld [vmem:[%s3473 + $0x10c] sm:$0xff]
        %v3483 = vld [vmem:[%s3473 + $0x114] sm:$0xff]
        %v3484 = vld [vmem:[%s3473 + $0x14c] sm:$0xff]
        %v3485 = vld [vmem:[%s3473 + $0x154] sm:$0xff]
        %v3486 = vld [vmem:[%s3473 + $0x18c] sm:$0xff]
        %v3487 = vld [vmem:[%s3473 + $0x194] sm:$0xff]
        %v3488 = vld [vmem:[%s3473 + $0x1cc] sm:$0xff]
        %v3489 = vld [vmem:[%s3473 + $0x1d4] sm:$0xff]
        %v3490 = vpack.c.bf16 %v3474, %v3474
        %v3491 = vpack.c.bf16 %v3475, %v3475
        %v3492 = vpack.c.bf16 %v3476, %v3476
        %v3493 = vpack.c.bf16 %v3477, %v3477
        %v3494 = vpack.c.bf16 %v3478, %v3478
        %v3495 = vpack.c.bf16 %v3479, %v3479
        %v3496 = vpack.c.bf16 %v3480, %v3480
        %v3497 = vpack.c.bf16 %v3481, %v3481
        %v3498 = vpack.c.bf16 %v3482, %v3482
        %v3499 = vpack.c.bf16 %v3483, %v3483
        %v3500 = vpack.c.bf16 %v3484, %v3484
        %v3501 = vpack.c.bf16 %v3485, %v3485
        %v3502 = vpack.c.bf16 %v3486, %v3486
        %v3503 = vpack.c.bf16 %v3487, %v3487
        %v3504 = vpack.c.bf16 %v3488, %v3488
        %v3505 = vpack.c.bf16 %v3489, %v3489
        %v3506 = vld [vmem:[%s3473 + $0x18] sm:$0xff]
        %v3507 = vld [vmem:[%s3473 + $0x20] sm:$0xff]
        %v3508 = vld [vmem:[%s3473 + $0x58] sm:$0xff]
        %v3509 = vld [vmem:[%s3473 + $0x60] sm:$0xff]
        %v3510 = vld [vmem:[%s3473 + $0x98] sm:$0xff]
        %v3511 = vld [vmem:[%s3473 + $0xa0] sm:$0xff]
        %v3512 = vld [vmem:[%s3473 + $0xd8] sm:$0xff]
        %v3513 = vld [vmem:[%s3473 + $0xe0] sm:$0xff]
        %v3514 = vld [vmem:[%s3473 + $0x118] sm:$0xff]
        %v3515 = vld [vmem:[%s3473 + $0x120] sm:$0xff]
        %v3516 = vld [vmem:[%s3473 + $0x158] sm:$0xff]
        %v3517 = vld [vmem:[%s3473 + $0x160] sm:$0xff]
        %v3518 = vld [vmem:[%s3473 + $0x198] sm:$0xff]
        %v3519 = vld [vmem:[%s3473 + $0x1a0] sm:$0xff]
        %v3520 = vld [vmem:[%s3473 + $0x1d8] sm:$0xff]
        %v3521 = vld [vmem:[%s3473 + $0x1e0] sm:$0xff]
        %v3522 = vpack.c.bf16 %v3506, %v3506
        %v3523 = vpack.c.bf16 %v3507, %v3507
        %v3524 = vpack.c.bf16 %v3508, %v3508
        %v3525 = vpack.c.bf16 %v3509, %v3509
        %v3526 = vpack.c.bf16 %v3510, %v3510
        %v3527 = vpack.c.bf16 %v3511, %v3511
        %v3528 = vpack.c.bf16 %v3512, %v3512
        %v3529 = vpack.c.bf16 %v3513, %v3513
        %v3530 = vpack.c.bf16 %v3514, %v3514
        %v3531 = vpack.c.bf16 %v3515, %v3515
        %v3532 = vpack.c.bf16 %v3516, %v3516
        %v3533 = vpack.c.bf16 %v3517, %v3517
        %v3534 = vpack.c.bf16 %v3518, %v3518
        %v3535 = vpack.c.bf16 %v3519, %v3519
        %v3536 = vpack.c.bf16 %v3520, %v3520
        %v3537 = vpack.c.bf16 %v3521, %v3521
        %v3538 = vld [vmem:[%s3473 + $0x24] sm:$0xff]
        %v3539 = vld [vmem:[%s3473 + $0x2c] sm:$0xff]
        %v3540 = vld [vmem:[%s3473 + $0x64] sm:$0xff]
        %v3541 = vld [vmem:[%s3473 + $0x6c] sm:$0xff]
        %v3542 = vld [vmem:[%s3473 + $0xa4] sm:$0xff]
        %v3543 = vld [vmem:[%s3473 + $0xac] sm:$0xff]
        %v3544 = vld [vmem:[%s3473 + $0xe4] sm:$0xff]
        %v3545 = vld [vmem:[%s3473 + $0xec] sm:$0xff]
        %v3546 = vld [vmem:[%s3473 + $0x124] sm:$0xff]
        %v3547 = vld [vmem:[%s3473 + $0x12c] sm:$0xff]
        %v3548 = vld [vmem:[%s3473 + $0x164] sm:$0xff]
        %v3549 = vld [vmem:[%s3473 + $0x16c] sm:$0xff]
        %v3550 = vld [vmem:[%s3473 + $0x1a4] sm:$0xff]
        %v3551 = vld [vmem:[%s3473 + $0x1ac] sm:$0xff]
        %v3552 = vld [vmem:[%s3473 + $0x1e4] sm:$0xff]
        %v3553 = vld [vmem:[%s3473 + $0x1ec] sm:$0xff]
        %v3554 = vpack.c.bf16 %v3538, %v3538
        %v3555 = vpack.c.bf16 %v3539, %v3539
        %v3556 = vpack.c.bf16 %v3540, %v3540
        %v3557 = vpack.c.bf16 %v3541, %v3541
        %v3558 = vpack.c.bf16 %v3542, %v3542
        %v3559 = vpack.c.bf16 %v3543, %v3543
        %v3560 = vpack.c.bf16 %v3544, %v3544
        %v3561 = vpack.c.bf16 %v3545, %v3545
        %v3562 = vpack.c.bf16 %v3546, %v3546
        %v3563 = vpack.c.bf16 %v3547, %v3547
        %v3564 = vpack.c.bf16 %v3548, %v3548
        %v3565 = vpack.c.bf16 %v3549, %v3549
        %v3566 = vpack.c.bf16 %v3550, %v3550
        %v3567 = vpack.c.bf16 %v3551, %v3551
        %v3568 = vpack.c.bf16 %v3552, %v3552
        %v3569 = vpack.c.bf16 %v3553, %v3553
        %v3570 = vld [vmem:[%s1267 + $0xc] sm:$0xff]
        %v3571 = vld [vmem:[%s1267 + $0x14] sm:$0xff]
        %v3572 = vld [vmem:[%s1267 + $0x4c] sm:$0xff]
        %v3573 = vld [vmem:[%s1267 + $0x54] sm:$0xff]
        %v3574 = vld [vmem:[%s1267 + $0x8c] sm:$0xff]
        %v3575 = vld [vmem:[%s1267 + $0x94] sm:$0xff]
        %v3576 = vld [vmem:[%s1267 + $0xcc] sm:$0xff]
        %v3577 = vld [vmem:[%s1267 + $0xd4] sm:$0xff]
        %v3578 = vld [vmem:[%s1267 + $0x10c] sm:$0xff]
        %v3579 = vld [vmem:[%s1267 + $0x114] sm:$0xff]
        %v3580 = vld [vmem:[%s1267 + $0x14c] sm:$0xff]
        %v3581 = vld [vmem:[%s1267 + $0x154] sm:$0xff]
        %v3582 = vld [vmem:[%s1267 + $0x18c] sm:$0xff]
        %v3583 = vld [vmem:[%s1267 + $0x194] sm:$0xff]
        %v3584 = vld [vmem:[%s1267 + $0x1cc] sm:$0xff]
        %v3585 = vld [vmem:[%s1267 + $0x1d4] sm:$0xff]
        %v3586 = vpack.c.bf16 %v3570, %v3570
        %v3587 = vpack.c.bf16 %v3571, %v3571
        %v3588 = vpack.c.bf16 %v3572, %v3572
        %v3589 = vpack.c.bf16 %v3573, %v3573
        %v3590 = vpack.c.bf16 %v3574, %v3574
        %v3591 = vpack.c.bf16 %v3575, %v3575
        %v3592 = vpack.c.bf16 %v3576, %v3576
        %v3593 = vpack.c.bf16 %v3577, %v3577
        %v3594 = vpack.c.bf16 %v3578, %v3578
        %v3595 = vpack.c.bf16 %v3579, %v3579
        %v3596 = vpack.c.bf16 %v3580, %v3580
        %v3597 = vpack.c.bf16 %v3581, %v3581
        %v3598 = vpack.c.bf16 %v3582, %v3582
        %v3599 = vpack.c.bf16 %v3583, %v3583
        %v3600 = vpack.c.bf16 %v3584, %v3584
        %v3601 = vpack.c.bf16 %v3585, %v3585
        %v3602 = vld [vmem:[%s1267 + $0x24] sm:$0xff]
        %v3603 = vld [vmem:[%s1267 + $0x2c] sm:$0xff]
        %v3604 = vld [vmem:[%s1267 + $0x64] sm:$0xff]
        %v3605 = vld [vmem:[%s1267 + $0x6c] sm:$0xff]
        %v3606 = vld [vmem:[%s1267 + $0xa4] sm:$0xff]
        %v3607 = vld [vmem:[%s1267 + $0xac] sm:$0xff]
        %v3608 = vld [vmem:[%s1267 + $0xe4] sm:$0xff]
        %v3609 = vld [vmem:[%s1267 + $0xec] sm:$0xff]
        %v3610 = vld [vmem:[%s1267 + $0x124] sm:$0xff]
        %v3611 = vld [vmem:[%s1267 + $0x12c] sm:$0xff]
        %v3612 = vld [vmem:[%s1267 + $0x164] sm:$0xff]
        %v3613 = vld [vmem:[%s1267 + $0x16c] sm:$0xff]
        %v3614 = vld [vmem:[%s1267 + $0x1a4] sm:$0xff]
        %v3615 = vld [vmem:[%s1267 + $0x1ac] sm:$0xff]
        %v3616 = vld [vmem:[%s1267 + $0x1e4] sm:$0xff]
        %v3617 = vld [vmem:[%s1267 + $0x1ec] sm:$0xff]
        %v3618 = vpack.c.bf16 %v3602, %v3602
        %v3619 = vpack.c.bf16 %v3603, %v3603
        %v3620 = vpack.c.bf16 %v3604, %v3604
        %v3621 = vpack.c.bf16 %v3605, %v3605
        %v3622 = vpack.c.bf16 %v3606, %v3606
        %v3623 = vpack.c.bf16 %v3607, %v3607
        %v3624 = vpack.c.bf16 %v3608, %v3608
        %v3625 = vpack.c.bf16 %v3609, %v3609
        %v3626 = vpack.c.bf16 %v3610, %v3610
        %v3627 = vpack.c.bf16 %v3611, %v3611
        %v3628 = vpack.c.bf16 %v3612, %v3612
        %v3629 = vpack.c.bf16 %v3613, %v3613
        %v3630 = vpack.c.bf16 %v3614, %v3614
        %v3631 = vpack.c.bf16 %v3615, %v3615
        %v3632 = vpack.c.bf16 %v3616, %v3616
        %v3633 = vpack.c.bf16 %v3617, %v3617
        %s3634 = sadd.s32 %s1264, 36
        %s3635 = smul.u32 %s3634, 64
        %s3636 = scalar_lea.vmem [#allocation2], %s3635
        %v3637 = vld [vmem:[%s3636 + $0xc] sm:$0xff]
        %v3638 = vld [vmem:[%s3636 + $0x14] sm:$0xff]
        %v3639 = vld [vmem:[%s3636 + $0x4c] sm:$0xff]
        %v3640 = vld [vmem:[%s3636 + $0x54] sm:$0xff]
        %v3641 = vld [vmem:[%s3636 + $0x8c] sm:$0xff]
        %v3642 = vld [vmem:[%s3636 + $0x94] sm:$0xff]
        %v3643 = vld [vmem:[%s3636 + $0xcc] sm:$0xff]
        %v3644 = vld [vmem:[%s3636 + $0xd4] sm:$0xff]
        %v3645 = vld [vmem:[%s3636 + $0x10c] sm:$0xff]
        %v3646 = vld [vmem:[%s3636 + $0x114] sm:$0xff]
        %v3647 = vld [vmem:[%s3636 + $0x14c] sm:$0xff]
        %v3648 = vld [vmem:[%s3636 + $0x154] sm:$0xff]
        %v3649 = vld [vmem:[%s3636 + $0x18c] sm:$0xff]
        %v3650 = vld [vmem:[%s3636 + $0x194] sm:$0xff]
        %v3651 = vld [vmem:[%s3636 + $0x1cc] sm:$0xff]
        %v3652 = vld [vmem:[%s3636 + $0x1d4] sm:$0xff]
        %v3653 = vpack.c.bf16 %v3637, %v3637
        %v3654 = vpack.c.bf16 %v3638, %v3638
        %v3655 = vpack.c.bf16 %v3639, %v3639
        %v3656 = vpack.c.bf16 %v3640, %v3640
        %v3657 = vpack.c.bf16 %v3641, %v3641
        %v3658 = vpack.c.bf16 %v3642, %v3642
        %v3659 = vpack.c.bf16 %v3643, %v3643
        %v3660 = vpack.c.bf16 %v3644, %v3644
        %v3661 = vpack.c.bf16 %v3645, %v3645
        %v3662 = vpack.c.bf16 %v3646, %v3646
        %v3663 = vpack.c.bf16 %v3647, %v3647
        %v3664 = vpack.c.bf16 %v3648, %v3648
        %v3665 = vpack.c.bf16 %v3649, %v3649
        %v3666 = vpack.c.bf16 %v3650, %v3650
        %v3667 = vpack.c.bf16 %v3651, %v3651
        %v3668 = vpack.c.bf16 %v3652, %v3652
        %v3669 = vld [vmem:[%s3636 + $0x18] sm:$0xff]
        %v3670 = vld [vmem:[%s3636 + $0x20] sm:$0xff]
        %v3671 = vld [vmem:[%s3636 + $0x58] sm:$0xff]
        %v3672 = vld [vmem:[%s3636 + $0x60] sm:$0xff]
        %v3673 = vld [vmem:[%s3636 + $0x98] sm:$0xff]
        %v3674 = vld [vmem:[%s3636 + $0xa0] sm:$0xff]
        %v3675 = vld [vmem:[%s3636 + $0xd8] sm:$0xff]
        %v3676 = vld [vmem:[%s3636 + $0xe0] sm:$0xff]
        %v3677 = vld [vmem:[%s3636 + $0x118] sm:$0xff]
        %v3678 = vld [vmem:[%s3636 + $0x120] sm:$0xff]
        %v3679 = vld [vmem:[%s3636 + $0x158] sm:$0xff]
        %v3680 = vld [vmem:[%s3636 + $0x160] sm:$0xff]
        %v3681 = vld [vmem:[%s3636 + $0x198] sm:$0xff]
        %v3682 = vld [vmem:[%s3636 + $0x1a0] sm:$0xff]
        %v3683 = vld [vmem:[%s3636 + $0x1d8] sm:$0xff]
        %v3684 = vld [vmem:[%s3636 + $0x1e0] sm:$0xff]
        %v3685 = vpack.c.bf16 %v3669, %v3669
        %v3686 = vpack.c.bf16 %v3670, %v3670
        %v3687 = vpack.c.bf16 %v3671, %v3671
        %v3688 = vpack.c.bf16 %v3672, %v3672
        %v3689 = vpack.c.bf16 %v3673, %v3673
        %v3690 = vpack.c.bf16 %v3674, %v3674
        %v3691 = vpack.c.bf16 %v3675, %v3675
        %v3692 = vpack.c.bf16 %v3676, %v3676
        %v3693 = vpack.c.bf16 %v3677, %v3677
        %v3694 = vpack.c.bf16 %v3678, %v3678
        %v3695 = vpack.c.bf16 %v3679, %v3679
        %v3696 = vpack.c.bf16 %v3680, %v3680
        %v3697 = vpack.c.bf16 %v3681, %v3681
        %v3698 = vpack.c.bf16 %v3682, %v3682
        %v3699 = vpack.c.bf16 %v3683, %v3683
        %v3700 = vpack.c.bf16 %v3684, %v3684
        %v3701 = vld [vmem:[%s3636 + $0x24] sm:$0xff]
        %v3702 = vld [vmem:[%s3636 + $0x2c] sm:$0xff]
        %v3703 = vld [vmem:[%s3636 + $0x64] sm:$0xff]
        %v3704 = vld [vmem:[%s3636 + $0x6c] sm:$0xff]
        %v3705 = vld [vmem:[%s3636 + $0xa4] sm:$0xff]
        %v3706 = vld [vmem:[%s3636 + $0xac] sm:$0xff]
        %v3707 = vld [vmem:[%s3636 + $0xe4] sm:$0xff]
        %v3708 = vld [vmem:[%s3636 + $0xec] sm:$0xff]
        %v3709 = vld [vmem:[%s3636 + $0x124] sm:$0xff]
        %v3710 = vld [vmem:[%s3636 + $0x12c] sm:$0xff]
        %v3711 = vld [vmem:[%s3636 + $0x164] sm:$0xff]
        %v3712 = vld [vmem:[%s3636 + $0x16c] sm:$0xff]
        %v3713 = vld [vmem:[%s3636 + $0x1a4] sm:$0xff]
        %v3714 = vld [vmem:[%s3636 + $0x1ac] sm:$0xff]
        %v3715 = vld [vmem:[%s3636 + $0x1e4] sm:$0xff]
        %v3716 = vld [vmem:[%s3636 + $0x1ec] sm:$0xff]
        %v3717 = vpack.c.bf16 %v3701, %v3701
        %v3718 = vpack.c.bf16 %v3702, %v3702
        %v3719 = vpack.c.bf16 %v3703, %v3703
        %v3720 = vpack.c.bf16 %v3704, %v3704
        %v3721 = vpack.c.bf16 %v3705, %v3705
        %v3722 = vpack.c.bf16 %v3706, %v3706
        %v3723 = vpack.c.bf16 %v3707, %v3707
        %v3724 = vpack.c.bf16 %v3708, %v3708
        %v3725 = vpack.c.bf16 %v3709, %v3709
        %v3726 = vpack.c.bf16 %v3710, %v3710
        %v3727 = vpack.c.bf16 %v3711, %v3711
        %v3728 = vpack.c.bf16 %v3712, %v3712
        %v3729 = vpack.c.bf16 %v3713, %v3713
        %v3730 = vpack.c.bf16 %v3714, %v3714
        %v3731 = vpack.c.bf16 %v3715, %v3715
        %v3732 = vpack.c.bf16 %v3716, %v3716
        %v3749 = vunpack.c.l.b16 %v3490
        %v3750 = vunpack.c.l.b16 %v3491
        %v3751 = vunpack.c.l.b16 %v3492
        %v3752 = vunpack.c.l.b16 %v3493
        %v3753 = vunpack.c.l.b16 %v3494
        %v3754 = vunpack.c.l.b16 %v3495
        %v3755 = vunpack.c.l.b16 %v3496
        %v3756 = vunpack.c.l.b16 %v3497
        %v3757 = vunpack.c.l.b16 %v3498
        %v3758 = vunpack.c.l.b16 %v3499
        %v3759 = vunpack.c.l.b16 %v3500
        %v3760 = vunpack.c.l.b16 %v3501
        %v3761 = vunpack.c.l.b16 %v3502
        %v3762 = vunpack.c.l.b16 %v3503
        %v3763 = vunpack.c.l.b16 %v3504
        %v3764 = vunpack.c.l.b16 %v3505
        %v3765 = vpack.c.b16 %v3750, %v3749
        %v3766 = vpack.c.b16 %v3752, %v3751
        %v3767 = vpack.c.b16 %v3754, %v3753
        %v3768 = vpack.c.b16 %v3756, %v3755
        %v3769 = vpack.c.b16 %v3758, %v3757
        %v3770 = vpack.c.b16 %v3760, %v3759
        %v3771 = vpack.c.b16 %v3762, %v3761
        %v3772 = vpack.c.b16 %v3764, %v3763
        %v3797 = vunpack.c.l.b16 %v3522
        %v3798 = vunpack.c.l.b16 %v3523
        %v3799 = vunpack.c.l.b16 %v3524
        %v3800 = vunpack.c.l.b16 %v3525
        %v3801 = vunpack.c.l.b16 %v3526
        %v3802 = vunpack.c.l.b16 %v3527
        %v3803 = vunpack.c.l.b16 %v3528
        %v3804 = vunpack.c.l.b16 %v3529
        %v3805 = vunpack.c.l.b16 %v3530
        %v3806 = vunpack.c.l.b16 %v3531
        %v3807 = vunpack.c.l.b16 %v3532
        %v3808 = vunpack.c.l.b16 %v3533
        %v3809 = vunpack.c.l.b16 %v3534
        %v3810 = vunpack.c.l.b16 %v3535
        %v3811 = vunpack.c.l.b16 %v3536
        %v3812 = vunpack.c.l.b16 %v3537
        %v3813 = vpack.c.b16 %v3798, %v3797
        %v3814 = vpack.c.b16 %v3800, %v3799
        %v3815 = vpack.c.b16 %v3802, %v3801
        %v3816 = vpack.c.b16 %v3804, %v3803
        %v3817 = vpack.c.b16 %v3806, %v3805
        %v3818 = vpack.c.b16 %v3808, %v3807
        %v3819 = vpack.c.b16 %v3810, %v3809
        %v3820 = vpack.c.b16 %v3812, %v3811
        %v3845 = vunpack.c.l.b16 %v3554
        %v3846 = vunpack.c.l.b16 %v3555
        %v3847 = vunpack.c.l.b16 %v3556
        %v3848 = vunpack.c.l.b16 %v3557
        %v3849 = vunpack.c.l.b16 %v3558
        %v3850 = vunpack.c.l.b16 %v3559
        %v3851 = vunpack.c.l.b16 %v3560
        %v3852 = vunpack.c.l.b16 %v3561
        %v3853 = vunpack.c.l.b16 %v3562
        %v3854 = vunpack.c.l.b16 %v3563
        %v3855 = vunpack.c.l.b16 %v3564
        %v3856 = vunpack.c.l.b16 %v3565
        %v3857 = vunpack.c.l.b16 %v3566
        %v3858 = vunpack.c.l.b16 %v3567
        %v3859 = vunpack.c.l.b16 %v3568
        %v3860 = vunpack.c.l.b16 %v3569
        %v3861 = vpack.c.b16 %v3846, %v3845
        %v3862 = vpack.c.b16 %v3848, %v3847
        %v3863 = vpack.c.b16 %v3850, %v3849
        %v3864 = vpack.c.b16 %v3852, %v3851
        %v3865 = vpack.c.b16 %v3854, %v3853
        %v3866 = vpack.c.b16 %v3856, %v3855
        %v3867 = vpack.c.b16 %v3858, %v3857
        %v3868 = vpack.c.b16 %v3860, %v3859
        %v3893 = vunpack.c.l.b16 %v3586
        %v3894 = vunpack.c.l.b16 %v3587
        %v3895 = vunpack.c.l.b16 %v3588
        %v3896 = vunpack.c.l.b16 %v3589
        %v3897 = vunpack.c.l.b16 %v3590
        %v3898 = vunpack.c.l.b16 %v3591
        %v3899 = vunpack.c.l.b16 %v3592
        %v3900 = vunpack.c.l.b16 %v3593
        %v3901 = vunpack.c.l.b16 %v3594
        %v3902 = vunpack.c.l.b16 %v3595
        %v3903 = vunpack.c.l.b16 %v3596
        %v3904 = vunpack.c.l.b16 %v3597
        %v3905 = vunpack.c.l.b16 %v3598
        %v3906 = vunpack.c.l.b16 %v3599
        %v3907 = vunpack.c.l.b16 %v3600
        %v3908 = vunpack.c.l.b16 %v3601
        %v3909 = vpack.c.b16 %v3894, %v3893
        %v3910 = vpack.c.b16 %v3896, %v3895
        %v3911 = vpack.c.b16 %v3898, %v3897
        %v3912 = vpack.c.b16 %v3900, %v3899
        %v3913 = vpack.c.b16 %v3902, %v3901
        %v3914 = vpack.c.b16 %v3904, %v3903
        %v3915 = vpack.c.b16 %v3906, %v3905
        %v3916 = vpack.c.b16 %v3908, %v3907
        %v3941 = vunpack.c.l.b16 %v3618
        %v3942 = vunpack.c.l.b16 %v3619
        %v3943 = vunpack.c.l.b16 %v3620
        %v3944 = vunpack.c.l.b16 %v3621
        %v3945 = vunpack.c.l.b16 %v3622
        %v3946 = vunpack.c.l.b16 %v3623
        %v3947 = vunpack.c.l.b16 %v3624
        %v3948 = vunpack.c.l.b16 %v3625
        %v3949 = vunpack.c.l.b16 %v3626
        %v3950 = vunpack.c.l.b16 %v3627
        %v3951 = vunpack.c.l.b16 %v3628
        %v3952 = vunpack.c.l.b16 %v3629
        %v3953 = vunpack.c.l.b16 %v3630
        %v3954 = vunpack.c.l.b16 %v3631
        %v3955 = vunpack.c.l.b16 %v3632
        %v3956 = vunpack.c.l.b16 %v3633
        %v3957 = vpack.c.b16 %v3942, %v3941
        %v3958 = vpack.c.b16 %v3944, %v3943
        %v3959 = vpack.c.b16 %v3946, %v3945
        %v3960 = vpack.c.b16 %v3948, %v3947
        %v3961 = vpack.c.b16 %v3950, %v3949
        %v3962 = vpack.c.b16 %v3952, %v3951
        %v3963 = vpack.c.b16 %v3954, %v3953
        %v3964 = vpack.c.b16 %v3956, %v3955
        %v3989 = vunpack.c.l.b16 %v3653
        %v3990 = vunpack.c.l.b16 %v3654
        %v3991 = vunpack.c.l.b16 %v3655
        %v3992 = vunpack.c.l.b16 %v3656
        %v3993 = vunpack.c.l.b16 %v3657
        %v3994 = vunpack.c.l.b16 %v3658
        %v3995 = vunpack.c.l.b16 %v3659
        %v3996 = vunpack.c.l.b16 %v3660
        %v3997 = vunpack.c.l.b16 %v3661
        %v3998 = vunpack.c.l.b16 %v3662
        %v3999 = vunpack.c.l.b16 %v3663
        %v4000 = vunpack.c.l.b16 %v3664
        %v4001 = vunpack.c.l.b16 %v3665
        %v4002 = vunpack.c.l.b16 %v3666
        %v4003 = vunpack.c.l.b16 %v3667
        %v4004 = vunpack.c.l.b16 %v3668
        %v4005 = vpack.c.b16 %v3990, %v3989
        %v4006 = vpack.c.b16 %v3992, %v3991
        %v4007 = vpack.c.b16 %v3994, %v3993
        %v4008 = vpack.c.b16 %v3996, %v3995
        %v4009 = vpack.c.b16 %v3998, %v3997
        %v4010 = vpack.c.b16 %v4000, %v3999
        %v4011 = vpack.c.b16 %v4002, %v4001
        %v4012 = vpack.c.b16 %v4004, %v4003
        %v4037 = vunpack.c.l.b16 %v3685
        %v4038 = vunpack.c.l.b16 %v3686
        %v4039 = vunpack.c.l.b16 %v3687
        %v4040 = vunpack.c.l.b16 %v3688
        %v4041 = vunpack.c.l.b16 %v3689
        %v4042 = vunpack.c.l.b16 %v3690
        %v4043 = vunpack.c.l.b16 %v3691
        %v4044 = vunpack.c.l.b16 %v3692
        %v4045 = vunpack.c.l.b16 %v3693
        %v4046 = vunpack.c.l.b16 %v3694
        %v4047 = vunpack.c.l.b16 %v3695
        %v4048 = vunpack.c.l.b16 %v3696
        %v4049 = vunpack.c.l.b16 %v3697
        %v4050 = vunpack.c.l.b16 %v3698
        %v4051 = vunpack.c.l.b16 %v3699
        %v4052 = vunpack.c.l.b16 %v3700
        %v4053 = vpack.c.b16 %v4038, %v4037
        %v4054 = vpack.c.b16 %v4040, %v4039
        %v4055 = vpack.c.b16 %v4042, %v4041
        %v4056 = vpack.c.b16 %v4044, %v4043
        %v4057 = vpack.c.b16 %v4046, %v4045
        %v4058 = vpack.c.b16 %v4048, %v4047
        %v4059 = vpack.c.b16 %v4050, %v4049
        %v4060 = vpack.c.b16 %v4052, %v4051
        %v4085 = vunpack.c.l.b16 %v3717
        %v4086 = vunpack.c.l.b16 %v3718
        %v4087 = vunpack.c.l.b16 %v3719
        %v4088 = vunpack.c.l.b16 %v3720
        %v4089 = vunpack.c.l.b16 %v3721
        %v4090 = vunpack.c.l.b16 %v3722
        %v4091 = vunpack.c.l.b16 %v3723
        %v4092 = vunpack.c.l.b16 %v3724
        %v4093 = vunpack.c.l.b16 %v3725
        %v4094 = vunpack.c.l.b16 %v3726
        %v4095 = vunpack.c.l.b16 %v3727
        %v4096 = vunpack.c.l.b16 %v3728
        %v4097 = vunpack.c.l.b16 %v3729
        %v4098 = vunpack.c.l.b16 %v3730
        %v4099 = vunpack.c.l.b16 %v3731
        %v4100 = vunpack.c.l.b16 %v3732
        %v4101 = vpack.c.b16 %v4086, %v4085
        %v4102 = vpack.c.b16 %v4088, %v4087
        %v4103 = vpack.c.b16 %v4090, %v4089
        %v4104 = vpack.c.b16 %v4092, %v4091
        %v4105 = vpack.c.b16 %v4094, %v4093
        %v4106 = vpack.c.b16 %v4096, %v4095
        %v4107 = vpack.c.b16 %v4098, %v4097
        %v4108 = vpack.c.b16 %v4100, %v4099
        %v4117 = vld [vmem:[#allocation4] sm:$0xf]
        %v4118 = vld [vmem:[#allocation4 + $0x4] sm:$0xf]
        %v4119 = vld [vmem:[#allocation4 + $0x8] sm:$0xf]
        %v4120 = vld [vmem:[#allocation4 + $0xc] sm:$0xf]
        %v4121 = vld [vmem:[#allocation4 + $0x10] sm:$0xf]
        %v4122 = vld [vmem:[#allocation4 + $0x14] sm:$0xf]
        %v4123 = vld [vmem:[#allocation4 + $0x18] sm:$0xf]
        %v4124 = vld [vmem:[#allocation4 + $0x1c] sm:$0xf]
        %v4125 = vld [vmem:[#allocation4 + $0x20] sm:$0xf]
        %v4126 = vld [vmem:[#allocation4 + $0x24] sm:$0xf]
        %v4127 = vld [vmem:[#allocation4 + $0x28] sm:$0xf]
        %v4128 = vld [vmem:[#allocation4 + $0x2c] sm:$0xf]
        %v4129 = vld [vmem:[#allocation4 + $0x30] sm:$0xf]
        %v4130 = vld [vmem:[#allocation4 + $0x34] sm:$0xf]
        %v4131 = vld [vmem:[#allocation4 + $0x38] sm:$0xf]
        %v4132 = vld [vmem:[#allocation4 + $0x3c] sm:$0xf]
        %v4133 = vld [vmem:[#allocation4 + $0x40] sm:$0xf]
        %v4134 = vld [vmem:[#allocation4 + $0x44] sm:$0xf]
        %v4135 = vld [vmem:[#allocation4 + $0x48] sm:$0xf]
        %v4136 = vld [vmem:[#allocation4 + $0x4c] sm:$0xf]
        %v4137 = vld [vmem:[#allocation4 + $0x50] sm:$0xf]
        %v4138 = vld [vmem:[#allocation4 + $0x54] sm:$0xf]
        %v4139 = vld [vmem:[#allocation4 + $0x58] sm:$0xf]
        %v4140 = vld [vmem:[#allocation4 + $0x5c] sm:$0xf]
        %v4141 = vld [vmem:[#allocation4 + $0x60] sm:$0xf]
        %v4142 = vld [vmem:[#allocation4 + $0x64] sm:$0xf]
        %v4143 = vld [vmem:[#allocation4 + $0x68] sm:$0xf]
        %v4144 = vld [vmem:[#allocation4 + $0x6c] sm:$0xf]
        %v4145 = vld [vmem:[#allocation4 + $0x70] sm:$0xf]
        %v4146 = vld [vmem:[#allocation4 + $0x74] sm:$0xf]
        %v4147 = vld [vmem:[#allocation4 + $0x78] sm:$0xf]
        %v4148 = vld [vmem:[#allocation4 + $0x7c] sm:$0xf]
        %v4149 = vld [vmem:[#allocation4 + $0x80] sm:$0xf]
        %v4150 = vld [vmem:[#allocation4 + $0x84] sm:$0xf]
        %v4151 = vld [vmem:[#allocation4 + $0x88] sm:$0xf]
        %v4152 = vld [vmem:[#allocation4 + $0x8c] sm:$0xf]
        %v4153 = vld [vmem:[#allocation4 + $0x90] sm:$0xf]
        %v4154 = vld [vmem:[#allocation4 + $0x94] sm:$0xf]
        %v4155 = vld [vmem:[#allocation4 + $0x98] sm:$0xf]
        %v4156 = vld [vmem:[#allocation4 + $0x9c] sm:$0xf]
        %v4157 = vld [vmem:[#allocation4 + $0xa0] sm:$0xf]
        %v4158 = vld [vmem:[#allocation4 + $0xa4] sm:$0xf]
        %v4159 = vld [vmem:[#allocation4 + $0xa8] sm:$0xf]
        %v4160 = vld [vmem:[#allocation4 + $0xac] sm:$0xf]
        %v4161 = vld [vmem:[#allocation4 + $0xb0] sm:$0xf]
        %v4162 = vld [vmem:[#allocation4 + $0xb4] sm:$0xf]
        %v4163 = vld [vmem:[#allocation4 + $0xb8] sm:$0xf]
        %v4164 = vld [vmem:[#allocation4 + $0xbc] sm:$0xf]
        %v4165 = vld [vmem:[#allocation4 + $0xc0] sm:$0xf]
        %v4166 = vld [vmem:[#allocation4 + $0xc4] sm:$0xf]
        %v4167 = vld [vmem:[#allocation4 + $0xc8] sm:$0xf]
        %v4168 = vld [vmem:[#allocation4 + $0xcc] sm:$0xf]
        %v4169 = vld [vmem:[#allocation4 + $0xd0] sm:$0xf]
        %v4170 = vld [vmem:[#allocation4 + $0xd4] sm:$0xf]
        %v4171 = vld [vmem:[#allocation4 + $0xd8] sm:$0xf]
        %v4172 = vld [vmem:[#allocation4 + $0xdc] sm:$0xf]
        %v4173 = vld [vmem:[#allocation4 + $0xe0] sm:$0xf]
        %v4174 = vld [vmem:[#allocation4 + $0xe4] sm:$0xf]
        %v4175 = vld [vmem:[#allocation4 + $0xe8] sm:$0xf]
        %v4176 = vld [vmem:[#allocation4 + $0xec] sm:$0xf]
        %v4177 = vld [vmem:[#allocation4 + $0xf0] sm:$0xf]
        %v4178 = vld [vmem:[#allocation4 + $0xf4] sm:$0xf]
        %v4179 = vld [vmem:[#allocation4 + $0xf8] sm:$0xf]
        %v4180 = vld [vmem:[#allocation4 + $0xfc] sm:$0xf]
        %v4181 = vld [vmem:[#allocation4 + $0x100] sm:$0xf]
        %v4182 = vld [vmem:[#allocation4 + $0x104] sm:$0xf]
        %v4183 = vld [vmem:[#allocation4 + $0x108] sm:$0xf]
        %v4184 = vld [vmem:[#allocation4 + $0x10c] sm:$0xf]
        %v4185 = vld [vmem:[#allocation4 + $0x110] sm:$0xf]
        %v4186 = vld [vmem:[#allocation4 + $0x114] sm:$0xf]
        %v4187 = vld [vmem:[#allocation4 + $0x118] sm:$0xf]
        %v4188 = vld [vmem:[#allocation4 + $0x11c] sm:$0xf]
        %v4189 = vld [vmem:[#allocation4 + $0x120] sm:$0xf]
        %v4190 = vld [vmem:[#allocation4 + $0x124] sm:$0xf]
        %v4191 = vld [vmem:[#allocation4 + $0x128] sm:$0xf]
        %v4192 = vld [vmem:[#allocation4 + $0x12c] sm:$0xf]
        %v4193 = vld [vmem:[#allocation4 + $0x130] sm:$0xf]
        %v4194 = vld [vmem:[#allocation4 + $0x134] sm:$0xf]
        %v4195 = vld [vmem:[#allocation4 + $0x138] sm:$0xf]
        %v4196 = vld [vmem:[#allocation4 + $0x13c] sm:$0xf]
        %v4197 = vld [vmem:[#allocation4 + $0x140] sm:$0xf]
        %v4198 = vld [vmem:[#allocation4 + $0x144] sm:$0xf]
        %v4199 = vld [vmem:[#allocation4 + $0x148] sm:$0xf]
        %v4200 = vld [vmem:[#allocation4 + $0x14c] sm:$0xf]
        %v4201 = vld [vmem:[#allocation4 + $0x150] sm:$0xf]
        %v4202 = vld [vmem:[#allocation4 + $0x154] sm:$0xf]
        %v4203 = vld [vmem:[#allocation4 + $0x158] sm:$0xf]
        %v4204 = vld [vmem:[#allocation4 + $0x15c] sm:$0xf]
        %v4205 = vld [vmem:[#allocation4 + $0x160] sm:$0xf]
        %v4206 = vld [vmem:[#allocation4 + $0x164] sm:$0xf]
        %v4207 = vld [vmem:[#allocation4 + $0x168] sm:$0xf]
        %v4208 = vld [vmem:[#allocation4 + $0x16c] sm:$0xf]
        %v4209 = vld [vmem:[#allocation4 + $0x170] sm:$0xf]
        %v4210 = vld [vmem:[#allocation4 + $0x174] sm:$0xf]
        %v4211 = vld [vmem:[#allocation4 + $0x178] sm:$0xf]
        %v4212 = vld [vmem:[#allocation4 + $0x17c] sm:$0xf]
        %v4213 = vld [vmem:[#allocation4 + $0x180] sm:$0xf]
        %v4214 = vld [vmem:[#allocation4 + $0x184] sm:$0xf]
        %v4215 = vld [vmem:[#allocation4 + $0x188] sm:$0xf]
        %v4216 = vld [vmem:[#allocation4 + $0x18c] sm:$0xf]
        %v4217 = vld [vmem:[#allocation4 + $0x190] sm:$0xf]
        %v4218 = vld [vmem:[#allocation4 + $0x194] sm:$0xf]
        %v4219 = vld [vmem:[#allocation4 + $0x198] sm:$0xf]
        %v4220 = vld [vmem:[#allocation4 + $0x19c] sm:$0xf]
        %v4221 = vld [vmem:[#allocation4 + $0x1a0] sm:$0xf]
        %v4222 = vld [vmem:[#allocation4 + $0x1a4] sm:$0xf]
        %v4223 = vld [vmem:[#allocation4 + $0x1a8] sm:$0xf]
        %v4224 = vld [vmem:[#allocation4 + $0x1ac] sm:$0xf]
        %v4225 = vld [vmem:[#allocation4 + $0x1b0] sm:$0xf]
        %v4226 = vld [vmem:[#allocation4 + $0x1b4] sm:$0xf]
        %v4227 = vld [vmem:[#allocation4 + $0x1b8] sm:$0xf]
        %v4228 = vld [vmem:[#allocation4 + $0x1bc] sm:$0xf]
        %v4229 = vld [vmem:[#allocation4 + $0x1c0] sm:$0xf]
        %v4230 = vld [vmem:[#allocation4 + $0x1c4] sm:$0xf]
        %v4231 = vld [vmem:[#allocation4 + $0x1c8] sm:$0xf]
        %v4232 = vld [vmem:[#allocation4 + $0x1cc] sm:$0xf]
        %v4233 = vld [vmem:[#allocation4 + $0x1d0] sm:$0xf]
        %v4234 = vld [vmem:[#allocation4 + $0x1d4] sm:$0xf]
        %v4235 = vld [vmem:[#allocation4 + $0x1d8] sm:$0xf]
        %v4236 = vld [vmem:[#allocation4 + $0x1dc] sm:$0xf]
        %v4237 = vld [vmem:[#allocation4 + $0x1e0] sm:$0xf]
        %v4238 = vld [vmem:[#allocation4 + $0x1e4] sm:$0xf]
        %v4239 = vld [vmem:[#allocation4 + $0x1e8] sm:$0xf]
        %v4240 = vld [vmem:[#allocation4 + $0x1ec] sm:$0xf]
        %v4241 = vld [vmem:[#allocation4 + $0x1f0] sm:$0xf]
        %v4242 = vld [vmem:[#allocation4 + $0x1f4] sm:$0xf]
        %v4243 = vld [vmem:[#allocation4 + $0x1f8] sm:$0xf]
        %v4244 = vld [vmem:[#allocation4 + $0x1fc] sm:$0xf]
        %v4245 = vld [vmem:[#allocation4 + $0x200] sm:$0xf]
        %v4246 = vld [vmem:[#allocation4 + $0x204] sm:$0xf]
        %v4247 = vld [vmem:[#allocation4 + $0x208] sm:$0xf]
        %v4248 = vld [vmem:[#allocation4 + $0x20c] sm:$0xf]
        %v4249 = vld [vmem:[#allocation4 + $0x210] sm:$0xf]
        %v4250 = vld [vmem:[#allocation4 + $0x214] sm:$0xf]
        %v4251 = vld [vmem:[#allocation4 + $0x218] sm:$0xf]
        %v4252 = vld [vmem:[#allocation4 + $0x21c] sm:$0xf]
        %v4253 = vld [vmem:[#allocation4 + $0x220] sm:$0xf]
        %v4254 = vld [vmem:[#allocation4 + $0x224] sm:$0xf]
        %v4255 = vld [vmem:[#allocation4 + $0x228] sm:$0xf]
        %v4256 = vld [vmem:[#allocation4 + $0x22c] sm:$0xf]
        %v4257 = vld [vmem:[#allocation4 + $0x230] sm:$0xf]
        %v4258 = vld [vmem:[#allocation4 + $0x234] sm:$0xf]
        %v4259 = vld [vmem:[#allocation4 + $0x238] sm:$0xf]
        %v4260 = vld [vmem:[#allocation4 + $0x23c] sm:$0xf]
        %v4405 = vunpack.c.l.b16 %v4117
        %v4406 = vunpack.c.l.b16 %v4118
        %v4407 = vunpack.c.l.b16 %v4119
        %v4408 = vunpack.c.l.b16 %v4120
        %v4409 = vunpack.c.l.b16 %v4121
        %v4410 = vunpack.c.l.b16 %v4122
        %v4411 = vunpack.c.l.b16 %v4123
        %v4412 = vunpack.c.l.b16 %v4124
        %v4413 = vunpack.c.l.b16 %v4125
        %v4414 = vunpack.c.l.b16 %v4126
        %v4415 = vunpack.c.l.b16 %v4127
        %v4416 = vunpack.c.l.b16 %v4128
        %v4417 = vunpack.c.l.b16 %v4129
        %v4418 = vunpack.c.l.b16 %v4130
        %v4419 = vunpack.c.l.b16 %v4131
        %v4420 = vunpack.c.l.b16 %v4132
        %v4421 = vunpack.c.l.b16 %v4133
        %v4422 = vunpack.c.l.b16 %v4134
        %v4423 = vunpack.c.l.b16 %v4135
        %v4424 = vunpack.c.l.b16 %v4136
        %v4425 = vunpack.c.l.b16 %v4137
        %v4426 = vunpack.c.l.b16 %v4138
        %v4427 = vunpack.c.l.b16 %v4139
        %v4428 = vunpack.c.l.b16 %v4140
        %v4429 = vunpack.c.l.b16 %v4141
        %v4430 = vunpack.c.l.b16 %v4142
        %v4431 = vunpack.c.l.b16 %v4143
        %v4432 = vunpack.c.l.b16 %v4144
        %v4433 = vunpack.c.l.b16 %v4145
        %v4434 = vunpack.c.l.b16 %v4146
        %v4435 = vunpack.c.l.b16 %v4147
        %v4436 = vunpack.c.l.b16 %v4148
        %v4437 = vunpack.c.l.b16 %v4149
        %v4438 = vunpack.c.l.b16 %v4150
        %v4439 = vunpack.c.l.b16 %v4151
        %v4440 = vunpack.c.l.b16 %v4152
        %v4441 = vunpack.c.l.b16 %v4153
        %v4442 = vunpack.c.l.b16 %v4154
        %v4443 = vunpack.c.l.b16 %v4155
        %v4444 = vunpack.c.l.b16 %v4156
        %v4445 = vunpack.c.l.b16 %v4157
        %v4446 = vunpack.c.l.b16 %v4158
        %v4447 = vunpack.c.l.b16 %v4159
        %v4448 = vunpack.c.l.b16 %v4160
        %v4449 = vunpack.c.l.b16 %v4161
        %v4450 = vunpack.c.l.b16 %v4162
        %v4451 = vunpack.c.l.b16 %v4163
        %v4452 = vunpack.c.l.b16 %v4164
        %v4453 = vunpack.c.l.b16 %v4165
        %v4454 = vunpack.c.l.b16 %v4166
        %v4455 = vunpack.c.l.b16 %v4167
        %v4456 = vunpack.c.l.b16 %v4168
        %v4457 = vunpack.c.l.b16 %v4169
        %v4458 = vunpack.c.l.b16 %v4170
        %v4459 = vunpack.c.l.b16 %v4171
        %v4460 = vunpack.c.l.b16 %v4172
        %v4461 = vunpack.c.l.b16 %v4173
        %v4462 = vunpack.c.l.b16 %v4174
        %v4463 = vunpack.c.l.b16 %v4175
        %v4464 = vunpack.c.l.b16 %v4176
        %v4465 = vunpack.c.l.b16 %v4177
        %v4466 = vunpack.c.l.b16 %v4178
        %v4467 = vunpack.c.l.b16 %v4179
        %v4468 = vunpack.c.l.b16 %v4180
        %v4469 = vunpack.c.l.b16 %v4181
        %v4470 = vunpack.c.l.b16 %v4182
        %v4471 = vunpack.c.l.b16 %v4183
        %v4472 = vunpack.c.l.b16 %v4184
        %v4473 = vunpack.c.l.b16 %v4185
        %v4474 = vunpack.c.l.b16 %v4186
        %v4475 = vunpack.c.l.b16 %v4187
        %v4476 = vunpack.c.l.b16 %v4188
        %v4477 = vunpack.c.l.b16 %v4189
        %v4478 = vunpack.c.l.b16 %v4190
        %v4479 = vunpack.c.l.b16 %v4191
        %v4480 = vunpack.c.l.b16 %v4192
        %v4481 = vunpack.c.l.b16 %v4193
        %v4482 = vunpack.c.l.b16 %v4194
        %v4483 = vunpack.c.l.b16 %v4195
        %v4484 = vunpack.c.l.b16 %v4196
        %v4485 = vunpack.c.l.b16 %v4197
        %v4486 = vunpack.c.l.b16 %v4198
        %v4487 = vunpack.c.l.b16 %v4199
        %v4488 = vunpack.c.l.b16 %v4200
        %v4489 = vunpack.c.l.b16 %v4201
        %v4490 = vunpack.c.l.b16 %v4202
        %v4491 = vunpack.c.l.b16 %v4203
        %v4492 = vunpack.c.l.b16 %v4204
        %v4493 = vunpack.c.l.b16 %v4205
        %v4494 = vunpack.c.l.b16 %v4206
        %v4495 = vunpack.c.l.b16 %v4207
        %v4496 = vunpack.c.l.b16 %v4208
        %v4497 = vunpack.c.l.b16 %v4209
        %v4498 = vunpack.c.l.b16 %v4210
        %v4499 = vunpack.c.l.b16 %v4211
        %v4500 = vunpack.c.l.b16 %v4212
        %v4501 = vunpack.c.l.b16 %v4213
        %v4502 = vunpack.c.l.b16 %v4214
        %v4503 = vunpack.c.l.b16 %v4215
        %v4504 = vunpack.c.l.b16 %v4216
        %v4505 = vunpack.c.l.b16 %v4217
        %v4506 = vunpack.c.l.b16 %v4218
        %v4507 = vunpack.c.l.b16 %v4219
        %v4508 = vunpack.c.l.b16 %v4220
        %v4509 = vunpack.c.l.b16 %v4221
        %v4510 = vunpack.c.l.b16 %v4222
        %v4511 = vunpack.c.l.b16 %v4223
        %v4512 = vunpack.c.l.b16 %v4224
        %v4513 = vunpack.c.l.b16 %v4225
        %v4514 = vunpack.c.l.b16 %v4226
        %v4515 = vunpack.c.l.b16 %v4227
        %v4516 = vunpack.c.l.b16 %v4228
        %v4517 = vunpack.c.l.b16 %v4229
        %v4518 = vunpack.c.l.b16 %v4230
        %v4519 = vunpack.c.l.b16 %v4231
        %v4520 = vunpack.c.l.b16 %v4232
        %v4521 = vunpack.c.l.b16 %v4233
        %v4522 = vunpack.c.l.b16 %v4234
        %v4523 = vunpack.c.l.b16 %v4235
        %v4524 = vunpack.c.l.b16 %v4236
        %v4525 = vunpack.c.l.b16 %v4237
        %v4526 = vunpack.c.l.b16 %v4238
        %v4527 = vunpack.c.l.b16 %v4239
        %v4528 = vunpack.c.l.b16 %v4240
        %v4529 = vunpack.c.l.b16 %v4241
        %v4530 = vunpack.c.l.b16 %v4242
        %v4531 = vunpack.c.l.b16 %v4243
        %v4532 = vunpack.c.l.b16 %v4244
        %v4533 = vunpack.c.l.b16 %v4245
        %v4534 = vunpack.c.l.b16 %v4246
        %v4535 = vunpack.c.l.b16 %v4247
        %v4536 = vunpack.c.l.b16 %v4248
        %v4537 = vunpack.c.l.b16 %v4249
        %v4538 = vunpack.c.l.b16 %v4250
        %v4539 = vunpack.c.l.b16 %v4251
        %v4540 = vunpack.c.l.b16 %v4252
        %v4541 = vunpack.c.l.b16 %v4253
        %v4542 = vunpack.c.l.b16 %v4254
        %v4543 = vunpack.c.l.b16 %v4255
        %v4544 = vunpack.c.l.b16 %v4256
        %v4545 = vunpack.c.l.b16 %v4257
        %v4546 = vunpack.c.l.b16 %v4258
        %v4547 = vunpack.c.l.b16 %v4259
        %v4548 = vunpack.c.l.b16 %v4260
        %v4549 = vpack.c.b16 %v4406, %v4405
        %v4550 = vpack.c.b16 %v4408, %v4407
        %v4551 = vpack.c.b16 %v4410, %v4409
        %v4552 = vpack.c.b16 %v4412, %v4411
        %v4553 = vpack.c.b16 %v4414, %v4413
        %v4554 = vpack.c.b16 %v4416, %v4415
        %v4555 = vpack.c.b16 %v4418, %v4417
        %v4556 = vpack.c.b16 %v4420, %v4419
        %v4557 = vpack.c.b16 %v4422, %v4421
        %v4558 = vpack.c.b16 %v4424, %v4423
        %v4559 = vpack.c.b16 %v4426, %v4425
        %v4560 = vpack.c.b16 %v4428, %v4427
        %v4561 = vpack.c.b16 %v4430, %v4429
        %v4562 = vpack.c.b16 %v4432, %v4431
        %v4563 = vpack.c.b16 %v4434, %v4433
        %v4564 = vpack.c.b16 %v4436, %v4435
        %v4565 = vpack.c.b16 %v4438, %v4437
        %v4566 = vpack.c.b16 %v4440, %v4439
        %v4567 = vpack.c.b16 %v4442, %v4441
        %v4568 = vpack.c.b16 %v4444, %v4443
        %v4569 = vpack.c.b16 %v4446, %v4445
        %v4570 = vpack.c.b16 %v4448, %v4447
        %v4571 = vpack.c.b16 %v4450, %v4449
        %v4572 = vpack.c.b16 %v4452, %v4451
        %v4573 = vpack.c.b16 %v4454, %v4453
        %v4574 = vpack.c.b16 %v4456, %v4455
        %v4575 = vpack.c.b16 %v4458, %v4457
        %v4576 = vpack.c.b16 %v4460, %v4459
        %v4577 = vpack.c.b16 %v4462, %v4461
        %v4578 = vpack.c.b16 %v4464, %v4463
        %v4579 = vpack.c.b16 %v4466, %v4465
        %v4580 = vpack.c.b16 %v4468, %v4467
        %v4581 = vpack.c.b16 %v4470, %v4469
        %v4582 = vpack.c.b16 %v4472, %v4471
        %v4583 = vpack.c.b16 %v4474, %v4473
        %v4584 = vpack.c.b16 %v4476, %v4475
        %v4585 = vpack.c.b16 %v4478, %v4477
        %v4586 = vpack.c.b16 %v4480, %v4479
        %v4587 = vpack.c.b16 %v4482, %v4481
        %v4588 = vpack.c.b16 %v4484, %v4483
        %v4589 = vpack.c.b16 %v4486, %v4485
        %v4590 = vpack.c.b16 %v4488, %v4487
        %v4591 = vpack.c.b16 %v4490, %v4489
        %v4592 = vpack.c.b16 %v4492, %v4491
        %v4593 = vpack.c.b16 %v4494, %v4493
        %v4594 = vpack.c.b16 %v4496, %v4495
        %v4595 = vpack.c.b16 %v4498, %v4497
        %v4596 = vpack.c.b16 %v4500, %v4499
        %v4597 = vpack.c.b16 %v4502, %v4501
        %v4598 = vpack.c.b16 %v4504, %v4503
        %v4599 = vpack.c.b16 %v4506, %v4505
        %v4600 = vpack.c.b16 %v4508, %v4507
        %v4601 = vpack.c.b16 %v4510, %v4509
        %v4602 = vpack.c.b16 %v4512, %v4511
        %v4603 = vpack.c.b16 %v4514, %v4513
        %v4604 = vpack.c.b16 %v4516, %v4515
        %v4605 = vpack.c.b16 %v4518, %v4517
        %v4606 = vpack.c.b16 %v4520, %v4519
        %v4607 = vpack.c.b16 %v4522, %v4521
        %v4608 = vpack.c.b16 %v4524, %v4523
        %v4609 = vpack.c.b16 %v4526, %v4525
        %v4610 = vpack.c.b16 %v4528, %v4527
        %v4611 = vpack.c.b16 %v4530, %v4529
        %v4612 = vpack.c.b16 %v4532, %v4531
        %v4613 = vpack.c.b16 %v4534, %v4533
        %v4614 = vpack.c.b16 %v4536, %v4535
        %v4615 = vpack.c.b16 %v4538, %v4537
        %v4616 = vpack.c.b16 %v4540, %v4539
        %v4617 = vpack.c.b16 %v4542, %v4541
        %v4618 = vpack.c.b16 %v4544, %v4543
        %v4619 = vpack.c.b16 %v4546, %v4545
        %v4620 = vpack.c.b16 %v4548, %v4547
        %4693 = vmatpush.bf16.msra.mxu0 %v4556
        %4694 = vmatpush.bf16.msra.mxu0 %v4555
        %4695 = vmatpush.bf16.msra.mxu0 %v4554
        %4696 = vmatpush.bf16.msra.mxu0 %v4553
        %4697 = vmatpush.bf16.msra.mxu0 %v4552
        %4698 = vmatpush.bf16.msra.mxu0 %v4551
        %4699 = vmatpush.bf16.msra.mxu0 %v4550
        %4700 = vmatpush.bf16.msra.mxu0 %v4549
        %4701 = vmatmul.bf16.gmra.mxu0 %v3765
        %v4702 = vpop.f32.mrf.mxu0
        %v4703 = vadd.f32 0.0, %v4702
        %v4704 = vpop.f32.mrf.mxu0
        %v4705 = vadd.f32 0.0, %v4704
        %4706 = vmatmul.bf16.gmra.mxu0 %v3766
        %v4707 = vpop.f32.mrf.mxu0
        %v4708 = vadd.f32 0.0, %v4707
        %v4709 = vpop.f32.mrf.mxu0
        %v4710 = vadd.f32 0.0, %v4709
        %4711 = vmatmul.bf16.gmra.mxu0 %v3767
        %v4712 = vpop.f32.mrf.mxu0
        %v4713 = vadd.f32 0.0, %v4712
        %v4714 = vpop.f32.mrf.mxu0
        %v4715 = vadd.f32 0.0, %v4714
        %4716 = vmatmul.bf16.gmra.mxu0 %v3768
        %v4717 = vpop.f32.mrf.mxu0
        %v4718 = vadd.f32 0.0, %v4717
        %v4719 = vpop.f32.mrf.mxu0
        %v4720 = vadd.f32 0.0, %v4719
        %4721 = vmatmul.bf16.gmra.mxu0 %v3769
        %v4722 = vpop.f32.mrf.mxu0
        %v4723 = vadd.f32 0.0, %v4722
        %v4724 = vpop.f32.mrf.mxu0
        %v4725 = vadd.f32 0.0, %v4724
        %4726 = vmatmul.bf16.gmra.mxu0 %v3770
        %v4727 = vpop.f32.mrf.mxu0
        %v4728 = vadd.f32 0.0, %v4727
        %v4729 = vpop.f32.mrf.mxu0
        %v4730 = vadd.f32 0.0, %v4729
        %4731 = vmatmul.bf16.gmra.mxu0 %v3771
        %v4732 = vpop.f32.mrf.mxu0
        %v4733 = vadd.f32 0.0, %v4732
        %v4734 = vpop.f32.mrf.mxu0
        %v4735 = vadd.f32 0.0, %v4734
        %4736 = vmatmul.bf16.gmra.mxu0 %v3772
        %v4737 = vpop.f32.mrf.mxu0
        %v4738 = vadd.f32 0.0, %v4737
        %v4739 = vpop.f32.mrf.mxu0
        %v4740 = vadd.f32 0.0, %v4739
        %4741 = vdwg.mxu0
        %4742 = vmatpush.bf16.msra.mxu0 %v4564
        %4743 = vmatpush.bf16.msra.mxu0 %v4563
        %4744 = vmatpush.bf16.msra.mxu0 %v4562
        %4745 = vmatpush.bf16.msra.mxu0 %v4561
        %4746 = vmatpush.bf16.msra.mxu0 %v4560
        %4747 = vmatpush.bf16.msra.mxu0 %v4559
        %4748 = vmatpush.bf16.msra.mxu0 %v4558
        %4749 = vmatpush.bf16.msra.mxu0 %v4557
        %4750 = vmatmul.bf16.gmra.mxu0 %v3813
        %v4751 = vpop.f32.mrf.mxu0
        %v4752 = vadd.f32 %v4703, %v4751
        %v4753 = vpop.f32.mrf.mxu0
        %v4754 = vadd.f32 %v4705, %v4753
        %4755 = vmatmul.bf16.gmra.mxu0 %v3814
        %v4756 = vpop.f32.mrf.mxu0
        %v4757 = vadd.f32 %v4708, %v4756
        %v4758 = vpop.f32.mrf.mxu0
        %v4759 = vadd.f32 %v4710, %v4758
        %4760 = vmatmul.bf16.gmra.mxu0 %v3815
        %v4761 = vpop.f32.mrf.mxu0
        %v4762 = vadd.f32 %v4713, %v4761
        %v4763 = vpop.f32.mrf.mxu0
        %v4764 = vadd.f32 %v4715, %v4763
        %4765 = vmatmul.bf16.gmra.mxu0 %v3816
        %v4766 = vpop.f32.mrf.mxu0
        %v4767 = vadd.f32 %v4718, %v4766
        %v4768 = vpop.f32.mrf.mxu0
        %v4769 = vadd.f32 %v4720, %v4768
        %4770 = vmatmul.bf16.gmra.mxu0 %v3817
        %v4771 = vpop.f32.mrf.mxu0
        %v4772 = vadd.f32 %v4723, %v4771
        %v4773 = vpop.f32.mrf.mxu0
        %v4774 = vadd.f32 %v4725, %v4773
        %4775 = vmatmul.bf16.gmra.mxu0 %v3818
        %v4776 = vpop.f32.mrf.mxu0
        %v4777 = vadd.f32 %v4728, %v4776
        %v4778 = vpop.f32.mrf.mxu0
        %v4779 = vadd.f32 %v4730, %v4778
        %4780 = vmatmul.bf16.gmra.mxu0 %v3819
        %v4781 = vpop.f32.mrf.mxu0
        %v4782 = vadd.f32 %v4733, %v4781
        %v4783 = vpop.f32.mrf.mxu0
        %v4784 = vadd.f32 %v4735, %v4783
        %4785 = vmatmul.bf16.gmra.mxu0 %v3820
        %v4786 = vpop.f32.mrf.mxu0
        %v4787 = vadd.f32 %v4738, %v4786
        %v4788 = vpop.f32.mrf.mxu0
        %v4789 = vadd.f32 %v4740, %v4788
        %4790 = vdwg.mxu0
        %4791 = vmatpush.bf16.msra.mxu0 %v4572
        %4792 = vmatpush.bf16.msra.mxu0 %v4571
        %4793 = vmatpush.bf16.msra.mxu0 %v4570
        %4794 = vmatpush.bf16.msra.mxu0 %v4569
        %4795 = vmatpush.bf16.msra.mxu0 %v4568
        %4796 = vmatpush.bf16.msra.mxu0 %v4567
        %4797 = vmatpush.bf16.msra.mxu0 %v4566
        %4798 = vmatpush.bf16.msra.mxu0 %v4565
        %4799 = vmatmul.bf16.gmra.mxu0 %v3861
        %v4800 = vpop.f32.mrf.mxu0
        %v4801 = vadd.f32 %v4752, %v4800
        %v4802 = vpop.f32.mrf.mxu0
        %v4803 = vadd.f32 %v4754, %v4802
        %4804 = vmatmul.bf16.gmra.mxu0 %v3862
        %v4805 = vpop.f32.mrf.mxu0
        %v4806 = vadd.f32 %v4757, %v4805
        %v4807 = vpop.f32.mrf.mxu0
        %v4808 = vadd.f32 %v4759, %v4807
        %4809 = vmatmul.bf16.gmra.mxu0 %v3863
        %v4810 = vpop.f32.mrf.mxu0
        %v4811 = vadd.f32 %v4762, %v4810
        %v4812 = vpop.f32.mrf.mxu0
        %v4813 = vadd.f32 %v4764, %v4812
        %4814 = vmatmul.bf16.gmra.mxu0 %v3864
        %v4815 = vpop.f32.mrf.mxu0
        %v4816 = vadd.f32 %v4767, %v4815
        %v4817 = vpop.f32.mrf.mxu0
        %v4818 = vadd.f32 %v4769, %v4817
        %4819 = vmatmul.bf16.gmra.mxu0 %v3865
        %v4820 = vpop.f32.mrf.mxu0
        %v4821 = vadd.f32 %v4772, %v4820
        %v4822 = vpop.f32.mrf.mxu0
        %v4823 = vadd.f32 %v4774, %v4822
        %4824 = vmatmul.bf16.gmra.mxu0 %v3866
        %v4825 = vpop.f32.mrf.mxu0
        %v4826 = vadd.f32 %v4777, %v4825
        %v4827 = vpop.f32.mrf.mxu0
        %v4828 = vadd.f32 %v4779, %v4827
        %4829 = vmatmul.bf16.gmra.mxu0 %v3867
        %v4830 = vpop.f32.mrf.mxu0
        %v4831 = vadd.f32 %v4782, %v4830
        %v4832 = vpop.f32.mrf.mxu0
        %v4833 = vadd.f32 %v4784, %v4832
        %4834 = vmatmul.bf16.gmra.mxu0 %v3868
        %v4835 = vpop.f32.mrf.mxu0
        %v4836 = vadd.f32 %v4787, %v4835
        %v4837 = vpop.f32.mrf.mxu0
        %v4838 = vadd.f32 %v4789, %v4837
        %4839 = vdwg.mxu0
        %4840 = vmatpush.bf16.msra.mxu0 %v4580
        %4841 = vmatpush.bf16.msra.mxu0 %v4579
        %4842 = vmatpush.bf16.msra.mxu0 %v4578
        %4843 = vmatpush.bf16.msra.mxu0 %v4577
        %4844 = vmatpush.bf16.msra.mxu0 %v4576
        %4845 = vmatpush.bf16.msra.mxu0 %v4575
        %4846 = vmatpush.bf16.msra.mxu0 %v4574
        %4847 = vmatpush.bf16.msra.mxu0 %v4573
        %4848 = vmatmul.bf16.gmra.mxu0 %v3909
        %v4849 = vpop.f32.mrf.mxu0
        %v4850 = vadd.f32 %v4801, %v4849
        %v4851 = vpop.f32.mrf.mxu0
        %v4852 = vadd.f32 %v4803, %v4851
        %4853 = vmatmul.bf16.gmra.mxu0 %v3910
        %v4854 = vpop.f32.mrf.mxu0
        %v4855 = vadd.f32 %v4806, %v4854
        %v4856 = vpop.f32.mrf.mxu0
        %v4857 = vadd.f32 %v4808, %v4856
        %4858 = vmatmul.bf16.gmra.mxu0 %v3911
        %v4859 = vpop.f32.mrf.mxu0
        %v4860 = vadd.f32 %v4811, %v4859
        %v4861 = vpop.f32.mrf.mxu0
        %v4862 = vadd.f32 %v4813, %v4861
        %4863 = vmatmul.bf16.gmra.mxu0 %v3912
        %v4864 = vpop.f32.mrf.mxu0
        %v4865 = vadd.f32 %v4816, %v4864
        %v4866 = vpop.f32.mrf.mxu0
        %v4867 = vadd.f32 %v4818, %v4866
        %4868 = vmatmul.bf16.gmra.mxu0 %v3913
        %v4869 = vpop.f32.mrf.mxu0
        %v4870 = vadd.f32 %v4821, %v4869
        %v4871 = vpop.f32.mrf.mxu0
        %v4872 = vadd.f32 %v4823, %v4871
        %4873 = vmatmul.bf16.gmra.mxu0 %v3914
        %v4874 = vpop.f32.mrf.mxu0
        %v4875 = vadd.f32 %v4826, %v4874
        %v4876 = vpop.f32.mrf.mxu0
        %v4877 = vadd.f32 %v4828, %v4876
        %4878 = vmatmul.bf16.gmra.mxu0 %v3915
        %v4879 = vpop.f32.mrf.mxu0
        %v4880 = vadd.f32 %v4831, %v4879
        %v4881 = vpop.f32.mrf.mxu0
        %v4882 = vadd.f32 %v4833, %v4881
        %4883 = vmatmul.bf16.gmra.mxu0 %v3916
        %v4884 = vpop.f32.mrf.mxu0
        %v4885 = vadd.f32 %v4836, %v4884
        %v4886 = vpop.f32.mrf.mxu0
        %v4887 = vadd.f32 %v4838, %v4886
        %4888 = vdwg.mxu0
        %4889 = vmatpush.bf16.msra.mxu0 %v4588
        %4890 = vmatpush.bf16.msra.mxu0 %v4587
        %4891 = vmatpush.bf16.msra.mxu0 %v4586
        %4892 = vmatpush.bf16.msra.mxu0 %v4585
        %4893 = vmatpush.bf16.msra.mxu0 %v4584
        %4894 = vmatpush.bf16.msra.mxu0 %v4583
        %4895 = vmatpush.bf16.msra.mxu0 %v4582
        %4896 = vmatpush.bf16.msra.mxu0 %v4581
        %4897 = vmatmul.bf16.gmra.mxu0 %v1348
        %v4898 = vpop.f32.mrf.mxu0
        %v4899 = vadd.f32 %v4850, %v4898
        %v4900 = vpop.f32.mrf.mxu0
        %v4901 = vadd.f32 %v4852, %v4900
        %4902 = vmatmul.bf16.gmra.mxu0 %v1349
        %v4903 = vpop.f32.mrf.mxu0
        %v4904 = vadd.f32 %v4855, %v4903
        %v4905 = vpop.f32.mrf.mxu0
        %v4906 = vadd.f32 %v4857, %v4905
        %4907 = vmatmul.bf16.gmra.mxu0 %v1350
        %v4908 = vpop.f32.mrf.mxu0
        %v4909 = vadd.f32 %v4860, %v4908
        %v4910 = vpop.f32.mrf.mxu0
        %v4911 = vadd.f32 %v4862, %v4910
        %4912 = vmatmul.bf16.gmra.mxu0 %v1351
        %v4913 = vpop.f32.mrf.mxu0
        %v4914 = vadd.f32 %v4865, %v4913
        %v4915 = vpop.f32.mrf.mxu0
        %v4916 = vadd.f32 %v4867, %v4915
        %4917 = vmatmul.bf16.gmra.mxu0 %v1352
        %v4918 = vpop.f32.mrf.mxu0
        %v4919 = vadd.f32 %v4870, %v4918
        %v4920 = vpop.f32.mrf.mxu0
        %v4921 = vadd.f32 %v4872, %v4920
        %4922 = vmatmul.bf16.gmra.mxu0 %v1353
        %v4923 = vpop.f32.mrf.mxu0
        %v4924 = vadd.f32 %v4875, %v4923
        %v4925 = vpop.f32.mrf.mxu0
        %v4926 = vadd.f32 %v4877, %v4925
        %4927 = vmatmul.bf16.gmra.mxu0 %v1354
        %v4928 = vpop.f32.mrf.mxu0
        %v4929 = vadd.f32 %v4880, %v4928
        %v4930 = vpop.f32.mrf.mxu0
        %v4931 = vadd.f32 %v4882, %v4930
        %4932 = vmatmul.bf16.gmra.mxu0 %v1355
        %v4933 = vpop.f32.mrf.mxu0
        %v4934 = vadd.f32 %v4885, %v4933
        %v4935 = vpop.f32.mrf.mxu0
        %v4936 = vadd.f32 %v4887, %v4935
        %4937 = vdwg.mxu0
        %4938 = vmatpush.bf16.msra.mxu0 %v4596
        %4939 = vmatpush.bf16.msra.mxu0 %v4595
        %4940 = vmatpush.bf16.msra.mxu0 %v4594
        %4941 = vmatpush.bf16.msra.mxu0 %v4593
        %4942 = vmatpush.bf16.msra.mxu0 %v4592
        %4943 = vmatpush.bf16.msra.mxu0 %v4591
        %4944 = vmatpush.bf16.msra.mxu0 %v4590
        %4945 = vmatpush.bf16.msra.mxu0 %v4589
        %4946 = vmatmul.bf16.gmra.mxu0 %v3957
        %v4947 = vpop.f32.mrf.mxu0
        %v4948 = vadd.f32 %v4899, %v4947
        %v4949 = vpop.f32.mrf.mxu0
        %v4950 = vadd.f32 %v4901, %v4949
        %4951 = vmatmul.bf16.gmra.mxu0 %v3958
        %v4952 = vpop.f32.mrf.mxu0
        %v4953 = vadd.f32 %v4904, %v4952
        %v4954 = vpop.f32.mrf.mxu0
        %v4955 = vadd.f32 %v4906, %v4954
        %4956 = vmatmul.bf16.gmra.mxu0 %v3959
        %v4957 = vpop.f32.mrf.mxu0
        %v4958 = vadd.f32 %v4909, %v4957
        %v4959 = vpop.f32.mrf.mxu0
        %v4960 = vadd.f32 %v4911, %v4959
        %4961 = vmatmul.bf16.gmra.mxu0 %v3960
        %v4962 = vpop.f32.mrf.mxu0
        %v4963 = vadd.f32 %v4914, %v4962
        %v4964 = vpop.f32.mrf.mxu0
        %v4965 = vadd.f32 %v4916, %v4964
        %4966 = vmatmul.bf16.gmra.mxu0 %v3961
        %v4967 = vpop.f32.mrf.mxu0
        %v4968 = vadd.f32 %v4919, %v4967
        %v4969 = vpop.f32.mrf.mxu0
        %v4970 = vadd.f32 %v4921, %v4969
        %4971 = vmatmul.bf16.gmra.mxu0 %v3962
        %v4972 = vpop.f32.mrf.mxu0
        %v4973 = vadd.f32 %v4924, %v4972
        %v4974 = vpop.f32.mrf.mxu0
        %v4975 = vadd.f32 %v4926, %v4974
        %4976 = vmatmul.bf16.gmra.mxu0 %v3963
        %v4977 = vpop.f32.mrf.mxu0
        %v4978 = vadd.f32 %v4929, %v4977
        %v4979 = vpop.f32.mrf.mxu0
        %v4980 = vadd.f32 %v4931, %v4979
        %4981 = vmatmul.bf16.gmra.mxu0 %v3964
        %v4982 = vpop.f32.mrf.mxu0
        %v4983 = vadd.f32 %v4934, %v4982
        %v4984 = vpop.f32.mrf.mxu0
        %v4985 = vadd.f32 %v4936, %v4984
        %4986 = vdwg.mxu0
        %4987 = vmatpush.bf16.msra.mxu0 %v4604
        %4988 = vmatpush.bf16.msra.mxu0 %v4603
        %4989 = vmatpush.bf16.msra.mxu0 %v4602
        %4990 = vmatpush.bf16.msra.mxu0 %v4601
        %4991 = vmatpush.bf16.msra.mxu0 %v4600
        %4992 = vmatpush.bf16.msra.mxu0 %v4599
        %4993 = vmatpush.bf16.msra.mxu0 %v4598
        %4994 = vmatpush.bf16.msra.mxu0 %v4597
        %4995 = vmatmul.bf16.gmra.mxu0 %v4005
        %v4996 = vpop.f32.mrf.mxu0
        %v4997 = vadd.f32 %v4948, %v4996
        %v4998 = vpop.f32.mrf.mxu0
        %v4999 = vadd.f32 %v4950, %v4998
        %5000 = vmatmul.bf16.gmra.mxu0 %v4006
        %v5001 = vpop.f32.mrf.mxu0
        %v5002 = vadd.f32 %v4953, %v5001
        %v5003 = vpop.f32.mrf.mxu0
        %v5004 = vadd.f32 %v4955, %v5003
        %5005 = vmatmul.bf16.gmra.mxu0 %v4007
        %v5006 = vpop.f32.mrf.mxu0
        %v5007 = vadd.f32 %v4958, %v5006
        %v5008 = vpop.f32.mrf.mxu0
        %v5009 = vadd.f32 %v4960, %v5008
        %5010 = vmatmul.bf16.gmra.mxu0 %v4008
        %v5011 = vpop.f32.mrf.mxu0
        %v5012 = vadd.f32 %v4963, %v5011
        %v5013 = vpop.f32.mrf.mxu0
        %v5014 = vadd.f32 %v4965, %v5013
        %5015 = vmatmul.bf16.gmra.mxu0 %v4009
        %v5016 = vpop.f32.mrf.mxu0
        %v5017 = vadd.f32 %v4968, %v5016
        %v5018 = vpop.f32.mrf.mxu0
        %v5019 = vadd.f32 %v4970, %v5018
        %5020 = vmatmul.bf16.gmra.mxu0 %v4010
        %v5021 = vpop.f32.mrf.mxu0
        %v5022 = vadd.f32 %v4973, %v5021
        %v5023 = vpop.f32.mrf.mxu0
        %v5024 = vadd.f32 %v4975, %v5023
        %5025 = vmatmul.bf16.gmra.mxu0 %v4011
        %v5026 = vpop.f32.mrf.mxu0
        %v5027 = vadd.f32 %v4978, %v5026
        %v5028 = vpop.f32.mrf.mxu0
        %v5029 = vadd.f32 %v4980, %v5028
        %5030 = vmatmul.bf16.gmra.mxu0 %v4012
        %v5031 = vpop.f32.mrf.mxu0
        %v5032 = vadd.f32 %v4983, %v5031
        %v5033 = vpop.f32.mrf.mxu0
        %v5034 = vadd.f32 %v4985, %v5033
        %5035 = vdwg.mxu0
        %5036 = vmatpush.bf16.msra.mxu0 %v4612
        %5037 = vmatpush.bf16.msra.mxu0 %v4611
        %5038 = vmatpush.bf16.msra.mxu0 %v4610
        %5039 = vmatpush.bf16.msra.mxu0 %v4609
        %5040 = vmatpush.bf16.msra.mxu0 %v4608
        %5041 = vmatpush.bf16.msra.mxu0 %v4607
        %5042 = vmatpush.bf16.msra.mxu0 %v4606
        %5043 = vmatpush.bf16.msra.mxu0 %v4605
        %5044 = vmatmul.bf16.gmra.mxu0 %v4053
        %v5045 = vpop.f32.mrf.mxu0
        %v5046 = vadd.f32 %v4997, %v5045
        %v5047 = vpop.f32.mrf.mxu0
        %v5048 = vadd.f32 %v4999, %v5047
        %5049 = vmatmul.bf16.gmra.mxu0 %v4054
        %v5050 = vpop.f32.mrf.mxu0
        %v5051 = vadd.f32 %v5002, %v5050
        %v5052 = vpop.f32.mrf.mxu0
        %v5053 = vadd.f32 %v5004, %v5052
        %5054 = vmatmul.bf16.gmra.mxu0 %v4055
        %v5055 = vpop.f32.mrf.mxu0
        %v5056 = vadd.f32 %v5007, %v5055
        %v5057 = vpop.f32.mrf.mxu0
        %v5058 = vadd.f32 %v5009, %v5057
        %5059 = vmatmul.bf16.gmra.mxu0 %v4056
        %v5060 = vpop.f32.mrf.mxu0
        %v5061 = vadd.f32 %v5012, %v5060
        %v5062 = vpop.f32.mrf.mxu0
        %v5063 = vadd.f32 %v5014, %v5062
        %5064 = vmatmul.bf16.gmra.mxu0 %v4057
        %v5065 = vpop.f32.mrf.mxu0
        %v5066 = vadd.f32 %v5017, %v5065
        %v5067 = vpop.f32.mrf.mxu0
        %v5068 = vadd.f32 %v5019, %v5067
        %5069 = vmatmul.bf16.gmra.mxu0 %v4058
        %v5070 = vpop.f32.mrf.mxu0
        %v5071 = vadd.f32 %v5022, %v5070
        %v5072 = vpop.f32.mrf.mxu0
        %v5073 = vadd.f32 %v5024, %v5072
        %5074 = vmatmul.bf16.gmra.mxu0 %v4059
        %v5075 = vpop.f32.mrf.mxu0
        %v5076 = vadd.f32 %v5027, %v5075
        %v5077 = vpop.f32.mrf.mxu0
        %v5078 = vadd.f32 %v5029, %v5077
        %5079 = vmatmul.bf16.gmra.mxu0 %v4060
        %v5080 = vpop.f32.mrf.mxu0
        %v5081 = vadd.f32 %v5032, %v5080
        %v5082 = vpop.f32.mrf.mxu0
        %v5083 = vadd.f32 %v5034, %v5082
        %5084 = vdwg.mxu0
        %5085 = vmatpush.bf16.msra.mxu0 %v4620
        %5086 = vmatpush.bf16.msra.mxu0 %v4619
        %5087 = vmatpush.bf16.msra.mxu0 %v4618
        %5088 = vmatpush.bf16.msra.mxu0 %v4617
        %5089 = vmatpush.bf16.msra.mxu0 %v4616
        %5090 = vmatpush.bf16.msra.mxu0 %v4615
        %5091 = vmatpush.bf16.msra.mxu0 %v4614
        %5092 = vmatpush.bf16.msra.mxu0 %v4613
        %5093 = vmatmul.bf16.gmra.mxu0 %v4101
        %v5094 = vpop.f32.mrf.mxu0
        %v5095 = vadd.f32 %v5046, %v5094
        %v5096 = vpop.f32.mrf.mxu0
        %v5097 = vadd.f32 %v5048, %v5096
        %5098 = vmatmul.bf16.gmra.mxu0 %v4102
        %v5099 = vpop.f32.mrf.mxu0
        %v5100 = vadd.f32 %v5051, %v5099
        %v5101 = vpop.f32.mrf.mxu0
        %v5102 = vadd.f32 %v5053, %v5101
        %5103 = vmatmul.bf16.gmra.mxu0 %v4103
        %v5104 = vpop.f32.mrf.mxu0
        %v5105 = vadd.f32 %v5056, %v5104
        %v5106 = vpop.f32.mrf.mxu0
        %v5107 = vadd.f32 %v5058, %v5106
        %5108 = vmatmul.bf16.gmra.mxu0 %v4104
        %v5109 = vpop.f32.mrf.mxu0
        %v5110 = vadd.f32 %v5061, %v5109
        %v5111 = vpop.f32.mrf.mxu0
        %v5112 = vadd.f32 %v5063, %v5111
        %5113 = vmatmul.bf16.gmra.mxu0 %v4105
        %v5114 = vpop.f32.mrf.mxu0
        %v5115 = vadd.f32 %v5066, %v5114
        %v5116 = vpop.f32.mrf.mxu0
        %v5117 = vadd.f32 %v5068, %v5116
        %5118 = vmatmul.bf16.gmra.mxu0 %v4106
        %v5119 = vpop.f32.mrf.mxu0
        %v5120 = vadd.f32 %v5071, %v5119
        %v5121 = vpop.f32.mrf.mxu0
        %v5122 = vadd.f32 %v5073, %v5121
        %5123 = vmatmul.bf16.gmra.mxu0 %v4107
        %v5124 = vpop.f32.mrf.mxu0
        %v5125 = vadd.f32 %v5076, %v5124
        %v5126 = vpop.f32.mrf.mxu0
        %v5127 = vadd.f32 %v5078, %v5126
        %5128 = vmatmul.bf16.gmra.mxu0 %v4108
        %v5129 = vpop.f32.mrf.mxu0
        %v5130 = vadd.f32 %v5081, %v5129
        %v5131 = vpop.f32.mrf.mxu0
        %v5132 = vadd.f32 %v5083, %v5131
        %5133 = vdwg.mxu0
        %v5134 = vld [vmem:[#allocation12 + $0x2] sm:$0x1]
        %v5135 = vld [vmem:[#allocation13 + $0x2] sm:$0x1]
        %v5136 = vperm.slane %v5134, 0
        %v5137 = vmul.f32 %v5095, %v5136
        %v5138 = vmul.f32 %v5097, %v5136
        %v5139 = vmul.f32 %v5100, %v5136
        %v5140 = vmul.f32 %v5102, %v5136
        %v5141 = vmul.f32 %v5105, %v5136
        %v5142 = vmul.f32 %v5107, %v5136
        %v5143 = vmul.f32 %v5110, %v5136
        %v5144 = vmul.f32 %v5112, %v5136
        %v5145 = vmul.f32 %v5115, %v5136
        %v5146 = vmul.f32 %v5117, %v5136
        %v5147 = vmul.f32 %v5120, %v5136
        %v5148 = vmul.f32 %v5122, %v5136
        %v5149 = vmul.f32 %v5125, %v5136
        %v5150 = vmul.f32 %v5127, %v5136
        %v5151 = vmul.f32 %v5130, %v5136
        %v5152 = vmul.f32 %v5132, %v5136
        %v5153 = vperm.slane %v5135, 0
        %v5154 = vadd.f32 %v5137, %v5153
        %v5155 = vadd.f32 %v5138, %v5153
        %v5156 = vadd.f32 %v5139, %v5153
        %v5157 = vadd.f32 %v5140, %v5153
        %v5158 = vadd.f32 %v5141, %v5153
        %v5159 = vadd.f32 %v5142, %v5153
        %v5160 = vadd.f32 %v5143, %v5153
        %v5161 = vadd.f32 %v5144, %v5153
        %v5162 = vadd.f32 %v5145, %v5153
        %v5163 = vadd.f32 %v5146, %v5153
        %v5164 = vadd.f32 %v5147, %v5153
        %v5165 = vadd.f32 %v5148, %v5153
        %v5166 = vadd.f32 %v5149, %v5153
        %v5167 = vadd.f32 %v5150, %v5153
        %v5168 = vadd.f32 %v5151, %v5153
        %v5169 = vadd.f32 %v5152, %v5153
        %v5170 = vmax.f32 %v5154, 0.0
        %v5171 = vmax.f32 %v5155, 0.0
        %v5172 = vmax.f32 %v5156, 0.0
        %v5173 = vmax.f32 %v5157, 0.0
        %v5174 = vmax.f32 %v5158, 0.0
        %v5175 = vmax.f32 %v5159, 0.0
        %v5176 = vmax.f32 %v5160, 0.0
        %v5177 = vmax.f32 %v5161, 0.0
        %v5178 = vmax.f32 %v5162, 0.0
        %v5179 = vmax.f32 %v5163, 0.0
        %v5180 = vmax.f32 %v5164, 0.0
        %v5181 = vmax.f32 %v5165, 0.0
        %v5182 = vmax.f32 %v5166, 0.0
        %v5183 = vmax.f32 %v5167, 0.0
        %v5184 = vmax.f32 %v5168, 0.0
        %v5185 = vmax.f32 %v5169, 0.0
        %v5186 = vpack.c.bf16 %v5171, %v5170
        %v5187 = vpack.c.bf16 %v5173, %v5172
        %v5188 = vpack.c.bf16 %v5175, %v5174
        %v5189 = vpack.c.bf16 %v5177, %v5176
        %v5190 = vpack.c.bf16 %v5179, %v5178
        %v5191 = vpack.c.bf16 %v5181, %v5180
        %v5192 = vpack.c.bf16 %v5183, %v5182
        %v5193 = vpack.c.bf16 %v5185, %v5184
        %s5194 = scalar_lea.vmem [#allocation10], 128
        %v5195 = vld [vmem:[%s5194] sm:$0xf]
        %v5196 = vld [vmem:[%s5194 + $0x4] sm:$0xf]
        %v5197 = vld [vmem:[%s5194 + $0x8] sm:$0xf]
        %v5198 = vld [vmem:[%s5194 + $0xc] sm:$0xf]
        %v5199 = vld [vmem:[%s5194 + $0x10] sm:$0xf]
        %v5200 = vld [vmem:[%s5194 + $0x14] sm:$0xf]
        %v5201 = vld [vmem:[%s5194 + $0x18] sm:$0xf]
        %v5202 = vld [vmem:[%s5194 + $0x1c] sm:$0xf]
        %v5203 = vld [vmem:[%s5194 + $0x20] sm:$0xf]
        %v5204 = vld [vmem:[%s5194 + $0x24] sm:$0xf]
        %v5205 = vld [vmem:[%s5194 + $0x28] sm:$0xf]
        %v5206 = vld [vmem:[%s5194 + $0x2c] sm:$0xf]
        %v5207 = vld [vmem:[%s5194 + $0x30] sm:$0xf]
        %v5208 = vld [vmem:[%s5194 + $0x34] sm:$0xf]
        %v5209 = vld [vmem:[%s5194 + $0x38] sm:$0xf]
        %v5210 = vld [vmem:[%s5194 + $0x3c] sm:$0xf]
        %v5227 = vunpack.c.l.b16 %v5195
        %v5228 = vunpack.c.l.b16 %v5196
        %v5229 = vunpack.c.l.b16 %v5197
        %v5230 = vunpack.c.l.b16 %v5198
        %v5231 = vunpack.c.l.b16 %v5199
        %v5232 = vunpack.c.l.b16 %v5200
        %v5233 = vunpack.c.l.b16 %v5201
        %v5234 = vunpack.c.l.b16 %v5202
        %v5235 = vunpack.c.l.b16 %v5203
        %v5236 = vunpack.c.l.b16 %v5204
        %v5237 = vunpack.c.l.b16 %v5205
        %v5238 = vunpack.c.l.b16 %v5206
        %v5239 = vunpack.c.l.b16 %v5207
        %v5240 = vunpack.c.l.b16 %v5208
        %v5241 = vunpack.c.l.b16 %v5209
        %v5242 = vunpack.c.l.b16 %v5210
        %v5243 = vpack.c.b16 %v5228, %v5227
        %v5244 = vpack.c.b16 %v5230, %v5229
        %v5245 = vpack.c.b16 %v5232, %v5231
        %v5246 = vpack.c.b16 %v5234, %v5233
        %v5247 = vpack.c.b16 %v5236, %v5235
        %v5248 = vpack.c.b16 %v5238, %v5237
        %v5249 = vpack.c.b16 %v5240, %v5239
        %v5250 = vpack.c.b16 %v5242, %v5241
        %5259 = vmatpush.bf16.msra.mxu0 %v5250
        %5260 = vmatpush.bf16.msra.mxu0 %v5249
        %5261 = vmatpush.bf16.msra.mxu0 %v5248
        %5262 = vmatpush.bf16.msra.mxu0 %v5247
        %5263 = vmatpush.bf16.msra.mxu0 %v5246
        %5264 = vmatpush.bf16.msra.mxu0 %v5245
        %5265 = vmatpush.bf16.msra.mxu0 %v5244
        %5266 = vmatpush.bf16.msra.mxu0 %v5243
        %5267 = vmatmul.bf16.gmra.mxu0 %v5186
        %v5268 = vpop.f32.mrf.mxu0
        %v5269 = vadd.f32 0.0, %v5268
        %v5270 = vpop.f32.mrf.mxu0
        %v5271 = vadd.f32 0.0, %v5270
        %5272 = vmatmul.bf16.gmra.mxu0 %v5187
        %v5273 = vpop.f32.mrf.mxu0
        %v5274 = vadd.f32 0.0, %v5273
        %v5275 = vpop.f32.mrf.mxu0
        %v5276 = vadd.f32 0.0, %v5275
        %5277 = vmatmul.bf16.gmra.mxu0 %v5188
        %v5278 = vpop.f32.mrf.mxu0
        %v5279 = vadd.f32 0.0, %v5278
        %v5280 = vpop.f32.mrf.mxu0
        %v5281 = vadd.f32 0.0, %v5280
        %5282 = vmatmul.bf16.gmra.mxu0 %v5189
        %v5283 = vpop.f32.mrf.mxu0
        %v5284 = vadd.f32 0.0, %v5283
        %v5285 = vpop.f32.mrf.mxu0
        %v5286 = vadd.f32 0.0, %v5285
        %5287 = vmatmul.bf16.gmra.mxu0 %v5190
        %v5288 = vpop.f32.mrf.mxu0
        %v5289 = vadd.f32 0.0, %v5288
        %v5290 = vpop.f32.mrf.mxu0
        %v5291 = vadd.f32 0.0, %v5290
        %5292 = vmatmul.bf16.gmra.mxu0 %v5191
        %v5293 = vpop.f32.mrf.mxu0
        %v5294 = vadd.f32 0.0, %v5293
        %v5295 = vpop.f32.mrf.mxu0
        %v5296 = vadd.f32 0.0, %v5295
        %5297 = vmatmul.bf16.gmra.mxu0 %v5192
        %v5298 = vpop.f32.mrf.mxu0
        %v5299 = vadd.f32 0.0, %v5298
        %v5300 = vpop.f32.mrf.mxu0
        %v5301 = vadd.f32 0.0, %v5300
        %5302 = vmatmul.bf16.gmra.mxu0 %v5193
        %v5303 = vpop.f32.mrf.mxu0
        %v5304 = vadd.f32 0.0, %v5303
        %v5305 = vpop.f32.mrf.mxu0
        %v5306 = vadd.f32 0.0, %v5305
        %5307 = vdwg.mxu0
        %v5308 = vadd.f32 %v3432, %v5269
        %v5309 = vadd.f32 %v3434, %v5271
        %v5310 = vadd.f32 %v3437, %v5274
        %v5311 = vadd.f32 %v3439, %v5276
        %v5312 = vadd.f32 %v3442, %v5279
        %v5313 = vadd.f32 %v3444, %v5281
        %v5314 = vadd.f32 %v3447, %v5284
        %v5315 = vadd.f32 %v3449, %v5286
        %v5316 = vadd.f32 %v3452, %v5289
        %v5317 = vadd.f32 %v3454, %v5291
        %v5318 = vadd.f32 %v3457, %v5294
        %v5319 = vadd.f32 %v3459, %v5296
        %v5320 = vadd.f32 %v3462, %v5299
        %v5321 = vadd.f32 %v3464, %v5301
        %v5322 = vadd.f32 %v3467, %v5304
        %v5323 = vadd.f32 %v3469, %v5306
        %s5324 = sadd.s32 %s1264, 6
        %s5325 = smul.u32 %s5324, 64
        %s5326 = scalar_lea.vmem [#allocation2], %s5325
        %v5327 = vld [vmem:[%s5326 + $0x6] sm:$0xff]
        %v5328 = vld [vmem:[%s5326 + $0xe] sm:$0xff]
        %v5329 = vld [vmem:[%s5326 + $0x46] sm:$0xff]
        %v5330 = vld [vmem:[%s5326 + $0x4e] sm:$0xff]
        %v5331 = vld [vmem:[%s5326 + $0x86] sm:$0xff]
        %v5332 = vld [vmem:[%s5326 + $0x8e] sm:$0xff]
        %v5333 = vld [vmem:[%s5326 + $0xc6] sm:$0xff]
        %v5334 = vld [vmem:[%s5326 + $0xce] sm:$0xff]
        %v5335 = vld [vmem:[%s5326 + $0x106] sm:$0xff]
        %v5336 = vld [vmem:[%s5326 + $0x10e] sm:$0xff]
        %v5337 = vld [vmem:[%s5326 + $0x146] sm:$0xff]
        %v5338 = vld [vmem:[%s5326 + $0x14e] sm:$0xff]
        %v5339 = vld [vmem:[%s5326 + $0x186] sm:$0xff]
        %v5340 = vld [vmem:[%s5326 + $0x18e] sm:$0xff]
        %v5341 = vld [vmem:[%s5326 + $0x1c6] sm:$0xff]
        %v5342 = vld [vmem:[%s5326 + $0x1ce] sm:$0xff]
        %v5343 = vpack.c.bf16 %v5327, %v5327
        %v5344 = vpack.c.bf16 %v5328, %v5328
        %v5345 = vpack.c.bf16 %v5329, %v5329
        %v5346 = vpack.c.bf16 %v5330, %v5330
        %v5347 = vpack.c.bf16 %v5331, %v5331
        %v5348 = vpack.c.bf16 %v5332, %v5332
        %v5349 = vpack.c.bf16 %v5333, %v5333
        %v5350 = vpack.c.bf16 %v5334, %v5334
        %v5351 = vpack.c.bf16 %v5335, %v5335
        %v5352 = vpack.c.bf16 %v5336, %v5336
        %v5353 = vpack.c.bf16 %v5337, %v5337
        %v5354 = vpack.c.bf16 %v5338, %v5338
        %v5355 = vpack.c.bf16 %v5339, %v5339
        %v5356 = vpack.c.bf16 %v5340, %v5340
        %v5357 = vpack.c.bf16 %v5341, %v5341
        %v5358 = vpack.c.bf16 %v5342, %v5342
        %v5359 = vld [vmem:[%s5326 + $0x18] sm:$0xff]
        %v5360 = vld [vmem:[%s5326 + $0x20] sm:$0xff]
        %v5361 = vld [vmem:[%s5326 + $0x58] sm:$0xff]
        %v5362 = vld [vmem:[%s5326 + $0x60] sm:$0xff]
        %v5363 = vld [vmem:[%s5326 + $0x98] sm:$0xff]
        %v5364 = vld [vmem:[%s5326 + $0xa0] sm:$0xff]
        %v5365 = vld [vmem:[%s5326 + $0xd8] sm:$0xff]
        %v5366 = vld [vmem:[%s5326 + $0xe0] sm:$0xff]
        %v5367 = vld [vmem:[%s5326 + $0x118] sm:$0xff]
        %v5368 = vld [vmem:[%s5326 + $0x120] sm:$0xff]
        %v5369 = vld [vmem:[%s5326 + $0x158] sm:$0xff]
        %v5370 = vld [vmem:[%s5326 + $0x160] sm:$0xff]
        %v5371 = vld [vmem:[%s5326 + $0x198] sm:$0xff]
        %v5372 = vld [vmem:[%s5326 + $0x1a0] sm:$0xff]
        %v5373 = vld [vmem:[%s5326 + $0x1d8] sm:$0xff]
        %v5374 = vld [vmem:[%s5326 + $0x1e0] sm:$0xff]
        %v5375 = vpack.c.bf16 %v5359, %v5359
        %v5376 = vpack.c.bf16 %v5360, %v5360
        %v5377 = vpack.c.bf16 %v5361, %v5361
        %v5378 = vpack.c.bf16 %v5362, %v5362
        %v5379 = vpack.c.bf16 %v5363, %v5363
        %v5380 = vpack.c.bf16 %v5364, %v5364
        %v5381 = vpack.c.bf16 %v5365, %v5365
        %v5382 = vpack.c.bf16 %v5366, %v5366
        %v5383 = vpack.c.bf16 %v5367, %v5367
        %v5384 = vpack.c.bf16 %v5368, %v5368
        %v5385 = vpack.c.bf16 %v5369, %v5369
        %v5386 = vpack.c.bf16 %v5370, %v5370
        %v5387 = vpack.c.bf16 %v5371, %v5371
        %v5388 = vpack.c.bf16 %v5372, %v5372
        %v5389 = vpack.c.bf16 %v5373, %v5373
        %v5390 = vpack.c.bf16 %v5374, %v5374
        %v5391 = vld [vmem:[%s5326 + $0x2a] sm:$0xff]
        %v5392 = vld [vmem:[%s5326 + $0x32] sm:$0xff]
        %v5393 = vld [vmem:[%s5326 + $0x6a] sm:$0xff]
        %v5394 = vld [vmem:[%s5326 + $0x72] sm:$0xff]
        %v5395 = vld [vmem:[%s5326 + $0xaa] sm:$0xff]
        %v5396 = vld [vmem:[%s5326 + $0xb2] sm:$0xff]
        %v5397 = vld [vmem:[%s5326 + $0xea] sm:$0xff]
        %v5398 = vld [vmem:[%s5326 + $0xf2] sm:$0xff]
        %v5399 = vld [vmem:[%s5326 + $0x12a] sm:$0xff]
        %v5400 = vld [vmem:[%s5326 + $0x132] sm:$0xff]
        %v5401 = vld [vmem:[%s5326 + $0x16a] sm:$0xff]
        %v5402 = vld [vmem:[%s5326 + $0x172] sm:$0xff]
        %v5403 = vld [vmem:[%s5326 + $0x1aa] sm:$0xff]
        %v5404 = vld [vmem:[%s5326 + $0x1b2] sm:$0xff]
        %v5405 = vld [vmem:[%s5326 + $0x1ea] sm:$0xff]
        %v5406 = vld [vmem:[%s5326 + $0x1f2] sm:$0xff]
        %v5407 = vpack.c.bf16 %v5391, %v5391
        %v5408 = vpack.c.bf16 %v5392, %v5392
        %v5409 = vpack.c.bf16 %v5393, %v5393
        %v5410 = vpack.c.bf16 %v5394, %v5394
        %v5411 = vpack.c.bf16 %v5395, %v5395
        %v5412 = vpack.c.bf16 %v5396, %v5396
        %v5413 = vpack.c.bf16 %v5397, %v5397
        %v5414 = vpack.c.bf16 %v5398, %v5398
        %v5415 = vpack.c.bf16 %v5399, %v5399
        %v5416 = vpack.c.bf16 %v5400, %v5400
        %v5417 = vpack.c.bf16 %v5401, %v5401
        %v5418 = vpack.c.bf16 %v5402, %v5402
        %v5419 = vpack.c.bf16 %v5403, %v5403
        %v5420 = vpack.c.bf16 %v5404, %v5404
        %v5421 = vpack.c.bf16 %v5405, %v5405
        %v5422 = vpack.c.bf16 %v5406, %v5406
        %v5423 = vld [vmem:[%s1267 + $0x6] sm:$0xff]
        %v5424 = vld [vmem:[%s1267 + $0xe] sm:$0xff]
        %v5425 = vld [vmem:[%s1267 + $0x46] sm:$0xff]
        %v5426 = vld [vmem:[%s1267 + $0x4e] sm:$0xff]
        %v5427 = vld [vmem:[%s1267 + $0x86] sm:$0xff]
        %v5428 = vld [vmem:[%s1267 + $0x8e] sm:$0xff]
        %v5429 = vld [vmem:[%s1267 + $0xc6] sm:$0xff]
        %v5430 = vld [vmem:[%s1267 + $0xce] sm:$0xff]
        %v5431 = vld [vmem:[%s1267 + $0x106] sm:$0xff]
        %v5432 = vld [vmem:[%s1267 + $0x10e] sm:$0xff]
        %v5433 = vld [vmem:[%s1267 + $0x146] sm:$0xff]
        %v5434 = vld [vmem:[%s1267 + $0x14e] sm:$0xff]
        %v5435 = vld [vmem:[%s1267 + $0x186] sm:$0xff]
        %v5436 = vld [vmem:[%s1267 + $0x18e] sm:$0xff]
        %v5437 = vld [vmem:[%s1267 + $0x1c6] sm:$0xff]
        %v5438 = vld [vmem:[%s1267 + $0x1ce] sm:$0xff]
        %v5439 = vpack.c.bf16 %v5423, %v5423
        %v5440 = vpack.c.bf16 %v5424, %v5424
        %v5441 = vpack.c.bf16 %v5425, %v5425
        %v5442 = vpack.c.bf16 %v5426, %v5426
        %v5443 = vpack.c.bf16 %v5427, %v5427
        %v5444 = vpack.c.bf16 %v5428, %v5428
        %v5445 = vpack.c.bf16 %v5429, %v5429
        %v5446 = vpack.c.bf16 %v5430, %v5430
        %v5447 = vpack.c.bf16 %v5431, %v5431
        %v5448 = vpack.c.bf16 %v5432, %v5432
        %v5449 = vpack.c.bf16 %v5433, %v5433
        %v5450 = vpack.c.bf16 %v5434, %v5434
        %v5451 = vpack.c.bf16 %v5435, %v5435
        %v5452 = vpack.c.bf16 %v5436, %v5436
        %v5453 = vpack.c.bf16 %v5437, %v5437
        %v5454 = vpack.c.bf16 %v5438, %v5438
        %v5455 = vld [vmem:[%s1267 + $0x2a] sm:$0xff]
        %v5456 = vld [vmem:[%s1267 + $0x32] sm:$0xff]
        %v5457 = vld [vmem:[%s1267 + $0x6a] sm:$0xff]
        %v5458 = vld [vmem:[%s1267 + $0x72] sm:$0xff]
        %v5459 = vld [vmem:[%s1267 + $0xaa] sm:$0xff]
        %v5460 = vld [vmem:[%s1267 + $0xb2] sm:$0xff]
        %v5461 = vld [vmem:[%s1267 + $0xea] sm:$0xff]
        %v5462 = vld [vmem:[%s1267 + $0xf2] sm:$0xff]
        %v5463 = vld [vmem:[%s1267 + $0x12a] sm:$0xff]
        %v5464 = vld [vmem:[%s1267 + $0x132] sm:$0xff]
        %v5465 = vld [vmem:[%s1267 + $0x16a] sm:$0xff]
        %v5466 = vld [vmem:[%s1267 + $0x172] sm:$0xff]
        %v5467 = vld [vmem:[%s1267 + $0x1aa] sm:$0xff]
        %v5468 = vld [vmem:[%s1267 + $0x1b2] sm:$0xff]
        %v5469 = vld [vmem:[%s1267 + $0x1ea] sm:$0xff]
        %v5470 = vld [vmem:[%s1267 + $0x1f2] sm:$0xff]
        %v5471 = vpack.c.bf16 %v5455, %v5455
        %v5472 = vpack.c.bf16 %v5456, %v5456
        %v5473 = vpack.c.bf16 %v5457, %v5457
        %v5474 = vpack.c.bf16 %v5458, %v5458
        %v5475 = vpack.c.bf16 %v5459, %v5459
        %v5476 = vpack.c.bf16 %v5460, %v5460
        %v5477 = vpack.c.bf16 %v5461, %v5461
        %v5478 = vpack.c.bf16 %v5462, %v5462
        %v5479 = vpack.c.bf16 %v5463, %v5463
        %v5480 = vpack.c.bf16 %v5464, %v5464
        %v5481 = vpack.c.bf16 %v5465, %v5465
        %v5482 = vpack.c.bf16 %v5466, %v5466
        %v5483 = vpack.c.bf16 %v5467, %v5467
        %v5484 = vpack.c.bf16 %v5468, %v5468
        %v5485 = vpack.c.bf16 %v5469, %v5469
        %v5486 = vpack.c.bf16 %v5470, %v5470
        %s5487 = sadd.s32 %s1264, 42
        %s5488 = smul.u32 %s5487, 64
        %s5489 = scalar_lea.vmem [#allocation2], %s5488
        %v5490 = vld [vmem:[%s5489 + $0x6] sm:$0xff]
        %v5491 = vld [vmem:[%s5489 + $0xe] sm:$0xff]
        %v5492 = vld [vmem:[%s5489 + $0x46] sm:$0xff]
        %v5493 = vld [vmem:[%s5489 + $0x4e] sm:$0xff]
        %v5494 = vld [vmem:[%s5489 + $0x86] sm:$0xff]
        %v5495 = vld [vmem:[%s5489 + $0x8e] sm:$0xff]
        %v5496 = vld [vmem:[%s5489 + $0xc6] sm:$0xff]
        %v5497 = vld [vmem:[%s5489 + $0xce] sm:$0xff]
        %v5498 = vld [vmem:[%s5489 + $0x106] sm:$0xff]
        %v5499 = vld [vmem:[%s5489 + $0x10e] sm:$0xff]
        %v5500 = vld [vmem:[%s5489 + $0x146] sm:$0xff]
        %v5501 = vld [vmem:[%s5489 + $0x14e] sm:$0xff]
        %v5502 = vld [vmem:[%s5489 + $0x186] sm:$0xff]
        %v5503 = vld [vmem:[%s5489 + $0x18e] sm:$0xff]
        %v5504 = vld [vmem:[%s5489 + $0x1c6] sm:$0xff]
        %v5505 = vld [vmem:[%s5489 + $0x1ce] sm:$0xff]
        %v5506 = vpack.c.bf16 %v5490, %v5490
        %v5507 = vpack.c.bf16 %v5491, %v5491
        %v5508 = vpack.c.bf16 %v5492, %v5492
        %v5509 = vpack.c.bf16 %v5493, %v5493
        %v5510 = vpack.c.bf16 %v5494, %v5494
        %v5511 = vpack.c.bf16 %v5495, %v5495
        %v5512 = vpack.c.bf16 %v5496, %v5496
        %v5513 = vpack.c.bf16 %v5497, %v5497
        %v5514 = vpack.c.bf16 %v5498, %v5498
        %v5515 = vpack.c.bf16 %v5499, %v5499
        %v5516 = vpack.c.bf16 %v5500, %v5500
        %v5517 = vpack.c.bf16 %v5501, %v5501
        %v5518 = vpack.c.bf16 %v5502, %v5502
        %v5519 = vpack.c.bf16 %v5503, %v5503
        %v5520 = vpack.c.bf16 %v5504, %v5504
        %v5521 = vpack.c.bf16 %v5505, %v5505
        %v5522 = vld [vmem:[%s5489 + $0x18] sm:$0xff]
        %v5523 = vld [vmem:[%s5489 + $0x20] sm:$0xff]
        %v5524 = vld [vmem:[%s5489 + $0x58] sm:$0xff]
        %v5525 = vld [vmem:[%s5489 + $0x60] sm:$0xff]
        %v5526 = vld [vmem:[%s5489 + $0x98] sm:$0xff]
        %v5527 = vld [vmem:[%s5489 + $0xa0] sm:$0xff]
        %v5528 = vld [vmem:[%s5489 + $0xd8] sm:$0xff]
        %v5529 = vld [vmem:[%s5489 + $0xe0] sm:$0xff]
        %v5530 = vld [vmem:[%s5489 + $0x118] sm:$0xff]
        %v5531 = vld [vmem:[%s5489 + $0x120] sm:$0xff]
        %v5532 = vld [vmem:[%s5489 + $0x158] sm:$0xff]
        %v5533 = vld [vmem:[%s5489 + $0x160] sm:$0xff]
        %v5534 = vld [vmem:[%s5489 + $0x198] sm:$0xff]
        %v5535 = vld [vmem:[%s5489 + $0x1a0] sm:$0xff]
        %v5536 = vld [vmem:[%s5489 + $0x1d8] sm:$0xff]
        %v5537 = vld [vmem:[%s5489 + $0x1e0] sm:$0xff]
        %v5538 = vpack.c.bf16 %v5522, %v5522
        %v5539 = vpack.c.bf16 %v5523, %v5523
        %v5540 = vpack.c.bf16 %v5524, %v5524
        %v5541 = vpack.c.bf16 %v5525, %v5525
        %v5542 = vpack.c.bf16 %v5526, %v5526
        %v5543 = vpack.c.bf16 %v5527, %v5527
        %v5544 = vpack.c.bf16 %v5528, %v5528
        %v5545 = vpack.c.bf16 %v5529, %v5529
        %v5546 = vpack.c.bf16 %v5530, %v5530
        %v5547 = vpack.c.bf16 %v5531, %v5531
        %v5548 = vpack.c.bf16 %v5532, %v5532
        %v5549 = vpack.c.bf16 %v5533, %v5533
        %v5550 = vpack.c.bf16 %v5534, %v5534
        %v5551 = vpack.c.bf16 %v5535, %v5535
        %v5552 = vpack.c.bf16 %v5536, %v5536
        %v5553 = vpack.c.bf16 %v5537, %v5537
        %v5554 = vld [vmem:[%s5489 + $0x2a] sm:$0xff]
        %v5555 = vld [vmem:[%s5489 + $0x32] sm:$0xff]
        %v5556 = vld [vmem:[%s5489 + $0x6a] sm:$0xff]
        %v5557 = vld [vmem:[%s5489 + $0x72] sm:$0xff]
        %v5558 = vld [vmem:[%s5489 + $0xaa] sm:$0xff]
        %v5559 = vld [vmem:[%s5489 + $0xb2] sm:$0xff]
        %v5560 = vld [vmem:[%s5489 + $0xea] sm:$0xff]
        %v5561 = vld [vmem:[%s5489 + $0xf2] sm:$0xff]
        %v5562 = vld [vmem:[%s5489 + $0x12a] sm:$0xff]
        %v5563 = vld [vmem:[%s5489 + $0x132] sm:$0xff]
        %v5564 = vld [vmem:[%s5489 + $0x16a] sm:$0xff]
        %v5565 = vld [vmem:[%s5489 + $0x172] sm:$0xff]
        %v5566 = vld [vmem:[%s5489 + $0x1aa] sm:$0xff]
        %v5567 = vld [vmem:[%s5489 + $0x1b2] sm:$0xff]
        %v5568 = vld [vmem:[%s5489 + $0x1ea] sm:$0xff]
        %v5569 = vld [vmem:[%s5489 + $0x1f2] sm:$0xff]
        %v5570 = vpack.c.bf16 %v5554, %v5554
        %v5571 = vpack.c.bf16 %v5555, %v5555
        %v5572 = vpack.c.bf16 %v5556, %v5556
        %v5573 = vpack.c.bf16 %v5557, %v5557
        %v5574 = vpack.c.bf16 %v5558, %v5558
        %v5575 = vpack.c.bf16 %v5559, %v5559
        %v5576 = vpack.c.bf16 %v5560, %v5560
        %v5577 = vpack.c.bf16 %v5561, %v5561
        %v5578 = vpack.c.bf16 %v5562, %v5562
        %v5579 = vpack.c.bf16 %v5563, %v5563
        %v5580 = vpack.c.bf16 %v5564, %v5564
        %v5581 = vpack.c.bf16 %v5565, %v5565
        %v5582 = vpack.c.bf16 %v5566, %v5566
        %v5583 = vpack.c.bf16 %v5567, %v5567
        %v5584 = vpack.c.bf16 %v5568, %v5568
        %v5585 = vpack.c.bf16 %v5569, %v5569
        %v5602 = vunpack.c.l.b16 %v5343
        %v5603 = vunpack.c.l.b16 %v5344
        %v5604 = vunpack.c.l.b16 %v5345
        %v5605 = vunpack.c.l.b16 %v5346
        %v5606 = vunpack.c.l.b16 %v5347
        %v5607 = vunpack.c.l.b16 %v5348
        %v5608 = vunpack.c.l.b16 %v5349
        %v5609 = vunpack.c.l.b16 %v5350
        %v5610 = vunpack.c.l.b16 %v5351
        %v5611 = vunpack.c.l.b16 %v5352
        %v5612 = vunpack.c.l.b16 %v5353
        %v5613 = vunpack.c.l.b16 %v5354
        %v5614 = vunpack.c.l.b16 %v5355
        %v5615 = vunpack.c.l.b16 %v5356
        %v5616 = vunpack.c.l.b16 %v5357
        %v5617 = vunpack.c.l.b16 %v5358
        %v5618 = vpack.c.b16 %v5603, %v5602
        %v5619 = vpack.c.b16 %v5605, %v5604
        %v5620 = vpack.c.b16 %v5607, %v5606
        %v5621 = vpack.c.b16 %v5609, %v5608
        %v5622 = vpack.c.b16 %v5611, %v5610
        %v5623 = vpack.c.b16 %v5613, %v5612
        %v5624 = vpack.c.b16 %v5615, %v5614
        %v5625 = vpack.c.b16 %v5617, %v5616
        %v5650 = vunpack.c.l.b16 %v5375
        %v5651 = vunpack.c.l.b16 %v5376
        %v5652 = vunpack.c.l.b16 %v5377
        %v5653 = vunpack.c.l.b16 %v5378
        %v5654 = vunpack.c.l.b16 %v5379
        %v5655 = vunpack.c.l.b16 %v5380
        %v5656 = vunpack.c.l.b16 %v5381
        %v5657 = vunpack.c.l.b16 %v5382
        %v5658 = vunpack.c.l.b16 %v5383
        %v5659 = vunpack.c.l.b16 %v5384
        %v5660 = vunpack.c.l.b16 %v5385
        %v5661 = vunpack.c.l.b16 %v5386
        %v5662 = vunpack.c.l.b16 %v5387
        %v5663 = vunpack.c.l.b16 %v5388
        %v5664 = vunpack.c.l.b16 %v5389
        %v5665 = vunpack.c.l.b16 %v5390
        %v5666 = vpack.c.b16 %v5651, %v5650
        %v5667 = vpack.c.b16 %v5653, %v5652
        %v5668 = vpack.c.b16 %v5655, %v5654
        %v5669 = vpack.c.b16 %v5657, %v5656
        %v5670 = vpack.c.b16 %v5659, %v5658
        %v5671 = vpack.c.b16 %v5661, %v5660
        %v5672 = vpack.c.b16 %v5663, %v5662
        %v5673 = vpack.c.b16 %v5665, %v5664
        %v5698 = vunpack.c.l.b16 %v5407
        %v5699 = vunpack.c.l.b16 %v5408
        %v5700 = vunpack.c.l.b16 %v5409
        %v5701 = vunpack.c.l.b16 %v5410
        %v5702 = vunpack.c.l.b16 %v5411
        %v5703 = vunpack.c.l.b16 %v5412
        %v5704 = vunpack.c.l.b16 %v5413
        %v5705 = vunpack.c.l.b16 %v5414
        %v5706 = vunpack.c.l.b16 %v5415
        %v5707 = vunpack.c.l.b16 %v5416
        %v5708 = vunpack.c.l.b16 %v5417
        %v5709 = vunpack.c.l.b16 %v5418
        %v5710 = vunpack.c.l.b16 %v5419
        %v5711 = vunpack.c.l.b16 %v5420
        %v5712 = vunpack.c.l.b16 %v5421
        %v5713 = vunpack.c.l.b16 %v5422
        %v5714 = vpack.c.b16 %v5699, %v5698
        %v5715 = vpack.c.b16 %v5701, %v5700
        %v5716 = vpack.c.b16 %v5703, %v5702
        %v5717 = vpack.c.b16 %v5705, %v5704
        %v5718 = vpack.c.b16 %v5707, %v5706
        %v5719 = vpack.c.b16 %v5709, %v5708
        %v5720 = vpack.c.b16 %v5711, %v5710
        %v5721 = vpack.c.b16 %v5713, %v5712
        %v5746 = vunpack.c.l.b16 %v5439
        %v5747 = vunpack.c.l.b16 %v5440
        %v5748 = vunpack.c.l.b16 %v5441
        %v5749 = vunpack.c.l.b16 %v5442
        %v5750 = vunpack.c.l.b16 %v5443
        %v5751 = vunpack.c.l.b16 %v5444
        %v5752 = vunpack.c.l.b16 %v5445
        %v5753 = vunpack.c.l.b16 %v5446
        %v5754 = vunpack.c.l.b16 %v5447
        %v5755 = vunpack.c.l.b16 %v5448
        %v5756 = vunpack.c.l.b16 %v5449
        %v5757 = vunpack.c.l.b16 %v5450
        %v5758 = vunpack.c.l.b16 %v5451
        %v5759 = vunpack.c.l.b16 %v5452
        %v5760 = vunpack.c.l.b16 %v5453
        %v5761 = vunpack.c.l.b16 %v5454
        %v5762 = vpack.c.b16 %v5747, %v5746
        %v5763 = vpack.c.b16 %v5749, %v5748
        %v5764 = vpack.c.b16 %v5751, %v5750
        %v5765 = vpack.c.b16 %v5753, %v5752
        %v5766 = vpack.c.b16 %v5755, %v5754
        %v5767 = vpack.c.b16 %v5757, %v5756
        %v5768 = vpack.c.b16 %v5759, %v5758
        %v5769 = vpack.c.b16 %v5761, %v5760
        %v5794 = vunpack.c.l.b16 %v5471
        %v5795 = vunpack.c.l.b16 %v5472
        %v5796 = vunpack.c.l.b16 %v5473
        %v5797 = vunpack.c.l.b16 %v5474
        %v5798 = vunpack.c.l.b16 %v5475
        %v5799 = vunpack.c.l.b16 %v5476
        %v5800 = vunpack.c.l.b16 %v5477
        %v5801 = vunpack.c.l.b16 %v5478
        %v5802 = vunpack.c.l.b16 %v5479
        %v5803 = vunpack.c.l.b16 %v5480
        %v5804 = vunpack.c.l.b16 %v5481
        %v5805 = vunpack.c.l.b16 %v5482
        %v5806 = vunpack.c.l.b16 %v5483
        %v5807 = vunpack.c.l.b16 %v5484
        %v5808 = vunpack.c.l.b16 %v5485
        %v5809 = vunpack.c.l.b16 %v5486
        %v5810 = vpack.c.b16 %v5795, %v5794
        %v5811 = vpack.c.b16 %v5797, %v5796
        %v5812 = vpack.c.b16 %v5799, %v5798
        %v5813 = vpack.c.b16 %v5801, %v5800
        %v5814 = vpack.c.b16 %v5803, %v5802
        %v5815 = vpack.c.b16 %v5805, %v5804
        %v5816 = vpack.c.b16 %v5807, %v5806
        %v5817 = vpack.c.b16 %v5809, %v5808
        %v5842 = vunpack.c.l.b16 %v5506
        %v5843 = vunpack.c.l.b16 %v5507
        %v5844 = vunpack.c.l.b16 %v5508
        %v5845 = vunpack.c.l.b16 %v5509
        %v5846 = vunpack.c.l.b16 %v5510
        %v5847 = vunpack.c.l.b16 %v5511
        %v5848 = vunpack.c.l.b16 %v5512
        %v5849 = vunpack.c.l.b16 %v5513
        %v5850 = vunpack.c.l.b16 %v5514
        %v5851 = vunpack.c.l.b16 %v5515
        %v5852 = vunpack.c.l.b16 %v5516
        %v5853 = vunpack.c.l.b16 %v5517
        %v5854 = vunpack.c.l.b16 %v5518
        %v5855 = vunpack.c.l.b16 %v5519
        %v5856 = vunpack.c.l.b16 %v5520
        %v5857 = vunpack.c.l.b16 %v5521
        %v5858 = vpack.c.b16 %v5843, %v5842
        %v5859 = vpack.c.b16 %v5845, %v5844
        %v5860 = vpack.c.b16 %v5847, %v5846
        %v5861 = vpack.c.b16 %v5849, %v5848
        %v5862 = vpack.c.b16 %v5851, %v5850
        %v5863 = vpack.c.b16 %v5853, %v5852
        %v5864 = vpack.c.b16 %v5855, %v5854
        %v5865 = vpack.c.b16 %v5857, %v5856
        %v5890 = vunpack.c.l.b16 %v5538
        %v5891 = vunpack.c.l.b16 %v5539
        %v5892 = vunpack.c.l.b16 %v5540
        %v5893 = vunpack.c.l.b16 %v5541
        %v5894 = vunpack.c.l.b16 %v5542
        %v5895 = vunpack.c.l.b16 %v5543
        %v5896 = vunpack.c.l.b16 %v5544
        %v5897 = vunpack.c.l.b16 %v5545
        %v5898 = vunpack.c.l.b16 %v5546
        %v5899 = vunpack.c.l.b16 %v5547
        %v5900 = vunpack.c.l.b16 %v5548
        %v5901 = vunpack.c.l.b16 %v5549
        %v5902 = vunpack.c.l.b16 %v5550
        %v5903 = vunpack.c.l.b16 %v5551
        %v5904 = vunpack.c.l.b16 %v5552
        %v5905 = vunpack.c.l.b16 %v5553
        %v5906 = vpack.c.b16 %v5891, %v5890
        %v5907 = vpack.c.b16 %v5893, %v5892
        %v5908 = vpack.c.b16 %v5895, %v5894
        %v5909 = vpack.c.b16 %v5897, %v5896
        %v5910 = vpack.c.b16 %v5899, %v5898
        %v5911 = vpack.c.b16 %v5901, %v5900
        %v5912 = vpack.c.b16 %v5903, %v5902
        %v5913 = vpack.c.b16 %v5905, %v5904
        %v5938 = vunpack.c.l.b16 %v5570
        %v5939 = vunpack.c.l.b16 %v5571
        %v5940 = vunpack.c.l.b16 %v5572
        %v5941 = vunpack.c.l.b16 %v5573
        %v5942 = vunpack.c.l.b16 %v5574
        %v5943 = vunpack.c.l.b16 %v5575
        %v5944 = vunpack.c.l.b16 %v5576
        %v5945 = vunpack.c.l.b16 %v5577
        %v5946 = vunpack.c.l.b16 %v5578
        %v5947 = vunpack.c.l.b16 %v5579
        %v5948 = vunpack.c.l.b16 %v5580
        %v5949 = vunpack.c.l.b16 %v5581
        %v5950 = vunpack.c.l.b16 %v5582
        %v5951 = vunpack.c.l.b16 %v5583
        %v5952 = vunpack.c.l.b16 %v5584
        %v5953 = vunpack.c.l.b16 %v5585
        %v5954 = vpack.c.b16 %v5939, %v5938
        %v5955 = vpack.c.b16 %v5941, %v5940
        %v5956 = vpack.c.b16 %v5943, %v5942
        %v5957 = vpack.c.b16 %v5945, %v5944
        %v5958 = vpack.c.b16 %v5947, %v5946
        %v5959 = vpack.c.b16 %v5949, %v5948
        %v5960 = vpack.c.b16 %v5951, %v5950
        %v5961 = vpack.c.b16 %v5953, %v5952
        %v5970 = vld [vmem:[#allocation7] sm:$0xf]
        %v5971 = vld [vmem:[#allocation7 + $0x4] sm:$0xf]
        %v5972 = vld [vmem:[#allocation7 + $0x8] sm:$0xf]
        %v5973 = vld [vmem:[#allocation7 + $0xc] sm:$0xf]
        %v5974 = vld [vmem:[#allocation7 + $0x10] sm:$0xf]
        %v5975 = vld [vmem:[#allocation7 + $0x14] sm:$0xf]
        %v5976 = vld [vmem:[#allocation7 + $0x18] sm:$0xf]
        %v5977 = vld [vmem:[#allocation7 + $0x1c] sm:$0xf]
        %v5978 = vld [vmem:[#allocation7 + $0x20] sm:$0xf]
        %v5979 = vld [vmem:[#allocation7 + $0x24] sm:$0xf]
        %v5980 = vld [vmem:[#allocation7 + $0x28] sm:$0xf]
        %v5981 = vld [vmem:[#allocation7 + $0x2c] sm:$0xf]
        %v5982 = vld [vmem:[#allocation7 + $0x30] sm:$0xf]
        %v5983 = vld [vmem:[#allocation7 + $0x34] sm:$0xf]
        %v5984 = vld [vmem:[#allocation7 + $0x38] sm:$0xf]
        %v5985 = vld [vmem:[#allocation7 + $0x3c] sm:$0xf]
        %v5986 = vld [vmem:[#allocation7 + $0x40] sm:$0xf]
        %v5987 = vld [vmem:[#allocation7 + $0x44] sm:$0xf]
        %v5988 = vld [vmem:[#allocation7 + $0x48] sm:$0xf]
        %v5989 = vld [vmem:[#allocation7 + $0x4c] sm:$0xf]
        %v5990 = vld [vmem:[#allocation7 + $0x50] sm:$0xf]
        %v5991 = vld [vmem:[#allocation7 + $0x54] sm:$0xf]
        %v5992 = vld [vmem:[#allocation7 + $0x58] sm:$0xf]
        %v5993 = vld [vmem:[#allocation7 + $0x5c] sm:$0xf]
        %v5994 = vld [vmem:[#allocation7 + $0x60] sm:$0xf]
        %v5995 = vld [vmem:[#allocation7 + $0x64] sm:$0xf]
        %v5996 = vld [vmem:[#allocation7 + $0x68] sm:$0xf]
        %v5997 = vld [vmem:[#allocation7 + $0x6c] sm:$0xf]
        %v5998 = vld [vmem:[#allocation7 + $0x70] sm:$0xf]
        %v5999 = vld [vmem:[#allocation7 + $0x74] sm:$0xf]
        %v6000 = vld [vmem:[#allocation7 + $0x78] sm:$0xf]
        %v6001 = vld [vmem:[#allocation7 + $0x7c] sm:$0xf]
        %v6002 = vld [vmem:[#allocation7 + $0x80] sm:$0xf]
        %v6003 = vld [vmem:[#allocation7 + $0x84] sm:$0xf]
        %v6004 = vld [vmem:[#allocation7 + $0x88] sm:$0xf]
        %v6005 = vld [vmem:[#allocation7 + $0x8c] sm:$0xf]
        %v6006 = vld [vmem:[#allocation7 + $0x90] sm:$0xf]
        %v6007 = vld [vmem:[#allocation7 + $0x94] sm:$0xf]
        %v6008 = vld [vmem:[#allocation7 + $0x98] sm:$0xf]
        %v6009 = vld [vmem:[#allocation7 + $0x9c] sm:$0xf]
        %v6010 = vld [vmem:[#allocation7 + $0xa0] sm:$0xf]
        %v6011 = vld [vmem:[#allocation7 + $0xa4] sm:$0xf]
        %v6012 = vld [vmem:[#allocation7 + $0xa8] sm:$0xf]
        %v6013 = vld [vmem:[#allocation7 + $0xac] sm:$0xf]
        %v6014 = vld [vmem:[#allocation7 + $0xb0] sm:$0xf]
        %v6015 = vld [vmem:[#allocation7 + $0xb4] sm:$0xf]
        %v6016 = vld [vmem:[#allocation7 + $0xb8] sm:$0xf]
        %v6017 = vld [vmem:[#allocation7 + $0xbc] sm:$0xf]
        %v6018 = vld [vmem:[#allocation7 + $0xc0] sm:$0xf]
        %v6019 = vld [vmem:[#allocation7 + $0xc4] sm:$0xf]
        %v6020 = vld [vmem:[#allocation7 + $0xc8] sm:$0xf]
        %v6021 = vld [vmem:[#allocation7 + $0xcc] sm:$0xf]
        %v6022 = vld [vmem:[#allocation7 + $0xd0] sm:$0xf]
        %v6023 = vld [vmem:[#allocation7 + $0xd4] sm:$0xf]
        %v6024 = vld [vmem:[#allocation7 + $0xd8] sm:$0xf]
        %v6025 = vld [vmem:[#allocation7 + $0xdc] sm:$0xf]
        %v6026 = vld [vmem:[#allocation7 + $0xe0] sm:$0xf]
        %v6027 = vld [vmem:[#allocation7 + $0xe4] sm:$0xf]
        %v6028 = vld [vmem:[#allocation7 + $0xe8] sm:$0xf]
        %v6029 = vld [vmem:[#allocation7 + $0xec] sm:$0xf]
        %v6030 = vld [vmem:[#allocation7 + $0xf0] sm:$0xf]
        %v6031 = vld [vmem:[#allocation7 + $0xf4] sm:$0xf]
        %v6032 = vld [vmem:[#allocation7 + $0xf8] sm:$0xf]
        %v6033 = vld [vmem:[#allocation7 + $0xfc] sm:$0xf]
        %v6034 = vld [vmem:[#allocation7 + $0x100] sm:$0xf]
        %v6035 = vld [vmem:[#allocation7 + $0x104] sm:$0xf]
        %v6036 = vld [vmem:[#allocation7 + $0x108] sm:$0xf]
        %v6037 = vld [vmem:[#allocation7 + $0x10c] sm:$0xf]
        %v6038 = vld [vmem:[#allocation7 + $0x110] sm:$0xf]
        %v6039 = vld [vmem:[#allocation7 + $0x114] sm:$0xf]
        %v6040 = vld [vmem:[#allocation7 + $0x118] sm:$0xf]
        %v6041 = vld [vmem:[#allocation7 + $0x11c] sm:$0xf]
        %v6042 = vld [vmem:[#allocation7 + $0x120] sm:$0xf]
        %v6043 = vld [vmem:[#allocation7 + $0x124] sm:$0xf]
        %v6044 = vld [vmem:[#allocation7 + $0x128] sm:$0xf]
        %v6045 = vld [vmem:[#allocation7 + $0x12c] sm:$0xf]
        %v6046 = vld [vmem:[#allocation7 + $0x130] sm:$0xf]
        %v6047 = vld [vmem:[#allocation7 + $0x134] sm:$0xf]
        %v6048 = vld [vmem:[#allocation7 + $0x138] sm:$0xf]
        %v6049 = vld [vmem:[#allocation7 + $0x13c] sm:$0xf]
        %v6050 = vld [vmem:[#allocation7 + $0x140] sm:$0xf]
        %v6051 = vld [vmem:[#allocation7 + $0x144] sm:$0xf]
        %v6052 = vld [vmem:[#allocation7 + $0x148] sm:$0xf]
        %v6053 = vld [vmem:[#allocation7 + $0x14c] sm:$0xf]
        %v6054 = vld [vmem:[#allocation7 + $0x150] sm:$0xf]
        %v6055 = vld [vmem:[#allocation7 + $0x154] sm:$0xf]
        %v6056 = vld [vmem:[#allocation7 + $0x158] sm:$0xf]
        %v6057 = vld [vmem:[#allocation7 + $0x15c] sm:$0xf]
        %v6058 = vld [vmem:[#allocation7 + $0x160] sm:$0xf]
        %v6059 = vld [vmem:[#allocation7 + $0x164] sm:$0xf]
        %v6060 = vld [vmem:[#allocation7 + $0x168] sm:$0xf]
        %v6061 = vld [vmem:[#allocation7 + $0x16c] sm:$0xf]
        %v6062 = vld [vmem:[#allocation7 + $0x170] sm:$0xf]
        %v6063 = vld [vmem:[#allocation7 + $0x174] sm:$0xf]
        %v6064 = vld [vmem:[#allocation7 + $0x178] sm:$0xf]
        %v6065 = vld [vmem:[#allocation7 + $0x17c] sm:$0xf]
        %v6066 = vld [vmem:[#allocation7 + $0x180] sm:$0xf]
        %v6067 = vld [vmem:[#allocation7 + $0x184] sm:$0xf]
        %v6068 = vld [vmem:[#allocation7 + $0x188] sm:$0xf]
        %v6069 = vld [vmem:[#allocation7 + $0x18c] sm:$0xf]
        %v6070 = vld [vmem:[#allocation7 + $0x190] sm:$0xf]
        %v6071 = vld [vmem:[#allocation7 + $0x194] sm:$0xf]
        %v6072 = vld [vmem:[#allocation7 + $0x198] sm:$0xf]
        %v6073 = vld [vmem:[#allocation7 + $0x19c] sm:$0xf]
        %v6074 = vld [vmem:[#allocation7 + $0x1a0] sm:$0xf]
        %v6075 = vld [vmem:[#allocation7 + $0x1a4] sm:$0xf]
        %v6076 = vld [vmem:[#allocation7 + $0x1a8] sm:$0xf]
        %v6077 = vld [vmem:[#allocation7 + $0x1ac] sm:$0xf]
        %v6078 = vld [vmem:[#allocation7 + $0x1b0] sm:$0xf]
        %v6079 = vld [vmem:[#allocation7 + $0x1b4] sm:$0xf]
        %v6080 = vld [vmem:[#allocation7 + $0x1b8] sm:$0xf]
        %v6081 = vld [vmem:[#allocation7 + $0x1bc] sm:$0xf]
        %v6082 = vld [vmem:[#allocation7 + $0x1c0] sm:$0xf]
        %v6083 = vld [vmem:[#allocation7 + $0x1c4] sm:$0xf]
        %v6084 = vld [vmem:[#allocation7 + $0x1c8] sm:$0xf]
        %v6085 = vld [vmem:[#allocation7 + $0x1cc] sm:$0xf]
        %v6086 = vld [vmem:[#allocation7 + $0x1d0] sm:$0xf]
        %v6087 = vld [vmem:[#allocation7 + $0x1d4] sm:$0xf]
        %v6088 = vld [vmem:[#allocation7 + $0x1d8] sm:$0xf]
        %v6089 = vld [vmem:[#allocation7 + $0x1dc] sm:$0xf]
        %v6090 = vld [vmem:[#allocation7 + $0x1e0] sm:$0xf]
        %v6091 = vld [vmem:[#allocation7 + $0x1e4] sm:$0xf]
        %v6092 = vld [vmem:[#allocation7 + $0x1e8] sm:$0xf]
        %v6093 = vld [vmem:[#allocation7 + $0x1ec] sm:$0xf]
        %v6094 = vld [vmem:[#allocation7 + $0x1f0] sm:$0xf]
        %v6095 = vld [vmem:[#allocation7 + $0x1f4] sm:$0xf]
        %v6096 = vld [vmem:[#allocation7 + $0x1f8] sm:$0xf]
        %v6097 = vld [vmem:[#allocation7 + $0x1fc] sm:$0xf]
        %v6098 = vld [vmem:[#allocation7 + $0x200] sm:$0xf]
        %v6099 = vld [vmem:[#allocation7 + $0x204] sm:$0xf]
        %v6100 = vld [vmem:[#allocation7 + $0x208] sm:$0xf]
        %v6101 = vld [vmem:[#allocation7 + $0x20c] sm:$0xf]
        %v6102 = vld [vmem:[#allocation7 + $0x210] sm:$0xf]
        %v6103 = vld [vmem:[#allocation7 + $0x214] sm:$0xf]
        %v6104 = vld [vmem:[#allocation7 + $0x218] sm:$0xf]
        %v6105 = vld [vmem:[#allocation7 + $0x21c] sm:$0xf]
        %v6106 = vld [vmem:[#allocation7 + $0x220] sm:$0xf]
        %v6107 = vld [vmem:[#allocation7 + $0x224] sm:$0xf]
        %v6108 = vld [vmem:[#allocation7 + $0x228] sm:$0xf]
        %v6109 = vld [vmem:[#allocation7 + $0x22c] sm:$0xf]
        %v6110 = vld [vmem:[#allocation7 + $0x230] sm:$0xf]
        %v6111 = vld [vmem:[#allocation7 + $0x234] sm:$0xf]
        %v6112 = vld [vmem:[#allocation7 + $0x238] sm:$0xf]
        %v6113 = vld [vmem:[#allocation7 + $0x23c] sm:$0xf]
        %v6258 = vunpack.c.l.b16 %v5970
        %v6259 = vunpack.c.l.b16 %v5971
        %v6260 = vunpack.c.l.b16 %v5972
        %v6261 = vunpack.c.l.b16 %v5973
        %v6262 = vunpack.c.l.b16 %v5974
        %v6263 = vunpack.c.l.b16 %v5975
        %v6264 = vunpack.c.l.b16 %v5976
        %v6265 = vunpack.c.l.b16 %v5977
        %v6266 = vunpack.c.l.b16 %v5978
        %v6267 = vunpack.c.l.b16 %v5979
        %v6268 = vunpack.c.l.b16 %v5980
        %v6269 = vunpack.c.l.b16 %v5981
        %v6270 = vunpack.c.l.b16 %v5982
        %v6271 = vunpack.c.l.b16 %v5983
        %v6272 = vunpack.c.l.b16 %v5984
        %v6273 = vunpack.c.l.b16 %v5985
        %v6274 = vunpack.c.l.b16 %v5986
        %v6275 = vunpack.c.l.b16 %v5987
        %v6276 = vunpack.c.l.b16 %v5988
        %v6277 = vunpack.c.l.b16 %v5989
        %v6278 = vunpack.c.l.b16 %v5990
        %v6279 = vunpack.c.l.b16 %v5991
        %v6280 = vunpack.c.l.b16 %v5992
        %v6281 = vunpack.c.l.b16 %v5993
        %v6282 = vunpack.c.l.b16 %v5994
        %v6283 = vunpack.c.l.b16 %v5995
        %v6284 = vunpack.c.l.b16 %v5996
        %v6285 = vunpack.c.l.b16 %v5997
        %v6286 = vunpack.c.l.b16 %v5998
        %v6287 = vunpack.c.l.b16 %v5999
        %v6288 = vunpack.c.l.b16 %v6000
        %v6289 = vunpack.c.l.b16 %v6001
        %v6290 = vunpack.c.l.b16 %v6002
        %v6291 = vunpack.c.l.b16 %v6003
        %v6292 = vunpack.c.l.b16 %v6004
        %v6293 = vunpack.c.l.b16 %v6005
        %v6294 = vunpack.c.l.b16 %v6006
        %v6295 = vunpack.c.l.b16 %v6007
        %v6296 = vunpack.c.l.b16 %v6008
        %v6297 = vunpack.c.l.b16 %v6009
        %v6298 = vunpack.c.l.b16 %v6010
        %v6299 = vunpack.c.l.b16 %v6011
        %v6300 = vunpack.c.l.b16 %v6012
        %v6301 = vunpack.c.l.b16 %v6013
        %v6302 = vunpack.c.l.b16 %v6014
        %v6303 = vunpack.c.l.b16 %v6015
        %v6304 = vunpack.c.l.b16 %v6016
        %v6305 = vunpack.c.l.b16 %v6017
        %v6306 = vunpack.c.l.b16 %v6018
        %v6307 = vunpack.c.l.b16 %v6019
        %v6308 = vunpack.c.l.b16 %v6020
        %v6309 = vunpack.c.l.b16 %v6021
        %v6310 = vunpack.c.l.b16 %v6022
        %v6311 = vunpack.c.l.b16 %v6023
        %v6312 = vunpack.c.l.b16 %v6024
        %v6313 = vunpack.c.l.b16 %v6025
        %v6314 = vunpack.c.l.b16 %v6026
        %v6315 = vunpack.c.l.b16 %v6027
        %v6316 = vunpack.c.l.b16 %v6028
        %v6317 = vunpack.c.l.b16 %v6029
        %v6318 = vunpack.c.l.b16 %v6030
        %v6319 = vunpack.c.l.b16 %v6031
        %v6320 = vunpack.c.l.b16 %v6032
        %v6321 = vunpack.c.l.b16 %v6033
        %v6322 = vunpack.c.l.b16 %v6034
        %v6323 = vunpack.c.l.b16 %v6035
        %v6324 = vunpack.c.l.b16 %v6036
        %v6325 = vunpack.c.l.b16 %v6037
        %v6326 = vunpack.c.l.b16 %v6038
        %v6327 = vunpack.c.l.b16 %v6039
        %v6328 = vunpack.c.l.b16 %v6040
        %v6329 = vunpack.c.l.b16 %v6041
        %v6330 = vunpack.c.l.b16 %v6042
        %v6331 = vunpack.c.l.b16 %v6043
        %v6332 = vunpack.c.l.b16 %v6044
        %v6333 = vunpack.c.l.b16 %v6045
        %v6334 = vunpack.c.l.b16 %v6046
        %v6335 = vunpack.c.l.b16 %v6047
        %v6336 = vunpack.c.l.b16 %v6048
        %v6337 = vunpack.c.l.b16 %v6049
        %v6338 = vunpack.c.l.b16 %v6050
        %v6339 = vunpack.c.l.b16 %v6051
        %v6340 = vunpack.c.l.b16 %v6052
        %v6341 = vunpack.c.l.b16 %v6053
        %v6342 = vunpack.c.l.b16 %v6054
        %v6343 = vunpack.c.l.b16 %v6055
        %v6344 = vunpack.c.l.b16 %v6056
        %v6345 = vunpack.c.l.b16 %v6057
        %v6346 = vunpack.c.l.b16 %v6058
        %v6347 = vunpack.c.l.b16 %v6059
        %v6348 = vunpack.c.l.b16 %v6060
        %v6349 = vunpack.c.l.b16 %v6061
        %v6350 = vunpack.c.l.b16 %v6062
        %v6351 = vunpack.c.l.b16 %v6063
        %v6352 = vunpack.c.l.b16 %v6064
        %v6353 = vunpack.c.l.b16 %v6065
        %v6354 = vunpack.c.l.b16 %v6066
        %v6355 = vunpack.c.l.b16 %v6067
        %v6356 = vunpack.c.l.b16 %v6068
        %v6357 = vunpack.c.l.b16 %v6069
        %v6358 = vunpack.c.l.b16 %v6070
        %v6359 = vunpack.c.l.b16 %v6071
        %v6360 = vunpack.c.l.b16 %v6072
        %v6361 = vunpack.c.l.b16 %v6073
        %v6362 = vunpack.c.l.b16 %v6074
        %v6363 = vunpack.c.l.b16 %v6075
        %v6364 = vunpack.c.l.b16 %v6076
        %v6365 = vunpack.c.l.b16 %v6077
        %v6366 = vunpack.c.l.b16 %v6078
        %v6367 = vunpack.c.l.b16 %v6079
        %v6368 = vunpack.c.l.b16 %v6080
        %v6369 = vunpack.c.l.b16 %v6081
        %v6370 = vunpack.c.l.b16 %v6082
        %v6371 = vunpack.c.l.b16 %v6083
        %v6372 = vunpack.c.l.b16 %v6084
        %v6373 = vunpack.c.l.b16 %v6085
        %v6374 = vunpack.c.l.b16 %v6086
        %v6375 = vunpack.c.l.b16 %v6087
        %v6376 = vunpack.c.l.b16 %v6088
        %v6377 = vunpack.c.l.b16 %v6089
        %v6378 = vunpack.c.l.b16 %v6090
        %v6379 = vunpack.c.l.b16 %v6091
        %v6380 = vunpack.c.l.b16 %v6092
        %v6381 = vunpack.c.l.b16 %v6093
        %v6382 = vunpack.c.l.b16 %v6094
        %v6383 = vunpack.c.l.b16 %v6095
        %v6384 = vunpack.c.l.b16 %v6096
        %v6385 = vunpack.c.l.b16 %v6097
        %v6386 = vunpack.c.l.b16 %v6098
        %v6387 = vunpack.c.l.b16 %v6099
        %v6388 = vunpack.c.l.b16 %v6100
        %v6389 = vunpack.c.l.b16 %v6101
        %v6390 = vunpack.c.l.b16 %v6102
        %v6391 = vunpack.c.l.b16 %v6103
        %v6392 = vunpack.c.l.b16 %v6104
        %v6393 = vunpack.c.l.b16 %v6105
        %v6394 = vunpack.c.l.b16 %v6106
        %v6395 = vunpack.c.l.b16 %v6107
        %v6396 = vunpack.c.l.b16 %v6108
        %v6397 = vunpack.c.l.b16 %v6109
        %v6398 = vunpack.c.l.b16 %v6110
        %v6399 = vunpack.c.l.b16 %v6111
        %v6400 = vunpack.c.l.b16 %v6112
        %v6401 = vunpack.c.l.b16 %v6113
        %v6402 = vpack.c.b16 %v6259, %v6258
        %v6403 = vpack.c.b16 %v6261, %v6260
        %v6404 = vpack.c.b16 %v6263, %v6262
        %v6405 = vpack.c.b16 %v6265, %v6264
        %v6406 = vpack.c.b16 %v6267, %v6266
        %v6407 = vpack.c.b16 %v6269, %v6268
        %v6408 = vpack.c.b16 %v6271, %v6270
        %v6409 = vpack.c.b16 %v6273, %v6272
        %v6410 = vpack.c.b16 %v6275, %v6274
        %v6411 = vpack.c.b16 %v6277, %v6276
        %v6412 = vpack.c.b16 %v6279, %v6278
        %v6413 = vpack.c.b16 %v6281, %v6280
        %v6414 = vpack.c.b16 %v6283, %v6282
        %v6415 = vpack.c.b16 %v6285, %v6284
        %v6416 = vpack.c.b16 %v6287, %v6286
        %v6417 = vpack.c.b16 %v6289, %v6288
        %v6418 = vpack.c.b16 %v6291, %v6290
        %v6419 = vpack.c.b16 %v6293, %v6292
        %v6420 = vpack.c.b16 %v6295, %v6294
        %v6421 = vpack.c.b16 %v6297, %v6296
        %v6422 = vpack.c.b16 %v6299, %v6298
        %v6423 = vpack.c.b16 %v6301, %v6300
        %v6424 = vpack.c.b16 %v6303, %v6302
        %v6425 = vpack.c.b16 %v6305, %v6304
        %v6426 = vpack.c.b16 %v6307, %v6306
        %v6427 = vpack.c.b16 %v6309, %v6308
        %v6428 = vpack.c.b16 %v6311, %v6310
        %v6429 = vpack.c.b16 %v6313, %v6312
        %v6430 = vpack.c.b16 %v6315, %v6314
        %v6431 = vpack.c.b16 %v6317, %v6316
        %v6432 = vpack.c.b16 %v6319, %v6318
        %v6433 = vpack.c.b16 %v6321, %v6320
        %v6434 = vpack.c.b16 %v6323, %v6322
        %v6435 = vpack.c.b16 %v6325, %v6324
        %v6436 = vpack.c.b16 %v6327, %v6326
        %v6437 = vpack.c.b16 %v6329, %v6328
        %v6438 = vpack.c.b16 %v6331, %v6330
        %v6439 = vpack.c.b16 %v6333, %v6332
        %v6440 = vpack.c.b16 %v6335, %v6334
        %v6441 = vpack.c.b16 %v6337, %v6336
        %v6442 = vpack.c.b16 %v6339, %v6338
        %v6443 = vpack.c.b16 %v6341, %v6340
        %v6444 = vpack.c.b16 %v6343, %v6342
        %v6445 = vpack.c.b16 %v6345, %v6344
        %v6446 = vpack.c.b16 %v6347, %v6346
        %v6447 = vpack.c.b16 %v6349, %v6348
        %v6448 = vpack.c.b16 %v6351, %v6350
        %v6449 = vpack.c.b16 %v6353, %v6352
        %v6450 = vpack.c.b16 %v6355, %v6354
        %v6451 = vpack.c.b16 %v6357, %v6356
        %v6452 = vpack.c.b16 %v6359, %v6358
        %v6453 = vpack.c.b16 %v6361, %v6360
        %v6454 = vpack.c.b16 %v6363, %v6362
        %v6455 = vpack.c.b16 %v6365, %v6364
        %v6456 = vpack.c.b16 %v6367, %v6366
        %v6457 = vpack.c.b16 %v6369, %v6368
        %v6458 = vpack.c.b16 %v6371, %v6370
        %v6459 = vpack.c.b16 %v6373, %v6372
        %v6460 = vpack.c.b16 %v6375, %v6374
        %v6461 = vpack.c.b16 %v6377, %v6376
        %v6462 = vpack.c.b16 %v6379, %v6378
        %v6463 = vpack.c.b16 %v6381, %v6380
        %v6464 = vpack.c.b16 %v6383, %v6382
        %v6465 = vpack.c.b16 %v6385, %v6384
        %v6466 = vpack.c.b16 %v6387, %v6386
        %v6467 = vpack.c.b16 %v6389, %v6388
        %v6468 = vpack.c.b16 %v6391, %v6390
        %v6469 = vpack.c.b16 %v6393, %v6392
        %v6470 = vpack.c.b16 %v6395, %v6394
        %v6471 = vpack.c.b16 %v6397, %v6396
        %v6472 = vpack.c.b16 %v6399, %v6398
        %v6473 = vpack.c.b16 %v6401, %v6400
        %6546 = vmatpush.bf16.msra.mxu0 %v6409
        %6547 = vmatpush.bf16.msra.mxu0 %v6408
        %6548 = vmatpush.bf16.msra.mxu0 %v6407
        %6549 = vmatpush.bf16.msra.mxu0 %v6406
        %6550 = vmatpush.bf16.msra.mxu0 %v6405
        %6551 = vmatpush.bf16.msra.mxu0 %v6404
        %6552 = vmatpush.bf16.msra.mxu0 %v6403
        %6553 = vmatpush.bf16.msra.mxu0 %v6402
        %6554 = vmatmul.bf16.gmra.mxu0 %v5618
        %v6555 = vpop.f32.mrf.mxu0
        %v6556 = vadd.f32 0.0, %v6555
        %v6557 = vpop.f32.mrf.mxu0
        %v6558 = vadd.f32 0.0, %v6557
        %6559 = vmatmul.bf16.gmra.mxu0 %v5619
        %v6560 = vpop.f32.mrf.mxu0
        %v6561 = vadd.f32 0.0, %v6560
        %v6562 = vpop.f32.mrf.mxu0
        %v6563 = vadd.f32 0.0, %v6562
        %6564 = vmatmul.bf16.gmra.mxu0 %v5620
        %v6565 = vpop.f32.mrf.mxu0
        %v6566 = vadd.f32 0.0, %v6565
        %v6567 = vpop.f32.mrf.mxu0
        %v6568 = vadd.f32 0.0, %v6567
        %6569 = vmatmul.bf16.gmra.mxu0 %v5621
        %v6570 = vpop.f32.mrf.mxu0
        %v6571 = vadd.f32 0.0, %v6570
        %v6572 = vpop.f32.mrf.mxu0
        %v6573 = vadd.f32 0.0, %v6572
        %6574 = vmatmul.bf16.gmra.mxu0 %v5622
        %v6575 = vpop.f32.mrf.mxu0
        %v6576 = vadd.f32 0.0, %v6575
        %v6577 = vpop.f32.mrf.mxu0
        %v6578 = vadd.f32 0.0, %v6577
        %6579 = vmatmul.bf16.gmra.mxu0 %v5623
        %v6580 = vpop.f32.mrf.mxu0
        %v6581 = vadd.f32 0.0, %v6580
        %v6582 = vpop.f32.mrf.mxu0
        %v6583 = vadd.f32 0.0, %v6582
        %6584 = vmatmul.bf16.gmra.mxu0 %v5624
        %v6585 = vpop.f32.mrf.mxu0
        %v6586 = vadd.f32 0.0, %v6585
        %v6587 = vpop.f32.mrf.mxu0
        %v6588 = vadd.f32 0.0, %v6587
        %6589 = vmatmul.bf16.gmra.mxu0 %v5625
        %v6590 = vpop.f32.mrf.mxu0
        %v6591 = vadd.f32 0.0, %v6590
        %v6592 = vpop.f32.mrf.mxu0
        %v6593 = vadd.f32 0.0, %v6592
        %6594 = vdwg.mxu0
        %6595 = vmatpush.bf16.msra.mxu0 %v6417
        %6596 = vmatpush.bf16.msra.mxu0 %v6416
        %6597 = vmatpush.bf16.msra.mxu0 %v6415
        %6598 = vmatpush.bf16.msra.mxu0 %v6414
        %6599 = vmatpush.bf16.msra.mxu0 %v6413
        %6600 = vmatpush.bf16.msra.mxu0 %v6412
        %6601 = vmatpush.bf16.msra.mxu0 %v6411
        %6602 = vmatpush.bf16.msra.mxu0 %v6410
        %6603 = vmatmul.bf16.gmra.mxu0 %v5666
        %v6604 = vpop.f32.mrf.mxu0
        %v6605 = vadd.f32 %v6556, %v6604
        %v6606 = vpop.f32.mrf.mxu0
        %v6607 = vadd.f32 %v6558, %v6606
        %6608 = vmatmul.bf16.gmra.mxu0 %v5667
        %v6609 = vpop.f32.mrf.mxu0
        %v6610 = vadd.f32 %v6561, %v6609
        %v6611 = vpop.f32.mrf.mxu0
        %v6612 = vadd.f32 %v6563, %v6611
        %6613 = vmatmul.bf16.gmra.mxu0 %v5668
        %v6614 = vpop.f32.mrf.mxu0
        %v6615 = vadd.f32 %v6566, %v6614
        %v6616 = vpop.f32.mrf.mxu0
        %v6617 = vadd.f32 %v6568, %v6616
        %6618 = vmatmul.bf16.gmra.mxu0 %v5669
        %v6619 = vpop.f32.mrf.mxu0
        %v6620 = vadd.f32 %v6571, %v6619
        %v6621 = vpop.f32.mrf.mxu0
        %v6622 = vadd.f32 %v6573, %v6621
        %6623 = vmatmul.bf16.gmra.mxu0 %v5670
        %v6624 = vpop.f32.mrf.mxu0
        %v6625 = vadd.f32 %v6576, %v6624
        %v6626 = vpop.f32.mrf.mxu0
        %v6627 = vadd.f32 %v6578, %v6626
        %6628 = vmatmul.bf16.gmra.mxu0 %v5671
        %v6629 = vpop.f32.mrf.mxu0
        %v6630 = vadd.f32 %v6581, %v6629
        %v6631 = vpop.f32.mrf.mxu0
        %v6632 = vadd.f32 %v6583, %v6631
        %6633 = vmatmul.bf16.gmra.mxu0 %v5672
        %v6634 = vpop.f32.mrf.mxu0
        %v6635 = vadd.f32 %v6586, %v6634
        %v6636 = vpop.f32.mrf.mxu0
        %v6637 = vadd.f32 %v6588, %v6636
        %6638 = vmatmul.bf16.gmra.mxu0 %v5673
        %v6639 = vpop.f32.mrf.mxu0
        %v6640 = vadd.f32 %v6591, %v6639
        %v6641 = vpop.f32.mrf.mxu0
        %v6642 = vadd.f32 %v6593, %v6641
        %6643 = vdwg.mxu0
        %6644 = vmatpush.bf16.msra.mxu0 %v6425
        %6645 = vmatpush.bf16.msra.mxu0 %v6424
        %6646 = vmatpush.bf16.msra.mxu0 %v6423
        %6647 = vmatpush.bf16.msra.mxu0 %v6422
        %6648 = vmatpush.bf16.msra.mxu0 %v6421
        %6649 = vmatpush.bf16.msra.mxu0 %v6420
        %6650 = vmatpush.bf16.msra.mxu0 %v6419
        %6651 = vmatpush.bf16.msra.mxu0 %v6418
        %6652 = vmatmul.bf16.gmra.mxu0 %v5714
        %v6653 = vpop.f32.mrf.mxu0
        %v6654 = vadd.f32 %v6605, %v6653
        %v6655 = vpop.f32.mrf.mxu0
        %v6656 = vadd.f32 %v6607, %v6655
        %6657 = vmatmul.bf16.gmra.mxu0 %v5715
        %v6658 = vpop.f32.mrf.mxu0
        %v6659 = vadd.f32 %v6610, %v6658
        %v6660 = vpop.f32.mrf.mxu0
        %v6661 = vadd.f32 %v6612, %v6660
        %6662 = vmatmul.bf16.gmra.mxu0 %v5716
        %v6663 = vpop.f32.mrf.mxu0
        %v6664 = vadd.f32 %v6615, %v6663
        %v6665 = vpop.f32.mrf.mxu0
        %v6666 = vadd.f32 %v6617, %v6665
        %6667 = vmatmul.bf16.gmra.mxu0 %v5717
        %v6668 = vpop.f32.mrf.mxu0
        %v6669 = vadd.f32 %v6620, %v6668
        %v6670 = vpop.f32.mrf.mxu0
        %v6671 = vadd.f32 %v6622, %v6670
        %6672 = vmatmul.bf16.gmra.mxu0 %v5718
        %v6673 = vpop.f32.mrf.mxu0
        %v6674 = vadd.f32 %v6625, %v6673
        %v6675 = vpop.f32.mrf.mxu0
        %v6676 = vadd.f32 %v6627, %v6675
        %6677 = vmatmul.bf16.gmra.mxu0 %v5719
        %v6678 = vpop.f32.mrf.mxu0
        %v6679 = vadd.f32 %v6630, %v6678
        %v6680 = vpop.f32.mrf.mxu0
        %v6681 = vadd.f32 %v6632, %v6680
        %6682 = vmatmul.bf16.gmra.mxu0 %v5720
        %v6683 = vpop.f32.mrf.mxu0
        %v6684 = vadd.f32 %v6635, %v6683
        %v6685 = vpop.f32.mrf.mxu0
        %v6686 = vadd.f32 %v6637, %v6685
        %6687 = vmatmul.bf16.gmra.mxu0 %v5721
        %v6688 = vpop.f32.mrf.mxu0
        %v6689 = vadd.f32 %v6640, %v6688
        %v6690 = vpop.f32.mrf.mxu0
        %v6691 = vadd.f32 %v6642, %v6690
        %6692 = vdwg.mxu0
        %6693 = vmatpush.bf16.msra.mxu0 %v6433
        %6694 = vmatpush.bf16.msra.mxu0 %v6432
        %6695 = vmatpush.bf16.msra.mxu0 %v6431
        %6696 = vmatpush.bf16.msra.mxu0 %v6430
        %6697 = vmatpush.bf16.msra.mxu0 %v6429
        %6698 = vmatpush.bf16.msra.mxu0 %v6428
        %6699 = vmatpush.bf16.msra.mxu0 %v6427
        %6700 = vmatpush.bf16.msra.mxu0 %v6426
        %6701 = vmatmul.bf16.gmra.mxu0 %v5762
        %v6702 = vpop.f32.mrf.mxu0
        %v6703 = vadd.f32 %v6654, %v6702
        %v6704 = vpop.f32.mrf.mxu0
        %v6705 = vadd.f32 %v6656, %v6704
        %6706 = vmatmul.bf16.gmra.mxu0 %v5763
        %v6707 = vpop.f32.mrf.mxu0
        %v6708 = vadd.f32 %v6659, %v6707
        %v6709 = vpop.f32.mrf.mxu0
        %v6710 = vadd.f32 %v6661, %v6709
        %6711 = vmatmul.bf16.gmra.mxu0 %v5764
        %v6712 = vpop.f32.mrf.mxu0
        %v6713 = vadd.f32 %v6664, %v6712
        %v6714 = vpop.f32.mrf.mxu0
        %v6715 = vadd.f32 %v6666, %v6714
        %6716 = vmatmul.bf16.gmra.mxu0 %v5765
        %v6717 = vpop.f32.mrf.mxu0
        %v6718 = vadd.f32 %v6669, %v6717
        %v6719 = vpop.f32.mrf.mxu0
        %v6720 = vadd.f32 %v6671, %v6719
        %6721 = vmatmul.bf16.gmra.mxu0 %v5766
        %v6722 = vpop.f32.mrf.mxu0
        %v6723 = vadd.f32 %v6674, %v6722
        %v6724 = vpop.f32.mrf.mxu0
        %v6725 = vadd.f32 %v6676, %v6724
        %6726 = vmatmul.bf16.gmra.mxu0 %v5767
        %v6727 = vpop.f32.mrf.mxu0
        %v6728 = vadd.f32 %v6679, %v6727
        %v6729 = vpop.f32.mrf.mxu0
        %v6730 = vadd.f32 %v6681, %v6729
        %6731 = vmatmul.bf16.gmra.mxu0 %v5768
        %v6732 = vpop.f32.mrf.mxu0
        %v6733 = vadd.f32 %v6684, %v6732
        %v6734 = vpop.f32.mrf.mxu0
        %v6735 = vadd.f32 %v6686, %v6734
        %6736 = vmatmul.bf16.gmra.mxu0 %v5769
        %v6737 = vpop.f32.mrf.mxu0
        %v6738 = vadd.f32 %v6689, %v6737
        %v6739 = vpop.f32.mrf.mxu0
        %v6740 = vadd.f32 %v6691, %v6739
        %6741 = vdwg.mxu0
        %6742 = vmatpush.bf16.msra.mxu0 %v6441
        %6743 = vmatpush.bf16.msra.mxu0 %v6440
        %6744 = vmatpush.bf16.msra.mxu0 %v6439
        %6745 = vmatpush.bf16.msra.mxu0 %v6438
        %6746 = vmatpush.bf16.msra.mxu0 %v6437
        %6747 = vmatpush.bf16.msra.mxu0 %v6436
        %6748 = vmatpush.bf16.msra.mxu0 %v6435
        %6749 = vmatpush.bf16.msra.mxu0 %v6434
        %6750 = vmatmul.bf16.gmra.mxu0 %v1348
        %v6751 = vpop.f32.mrf.mxu0
        %v6752 = vadd.f32 %v6703, %v6751
        %v6753 = vpop.f32.mrf.mxu0
        %v6754 = vadd.f32 %v6705, %v6753
        %6755 = vmatmul.bf16.gmra.mxu0 %v1349
        %v6756 = vpop.f32.mrf.mxu0
        %v6757 = vadd.f32 %v6708, %v6756
        %v6758 = vpop.f32.mrf.mxu0
        %v6759 = vadd.f32 %v6710, %v6758
        %6760 = vmatmul.bf16.gmra.mxu0 %v1350
        %v6761 = vpop.f32.mrf.mxu0
        %v6762 = vadd.f32 %v6713, %v6761
        %v6763 = vpop.f32.mrf.mxu0
        %v6764 = vadd.f32 %v6715, %v6763
        %6765 = vmatmul.bf16.gmra.mxu0 %v1351
        %v6766 = vpop.f32.mrf.mxu0
        %v6767 = vadd.f32 %v6718, %v6766
        %v6768 = vpop.f32.mrf.mxu0
        %v6769 = vadd.f32 %v6720, %v6768
        %6770 = vmatmul.bf16.gmra.mxu0 %v1352
        %v6771 = vpop.f32.mrf.mxu0
        %v6772 = vadd.f32 %v6723, %v6771
        %v6773 = vpop.f32.mrf.mxu0
        %v6774 = vadd.f32 %v6725, %v6773
        %6775 = vmatmul.bf16.gmra.mxu0 %v1353
        %v6776 = vpop.f32.mrf.mxu0
        %v6777 = vadd.f32 %v6728, %v6776
        %v6778 = vpop.f32.mrf.mxu0
        %v6779 = vadd.f32 %v6730, %v6778
        %6780 = vmatmul.bf16.gmra.mxu0 %v1354
        %v6781 = vpop.f32.mrf.mxu0
        %v6782 = vadd.f32 %v6733, %v6781
        %v6783 = vpop.f32.mrf.mxu0
        %v6784 = vadd.f32 %v6735, %v6783
        %6785 = vmatmul.bf16.gmra.mxu0 %v1355
        %v6786 = vpop.f32.mrf.mxu0
        %v6787 = vadd.f32 %v6738, %v6786
        %v6788 = vpop.f32.mrf.mxu0
        %v6789 = vadd.f32 %v6740, %v6788
        %6790 = vdwg.mxu0
        %6791 = vmatpush.bf16.msra.mxu0 %v6449
        %6792 = vmatpush.bf16.msra.mxu0 %v6448
        %6793 = vmatpush.bf16.msra.mxu0 %v6447
        %6794 = vmatpush.bf16.msra.mxu0 %v6446
        %6795 = vmatpush.bf16.msra.mxu0 %v6445
        %6796 = vmatpush.bf16.msra.mxu0 %v6444
        %6797 = vmatpush.bf16.msra.mxu0 %v6443
        %6798 = vmatpush.bf16.msra.mxu0 %v6442
        %6799 = vmatmul.bf16.gmra.mxu0 %v5810
        %v6800 = vpop.f32.mrf.mxu0
        %v6801 = vadd.f32 %v6752, %v6800
        %v6802 = vpop.f32.mrf.mxu0
        %v6803 = vadd.f32 %v6754, %v6802
        %6804 = vmatmul.bf16.gmra.mxu0 %v5811
        %v6805 = vpop.f32.mrf.mxu0
        %v6806 = vadd.f32 %v6757, %v6805
        %v6807 = vpop.f32.mrf.mxu0
        %v6808 = vadd.f32 %v6759, %v6807
        %6809 = vmatmul.bf16.gmra.mxu0 %v5812
        %v6810 = vpop.f32.mrf.mxu0
        %v6811 = vadd.f32 %v6762, %v6810
        %v6812 = vpop.f32.mrf.mxu0
        %v6813 = vadd.f32 %v6764, %v6812
        %6814 = vmatmul.bf16.gmra.mxu0 %v5813
        %v6815 = vpop.f32.mrf.mxu0
        %v6816 = vadd.f32 %v6767, %v6815
        %v6817 = vpop.f32.mrf.mxu0
        %v6818 = vadd.f32 %v6769, %v6817
        %6819 = vmatmul.bf16.gmra.mxu0 %v5814
        %v6820 = vpop.f32.mrf.mxu0
        %v6821 = vadd.f32 %v6772, %v6820
        %v6822 = vpop.f32.mrf.mxu0
        %v6823 = vadd.f32 %v6774, %v6822
        %6824 = vmatmul.bf16.gmra.mxu0 %v5815
        %v6825 = vpop.f32.mrf.mxu0
        %v6826 = vadd.f32 %v6777, %v6825
        %v6827 = vpop.f32.mrf.mxu0
        %v6828 = vadd.f32 %v6779, %v6827
        %6829 = vmatmul.bf16.gmra.mxu0 %v5816
        %v6830 = vpop.f32.mrf.mxu0
        %v6831 = vadd.f32 %v6782, %v6830
        %v6832 = vpop.f32.mrf.mxu0
        %v6833 = vadd.f32 %v6784, %v6832
        %6834 = vmatmul.bf16.gmra.mxu0 %v5817
        %v6835 = vpop.f32.mrf.mxu0
        %v6836 = vadd.f32 %v6787, %v6835
        %v6837 = vpop.f32.mrf.mxu0
        %v6838 = vadd.f32 %v6789, %v6837
        %6839 = vdwg.mxu0
        %6840 = vmatpush.bf16.msra.mxu0 %v6457
        %6841 = vmatpush.bf16.msra.mxu0 %v6456
        %6842 = vmatpush.bf16.msra.mxu0 %v6455
        %6843 = vmatpush.bf16.msra.mxu0 %v6454
        %6844 = vmatpush.bf16.msra.mxu0 %v6453
        %6845 = vmatpush.bf16.msra.mxu0 %v6452
        %6846 = vmatpush.bf16.msra.mxu0 %v6451
        %6847 = vmatpush.bf16.msra.mxu0 %v6450
        %6848 = vmatmul.bf16.gmra.mxu0 %v5858
        %v6849 = vpop.f32.mrf.mxu0
        %v6850 = vadd.f32 %v6801, %v6849
        %v6851 = vpop.f32.mrf.mxu0
        %v6852 = vadd.f32 %v6803, %v6851
        %6853 = vmatmul.bf16.gmra.mxu0 %v5859
        %v6854 = vpop.f32.mrf.mxu0
        %v6855 = vadd.f32 %v6806, %v6854
        %v6856 = vpop.f32.mrf.mxu0
        %v6857 = vadd.f32 %v6808, %v6856
        %6858 = vmatmul.bf16.gmra.mxu0 %v5860
        %v6859 = vpop.f32.mrf.mxu0
        %v6860 = vadd.f32 %v6811, %v6859
        %v6861 = vpop.f32.mrf.mxu0
        %v6862 = vadd.f32 %v6813, %v6861
        %6863 = vmatmul.bf16.gmra.mxu0 %v5861
        %v6864 = vpop.f32.mrf.mxu0
        %v6865 = vadd.f32 %v6816, %v6864
        %v6866 = vpop.f32.mrf.mxu0
        %v6867 = vadd.f32 %v6818, %v6866
        %6868 = vmatmul.bf16.gmra.mxu0 %v5862
        %v6869 = vpop.f32.mrf.mxu0
        %v6870 = vadd.f32 %v6821, %v6869
        %v6871 = vpop.f32.mrf.mxu0
        %v6872 = vadd.f32 %v6823, %v6871
        %6873 = vmatmul.bf16.gmra.mxu0 %v5863
        %v6874 = vpop.f32.mrf.mxu0
        %v6875 = vadd.f32 %v6826, %v6874
        %v6876 = vpop.f32.mrf.mxu0
        %v6877 = vadd.f32 %v6828, %v6876
        %6878 = vmatmul.bf16.gmra.mxu0 %v5864
        %v6879 = vpop.f32.mrf.mxu0
        %v6880 = vadd.f32 %v6831, %v6879
        %v6881 = vpop.f32.mrf.mxu0
        %v6882 = vadd.f32 %v6833, %v6881
        %6883 = vmatmul.bf16.gmra.mxu0 %v5865
        %v6884 = vpop.f32.mrf.mxu0
        %v6885 = vadd.f32 %v6836, %v6884
        %v6886 = vpop.f32.mrf.mxu0
        %v6887 = vadd.f32 %v6838, %v6886
        %6888 = vdwg.mxu0
        %6889 = vmatpush.bf16.msra.mxu0 %v6465
        %6890 = vmatpush.bf16.msra.mxu0 %v6464
        %6891 = vmatpush.bf16.msra.mxu0 %v6463
        %6892 = vmatpush.bf16.msra.mxu0 %v6462
        %6893 = vmatpush.bf16.msra.mxu0 %v6461
        %6894 = vmatpush.bf16.msra.mxu0 %v6460
        %6895 = vmatpush.bf16.msra.mxu0 %v6459
        %6896 = vmatpush.bf16.msra.mxu0 %v6458
        %6897 = vmatmul.bf16.gmra.mxu0 %v5906
        %v6898 = vpop.f32.mrf.mxu0
        %v6899 = vadd.f32 %v6850, %v6898
        %v6900 = vpop.f32.mrf.mxu0
        %v6901 = vadd.f32 %v6852, %v6900
        %6902 = vmatmul.bf16.gmra.mxu0 %v5907
        %v6903 = vpop.f32.mrf.mxu0
        %v6904 = vadd.f32 %v6855, %v6903
        %v6905 = vpop.f32.mrf.mxu0
        %v6906 = vadd.f32 %v6857, %v6905
        %6907 = vmatmul.bf16.gmra.mxu0 %v5908
        %v6908 = vpop.f32.mrf.mxu0
        %v6909 = vadd.f32 %v6860, %v6908
        %v6910 = vpop.f32.mrf.mxu0
        %v6911 = vadd.f32 %v6862, %v6910
        %6912 = vmatmul.bf16.gmra.mxu0 %v5909
        %v6913 = vpop.f32.mrf.mxu0
        %v6914 = vadd.f32 %v6865, %v6913
        %v6915 = vpop.f32.mrf.mxu0
        %v6916 = vadd.f32 %v6867, %v6915
        %6917 = vmatmul.bf16.gmra.mxu0 %v5910
        %v6918 = vpop.f32.mrf.mxu0
        %v6919 = vadd.f32 %v6870, %v6918
        %v6920 = vpop.f32.mrf.mxu0
        %v6921 = vadd.f32 %v6872, %v6920
        %6922 = vmatmul.bf16.gmra.mxu0 %v5911
        %v6923 = vpop.f32.mrf.mxu0
        %v6924 = vadd.f32 %v6875, %v6923
        %v6925 = vpop.f32.mrf.mxu0
        %v6926 = vadd.f32 %v6877, %v6925
        %6927 = vmatmul.bf16.gmra.mxu0 %v5912
        %v6928 = vpop.f32.mrf.mxu0
        %v6929 = vadd.f32 %v6880, %v6928
        %v6930 = vpop.f32.mrf.mxu0
        %v6931 = vadd.f32 %v6882, %v6930
        %6932 = vmatmul.bf16.gmra.mxu0 %v5913
        %v6933 = vpop.f32.mrf.mxu0
        %v6934 = vadd.f32 %v6885, %v6933
        %v6935 = vpop.f32.mrf.mxu0
        %v6936 = vadd.f32 %v6887, %v6935
        %6937 = vdwg.mxu0
        %6938 = vmatpush.bf16.msra.mxu0 %v6473
        %6939 = vmatpush.bf16.msra.mxu0 %v6472
        %6940 = vmatpush.bf16.msra.mxu0 %v6471
        %6941 = vmatpush.bf16.msra.mxu0 %v6470
        %6942 = vmatpush.bf16.msra.mxu0 %v6469
        %6943 = vmatpush.bf16.msra.mxu0 %v6468
        %6944 = vmatpush.bf16.msra.mxu0 %v6467
        %6945 = vmatpush.bf16.msra.mxu0 %v6466
        %6946 = vmatmul.bf16.gmra.mxu0 %v5954
        %v6947 = vpop.f32.mrf.mxu0
        %v6948 = vadd.f32 %v6899, %v6947
        %v6949 = vpop.f32.mrf.mxu0
        %v6950 = vadd.f32 %v6901, %v6949
        %6951 = vmatmul.bf16.gmra.mxu0 %v5955
        %v6952 = vpop.f32.mrf.mxu0
        %v6953 = vadd.f32 %v6904, %v6952
        %v6954 = vpop.f32.mrf.mxu0
        %v6955 = vadd.f32 %v6906, %v6954
        %6956 = vmatmul.bf16.gmra.mxu0 %v5956
        %v6957 = vpop.f32.mrf.mxu0
        %v6958 = vadd.f32 %v6909, %v6957
        %v6959 = vpop.f32.mrf.mxu0
        %v6960 = vadd.f32 %v6911, %v6959
        %6961 = vmatmul.bf16.gmra.mxu0 %v5957
        %v6962 = vpop.f32.mrf.mxu0
        %v6963 = vadd.f32 %v6914, %v6962
        %v6964 = vpop.f32.mrf.mxu0
        %v6965 = vadd.f32 %v6916, %v6964
        %6966 = vmatmul.bf16.gmra.mxu0 %v5958
        %v6967 = vpop.f32.mrf.mxu0
        %v6968 = vadd.f32 %v6919, %v6967
        %v6969 = vpop.f32.mrf.mxu0
        %v6970 = vadd.f32 %v6921, %v6969
        %6971 = vmatmul.bf16.gmra.mxu0 %v5959
        %v6972 = vpop.f32.mrf.mxu0
        %v6973 = vadd.f32 %v6924, %v6972
        %v6974 = vpop.f32.mrf.mxu0
        %v6975 = vadd.f32 %v6926, %v6974
        %6976 = vmatmul.bf16.gmra.mxu0 %v5960
        %v6977 = vpop.f32.mrf.mxu0
        %v6978 = vadd.f32 %v6929, %v6977
        %v6979 = vpop.f32.mrf.mxu0
        %v6980 = vadd.f32 %v6931, %v6979
        %6981 = vmatmul.bf16.gmra.mxu0 %v5961
        %v6982 = vpop.f32.mrf.mxu0
        %v6983 = vadd.f32 %v6934, %v6982
        %v6984 = vpop.f32.mrf.mxu0
        %v6985 = vadd.f32 %v6936, %v6984
        %6986 = vdwg.mxu0
        %v6987 = vld [vmem:[#allocation12 + $0x3] sm:$0x1]
        %v6988 = vld [vmem:[#allocation13 + $0x3] sm:$0x1]
        %v6989 = vperm.slane %v6987, 0
        %v6990 = vmul.f32 %v6948, %v6989
        %v6991 = vmul.f32 %v6950, %v6989
        %v6992 = vmul.f32 %v6953, %v6989
        %v6993 = vmul.f32 %v6955, %v6989
        %v6994 = vmul.f32 %v6958, %v6989
        %v6995 = vmul.f32 %v6960, %v6989
        %v6996 = vmul.f32 %v6963, %v6989
        %v6997 = vmul.f32 %v6965, %v6989
        %v6998 = vmul.f32 %v6968, %v6989
        %v6999 = vmul.f32 %v6970, %v6989
        %v7000 = vmul.f32 %v6973, %v6989
        %v7001 = vmul.f32 %v6975, %v6989
        %v7002 = vmul.f32 %v6978, %v6989
        %v7003 = vmul.f32 %v6980, %v6989
        %v7004 = vmul.f32 %v6983, %v6989
        %v7005 = vmul.f32 %v6985, %v6989
        %v7006 = vperm.slane %v6988, 0
        %v7007 = vadd.f32 %v6990, %v7006
        %v7008 = vadd.f32 %v6991, %v7006
        %v7009 = vadd.f32 %v6992, %v7006
        %v7010 = vadd.f32 %v6993, %v7006
        %v7011 = vadd.f32 %v6994, %v7006
        %v7012 = vadd.f32 %v6995, %v7006
        %v7013 = vadd.f32 %v6996, %v7006
        %v7014 = vadd.f32 %v6997, %v7006
        %v7015 = vadd.f32 %v6998, %v7006
        %v7016 = vadd.f32 %v6999, %v7006
        %v7017 = vadd.f32 %v7000, %v7006
        %v7018 = vadd.f32 %v7001, %v7006
        %v7019 = vadd.f32 %v7002, %v7006
        %v7020 = vadd.f32 %v7003, %v7006
        %v7021 = vadd.f32 %v7004, %v7006
        %v7022 = vadd.f32 %v7005, %v7006
        %v7023 = vmax.f32 %v7007, 0.0
        %v7024 = vmax.f32 %v7008, 0.0
        %v7025 = vmax.f32 %v7009, 0.0
        %v7026 = vmax.f32 %v7010, 0.0
        %v7027 = vmax.f32 %v7011, 0.0
        %v7028 = vmax.f32 %v7012, 0.0
        %v7029 = vmax.f32 %v7013, 0.0
        %v7030 = vmax.f32 %v7014, 0.0
        %v7031 = vmax.f32 %v7015, 0.0
        %v7032 = vmax.f32 %v7016, 0.0
        %v7033 = vmax.f32 %v7017, 0.0
        %v7034 = vmax.f32 %v7018, 0.0
        %v7035 = vmax.f32 %v7019, 0.0
        %v7036 = vmax.f32 %v7020, 0.0
        %v7037 = vmax.f32 %v7021, 0.0
        %v7038 = vmax.f32 %v7022, 0.0
        %v7039 = vpack.c.bf16 %v7024, %v7023
        %v7040 = vpack.c.bf16 %v7026, %v7025
        %v7041 = vpack.c.bf16 %v7028, %v7027
        %v7042 = vpack.c.bf16 %v7030, %v7029
        %v7043 = vpack.c.bf16 %v7032, %v7031
        %v7044 = vpack.c.bf16 %v7034, %v7033
        %v7045 = vpack.c.bf16 %v7036, %v7035
        %v7046 = vpack.c.bf16 %v7038, %v7037
        %s7047 = scalar_lea.vmem [#allocation10], 192
        %v7048 = vld [vmem:[%s7047] sm:$0xf]
        %v7049 = vld [vmem:[%s7047 + $0x4] sm:$0xf]
        %v7050 = vld [vmem:[%s7047 + $0x8] sm:$0xf]
        %v7051 = vld [vmem:[%s7047 + $0xc] sm:$0xf]
        %v7052 = vld [vmem:[%s7047 + $0x10] sm:$0xf]
        %v7053 = vld [vmem:[%s7047 + $0x14] sm:$0xf]
        %v7054 = vld [vmem:[%s7047 + $0x18] sm:$0xf]
        %v7055 = vld [vmem:[%s7047 + $0x1c] sm:$0xf]
        %v7056 = vld [vmem:[%s7047 + $0x20] sm:$0xf]
        %v7057 = vld [vmem:[%s7047 + $0x24] sm:$0xf]
        %v7058 = vld [vmem:[%s7047 + $0x28] sm:$0xf]
        %v7059 = vld [vmem:[%s7047 + $0x2c] sm:$0xf]
        %v7060 = vld [vmem:[%s7047 + $0x30] sm:$0xf]
        %v7061 = vld [vmem:[%s7047 + $0x34] sm:$0xf]
        %v7062 = vld [vmem:[%s7047 + $0x38] sm:$0xf]
        %v7063 = vld [vmem:[%s7047 + $0x3c] sm:$0xf]
        %v7080 = vunpack.c.l.b16 %v7048
        %v7081 = vunpack.c.l.b16 %v7049
        %v7082 = vunpack.c.l.b16 %v7050
        %v7083 = vunpack.c.l.b16 %v7051
        %v7084 = vunpack.c.l.b16 %v7052
        %v7085 = vunpack.c.l.b16 %v7053
        %v7086 = vunpack.c.l.b16 %v7054
        %v7087 = vunpack.c.l.b16 %v7055
        %v7088 = vunpack.c.l.b16 %v7056
        %v7089 = vunpack.c.l.b16 %v7057
        %v7090 = vunpack.c.l.b16 %v7058
        %v7091 = vunpack.c.l.b16 %v7059
        %v7092 = vunpack.c.l.b16 %v7060
        %v7093 = vunpack.c.l.b16 %v7061
        %v7094 = vunpack.c.l.b16 %v7062
        %v7095 = vunpack.c.l.b16 %v7063
        %v7096 = vpack.c.b16 %v7081, %v7080
        %v7097 = vpack.c.b16 %v7083, %v7082
        %v7098 = vpack.c.b16 %v7085, %v7084
        %v7099 = vpack.c.b16 %v7087, %v7086
        %v7100 = vpack.c.b16 %v7089, %v7088
        %v7101 = vpack.c.b16 %v7091, %v7090
        %v7102 = vpack.c.b16 %v7093, %v7092
        %v7103 = vpack.c.b16 %v7095, %v7094
        %7112 = vmatpush.bf16.msra.mxu0 %v7103
        %7113 = vmatpush.bf16.msra.mxu0 %v7102
        %7114 = vmatpush.bf16.msra.mxu0 %v7101
        %7115 = vmatpush.bf16.msra.mxu0 %v7100
        %7116 = vmatpush.bf16.msra.mxu0 %v7099
        %7117 = vmatpush.bf16.msra.mxu0 %v7098
        %7118 = vmatpush.bf16.msra.mxu0 %v7097
        %7119 = vmatpush.bf16.msra.mxu0 %v7096
        %7120 = vmatmul.bf16.gmra.mxu0 %v7039
        %v7121 = vpop.f32.mrf.mxu0
        %v7122 = vadd.f32 0.0, %v7121
        %v7123 = vpop.f32.mrf.mxu0
        %v7124 = vadd.f32 0.0, %v7123
        %7125 = vmatmul.bf16.gmra.mxu0 %v7040
        %v7126 = vpop.f32.mrf.mxu0
        %v7127 = vadd.f32 0.0, %v7126
        %v7128 = vpop.f32.mrf.mxu0
        %v7129 = vadd.f32 0.0, %v7128
        %7130 = vmatmul.bf16.gmra.mxu0 %v7041
        %v7131 = vpop.f32.mrf.mxu0
        %v7132 = vadd.f32 0.0, %v7131
        %v7133 = vpop.f32.mrf.mxu0
        %v7134 = vadd.f32 0.0, %v7133
        %7135 = vmatmul.bf16.gmra.mxu0 %v7042
        %v7136 = vpop.f32.mrf.mxu0
        %v7137 = vadd.f32 0.0, %v7136
        %v7138 = vpop.f32.mrf.mxu0
        %v7139 = vadd.f32 0.0, %v7138
        %7140 = vmatmul.bf16.gmra.mxu0 %v7043
        %v7141 = vpop.f32.mrf.mxu0
        %v7142 = vadd.f32 0.0, %v7141
        %v7143 = vpop.f32.mrf.mxu0
        %v7144 = vadd.f32 0.0, %v7143
        %7145 = vmatmul.bf16.gmra.mxu0 %v7044
        %v7146 = vpop.f32.mrf.mxu0
        %v7147 = vadd.f32 0.0, %v7146
        %v7148 = vpop.f32.mrf.mxu0
        %v7149 = vadd.f32 0.0, %v7148
        %7150 = vmatmul.bf16.gmra.mxu0 %v7045
        %v7151 = vpop.f32.mrf.mxu0
        %v7152 = vadd.f32 0.0, %v7151
        %v7153 = vpop.f32.mrf.mxu0
        %v7154 = vadd.f32 0.0, %v7153
        %7155 = vmatmul.bf16.gmra.mxu0 %v7046
        %v7156 = vpop.f32.mrf.mxu0
        %v7157 = vadd.f32 0.0, %v7156
        %v7158 = vpop.f32.mrf.mxu0
        %v7159 = vadd.f32 0.0, %v7158
        %7160 = vdwg.mxu0
        %v7161 = vadd.f32 %v5308, %v7122
        %v7162 = vadd.f32 %v5309, %v7124
        %v7163 = vadd.f32 %v5310, %v7127
        %v7164 = vadd.f32 %v5311, %v7129
        %v7165 = vadd.f32 %v5312, %v7132
        %v7166 = vadd.f32 %v5313, %v7134
        %v7167 = vadd.f32 %v5314, %v7137
        %v7168 = vadd.f32 %v5315, %v7139
        %v7169 = vadd.f32 %v5316, %v7142
        %v7170 = vadd.f32 %v5317, %v7144
        %v7171 = vadd.f32 %v5318, %v7147
        %v7172 = vadd.f32 %v5319, %v7149
        %v7173 = vadd.f32 %v5320, %v7152
        %v7174 = vadd.f32 %v5321, %v7154
        %v7175 = vadd.f32 %v5322, %v7157
        %v7176 = vadd.f32 %v5323, %v7159
        %v7177 = vld [vmem:[#allocation3] sm:$0x1]
        %v7179 = vperm.slane %v7177, 0
        %v7181 = vadd.f32 %v7161, %v7179
        %v7182 = vadd.f32 %v7162, %v7179
        %v7183 = vadd.f32 %v7163, %v7179
        %v7184 = vadd.f32 %v7164, %v7179
        %v7185 = vadd.f32 %v7165, %v7179
        %v7186 = vadd.f32 %v7166, %v7179
        %v7187 = vadd.f32 %v7167, %v7179
        %v7188 = vadd.f32 %v7168, %v7179
        %v7189 = vadd.f32 %v7169, %v7179
        %v7190 = vadd.f32 %v7170, %v7179
        %v7191 = vadd.f32 %v7171, %v7179
        %v7192 = vadd.f32 %v7172, %v7179
        %v7193 = vadd.f32 %v7173, %v7179
        %v7194 = vadd.f32 %v7174, %v7179
        %v7195 = vadd.f32 %v7175, %v7179
        %v7196 = vadd.f32 %v7176, %v7179
        %v7197 = vld [vmem:[#allocation12 + $0x5] sm:$0x1]
        %v7198 = vld [vmem:[#allocation13 + $0x5] sm:$0x1]
        %v7199 = vperm.slane %v7197, 0
        %v7200 = vmul.f32 %v7181, %v7199
        %v7201 = vmul.f32 %v7182, %v7199
        %v7202 = vmul.f32 %v7183, %v7199
        %v7203 = vmul.f32 %v7184, %v7199
        %v7204 = vmul.f32 %v7185, %v7199
        %v7205 = vmul.f32 %v7186, %v7199
        %v7206 = vmul.f32 %v7187, %v7199
        %v7207 = vmul.f32 %v7188, %v7199
        %v7208 = vmul.f32 %v7189, %v7199
        %v7209 = vmul.f32 %v7190, %v7199
        %v7210 = vmul.f32 %v7191, %v7199
        %v7211 = vmul.f32 %v7192, %v7199
        %v7212 = vmul.f32 %v7193, %v7199
        %v7213 = vmul.f32 %v7194, %v7199
        %v7214 = vmul.f32 %v7195, %v7199
        %v7215 = vmul.f32 %v7196, %v7199
        %v7216 = vperm.slane %v7198, 0
        %v7217 = vadd.f32 %v7200, %v7216
        %v7218 = vadd.f32 %v7201, %v7216
        %v7219 = vadd.f32 %v7202, %v7216
        %v7220 = vadd.f32 %v7203, %v7216
        %v7221 = vadd.f32 %v7204, %v7216
        %v7222 = vadd.f32 %v7205, %v7216
        %v7223 = vadd.f32 %v7206, %v7216
        %v7224 = vadd.f32 %v7207, %v7216
        %v7225 = vadd.f32 %v7208, %v7216
        %v7226 = vadd.f32 %v7209, %v7216
        %v7227 = vadd.f32 %v7210, %v7216
        %v7228 = vadd.f32 %v7211, %v7216
        %v7229 = vadd.f32 %v7212, %v7216
        %v7230 = vadd.f32 %v7213, %v7216
        %v7231 = vadd.f32 %v7214, %v7216
        %v7232 = vadd.f32 %v7215, %v7216
        %v7233 = vmax.f32 %v7217, 0.0
        %v7234 = vmax.f32 %v7218, 0.0
        %v7235 = vmax.f32 %v7219, 0.0
        %v7236 = vmax.f32 %v7220, 0.0
        %v7237 = vmax.f32 %v7221, 0.0
        %v7238 = vmax.f32 %v7222, 0.0
        %v7239 = vmax.f32 %v7223, 0.0
        %v7240 = vmax.f32 %v7224, 0.0
        %v7241 = vmax.f32 %v7225, 0.0
        %v7242 = vmax.f32 %v7226, 0.0
        %v7243 = vmax.f32 %v7227, 0.0
        %v7244 = vmax.f32 %v7228, 0.0
        %v7245 = vmax.f32 %v7229, 0.0
        %v7246 = vmax.f32 %v7230, 0.0
        %v7247 = vmax.f32 %v7231, 0.0
        %v7248 = vmax.f32 %v7232, 0.0
        %7249 = vst [vmem:[%s435] sm:$0xff] %v7233
        %7250 = vst [vmem:[%s435 + $0x8] sm:$0xff] %v7234
        %7251 = vst [vmem:[%s435 + $0x10] sm:$0xff] %v7235
        %7252 = vst [vmem:[%s435 + $0x18] sm:$0xff] %v7236
        %7253 = vst [vmem:[%s435 + $0x20] sm:$0xff] %v7237
        %7254 = vst [vmem:[%s435 + $0x28] sm:$0xff] %v7238
        %7255 = vst [vmem:[%s435 + $0x30] sm:$0xff] %v7239
        %7256 = vst [vmem:[%s435 + $0x38] sm:$0xff] %v7240
        %7257 = vst [vmem:[%s435 + $0x40] sm:$0xff] %v7241
        %7258 = vst [vmem:[%s435 + $0x48] sm:$0xff] %v7242
        %7259 = vst [vmem:[%s435 + $0x50] sm:$0xff] %v7243
        %7260 = vst [vmem:[%s435 + $0x58] sm:$0xff] %v7244
        %7261 = vst [vmem:[%s435 + $0x60] sm:$0xff] %v7245
        %7262 = vst [vmem:[%s435 + $0x68] sm:$0xff] %v7246
        %7263 = vst [vmem:[%s435 + $0x70] sm:$0xff] %v7247
        %7264 = vst [vmem:[%s435 + $0x78] sm:$0xff] %v7248
        %s7265 = sand.u32 %s243, 1
        %s7266 = scalar_lea.sflag [#allocation6], %s7265
        %s7267 = sand.u32 %s243, 1
        %s7268 = smul.addr %s7267, 128
        %s7269 = scalar_lea.vmem [#allocation15], %s7268
        // Predicated region
        $region85: #{tpu_custom_call.1} parent=55 // pred_check
          %p7270 = pneg %p253
        $region86: #{tpu_custom_call.1} parent=55 // pred_check_branch
          %7272 = sbr.rel (%p7270) target = $region88
        $region87: #{tpu_custom_call.1} parent=55 // pred_region
          %s7273 = smul.u32 8, %s32
          %7275 = vsyncadd %s7266, 0
          %s7276 = smul.addr %s7273, 2
          %s7277 = smul.addr %s31, 32
          %s7278 = sadd.s32 %s7276, %s7277
          %s7279 = smul.addr %s7278, 8
          %s7280 = scalar_lea.hbm %s9, %s7279
          %s7281 = sshll.u32 %s7269, 4
          %s7282 = int_to_ptr.vmem [resolvable:$true] %s7281
          %s7283 = sshll.u32 %s7280, 4
          %s7284 = int_to_ptr.hbm [resolvable:$true] %s7283
          %7289 = dma.vmem_to_hbm [thread:$0]  %s7282, 2048, %s7284, %s7266, 128, 128, 8
        $region88: #{tpu_custom_call.1} parent=55 // pred_fallthru
          _
      $region56: #{tpu_custom_call.1} parent=5 // pred_fallthru
        _
      %p7290 = scmp.le.s32.totalorder 2, %s22
      // Predicated region
      $region89: #{tpu_custom_call.1} parent=5 // pred_check
        %p7291 = pneg %p7290
      $region90: #{tpu_custom_call.1} parent=5 // pred_check_branch
        %7293 = sbr.rel (%p7291) target = $region92
      $region91: #{tpu_custom_call.1} parent=5 // pred_region
        %s7294 = ssub.s32 %s22, 2
        // Predicated region
        $region93: #{tpu_custom_call.1} parent=91 // pred_check
          %p7295 = pneg %p259
        $region94: #{tpu_custom_call.1} parent=91 // pred_check_branch
          %7297 = sbr.rel (%p7295) target = $region96
        $region95: #{tpu_custom_call.1} parent=91 // pred_region
          %s7298 = sand.u32 %s244, 1
          %s7299 = scalar_lea.sflag [#allocation6], %s7298
          %s7300 = sand.u32 %s244, 1
          %s7301 = smul.addr %s7300, 128
          %s7302 = scalar_lea.vmem [#allocation15], %s7301
          %7304 = dma.done %s7299, 2048
        $region96: #{tpu_custom_call.1} parent=91 // pred_fallthru
          _
      $region92: #{tpu_custom_call.1} parent=5 // pred_fallthru
        _
    $region6: #{tpu_custom_call.1} parent=1 // loop_footer
      %s26 = sadd.s32 1, %s22
    $region7: #{tpu_custom_call.1} parent=1 // loop_footer_branch
      %21 = sbr.rel target = $region3
    $region8: #{tpu_custom_call.1} parent=1 // loop_exit
      _
    %7305 = vsyncpa [#allocation5], 1
    %s7306 = scalar_lea.sflag [#allocation5], 1
    %7307 = vsyncpa %s7306, 1
    %7308 = vsyncpa [#allocation8], 1
    %7309 = vsyncpa [#allocation11], 1
    %7310 = vsyncpa [#allocation14], 1
    %7311 = vsyncpa [#allocation6], 1
    %s7312 = scalar_lea.sflag [#allocation6], 1
    %7313 = vsyncpa %s7312, 1

</llo_original>
